<compile_context>
chip_gen: v6e
topology: v6e:2x2x1
jax: 0.10.0
libtpu: 0.0.40
codegen_flags: <defaults>
</compile_context>

<pallas_src>
import jax
import jax.numpy as jnp
from jax.experimental import pallas as pl
from jax.experimental.pallas import tpu as pltpu

VMEM = pl.BlockSpec(memory_space=pltpu.MemorySpace.VMEM)

# concatenated t-MLP hidden layout: [conv2_t 1024 | fc1_t 256 | fc3_t 784 | fc2_t 84]
_OFF_C2, _OFF_F1, _OFF_F3, _OFF_F2, _OFF_END = 0, 1024, 1280, 2064, 2148


# ----------------------------------------------------------------------------
# Kernel 1: conv1 (merged-quadrant im2col matmul) + timestep add + tanh +
#           2x2 max-pool, plus ALL timestep MLPs (first layers merged).
#   p1  : (25, 4*Wq)  im2col patches; column = q*Wq + b*144 + i*12 + j
#   t1  : (1,  4*Wq)  timestep-image value for that column
#   h1  : (6,  Wq)    pooled conv1 output (max over the 4 quadrant blocks)
#   tq  : (B, 1024)   conv2_t output (PyTorch (c, oy, ox) order; relayout in glue)
#   g1/g2/g3          fc1_t / fc2_t(padded to 128) / fc3_t outputs
# ----------------------------------------------------------------------------
def _stage1_kernel(p1_ref, t1_ref, w1_ref, b1_ref, temb_ref,
                   wt1_ref, bt1_ref,
                   c2w2_ref, c2b2_ref, f1w2_ref, f1b2_ref,
                   f3w2_ref, f3b2_ref, f2w2_ref, f2b2_ref,
                   h1_ref, tq_ref, g1_ref, g2_ref, g3_ref):
    # conv1: one matmul over all 4 pool quadrants, then vectorized pool.
    y1 = jnp.dot(w1_ref[...], p1_ref[...], preferred_element_type=jnp.float32)
    y1 = jnp.tanh(y1 + b1_ref[...] + t1_ref[...])
    wq = h1_ref.shape[1]                           # lane-aligned quadrant width
    h1_ref[...] = jnp.maximum(
        jnp.maximum(y1[:, 0:wq], y1[:, wq:2 * wq]),
        jnp.maximum(y1[:, 2 * wq:3 * wq], y1[:, 3 * wq:4 * wq]))

    # all four timestep-MLP first layers as ONE wide bf16 matmul.
    temb_bf = temb_ref[...].astype(jnp.bfloat16)
    hc = jnp.tanh(jnp.dot(temb_bf, wt1_ref[...],
                          preferred_element_type=jnp.float32) + bt1_ref[...])
    h_c2 = hc[:, _OFF_C2:_OFF_F1].astype(jnp.bfloat16)
    h_f1 = hc[:, _OFF_F1:_OFF_F3].astype(jnp.bfloat16)
    h_f3 = hc[:, _OFF_F3:_OFF_F2].astype(jnp.bfloat16)
    h_f2 = hc[:, _OFF_F2:_OFF_END].astype(jnp.bfloat16)

    tq_ref[...] = jnp.dot(h_c2, c2w2_ref[...],
                          preferred_element_type=jnp.float32) + c2b2_ref[...]
    g1_ref[...] = jnp.dot(h_f1, f1w2_ref[...],
                          preferred_element_type=jnp.float32) + f1b2_ref[...]
    g3_ref[...] = jnp.dot(h_f3, f3w2_ref[...],
                          preferred_element_type=jnp.float32) + f3b2_ref[...]
    g2_ref[...] = jnp.dot(h_f2, f2w2_ref[...],
                          preferred_element_type=jnp.float32) + f2b2_ref[...]


# ----------------------------------------------------------------------------
# Kernel 2: conv2 (im2col matmul, rows (q, p, b)) + pre-relayouted conv2_t add
#           + tanh + vectorized 2x2 max-pool + fc1/fc2/fc3 + sigmoids.
#   p2  : (64*B, 150) bf16 im2col patches, rows (quadrant, pooled-pos, batch)
#   tqa : (64*B, 16)  conv2_t addend already in the SAME row order (from glue)
#   out : (B, 784)    lane-dense final store
# ----------------------------------------------------------------------------
def _stage2_kernel(p2_ref, tqa_ref, w2_ref, b2_ref,
                   g1_ref, g2_ref, g3_ref,
                   fc1w_ref, fc1b_ref, fc2w_ref, fc2b_ref, fc3w_ref, fc3b_ref,
                   out_ref, xflat_scr):
    B = out_ref.shape[0]

    y = jnp.dot(p2_ref[...], w2_ref[...], preferred_element_type=jnp.float32)
    y = jnp.tanh(y + b2_ref[...] + tqa_ref[...])            # (64*B, 16)

    nb = 16 * B                                              # rows per quadrant
    xp = jnp.maximum(jnp.maximum(y[0:nb], y[nb:2 * nb]),
                     jnp.maximum(y[2 * nb:3 * nb], y[3 * nb:4 * nb]))  # (16B,16)

    # flatten (pooled-pos, batch) x channel -> (batch, pooled-pos*channel):
    # 16 static slice copies, pure data movement (no tanh/max in this loop).
    for p in range(16):
        xflat_scr[:, p * 16:(p + 1) * 16] = xp[p * B:(p + 1) * B, :]
    xflat = xflat_scr[...].astype(jnp.bfloat16)

    x1 = jax.nn.sigmoid(
        jnp.dot(xflat, fc1w_ref[...], preferred_element_type=jnp.float32)
        + fc1b_ref[...] + g1_ref[...])
    x2 = jax.nn.sigmoid(
        jnp.dot(x1.astype(jnp.bfloat16), fc2w_ref[...],
                preferred_element_type=jnp.float32)
        + fc2b_ref[...] + g2_ref[...])                       # (B, 128) padded
    x3 = jax.nn.sigmoid(
        jnp.dot(x2.astype(jnp.bfloat16), fc3w_ref[...],
                preferred_element_type=jnp.float32)
        + fc3b_ref[...] + g3_ref[...])
    out_ref[...] = x3


# ----------------------------------------------------------------------------
# Parameters (deterministic synthetic init; shapes match the PyTorch module)
# ----------------------------------------------------------------------------
def init_params(key):
    ks = iter(jax.random.split(key, 40))

    def p(shape, scale=0.1):
        return jax.random.normal(next(ks), shape, dtype=jnp.float32) * scale

    return dict(
        emb=p((1001, 24 * 24)),
        conv1_w=p((6, 1, 5, 5)), conv1_b=p((6,)),
        conv2_w=p((16, 6, 5, 5)), conv2_b=p((16,)),
        conv2_t_w1=p((1024, 576)), conv2_t_b1=p((1024,)),
        conv2_t_w2=p((1024, 1024)), conv2_t_b2=p((1024,)),
        fc1_w=p((256, 256)), fc1_b=p((256,)),
        fc1_t_w1=p((256, 576)), fc1_t_b1=p((256,)),
        fc1_t_w2=p((256, 256)), fc1_t_b2=p((256,)),
        fc2_w=p((84, 256)), fc2_b=p((84,)),
        fc2_t_w1=p((84, 576)), fc2_t_b1=p((84,)),
        fc2_t_w2=p((84, 84)), fc2_t_b2=p((84,)),
        fc3_w=p((784, 84)), fc3_b=p((784,)),
        fc3_t_w1=p((784, 576)), fc3_t_b1=p((784,)),
        fc3_t_w2=p((784, 784)), fc3_t_b2=p((784,)),
    )


# ----------------------------------------------------------------------------
# One-time parameter layout prep (transposes / permutations / bf16 casts)
# ----------------------------------------------------------------------------
def prepare_params(params):
    bf = jnp.bfloat16

    # conv1: (6,1,5,5) -> (6,25) taps (ky,kx); tiny, kept f32.
    w1m = params["conv1_w"].reshape(6, 25)
    b1c = params["conv1_b"].reshape(6, 1)

    # conv2: (16,6,5,5) -> (150,16) with rows (cin, ky, kx); bf16.
    w2m = params["conv2_w"].reshape(16, 150).T.astype(bf)
    b2r = params["conv2_b"].reshape(1, 16)

    # merged first layers of all four timestep MLPs: [conv2_t|fc1_t|fc3_t|fc2_t]
    wt1_cat = jnp.concatenate(
        [params["conv2_t_w1"].T, params["fc1_t_w1"].T,
         params["fc3_t_w1"].T, params["fc2_t_w1"].T], axis=1).astype(bf)
    bt1_cat = jnp.concatenate(
        [params["conv2_t_b1"], params["fc1_t_b1"],
         params["fc3_t_b1"], params["fc2_t_b1"]]).reshape(1, -1)

    # fc2 / fc2_t / fc3(K) zero-padded 84 -> 128 (padded fc3 rows are zero, so
    # the sigmoid(0)=0.5 garbage in the padded lanes never reaches the output).
    fc2_wT = jnp.zeros((256, 128), jnp.float32).at[:, :84].set(params["fc2_w"].T)
    fc2_b = jnp.zeros((1, 128), jnp.float32).at[0, :84].set(params["fc2_b"])
    f2t_w2T = jnp.zeros((84, 128), jnp.float32).at[:, :84].set(params["fc2_t_w2"].T)
    f2t_b2 = jnp.zeros((1, 128), jnp.float32).at[0, :84].set(params["fc2_t_b2"])
    fc3_wT = jnp.zeros((128, 784), jnp.float32).at[:84, :].set(params["fc3_w"].T)

    # fc1: permute input features; torch flatten gives (c, i, j) order while the
    # fused kernel produces (pooled-pos = i*4+j, c) order.
    mp = jnp.arange(256)
    src = (mp % 16) * 16 + (mp // 16)

    return dict(
        emb=params["emb"],
        w1m=w1m, b1c=b1c, w2m=w2m, b2r=b2r,
        wt1_cat=wt1_cat, bt1_cat=bt1_cat,
        c2t_w2=params["conv2_t_w2"].T.astype(bf),
        c2t_b2=params["conv2_t_b2"].reshape(1, 1024),
        f1t_w2=params["fc1_t_w2"].T.astype(bf),
        f1t_b2=params["fc1_t_b2"].reshape(1, 256),
        f2t_w2=f2t_w2T.astype(bf), f2t_b2=f2t_b2,
        f3t_w2=params["fc3_t_w2"].T.astype(bf),
        f3t_b2=params["fc3_t_b2"].reshape(1, 784),
        fc1_w=params["fc1_w"][:, src].T.astype(bf),
        fc1_b=params["fc1_b"].reshape(1, 256),
        fc2_w=fc2_wT.astype(bf), fc2_b=fc2_b,
        fc3_w=fc3_wT.astype(bf), fc3_b=params["fc3_b"].reshape(1, 784),
    )


# ----------------------------------------------------------------------------
# Forward pass: glue (gather / im2col / 8 KB relayouts) + 2 fused Pallas kernels
# ----------------------------------------------------------------------------
def diffusion_forward(prep, x, t):
    B = x.shape[0]

    # TODO(synk): embedding gather + im2col patch extraction + the 8 KB conv2_t
    # relayout stay in plain JAX (pure data movement); all FLOPs are in-kernel.
    emb = prep["emb"][t]                                          # (B, 576)

    # conv1 im2col grouped by 2x2 pool quadrant, padded to a lane multiple.
    x2d = x[:, 0]                                                 # (B, 28, 28)
    cols = jnp.stack([x2d[:, ky:ky + 24, kx:kx + 24]
                      for ky in range(5) for kx in range(5)], axis=-1)
    cg = cols.reshape(B, 12, 2, 12, 2, 25)                        # b,i,dy,j,dx,tap
    p1c = jnp.transpose(cg, (2, 4, 5, 0, 1, 3)).reshape(4, 25, B * 144)
    t1c = jnp.transpose(emb.reshape(B, 12, 2, 12, 2),
                        (2, 4, 0, 1, 3)).reshape(4, B * 144)
    wq = B * 144
    wqp = -(-wq // 128) * 128                                     # lane-aligned
    pad = wqp - wq
    p1 = jnp.transpose(jnp.pad(p1c, ((0, 0), (0, 0), (0, pad))),
                       (1, 0, 2)).reshape(25, 4 * wqp)
    t1 = jnp.pad(t1c, ((0, 0), (0, pad))).reshape(1, 4 * wqp)

    h1p, tq, g1, g2, g3 = pl.pallas_call(
        _stage1_kernel,
        out_shape=(jax.ShapeDtypeStruct((6, wqp), jnp.float32),
                   jax.ShapeDtypeStruct((B, 1024), jnp.float32),
                   jax.ShapeDtypeStruct((B, 256), jnp.float32),
                   jax.ShapeDtypeStruct((B, 128), jnp.float32),
                   jax.ShapeDtypeStruct((B, 784), jnp.float32)),
        in_specs=[VMEM] * 15,
        out_specs=(VMEM,) * 5,
        compiler_params=pltpu.CompilerParams(
            vmem_limit_bytes=32 * 1024 * 1024),
    )(p1, t1, prep["w1m"], prep["b1c"], emb,
      prep["wt1_cat"], prep["bt1_cat"],
      prep["c2t_w2"], prep["c2t_b2"], prep["f1t_w2"], prep["f1t_b2"],
      prep["f3t_w2"], prep["f3t_b2"], prep["f2t_w2"], prep["f2t_b2"])

    # conv2 im2col (rows ordered (quadrant, pooled-pos, batch)) + conv2_t
    # relayout into the SAME row order so the in-kernel add is one full op.
    h1 = h1p[:, :B * 144].reshape(6, B, 12, 12)
    win = jnp.stack([h1[:, :, ky:ky + 8, kx:kx + 8]
                     for ky in range(5) for kx in range(5)], axis=-1)
    wq2 = win.reshape(6, B, 4, 2, 4, 2, 25)                       # ci,b,i,dy,j,dx,kk
    p2 = jnp.transpose(wq2, (3, 5, 2, 4, 1, 0, 6)).reshape(64 * B, 150)
    p2 = p2.astype(jnp.bfloat16)
    tq6 = tq.reshape(B, 16, 4, 2, 4, 2)                           # b,c,i,dy,j,dx
    tqa = jnp.transpose(tq6, (3, 5, 2, 4, 0, 1)).reshape(64 * B, 16)

    operands = (p2, tqa, prep["w2m"], prep["b2r"], g1, g2, g3,
                prep["fc1_w"], prep["fc1_b"], prep["fc2_w"], prep["fc2_b"],
                prep["fc3_w"], prep["fc3_b"])
    out = pl.pallas_call(
        _stage2_kernel,
        out_shape=jax.ShapeDtypeStruct((B, 784), jnp.float32),
        in_specs=[VMEM] * len(operands),
        out_specs=VMEM,
        scratch_shapes=[pltpu.VMEM((B, 256), jnp.float32)],
        compiler_params=pltpu.CompilerParams(
            vmem_limit_bytes=32 * 1024 * 1024),
    )(*operands)

    return out.reshape(B, 1, 28, 28)


# ----------------------------------------------------------------------------
# Pure-JAX reference (PyTorch semantics, f32 HIGHEST) for a correctness check
# ----------------------------------------------------------------------------
def _mlp_ref(e, w1, b1, w2, b2):
    hp = jax.lax.Precision.HIGHEST
    h = jnp.tanh(jnp.dot(e, w1.T, precision=hp) + b1)
    return jnp.dot(h, w2.T, precision=hp) + b2


def reference_forward(params, x, t):
    B = x.shape[0]
    hp = jax.lax.Precision.HIGHEST
    dn = ("NCHW", "OIHW", "NCHW")
    emb = params["emb"][t]
    timg = emb.reshape(B, 1, 24, 24)
    y = jax.lax.conv_general_dilated(x, params["conv1_w"], (1, 1), "VALID",
                                     dimension_numbers=dn, precision=hp)
    y = jnp.tanh(y + params["conv1_b"].reshape(1, 6, 1, 1) + timg)
    y = y.reshape(B, 6, 12, 2, 12, 2).max(axis=(3, 5))
    c2t = _mlp_ref(emb, params["conv2_t_w1"], params["conv2_t_b1"],
                   params["conv2_t_w2"], params["conv2_t_b2"]).reshape(B, 16, 8, 8)
    y = jax.lax.conv_general_dilated(y, params["conv2_w"], (1, 1), "VALID",
                                     dimension_numbers=dn, precision=hp)
    y = jnp.tanh(y + params["conv2_b"].reshape(1, 16, 1, 1) + c2t)
    y = y.reshape(B, 16, 4, 2, 4, 2).max(axis=(3, 5))
    xf = y.reshape(B, 256)
    g1 = _mlp_ref(emb, params["fc1_t_w1"], params["fc1_t_b1"],
                  params["fc1_t_w2"], params["fc1_t_b2"])
    x1 = jax.nn.sigmoid(jnp.dot(xf, params["fc1_w"].T, precision=hp)
                        + params["fc1_b"] + g1)
    g2 = _mlp_ref(emb, params["fc2_t_w1"], params["fc2_t_b1"],
                  params["fc2_t_w2"], params["fc2_t_b2"])
    x2 = jax.nn.sigmoid(jnp.dot(x1, params["fc2_w"].T, precision=hp)
                        + params["fc2_b"] + g2)
    g3 = _mlp_ref(emb, params["fc3_t_w1"], params["fc3_t_b1"],
                  params["fc3_t_w2"], params["fc3_t_b2"])
    x3 = jax.nn.sigmoid(jnp.dot(x2, params["fc3_w"].T, precision=hp)
                        + params["fc3_b"] + g3)
    return x3.reshape(B, 1, 28, 28)


if __name__ == "__main__":
    key = jax.random.PRNGKey(0)
    kp, kx, kt = jax.random.split(key, 3)
    params = init_params(kp)
    prep = prepare_params(params)          # one-time, outside the jitted forward
    x = jax.random.normal(kx, (2, 1, 28, 28), dtype=jnp.float32)
    t = jax.random.randint(kt, (2,), 0, 1001, dtype=jnp.int32)

    fwd = jax.jit(diffusion_forward)
    out = fwd(prep, x, t)
    jax.block_until_ready(out)

    assert out.shape == (2, 1, 28, 28) and out.dtype == jnp.float32

    ref = reference_forward(params, x, t)
    err = float(jnp.max(jnp.abs(out - ref)))
    assert err < 5e-2, f"max abs diff vs reference too large: {err}"

    print("KERNEL_OK")
</pallas_src>

<mosaic_0001>
module attributes {stable_mosaic.version = 11 : i64} {
  func.func @_stage1_kernel(%arg0: memref<25x1536xf32, #tpu.memory_space<vmem>>, %arg1: memref<1x1536xf32, #tpu.memory_space<vmem>>, %arg2: memref<6x25xf32, #tpu.memory_space<vmem>>, %arg3: memref<6x1xf32, #tpu.memory_space<vmem>>, %arg4: memref<2x576xf32, #tpu.memory_space<vmem>>, %arg5: memref<576x2148xbf16, #tpu.memory_space<vmem>>, %arg6: memref<1x2148xf32, #tpu.memory_space<vmem>>, %arg7: memref<1024x1024xbf16, #tpu.memory_space<vmem>>, %arg8: memref<1x1024xf32, #tpu.memory_space<vmem>>, %arg9: memref<256x256xbf16, #tpu.memory_space<vmem>>, %arg10: memref<1x256xf32, #tpu.memory_space<vmem>>, %arg11: memref<784x784xbf16, #tpu.memory_space<vmem>>, %arg12: memref<1x784xf32, #tpu.memory_space<vmem>>, %arg13: memref<84x128xbf16, #tpu.memory_space<vmem>>, %arg14: memref<1x128xf32, #tpu.memory_space<vmem>>, %arg15: memref<6x384xf32, #tpu.memory_space<vmem>>, %arg16: memref<2x1024xf32, #tpu.memory_space<vmem>>, %arg17: memref<2x256xf32, #tpu.memory_space<vmem>>, %arg18: memref<2x128xf32, #tpu.memory_space<vmem>>, %arg19: memref<2x784xf32, #tpu.memory_space<vmem>>) attributes {dimension_semantics = [], scalar_prefetch = 0 : i64, scratch_operands = 0 : i64, tpu.core_type = #tpu.core_type<tc>} {
    %c0 = arith.constant 0 : index
    %c0_0 = arith.constant 0 : index
    %0 = vector.load %arg2[%c0, %c0_0] : memref<6x25xf32, #tpu.memory_space<vmem>>, vector<6x25xf32>
    %c0_1 = arith.constant 0 : index
    %c0_2 = arith.constant 0 : index
    %1 = vector.load %arg0[%c0_1, %c0_2] : memref<25x1536xf32, #tpu.memory_space<vmem>>, vector<25x1536xf32>
    %cst = arith.constant dense<0.000000e+00> : vector<6x1536xf32>
    %2 = tpu.matmul %0, %1, %cst {dimension_numbers = #tpu.dot_dimension_numbers<[1], [0], [0], [1], [0, 0, 1, 1], [], []>} : vector<6x25xf32>, vector<25x1536xf32>, vector<6x1536xf32> -> vector<6x1536xf32>
    %c0_3 = arith.constant 0 : index
    %c0_4 = arith.constant 0 : index
    %3 = vector.load %arg3[%c0_3, %c0_4] : memref<6x1xf32, #tpu.memory_space<vmem>>, vector<6x1xf32>
    %4 = vector.broadcast %3 : vector<6x1xf32> to vector<6x1536xf32>
    %5 = arith.addf %2, %4 : vector<6x1536xf32>
    %c0_5 = arith.constant 0 : index
    %c0_6 = arith.constant 0 : index
    %6 = vector.load %arg1[%c0_5, %c0_6] : memref<1x1536xf32, #tpu.memory_space<vmem>>, vector<1x1536xf32>
    %7 = vector.broadcast %6 : vector<1x1536xf32> to vector<6x1536xf32>
    %8 = arith.addf %5, %7 : vector<6x1536xf32>
    %9 = math.tanh %8 : vector<6x1536xf32>
    %10 = vector.extract_strided_slice %9 {offsets = [0, 0], sizes = [6, 384], strides = [1, 1]} : vector<6x1536xf32> to vector<6x384xf32>
    %11 = vector.extract_strided_slice %9 {offsets = [0, 384], sizes = [6, 384], strides = [1, 1]} : vector<6x1536xf32> to vector<6x384xf32>
    %12 = arith.maximumf %10, %11 : vector<6x384xf32>
    %13 = vector.extract_strided_slice %9 {offsets = [0, 768], sizes = [6, 384], strides = [1, 1]} : vector<6x1536xf32> to vector<6x384xf32>
    %14 = vector.extract_strided_slice %9 {offsets = [0, 1152], sizes = [6, 384], strides = [1, 1]} : vector<6x1536xf32> to vector<6x384xf32>
    %15 = arith.maximumf %13, %14 : vector<6x384xf32>
    %16 = arith.maximumf %12, %15 : vector<6x384xf32>
    %c0_7 = arith.constant 0 : index
    %c0_8 = arith.constant 0 : index
    %17 = vector.load %arg15[%c0_7, %c0_8] : memref<6x384xf32, #tpu.memory_space<vmem>>, vector<6x384xf32>
    tpu.vector_store %arg15[%c0_7, %c0_8], %16 {strides = array<i32>} : memref<6x384xf32, #tpu.memory_space<vmem>>, vector<6x384xf32>,
    %c0_9 = arith.constant 0 : index
    %c0_10 = arith.constant 0 : index
    %18 = vector.load %arg4[%c0_9, %c0_10] : memref<2x576xf32, #tpu.memory_space<vmem>>, vector<2x576xf32>
    %19 = arith.truncf %18 : vector<2x576xf32> to vector<2x576xbf16>
    %c0_11 = arith.constant 0 : index
    %c0_12 = arith.constant 0 : index
    %20 = vector.load %arg5[%c0_11, %c0_12] : memref<576x2148xbf16, #tpu.memory_space<vmem>>, vector<576x2148xbf16>
    %cst_13 = arith.constant dense<0.000000e+00> : vector<2x2148xf32>
    %21 = tpu.matmul %19, %20, %cst_13 {dimension_numbers = #tpu.dot_dimension_numbers<[1], [0], [0], [1], [0, 0, 1, 1], [], []>} : vector<2x576xbf16>, vector<576x2148xbf16>, vector<2x2148xf32> -> vector<2x2148xf32>
    %c0_14 = arith.constant 0 : index
    %c0_15 = arith.constant 0 : index
    %22 = vector.load %arg6[%c0_14, %c0_15] : memref<1x2148xf32, #tpu.memory_space<vmem>>, vector<1x2148xf32>
    %23 = vector.broadcast %22 : vector<1x2148xf32> to vector<2x2148xf32>
    %24 = arith.addf %21, %23 : vector<2x2148xf32>
    %25 = math.tanh %24 : vector<2x2148xf32>
    %26 = vector.extract_strided_slice %25 {offsets = [0, 0], sizes = [2, 1024], strides = [1, 1]} : vector<2x2148xf32> to vector<2x1024xf32>
    %27 = arith.truncf %26 : vector<2x1024xf32> to vector<2x1024xbf16>
    %28 = vector.extract_strided_slice %25 {offsets = [0, 1024], sizes = [2, 256], strides = [1, 1]} : vector<2x2148xf32> to vector<2x256xf32>
    %29 = arith.truncf %28 : vector<2x256xf32> to vector<2x256xbf16>
    %30 = vector.extract_strided_slice %25 {offsets = [0, 1280], sizes = [2, 784], strides = [1, 1]} : vector<2x2148xf32> to vector<2x784xf32>
    %31 = arith.truncf %30 : vector<2x784xf32> to vector<2x784xbf16>
    %32 = vector.extract_strided_slice %25 {offsets = [0, 2064], sizes = [2, 84], strides = [1, 1]} : vector<2x2148xf32> to vector<2x84xf32>
    %33 = arith.truncf %32 : vector<2x84xf32> to vector<2x84xbf16>
    %c0_16 = arith.constant 0 : index
    %c0_17 = arith.constant 0 : index
    %34 = vector.load %arg7[%c0_16, %c0_17] : memref<1024x1024xbf16, #tpu.memory_space<vmem>>, vector<1024x1024xbf16>
    %cst_18 = arith.constant dense<0.000000e+00> : vector<2x1024xf32>
    %35 = tpu.matmul %27, %34, %cst_18 {dimension_numbers = #tpu.dot_dimension_numbers<[1], [0], [0], [1], [0, 0, 1, 1], [], []>} : vector<2x1024xbf16>, vector<1024x1024xbf16>, vector<2x1024xf32> -> vector<2x1024xf32>
    %c0_19 = arith.constant 0 : index
    %c0_20 = arith.constant 0 : index
    %36 = vector.load %arg8[%c0_19, %c0_20] : memref<1x1024xf32, #tpu.memory_space<vmem>>, vector<1x1024xf32>
    %37 = vector.broadcast %36 : vector<1x1024xf32> to vector<2x1024xf32>
    %38 = arith.addf %35, %37 : vector<2x1024xf32>
    %c0_21 = arith.constant 0 : index
    %c0_22 = arith.constant 0 : index
    %39 = vector.load %arg16[%c0_21, %c0_22] : memref<2x1024xf32, #tpu.memory_space<vmem>>, vector<2x1024xf32>
    tpu.vector_store %arg16[%c0_21, %c0_22], %38 {strides = array<i32>} : memref<2x1024xf32, #tpu.memory_space<vmem>>, vector<2x1024xf32>,
    %c0_23 = arith.constant 0 : index
    %c0_24 = arith.constant 0 : index
    %40 = vector.load %arg9[%c0_23, %c0_24] : memref<256x256xbf16, #tpu.memory_space<vmem>>, vector<256x256xbf16>
    %cst_25 = arith.constant dense<0.000000e+00> : vector<2x256xf32>
    %41 = tpu.matmul %29, %40, %cst_25 {dimension_numbers = #tpu.dot_dimension_numbers<[1], [0], [0], [1], [0, 0, 1, 1], [], []>} : vector<2x256xbf16>, vector<256x256xbf16>, vector<2x256xf32> -> vector<2x256xf32>
    %c0_26 = arith.constant 0 : index
    %c0_27 = arith.constant 0 : index
    %42 = vector.load %arg10[%c0_26, %c0_27] : memref<1x256xf32, #tpu.memory_space<vmem>>, vector<1x256xf32>
    %43 = vector.broadcast %42 : vector<1x256xf32> to vector<2x256xf32>
    %44 = arith.addf %41, %43 : vector<2x256xf32>
    %c0_28 = arith.constant 0 : index
    %c0_29 = arith.constant 0 : index
    %45 = vector.load %arg17[%c0_28, %c0_29] : memref<2x256xf32, #tpu.memory_space<vmem>>, vector<2x256xf32>
    tpu.vector_store %arg17[%c0_28, %c0_29], %44 {strides = array<i32>} : memref<2x256xf32, #tpu.memory_space<vmem>>, vector<2x256xf32>,
    %c0_30 = arith.constant 0 : index
    %c0_31 = arith.constant 0 : index
    %46 = vector.load %arg11[%c0_30, %c0_31] : memref<784x784xbf16, #tpu.memory_space<vmem>>, vector<784x784xbf16>
    %cst_32 = arith.constant dense<0.000000e+00> : vector<2x784xf32>
    %47 = tpu.matmul %31, %46, %cst_32 {dimension_numbers = #tpu.dot_dimension_numbers<[1], [0], [0], [1], [0, 0, 1, 1], [], []>} : vector<2x784xbf16>, vector<784x784xbf16>, vector<2x784xf32> -> vector<2x784xf32>
    %c0_33 = arith.constant 0 : index
    %c0_34 = arith.constant 0 : index
    %48 = vector.load %arg12[%c0_33, %c0_34] : memref<1x784xf32, #tpu.memory_space<vmem>>, vector<1x784xf32>
    %49 = vector.broadcast %48 : vector<1x784xf32> to vector<2x784xf32>
    %50 = arith.addf %47, %49 : vector<2x784xf32>
    %c0_35 = arith.constant 0 : index
    %c0_36 = arith.constant 0 : index
    %51 = vector.load %arg19[%c0_35, %c0_36] : memref<2x784xf32, #tpu.memory_space<vmem>>, vector<2x784xf32>
    tpu.vector_store %arg19[%c0_35, %c0_36], %50 {strides = array<i32>} : memref<2x784xf32, #tpu.memory_space<vmem>>, vector<2x784xf32>,
    %c0_37 = arith.constant 0 : index
    %c0_38 = arith.constant 0 : index
    %52 = vector.load %arg13[%c0_37, %c0_38] : memref<84x128xbf16, #tpu.memory_space<vmem>>, vector<84x128xbf16>
    %cst_39 = arith.constant dense<0.000000e+00> : vector<2x128xf32>
    %53 = tpu.matmul %33, %52, %cst_39 {dimension_numbers = #tpu.dot_dimension_numbers<[1], [0], [0], [1], [0, 0, 1, 1], [], []>} : vector<2x84xbf16>, vector<84x128xbf16>, vector<2x128xf32> -> vector<2x128xf32>
    %c0_40 = arith.constant 0 : index
    %c0_41 = arith.constant 0 : index
    %54 = vector.load %arg14[%c0_40, %c0_41] : memref<1x128xf32, #tpu.memory_space<vmem>>, vector<1x128xf32>
    %55 = vector.broadcast %54 : vector<1x128xf32> to vector<2x128xf32>
    %56 = arith.addf %53, %55 : vector<2x128xf32>
    %c0_42 = arith.constant 0 : index
    %c0_43 = arith.constant 0 : index
    %57 = vector.load %arg18[%c0_42, %c0_43] : memref<2x128xf32, #tpu.memory_space<vmem>>, vector<2x128xf32>
    tpu.vector_store %arg18[%c0_42, %c0_43], %56 {strides = array<i32>} : memref<2x128xf32, #tpu.memory_space<vmem>>, vector<2x128xf32>,
    return
  }
}

module attributes {stable_mosaic.version = 11 : i64} {
  func.func @_stage2_kernel(%arg0: memref<128x150xbf16, #tpu.memory_space<vmem>>, %arg1: memref<128x16xf32, #tpu.memory_space<vmem>>, %arg2: memref<150x16xbf16, #tpu.memory_space<vmem>>, %arg3: memref<1x16xf32, #tpu.memory_space<vmem>>, %arg4: memref<2x256xf32, #tpu.memory_space<vmem>>, %arg5: memref<2x128xf32, #tpu.memory_space<vmem>>, %arg6: memref<2x784xf32, #tpu.memory_space<vmem>>, %arg7: memref<256x256xbf16, #tpu.memory_space<vmem>>, %arg8: memref<1x256xf32, #tpu.memory_space<vmem>>, %arg9: memref<256x128xbf16, #tpu.memory_space<vmem>>, %arg10: memref<1x128xf32, #tpu.memory_space<vmem>>, %arg11: memref<128x784xbf16, #tpu.memory_space<vmem>>, %arg12: memref<1x784xf32, #tpu.memory_space<vmem>>, %arg13: memref<2x784xf32, #tpu.memory_space<vmem>>, %arg14: memref<2x256xf32, #tpu.memory_space<vmem>>) attributes {dimension_semantics = [], scalar_prefetch = 0 : i64, scratch_operands = 1 : i64, tpu.core_type = #tpu.core_type<tc>} {
    %c0 = arith.constant 0 : index
    %c0_0 = arith.constant 0 : index
    %0 = vector.load %arg0[%c0, %c0_0] : memref<128x150xbf16, #tpu.memory_space<vmem>>, vector<128x150xbf16>
    %c0_1 = arith.constant 0 : index
    %c0_2 = arith.constant 0 : index
    %1 = vector.load %arg2[%c0_1, %c0_2] : memref<150x16xbf16, #tpu.memory_space<vmem>>, vector<150x16xbf16>
    %cst = arith.constant dense<0.000000e+00> : vector<128x16xf32>
    %2 = tpu.matmul %0, %1, %cst {dimension_numbers = #tpu.dot_dimension_numbers<[1], [0], [0], [1], [0, 0, 1, 1], [], []>} : vector<128x150xbf16>, vector<150x16xbf16>, vector<128x16xf32> -> vector<128x16xf32>
    %c0_3 = arith.constant 0 : index
    %c0_4 = arith.constant 0 : index
    %3 = vector.load %arg3[%c0_3, %c0_4] : memref<1x16xf32, #tpu.memory_space<vmem>>, vector<1x16xf32>
    %4 = vector.broadcast %3 : vector<1x16xf32> to vector<128x16xf32>
    %5 = arith.addf %2, %4 : vector<128x16xf32>
    %c0_5 = arith.constant 0 : index
    %c0_6 = arith.constant 0 : index
    %6 = vector.load %arg1[%c0_5, %c0_6] : memref<128x16xf32, #tpu.memory_space<vmem>>, vector<128x16xf32>
    %7 = arith.addf %5, %6 : vector<128x16xf32>
    %8 = math.tanh %7 : vector<128x16xf32>
    %9 = vector.extract_strided_slice %8 {offsets = [0, 0], sizes = [32, 16], strides = [1, 1]} : vector<128x16xf32> to vector<32x16xf32>
    %10 = vector.extract_strided_slice %8 {offsets = [32, 0], sizes = [32, 16], strides = [1, 1]} : vector<128x16xf32> to vector<32x16xf32>
    %11 = arith.maximumf %9, %10 : vector<32x16xf32>
    %12 = vector.extract_strided_slice %8 {offsets = [64, 0], sizes = [32, 16], strides = [1, 1]} : vector<128x16xf32> to vector<32x16xf32>
    %13 = vector.extract_strided_slice %8 {offsets = [96, 0], sizes = [32, 16], strides = [1, 1]} : vector<128x16xf32> to vector<32x16xf32>
    %14 = arith.maximumf %12, %13 : vector<32x16xf32>
    %15 = arith.maximumf %11, %14 : vector<32x16xf32>
    %16 = vector.extract_strided_slice %15 {offsets = [0, 0], sizes = [2, 16], strides = [1, 1]} : vector<32x16xf32> to vector<2x16xf32>
    %c0_7 = arith.constant 0 : index
    %c0_8 = arith.constant 0 : index
    %17 = vector.load %arg14[%c0_7, %c0_8] : memref<2x256xf32, #tpu.memory_space<vmem>>, vector<2x16xf32>
    tpu.vector_store %arg14[%c0_7, %c0_8], %16 {strides = array<i32>} : memref<2x256xf32, #tpu.memory_space<vmem>>, vector<2x16xf32>,
    %18 = vector.extract_strided_slice %15 {offsets = [2, 0], sizes = [2, 16], strides = [1, 1]} : vector<32x16xf32> to vector<2x16xf32>
    %c0_9 = arith.constant 0 : index
    %c16 = arith.constant 16 : index
    %19 = vector.load %arg14[%c0_9, %c16] : memref<2x256xf32, #tpu.memory_space<vmem>>, vector<2x16xf32>
    tpu.vector_store %arg14[%c0_9, %c16], %18 {strides = array<i32>} : memref<2x256xf32, #tpu.memory_space<vmem>>, vector<2x16xf32>,
    %20 = vector.extract_strided_slice %15 {offsets = [4, 0], sizes = [2, 16], strides = [1, 1]} : vector<32x16xf32> to vector<2x16xf32>
    %c0_10 = arith.constant 0 : index
    %c32 = arith.constant 32 : index
    %21 = vector.load %arg14[%c0_10, %c32] : memref<2x256xf32, #tpu.memory_space<vmem>>, vector<2x16xf32>
    tpu.vector_store %arg14[%c0_10, %c32], %20 {strides = array<i32>} : memref<2x256xf32, #tpu.memory_space<vmem>>, vector<2x16xf32>,
    %22 = vector.extract_strided_slice %15 {offsets = [6, 0], sizes = [2, 16], strides = [1, 1]} : vector<32x16xf32> to vector<2x16xf32>
    %c0_11 = arith.constant 0 : index
    %c48 = arith.constant 48 : index
    %23 = vector.load %arg14[%c0_11, %c48] : memref<2x256xf32, #tpu.memory_space<vmem>>, vector<2x16xf32>
    tpu.vector_store %arg14[%c0_11, %c48], %22 {strides = array<i32>} : memref<2x256xf32, #tpu.memory_space<vmem>>, vector<2x16xf32>,
    %24 = vector.extract_strided_slice %15 {offsets = [8, 0], sizes = [2, 16], strides = [1, 1]} : vector<32x16xf32> to vector<2x16xf32>
    %c0_12 = arith.constant 0 : index
    %c64 = arith.constant 64 : index
    %25 = vector.load %arg14[%c0_12, %c64] : memref<2x256xf32, #tpu.memory_space<vmem>>, vector<2x16xf32>
    tpu.vector_store %arg14[%c0_12, %c64], %24 {strides = array<i32>} : memref<2x256xf32, #tpu.memory_space<vmem>>, vector<2x16xf32>,
    %26 = vector.extract_strided_slice %15 {offsets = [10, 0], sizes = [2, 16], strides = [1, 1]} : vector<32x16xf32> to vector<2x16xf32>
    %c0_13 = arith.constant 0 : index
    %c80 = arith.constant 80 : index
    %27 = vector.load %arg14[%c0_13, %c80] : memref<2x256xf32, #tpu.memory_space<vmem>>, vector<2x16xf32>
    tpu.vector_store %arg14[%c0_13, %c80], %26 {strides = array<i32>} : memref<2x256xf32, #tpu.memory_space<vmem>>, vector<2x16xf32>,
    %28 = vector.extract_strided_slice %15 {offsets = [12, 0], sizes = [2, 16], strides = [1, 1]} : vector<32x16xf32> to vector<2x16xf32>
    %c0_14 = arith.constant 0 : index
    %c96 = arith.constant 96 : index
    %29 = vector.load %arg14[%c0_14, %c96] : memref<2x256xf32, #tpu.memory_space<vmem>>, vector<2x16xf32>
    tpu.vector_store %arg14[%c0_14, %c96], %28 {strides = array<i32>} : memref<2x256xf32, #tpu.memory_space<vmem>>, vector<2x16xf32>,
    %30 = vector.extract_strided_slice %15 {offsets = [14, 0], sizes = [2, 16], strides = [1, 1]} : vector<32x16xf32> to vector<2x16xf32>
    %c0_15 = arith.constant 0 : index
    %c112 = arith.constant 112 : index
    %31 = vector.load %arg14[%c0_15, %c112] : memref<2x256xf32, #tpu.memory_space<vmem>>, vector<2x16xf32>
    tpu.vector_store %arg14[%c0_15, %c112], %30 {strides = array<i32>} : memref<2x256xf32, #tpu.memory_space<vmem>>, vector<2x16xf32>,
    %32 = vector.extract_strided_slice %15 {offsets = [16, 0], sizes = [2, 16], strides = [1, 1]} : vector<32x16xf32> to vector<2x16xf32>
    %c0_16 = arith.constant 0 : index
    %c128 = arith.constant 128 : index
    %33 = vector.load %arg14[%c0_16, %c128] : memref<2x256xf32, #tpu.memory_space<vmem>>, vector<2x16xf32>
    tpu.vector_store %arg14[%c0_16, %c128], %32 {strides = array<i32>} : memref<2x256xf32, #tpu.memory_space<vmem>>, vector<2x16xf32>,
    %34 = vector.extract_strided_slice %15 {offsets = [18, 0], sizes = [2, 16], strides = [1, 1]} : vector<32x16xf32> to vector<2x16xf32>
    %c0_17 = arith.constant 0 : index
    %c144 = arith.constant 144 : index
    %35 = vector.load %arg14[%c0_17, %c144] : memref<2x256xf32, #tpu.memory_space<vmem>>, vector<2x16xf32>
    tpu.vector_store %arg14[%c0_17, %c144], %34 {strides = array<i32>} : memref<2x256xf32, #tpu.memory_space<vmem>>, vector<2x16xf32>,
    %36 = vector.extract_strided_slice %15 {offsets = [20, 0], sizes = [2, 16], strides = [1, 1]} : vector<32x16xf32> to vector<2x16xf32>
    %c0_18 = arith.constant 0 : index
    %c160 = arith.constant 160 : index
    %37 = vector.load %arg14[%c0_18, %c160] : memref<2x256xf32, #tpu.memory_space<vmem>>, vector<2x16xf32>
    tpu.vector_store %arg14[%c0_18, %c160], %36 {strides = array<i32>} : memref<2x256xf32, #tpu.memory_space<vmem>>, vector<2x16xf32>,
    %38 = vector.extract_strided_slice %15 {offsets = [22, 0], sizes = [2, 16], strides = [1, 1]} : vector<32x16xf32> to vector<2x16xf32>
    %c0_19 = arith.constant 0 : index
    %c176 = arith.constant 176 : index
    %39 = vector.load %arg14[%c0_19, %c176] : memref<2x256xf32, #tpu.memory_space<vmem>>, vector<2x16xf32>
    tpu.vector_store %arg14[%c0_19, %c176], %38 {strides = array<i32>} : memref<2x256xf32, #tpu.memory_space<vmem>>, vector<2x16xf32>,
    %40 = vector.extract_strided_slice %15 {offsets = [24, 0], sizes = [2, 16], strides = [1, 1]} : vector<32x16xf32> to vector<2x16xf32>
    %c0_20 = arith.constant 0 : index
    %c192 = arith.constant 192 : index
    %41 = vector.load %arg14[%c0_20, %c192] : memref<2x256xf32, #tpu.memory_space<vmem>>, vector<2x16xf32>
    tpu.vector_store %arg14[%c0_20, %c192], %40 {strides = array<i32>} : memref<2x256xf32, #tpu.memory_space<vmem>>, vector<2x16xf32>,
    %42 = vector.extract_strided_slice %15 {offsets = [26, 0], sizes = [2, 16], strides = [1, 1]} : vector<32x16xf32> to vector<2x16xf32>
    %c0_21 = arith.constant 0 : index
    %c208 = arith.constant 208 : index
    %43 = vector.load %arg14[%c0_21, %c208] : memref<2x256xf32, #tpu.memory_space<vmem>>, vector<2x16xf32>
    tpu.vector_store %arg14[%c0_21, %c208], %42 {strides = array<i32>} : memref<2x256xf32, #tpu.memory_space<vmem>>, vector<2x16xf32>,
    %44 = vector.extract_strided_slice %15 {offsets = [28, 0], sizes = [2, 16], strides = [1, 1]} : vector<32x16xf32> to vector<2x16xf32>
    %c0_22 = arith.constant 0 : index
    %c224 = arith.constant 224 : index
    %45 = vector.load %arg14[%c0_22, %c224] : memref<2x256xf32, #tpu.memory_space<vmem>>, vector<2x16xf32>
    tpu.vector_store %arg14[%c0_22, %c224], %44 {strides = array<i32>} : memref<2x256xf32, #tpu.memory_space<vmem>>, vector<2x16xf32>,
    %46 = vector.extract_strided_slice %15 {offsets = [30, 0], sizes = [2, 16], strides = [1, 1]} : vector<32x16xf32> to vector<2x16xf32>
    %c0_23 = arith.constant 0 : index
    %c240 = arith.constant 240 : index
    %47 = vector.load %arg14[%c0_23, %c240] : memref<2x256xf32, #tpu.memory_space<vmem>>, vector<2x16xf32>
    tpu.vector_store %arg14[%c0_23, %c240], %46 {strides = array<i32>} : memref<2x256xf32, #tpu.memory_space<vmem>>, vector<2x16xf32>,
    %c0_24 = arith.constant 0 : index
    %c0_25 = arith.constant 0 : index
    %48 = vector.load %arg14[%c0_24, %c0_25] : memref<2x256xf32, #tpu.memory_space<vmem>>, vector<2x256xf32>
    %49 = arith.truncf %48 : vector<2x256xf32> to vector<2x256xbf16>
    %c0_26 = arith.constant 0 : index
    %c0_27 = arith.constant 0 : index
    %50 = vector.load %arg7[%c0_26, %c0_27] : memref<256x256xbf16, #tpu.memory_space<vmem>>, vector<256x256xbf16>
    %cst_28 = arith.constant dense<0.000000e+00> : vector<2x256xf32>
    %51 = tpu.matmul %49, %50, %cst_28 {dimension_numbers = #tpu.dot_dimension_numbers<[1], [0], [0], [1], [0, 0, 1, 1], [], []>} : vector<2x256xbf16>, vector<256x256xbf16>, vector<2x256xf32> -> vector<2x256xf32>
    %c0_29 = arith.constant 0 : index
    %c0_30 = arith.constant 0 : index
    %52 = vector.load %arg8[%c0_29, %c0_30] : memref<1x256xf32, #tpu.memory_space<vmem>>, vector<1x256xf32>
    %53 = vector.broadcast %52 : vector<1x256xf32> to vector<2x256xf32>
    %54 = arith.addf %51, %53 : vector<2x256xf32>
    %c0_31 = arith.constant 0 : index
    %c0_32 = arith.constant 0 : index
    %55 = vector.load %arg4[%c0_31, %c0_32] : memref<2x256xf32, #tpu.memory_space<vmem>>, vector<2x256xf32>
    %56 = arith.addf %54, %55 : vector<2x256xf32>
    %57 = arith.negf %56 : vector<2x256xf32>
    %58 = math.exp %57 : vector<2x256xf32>
    %cst_33 = arith.constant 1.000000e+00 : f32
    %59 = vector.broadcast %cst_33 : f32 to vector<2x256xf32>
    %60 = arith.addf %59, %58 : vector<2x256xf32>
    %61 = arith.divf %59, %60 : vector<2x256xf32>
    %62 = arith.truncf %61 : vector<2x256xf32> to vector<2x256xbf16>
    %c0_34 = arith.constant 0 : index
    %c0_35 = arith.constant 0 : index
    %63 = vector.load %arg9[%c0_34, %c0_35] : memref<256x128xbf16, #tpu.memory_space<vmem>>, vector<256x128xbf16>
    %cst_36 = arith.constant dense<0.000000e+00> : vector<2x128xf32>
    %64 = tpu.matmul %62, %63, %cst_36 {dimension_numbers = #tpu.dot_dimension_numbers<[1], [0], [0], [1], [0, 0, 1, 1], [], []>} : vector<2x256xbf16>, vector<256x128xbf16>, vector<2x128xf32> -> vector<2x128xf32>
    %c0_37 = arith.constant 0 : index
    %c0_38 = arith.constant 0 : index
    %65 = vector.load %arg10[%c0_37, %c0_38] : memref<1x128xf32, #tpu.memory_space<vmem>>, vector<1x128xf32>
    %66 = vector.broadcast %65 : vector<1x128xf32> to vector<2x128xf32>
    %67 = arith.addf %64, %66 : vector<2x128xf32>
    %c0_39 = arith.constant 0 : index
    %c0_40 = arith.constant 0 : index
    %68 = vector.load %arg5[%c0_39, %c0_40] : memref<2x128xf32, #tpu.memory_space<vmem>>, vector<2x128xf32>
    %69 = arith.addf %67, %68 : vector<2x128xf32>
    %70 = arith.negf %69 : vector<2x128xf32>
    %71 = math.exp %70 : vector<2x128xf32>
    %cst_41 = arith.constant 1.000000e+00 : f32
    %72 = vector.broadcast %cst_41 : f32 to vector<2x128xf32>
    %73 = arith.addf %72, %71 : vector<2x128xf32>
    %74 = arith.divf %72, %73 : vector<2x128xf32>
    %75 = arith.truncf %74 : vector<2x128xf32> to vector<2x128xbf16>
    %c0_42 = arith.constant 0 : index
    %c0_43 = arith.constant 0 : index
    %76 = vector.load %arg11[%c0_42, %c0_43] : memref<128x784xbf16, #tpu.memory_space<vmem>>, vector<128x784xbf16>
    %cst_44 = arith.constant dense<0.000000e+00> : vector<2x784xf32>
    %77 = tpu.matmul %75, %76, %cst_44 {dimension_numbers = #tpu.dot_dimension_numbers<[1], [0], [0], [1], [0, 0, 1, 1], [], []>} : vector<2x128xbf16>, vector<128x784xbf16>, vector<2x784xf32> -> vector<2x784xf32>
    %c0_45 = arith.constant 0 : index
    %c0_46 = arith.constant 0 : index
    %78 = vector.load %arg12[%c0_45, %c0_46] : memref<1x784xf32, #tpu.memory_space<vmem>>, vector<1x784xf32>
    %79 = vector.broadcast %78 : vector<1x784xf32> to vector<2x784xf32>
    %80 = arith.addf %77, %79 : vector<2x784xf32>
    %c0_47 = arith.constant 0 : index
    %c0_48 = arith.constant 0 : index
    %81 = vector.load %arg6[%c0_47, %c0_48] : memref<2x784xf32, #tpu.memory_space<vmem>>, vector<2x784xf32>
    %82 = arith.addf %80, %81 : vector<2x784xf32>
    %83 = arith.negf %82 : vector<2x784xf32>
    %84 = math.exp %83 : vector<2x784xf32>
    %cst_49 = arith.constant 1.000000e+00 : f32
    %85 = vector.broadcast %cst_49 : f32 to vector<2x784xf32>
    %86 = arith.addf %85, %84 : vector<2x784xf32>
    %87 = arith.divf %85, %86 : vector<2x784xf32>
    %c0_50 = arith.constant 0 : index
    %c0_51 = arith.constant 0 : index
    %88 = vector.load %arg13[%c0_50, %c0_51] : memref<2x784xf32, #tpu.memory_space<vmem>>, vector<2x784xf32>
    tpu.vector_store %arg13[%c0_50, %c0_51], %87 {strides = array<i32>} : memref<2x784xf32, #tpu.memory_space<vmem>>, vector<2x784xf32>,
    return
  }
}

</mosaic_0001>

<llo_original>
// kernel: diffusion_forward.3
$region0: #{diffusion_forward.3}
  #allocation0 [shape = 'u32[]', space=smem, size = 0x4, offset = 0x4, fixed_abs, tag = 'smem constant byte address 0x4 - core index']
  #allocation1 [shape = 'u32[144,128]{1,0:T(1,128)}', space=vmem, size = 0x12000, scoped, tag = 'internal scratch']
  #allocation2 [shape = 'f32[2,256]{1,0:T(2,128)}', space=vmem, size = 0x800, scoped, tag = 'scratch operand']
  %s0 = inlined_call_operand.vmem [shape: bf16[128,150], index: 0, kind: input, shape index: {}]
  %s1 = inlined_call_operand.vmem [shape: f32[128,16], index: 1, kind: input, shape index: {}]
  %s2 = inlined_call_operand.vmem [shape: bf16[150,16], index: 2, kind: input, shape index: {}]
  %s3 = inlined_call_operand.vmem [shape: f32[1,16], index: 3, kind: input, shape index: {}]
  %s4 = inlined_call_operand.vmem [shape: f32[2,256], index: 4, kind: input, shape index: {}]
  %s5 = inlined_call_operand.vmem [shape: f32[2,128], index: 5, kind: input, shape index: {}]
  %s6 = inlined_call_operand.vmem [shape: f32[2,784], index: 6, kind: input, shape index: {}]
  %s7 = inlined_call_operand.vmem [shape: bf16[256,256], index: 7, kind: input, shape index: {}]
  %s8 = inlined_call_operand.vmem [shape: f32[1,256], index: 8, kind: input, shape index: {}]
  %s9 = inlined_call_operand.vmem [shape: bf16[256,128], index: 9, kind: input, shape index: {}]
  %s10 = inlined_call_operand.vmem [shape: f32[1,128], index: 10, kind: input, shape index: {}]
  %s11 = inlined_call_operand.vmem [shape: bf16[128,784], index: 11, kind: input, shape index: {}]
  %s12 = inlined_call_operand.vmem [shape: f32[1,784], index: 12, kind: input, shape index: {}]
  %s13 = inlined_call_operand.vmem [shape: f32[2,784], index: 13, kind: output, shape index: {}]
  %s14 = sld [smem:[#allocation0]]
  $region62: #{diffusion_forward.3} parent=0
    _
  %s16 = ssub.s32 1, %s14
  %s17 = scalar_select 0, %s16, %s14
  // Predicated region
  $region2: #{diffusion_forward.3} parent=0 // pred_check
    _
  $region3: #{diffusion_forward.3} parent=0 // pred_check_branch
    %19 = sbr.rel (0) target = $region5
  $region4: #{diffusion_forward.3} parent=0 // pred_region
    _
  $region5: #{diffusion_forward.3} parent=0 // pred_fallthru
    _
  // Predicated region
  $region6: #{diffusion_forward.3} parent=0 // pred_check
    _
  $region7: #{diffusion_forward.3} parent=0 // pred_check_branch
    %21 = sbr.rel (0) target = $region9
  $region8: #{diffusion_forward.3} parent=0 // pred_region
    _
  $region9: #{diffusion_forward.3} parent=0 // pred_fallthru
    _
  // Predicated region
  $region10: #{diffusion_forward.3} parent=0 // pred_check
    _
  $region11: #{diffusion_forward.3} parent=0 // pred_check_branch
    %23 = sbr.rel (0) target = $region13
  $region12: #{diffusion_forward.3} parent=0 // pred_region
    _
  $region13: #{diffusion_forward.3} parent=0 // pred_fallthru
    _
  // Predicated region
  $region14: #{diffusion_forward.3} parent=0 // pred_check
    _
  $region15: #{diffusion_forward.3} parent=0 // pred_check_branch
    %25 = sbr.rel (0) target = $region17
  $region16: #{diffusion_forward.3} parent=0 // pred_region
    _
  $region17: #{diffusion_forward.3} parent=0 // pred_fallthru
    _
  // Predicated region
  $region18: #{diffusion_forward.3} parent=0 // pred_check
    _
  $region19: #{diffusion_forward.3} parent=0 // pred_check_branch
    %27 = sbr.rel (0) target = $region21
  $region20: #{diffusion_forward.3} parent=0 // pred_region
    _
  $region21: #{diffusion_forward.3} parent=0 // pred_fallthru
    _
  // Predicated region
  $region22: #{diffusion_forward.3} parent=0 // pred_check
    _
  $region23: #{diffusion_forward.3} parent=0 // pred_check_branch
    %29 = sbr.rel (0) target = $region25
  $region24: #{diffusion_forward.3} parent=0 // pred_region
    _
  $region25: #{diffusion_forward.3} parent=0 // pred_fallthru
    _
  // Predicated region
  $region26: #{diffusion_forward.3} parent=0 // pred_check
    _
  $region27: #{diffusion_forward.3} parent=0 // pred_check_branch
    %31 = sbr.rel (0) target = $region29
  $region28: #{diffusion_forward.3} parent=0 // pred_region
    _
  $region29: #{diffusion_forward.3} parent=0 // pred_fallthru
    _
  // Predicated region
  $region30: #{diffusion_forward.3} parent=0 // pred_check
    _
  $region31: #{diffusion_forward.3} parent=0 // pred_check_branch
    %33 = sbr.rel (0) target = $region33
  $region32: #{diffusion_forward.3} parent=0 // pred_region
    _
  $region33: #{diffusion_forward.3} parent=0 // pred_fallthru
    _
  // Predicated region
  $region34: #{diffusion_forward.3} parent=0 // pred_check
    _
  $region35: #{diffusion_forward.3} parent=0 // pred_check_branch
    %35 = sbr.rel (0) target = $region37
  $region36: #{diffusion_forward.3} parent=0 // pred_region
    _
  $region37: #{diffusion_forward.3} parent=0 // pred_fallthru
    _
  // Predicated region
  $region38: #{diffusion_forward.3} parent=0 // pred_check
    _
  $region39: #{diffusion_forward.3} parent=0 // pred_check_branch
    %37 = sbr.rel (0) target = $region41
  $region40: #{diffusion_forward.3} parent=0 // pred_region
    _
  $region41: #{diffusion_forward.3} parent=0 // pred_fallthru
    _
  // Predicated region
  $region42: #{diffusion_forward.3} parent=0 // pred_check
    _
  $region43: #{diffusion_forward.3} parent=0 // pred_check_branch
    %39 = sbr.rel (0) target = $region45
  $region44: #{diffusion_forward.3} parent=0 // pred_region
    _
  $region45: #{diffusion_forward.3} parent=0 // pred_fallthru
    _
  // Predicated region
  $region46: #{diffusion_forward.3} parent=0 // pred_check
    _
  $region47: #{diffusion_forward.3} parent=0 // pred_check_branch
    %41 = sbr.rel (0) target = $region49
  $region48: #{diffusion_forward.3} parent=0 // pred_region
    _
  $region49: #{diffusion_forward.3} parent=0 // pred_fallthru
    _
  // Predicated region
  $region50: #{diffusion_forward.3} parent=0 // pred_check
    _
  $region51: #{diffusion_forward.3} parent=0 // pred_check_branch
    %43 = sbr.rel (0) target = $region53
  $region52: #{diffusion_forward.3} parent=0 // pred_region
    _
  $region53: #{diffusion_forward.3} parent=0 // pred_fallthru
    _
  %v45 = vld [vmem:[%s0] sm:$0xff]
  %v46 = vld [vmem:[%s0 + $0x8] sm:$0xff]
  %v47 = vld [vmem:[%s0 + $0x10] sm:$0xff]
  %v48 = vld [vmem:[%s0 + $0x18] sm:$0xff]
  %v49 = vld [vmem:[%s0 + $0x20] sm:$0xff]
  %v50 = vld [vmem:[%s0 + $0x28] sm:$0xff]
  %v51 = vld [vmem:[%s0 + $0x30] sm:$0xff]
  %v52 = vld [vmem:[%s0 + $0x38] sm:$0xff]
  %v53 = vld [vmem:[%s0 + $0x40] sm:$0xff]
  %v54 = vld [vmem:[%s0 + $0x48] sm:$0xff]
  %v55 = vld [vmem:[%s0 + $0x50] sm:$0xff]
  %v56 = vld [vmem:[%s0 + $0x58] sm:$0xff]
  %v57 = vld [vmem:[%s0 + $0x60] sm:$0xff]
  %v58 = vld [vmem:[%s0 + $0x68] sm:$0xff]
  %v59 = vld [vmem:[%s0 + $0x70] sm:$0xff]
  %v60 = vld [vmem:[%s0 + $0x78] sm:$0xff]
  %v61 = vld [vmem:[%s2] sm:$0xf]
  %v62 = vld [vmem:[%s2 + $0x4] sm:$0xf]
  %v63 = vld [vmem:[%s2 + $0x8] sm:$0xf]
  %v64 = vld [vmem:[%s2 + $0xc] sm:$0xf]
  %v65 = vld [vmem:[%s2 + $0x10] sm:$0xf]
  %v66 = vld [vmem:[%s2 + $0x14] sm:$0xf]
  %v67 = vld [vmem:[%s2 + $0x18] sm:$0xf]
  %v68 = vld [vmem:[%s2 + $0x1c] sm:$0xf]
  %v69 = vld [vmem:[%s2 + $0x20] sm:$0xf]
  %v70 = vld [vmem:[%s2 + $0x24] sm:$0xf]
  %v71 = vld [vmem:[%s2 + $0x28] sm:$0xf]
  %v72 = vld [vmem:[%s2 + $0x2c] sm:$0xf]
  %v73 = vld [vmem:[%s2 + $0x30] sm:$0xf]
  %v74 = vld [vmem:[%s2 + $0x34] sm:$0xf]
  %v75 = vld [vmem:[%s2 + $0x38] sm:$0xf]
  %v76 = vld [vmem:[%s2 + $0x3c] sm:$0xf]
  %v77 = vld [vmem:[%s2 + $0x40] sm:$0xf]
  %v78 = vld [vmem:[%s2 + $0x44] sm:$0xf]
  %v79 = vld [vmem:[%s2 + $0x48] sm:$0x7]
  %v80 = vld [vmem:[%s3] sm:$0x1]
  %v82 = vlaneseq
  %v83 = vshrl.u32 %v82, 7
  %v84 = vsub.s32 0, %v83
  %v85 = vrot.slane %v80, %v84
  %v103 = vunpack.c.l.b16 %v45
  %v104 = vunpack.c.h.b16 %v45
  %v105 = vunpack.c.l.b16 %v46
  %v106 = vunpack.c.h.b16 %v46
  %v107 = vunpack.c.l.b16 %v47
  %v108 = vunpack.c.h.b16 %v47
  %v109 = vunpack.c.l.b16 %v48
  %v110 = vunpack.c.h.b16 %v48
  %v111 = vunpack.c.l.b16 %v49
  %v112 = vunpack.c.h.b16 %v49
  %v113 = vunpack.c.l.b16 %v50
  %v114 = vunpack.c.h.b16 %v50
  %v115 = vunpack.c.l.b16 %v51
  %v116 = vunpack.c.h.b16 %v51
  %v117 = vunpack.c.l.b16 %v52
  %v118 = vunpack.c.h.b16 %v52
  %v119 = vunpack.c.l.b16 %v53
  %v120 = vunpack.c.h.b16 %v53
  %v121 = vunpack.c.l.b16 %v54
  %v122 = vunpack.c.h.b16 %v54
  %v123 = vunpack.c.l.b16 %v55
  %v124 = vunpack.c.h.b16 %v55
  %v125 = vunpack.c.l.b16 %v56
  %v126 = vunpack.c.h.b16 %v56
  %v127 = vunpack.c.l.b16 %v57
  %v128 = vunpack.c.h.b16 %v57
  %v129 = vunpack.c.l.b16 %v58
  %v130 = vunpack.c.h.b16 %v58
  %v131 = vunpack.c.l.b16 %v59
  %v132 = vunpack.c.h.b16 %v59
  %v133 = vunpack.c.l.b16 %v60
  %v134 = vunpack.c.h.b16 %v60
  %v135 = vpack.c.b16 %v105, %v103
  %v136 = vpack.c.b16 %v106, %v104
  %v137 = vpack.c.b16 %v109, %v107
  %v138 = vpack.c.b16 %v110, %v108
  %v139 = vpack.c.b16 %v113, %v111
  %v140 = vpack.c.b16 %v114, %v112
  %v141 = vpack.c.b16 %v117, %v115
  %v142 = vpack.c.b16 %v118, %v116
  %v143 = vpack.c.b16 %v121, %v119
  %v144 = vpack.c.b16 %v122, %v120
  %v145 = vpack.c.b16 %v125, %v123
  %v146 = vpack.c.b16 %v126, %v124
  %v147 = vpack.c.b16 %v129, %v127
  %v148 = vpack.c.b16 %v130, %v128
  %v149 = vpack.c.b16 %v133, %v131
  %v150 = vpack.c.b16 %v134, %v132
  %v178 = vunpack.c.l.b16 %v61
  %v179 = vunpack.c.l.b16 %v62
  %v180 = vunpack.c.l.b16 %v63
  %v181 = vunpack.c.l.b16 %v64
  %v182 = vunpack.c.l.b16 %v65
  %v183 = vunpack.c.l.b16 %v66
  %v184 = vunpack.c.l.b16 %v67
  %v185 = vunpack.c.l.b16 %v68
  %v186 = vunpack.c.l.b16 %v69
  %v187 = vunpack.c.l.b16 %v70
  %v188 = vunpack.c.l.b16 %v71
  %v189 = vunpack.c.l.b16 %v72
  %v190 = vunpack.c.l.b16 %v73
  %v191 = vunpack.c.l.b16 %v74
  %v192 = vunpack.c.l.b16 %v75
  %v193 = vunpack.c.l.b16 %v76
  %v194 = vunpack.c.l.b16 %v77
  %v195 = vunpack.c.l.b16 %v78
  %v196 = vunpack.c.l.b16 %v79
  %v197 = vpack.c.b16 %v179, %v178
  %v198 = vpack.c.b16 %v181, %v180
  %v199 = vpack.c.b16 %v183, %v182
  %v200 = vpack.c.b16 %v185, %v184
  %v201 = vpack.c.b16 %v187, %v186
  %v202 = vpack.c.b16 %v189, %v188
  %v203 = vpack.c.b16 %v191, %v190
  %v204 = vpack.c.b16 %v193, %v192
  %v205 = vpack.c.b16 %v195, %v194
  %v206 = vpack.c.b16 %v196, %v196
  %vm216 = vcmask 179200
  %v218 = vsel %vm216, %v136, 0
  %v221 = vsel %vm216, %v138, 0
  %v224 = vsel %vm216, %v140, 0
  %v227 = vsel %vm216, %v142, 0
  %v230 = vsel %vm216, %v144, 0
  %v233 = vsel %vm216, %v146, 0
  %v236 = vsel %vm216, %v148, 0
  %v239 = vsel %vm216, %v150, 0
  %vm241 = vcmask 1042432
  %v243 = vsel %vm241, %v206, 0
  %245 = vmatprep.subr.bf16.mxu0 0
  %246 = vmatpush1.bf16.msra.mxu0 %v204
  %247 = vmatprep.subr.bf16.mxu0 0
  %248 = vmatpush1.bf16.msra.mxu0 %v203
  %249 = vmatprep.subr.bf16.mxu0 0
  %250 = vmatpush1.bf16.msra.mxu0 %v202
  %251 = vmatprep.subr.bf16.mxu0 0
  %252 = vmatpush1.bf16.msra.mxu0 %v201
  %253 = vmatprep.subr.bf16.mxu0 0
  %254 = vmatpush1.bf16.msra.mxu0 %v200
  %255 = vmatprep.subr.bf16.mxu0 0
  %256 = vmatpush1.bf16.msra.mxu0 %v199
  %257 = vmatprep.subr.bf16.mxu0 0
  %258 = vmatpush1.bf16.msra.mxu0 %v198
  %259 = vmatprep.subr.bf16.mxu0 0
  %260 = vmatpush1.bf16.msra.mxu0 %v197
  %261 = vmatprep.subr.bf16.mxu0 0
  %262 = vmatpush2.bf16.msra.mxu0 0
  %263 = vmatprep.subr.bf16.mxu0 0
  %264 = vmatpush2.bf16.msra.mxu0 0
  %265 = vmatprep.subr.bf16.mxu0 0
  %266 = vmatpush2.bf16.msra.mxu0 0
  %267 = vmatprep.subr.bf16.mxu0 0
  %268 = vmatpush2.bf16.msra.mxu0 0
  %269 = vmatprep.subr.bf16.mxu0 0
  %270 = vmatpush2.bf16.msra.mxu0 0
  %271 = vmatprep.subr.bf16.mxu0 0
  %272 = vmatpush2.bf16.msra.mxu0 0
  %273 = vmatprep.subr.bf16.mxu0 0
  %274 = vmatpush2.bf16.msra.mxu0 %v243
  %275 = vmatprep.subr.bf16.mxu0 0
  %276 = vmatpush2.bf16.msra.mxu0 %v205
  %277 = vmatprep.mubr.bf16.mxu0 %v218
  %278 = vmatmul.mubr.bf16.gmra.mxu0 %v135
  %v279 = vpop.f32.mrf.mxu0
  %v280 = vadd.f32 %v85, %v279
  %v281 = vpop.f32.mrf.mxu0
  %v282 = vpop.f32.mrf.mxu0
  %v283 = vadd.f32 %v85, %v282
  %v284 = vpop.f32.mrf.mxu0
  %285 = vmatprep.mubr.bf16.mxu0 %v221
  %286 = vmatmul.mubr.bf16.gmra.mxu0 %v137
  %v287 = vpop.f32.mrf.mxu0
  %v288 = vadd.f32 %v85, %v287
  %v289 = vpop.f32.mrf.mxu0
  %v290 = vpop.f32.mrf.mxu0
  %v291 = vadd.f32 %v85, %v290
  %v292 = vpop.f32.mrf.mxu0
  %293 = vmatprep.mubr.bf16.mxu0 %v224
  %294 = vmatmul.mubr.bf16.gmra.mxu0 %v139
  %v295 = vpop.f32.mrf.mxu0
  %v296 = vadd.f32 %v85, %v295
  %v297 = vpop.f32.mrf.mxu0
  %v298 = vpop.f32.mrf.mxu0
  %v299 = vadd.f32 %v85, %v298
  %v300 = vpop.f32.mrf.mxu0
  %301 = vmatprep.mubr.bf16.mxu0 %v227
  %302 = vmatmul.mubr.bf16.gmra.mxu0 %v141
  %v303 = vpop.f32.mrf.mxu0
  %v304 = vadd.f32 %v85, %v303
  %v305 = vpop.f32.mrf.mxu0
  %v306 = vpop.f32.mrf.mxu0
  %v307 = vadd.f32 %v85, %v306
  %v308 = vpop.f32.mrf.mxu0
  %309 = vmatprep.mubr.bf16.mxu0 %v230
  %310 = vmatmul.mubr.bf16.gmra.mxu0 %v143
  %v311 = vpop.f32.mrf.mxu0
  %v312 = vadd.f32 %v85, %v311
  %v313 = vpop.f32.mrf.mxu0
  %v314 = vpop.f32.mrf.mxu0
  %v315 = vadd.f32 %v85, %v314
  %v316 = vpop.f32.mrf.mxu0
  %317 = vmatprep.mubr.bf16.mxu0 %v233
  %318 = vmatmul.mubr.bf16.gmra.mxu0 %v145
  %v319 = vpop.f32.mrf.mxu0
  %v320 = vadd.f32 %v85, %v319
  %v321 = vpop.f32.mrf.mxu0
  %v322 = vpop.f32.mrf.mxu0
  %v323 = vadd.f32 %v85, %v322
  %v324 = vpop.f32.mrf.mxu0
  %325 = vmatprep.mubr.bf16.mxu0 %v236
  %326 = vmatmul.mubr.bf16.gmra.mxu0 %v147
  %v327 = vpop.f32.mrf.mxu0
  %v328 = vadd.f32 %v85, %v327
  %v329 = vpop.f32.mrf.mxu0
  %v330 = vpop.f32.mrf.mxu0
  %v331 = vadd.f32 %v85, %v330
  %v332 = vpop.f32.mrf.mxu0
  %333 = vmatprep.mubr.bf16.mxu0 %v239
  %334 = vmatmul.mubr.bf16.gmra.mxu0 %v149
  %v335 = vpop.f32.mrf.mxu0
  %v336 = vadd.f32 %v85, %v335
  %v337 = vpop.f32.mrf.mxu0
  %v338 = vpop.f32.mrf.mxu0
  %v339 = vadd.f32 %v85, %v338
  %v340 = vpop.f32.mrf.mxu0
  %341 = vdwg.mxu0
  %v342 = vld [vmem:[%s1] sm:$0xff]
  %v343 = vld [vmem:[%s1 + $0x8] sm:$0xff]
  %v344 = vld [vmem:[%s1 + $0x10] sm:$0xff]
  %v345 = vld [vmem:[%s1 + $0x18] sm:$0xff]
  %v346 = vld [vmem:[%s1 + $0x20] sm:$0xff]
  %v347 = vld [vmem:[%s1 + $0x28] sm:$0xff]
  %v348 = vld [vmem:[%s1 + $0x30] sm:$0xff]
  %v349 = vld [vmem:[%s1 + $0x38] sm:$0xff]
  %v350 = vld [vmem:[%s1 + $0x40] sm:$0xff]
  %v351 = vld [vmem:[%s1 + $0x48] sm:$0xff]
  %v352 = vld [vmem:[%s1 + $0x50] sm:$0xff]
  %v353 = vld [vmem:[%s1 + $0x58] sm:$0xff]
  %v354 = vld [vmem:[%s1 + $0x60] sm:$0xff]
  %v355 = vld [vmem:[%s1 + $0x68] sm:$0xff]
  %v356 = vld [vmem:[%s1 + $0x70] sm:$0xff]
  %v357 = vld [vmem:[%s1 + $0x78] sm:$0xff]
  %v358 = vadd.f32 %v280, %v342
  %v359 = vadd.f32 %v283, %v343
  %v360 = vadd.f32 %v288, %v344
  %v361 = vadd.f32 %v291, %v345
  %v362 = vadd.f32 %v296, %v346
  %v363 = vadd.f32 %v299, %v347
  %v364 = vadd.f32 %v304, %v348
  %v365 = vadd.f32 %v307, %v349
  %v366 = vadd.f32 %v312, %v350
  %v367 = vadd.f32 %v315, %v351
  %v368 = vadd.f32 %v320, %v352
  %v369 = vadd.f32 %v323, %v353
  %v370 = vadd.f32 %v328, %v354
  %v371 = vadd.f32 %v331, %v355
  %v372 = vadd.f32 %v336, %v356
  %v373 = vadd.f32 %v339, %v357
  %v374 = vtanh.pop %v358
  %v375 = vtanh.pop %v359
  %v376 = vtanh.pop %v360
  %v377 = vtanh.pop %v361
  %v378 = vtanh.pop %v362
  %v379 = vtanh.pop %v363
  %v380 = vtanh.pop %v364
  %v381 = vtanh.pop %v365
  %v382 = vtanh.pop %v366
  %v383 = vtanh.pop %v367
  %v384 = vtanh.pop %v368
  %v385 = vtanh.pop %v369
  %v386 = vtanh.pop %v370
  %v387 = vtanh.pop %v371
  %v388 = vtanh.pop %v372
  %v389 = vtanh.pop %v373
  %v390 = vmax.f32 %v374, %v378
  %v391 = vmax.f32 %v375, %v379
  %v392 = vmax.f32 %v376, %v380
  %v393 = vmax.f32 %v377, %v381
  %v394 = vmax.f32 %v382, %v386
  %v395 = vmax.f32 %v383, %v387
  %v396 = vmax.f32 %v384, %v388
  %v397 = vmax.f32 %v385, %v389
  %v398 = vmax.f32 %v390, %v394
  %v399 = vmax.f32 %v391, %v395
  %v400 = vmax.f32 %v392, %v396
  %v401 = vmax.f32 %v393, %v397
  %vm402 = vcmask 123904
  %403 = vst.msk [vmem:[#allocation2] sm:$0x3] %vm402, %v398
  %v406 = vunpack.c.l.s4 1983009808
  %v407 = vunpack.c.0.s8 %v406
  %v408 = vlaneseq
  %v409 = vshrl.u32 %v408, 7
  %v410 = vsub.s32 %v407, %v409
  %v411 = vrot.slane %v398, %v410
  %v412 = vcombine.high %v411, %v411
  %413 = vrot.lane.b32.xlu0 %v412, 16
  %v414 = vpop.permute.xlu0 %413
  %vm416 = vcmask 255104
  %417 = vst.msk [vmem:[#allocation2] sm:$0x3] %vm416, %v414
  %v418 = vcombine.high %v398, %v398
  %v420 = vunpack.c.l.s4 1983009808
  %v421 = vunpack.c.0.s8 %v420
  %v422 = vlaneseq
  %v423 = vshrl.u32 %v422, 7
  %v424 = vsub.s32 %v421, %v423
  %v425 = vrot.slane %v418, %v424
  %426 = vrot.lane.b32.xlu0 %v425, 32
  %v427 = vpop.permute.xlu0 %426
  %vm429 = vcmask 386304
  %430 = vst.msk [vmem:[#allocation2] sm:$0x3] %vm429, %v427
  %v431 = vcombine.high %v425, %v425
  %432 = vrot.lane.b32.xlu0 %v431, 48
  %v433 = vpop.permute.xlu0 %432
  %vm435 = vcmask 517504
  %436 = vst.msk [vmem:[#allocation2] sm:$0x3] %vm435, %v433
  %v439 = vunpack.c.l.s4 1983009808
  %v440 = vunpack.c.0.s8 %v439
  %v441 = vlaneseq
  %v442 = vshrl.u32 %v441, 7
  %v443 = vsub.s32 %v440, %v442
  %v444 = vrot.slane %v399, %v443
  %445 = vrot.lane.b32.xlu0 %v444, 64
  %v446 = vpop.permute.xlu0 %445
  %vm448 = vcmask 648704
  %449 = vst.msk [vmem:[#allocation2] sm:$0x3] %vm448, %v446
  %v450 = vcombine.high %v444, %v444
  %451 = vrot.lane.b32.xlu0 %v450, 80
  %v452 = vpop.permute.xlu0 %451
  %vm454 = vcmask 779904
  %455 = vst.msk [vmem:[#allocation2] sm:$0x3] %vm454, %v452
  %v456 = vcombine.high %v399, %v399
  %v458 = vunpack.c.l.s4 1983009808
  %v459 = vunpack.c.0.s8 %v458
  %v460 = vlaneseq
  %v461 = vshrl.u32 %v460, 7
  %v462 = vsub.s32 %v459, %v461
  %v463 = vrot.slane %v456, %v462
  %464 = vrot.lane.b32.xlu0 %v463, 96
  %v465 = vpop.permute.xlu0 %464
  %vm467 = vcmask 911104
  %468 = vst.msk [vmem:[#allocation2] sm:$0x3] %vm467, %v465
  %v469 = vcombine.high %v463, %v463
  %470 = vrot.lane.b32.xlu0 %v469, 112
  %v471 = vpop.permute.xlu0 %470
  %vm473 = vcmask 1042304
  %474 = vst.msk [vmem:[#allocation2] sm:$0x3] %vm473, %v471
  %475 = vst.msk [vmem:[#allocation2 + $0x2] sm:$0x3] %vm402, %v400
  %v478 = vunpack.c.l.s4 1983009808
  %v479 = vunpack.c.0.s8 %v478
  %v480 = vlaneseq
  %v481 = vshrl.u32 %v480, 7
  %v482 = vsub.s32 %v479, %v481
  %v483 = vrot.slane %v400, %v482
  %v484 = vcombine.high %v483, %v483
  %485 = vrot.lane.b32.xlu0 %v484, 16
  %v486 = vpop.permute.xlu0 %485
  %488 = vst.msk [vmem:[#allocation2 + $0x2] sm:$0x3] %vm416, %v486
  %v489 = vcombine.high %v400, %v400
  %v491 = vunpack.c.l.s4 1983009808
  %v492 = vunpack.c.0.s8 %v491
  %v493 = vlaneseq
  %v494 = vshrl.u32 %v493, 7
  %v495 = vsub.s32 %v492, %v494
  %v496 = vrot.slane %v489, %v495
  %497 = vrot.lane.b32.xlu0 %v496, 32
  %v498 = vpop.permute.xlu0 %497
  %500 = vst.msk [vmem:[#allocation2 + $0x2] sm:$0x3] %vm429, %v498
  %v501 = vcombine.high %v496, %v496
  %502 = vrot.lane.b32.xlu0 %v501, 48
  %v503 = vpop.permute.xlu0 %502
  %505 = vst.msk [vmem:[#allocation2 + $0x2] sm:$0x3] %vm435, %v503
  %v508 = vunpack.c.l.s4 1983009808
  %v509 = vunpack.c.0.s8 %v508
  %v510 = vlaneseq
  %v511 = vshrl.u32 %v510, 7
  %v512 = vsub.s32 %v509, %v511
  %v513 = vrot.slane %v401, %v512
  %514 = vrot.lane.b32.xlu0 %v513, 64
  %v515 = vpop.permute.xlu0 %514
  %517 = vst.msk [vmem:[#allocation2 + $0x2] sm:$0x3] %vm448, %v515
  %v518 = vcombine.high %v513, %v513
  %519 = vrot.lane.b32.xlu0 %v518, 80
  %v520 = vpop.permute.xlu0 %519
  %522 = vst.msk [vmem:[#allocation2 + $0x2] sm:$0x3] %vm454, %v520
  %v523 = vcombine.high %v401, %v401
  %v525 = vunpack.c.l.s4 1983009808
  %v526 = vunpack.c.0.s8 %v525
  %v527 = vlaneseq
  %v528 = vshrl.u32 %v527, 7
  %v529 = vsub.s32 %v526, %v528
  %v530 = vrot.slane %v523, %v529
  %531 = vrot.lane.b32.xlu0 %v530, 96
  %v532 = vpop.permute.xlu0 %531
  %534 = vst.msk [vmem:[#allocation2 + $0x2] sm:$0x3] %vm467, %v532
  %v535 = vcombine.high %v530, %v530
  %536 = vrot.lane.b32.xlu0 %v535, 112
  %v537 = vpop.permute.xlu0 %536
  %539 = vst.msk [vmem:[#allocation2 + $0x2] sm:$0x3] %vm473, %v537
  %v540 = vld [vmem:[#allocation2] sm:$0xf]
  %v543 = vunpack.c.l.s4 1983009808
  %v544 = vunpack.c.0.s8 %v543
  %v545 = vlaneseq
  %v546 = vshrl.u32 %v545, 7
  %v547 = vsub.s32 %v544, %v546
  %v548 = vrot.slane %v540, %v547
  %v549 = vcombine.high %v548, %v548
  %v552 = vpack.c.bf16 %v548, %v548
  %v553 = vpack.c.bf16 %v549, %v549
  %v554 = vld [vmem:[%s7] sm:$0xff]
  %v555 = vld [vmem:[%s7 + $0x8] sm:$0xff]
  %v556 = vld [vmem:[%s7 + $0x10] sm:$0xff]
  %v557 = vld [vmem:[%s7 + $0x18] sm:$0xff]
  %v558 = vld [vmem:[%s7 + $0x20] sm:$0xff]
  %v559 = vld [vmem:[%s7 + $0x28] sm:$0xff]
  %v560 = vld [vmem:[%s7 + $0x30] sm:$0xff]
  %v561 = vld [vmem:[%s7 + $0x38] sm:$0xff]
  %v562 = vld [vmem:[%s7 + $0x40] sm:$0xff]
  %v563 = vld [vmem:[%s7 + $0x48] sm:$0xff]
  %v564 = vld [vmem:[%s7 + $0x50] sm:$0xff]
  %v565 = vld [vmem:[%s7 + $0x58] sm:$0xff]
  %v566 = vld [vmem:[%s7 + $0x60] sm:$0xff]
  %v567 = vld [vmem:[%s7 + $0x68] sm:$0xff]
  %v568 = vld [vmem:[%s7 + $0x70] sm:$0xff]
  %v569 = vld [vmem:[%s7 + $0x78] sm:$0xff]
  %v570 = vld [vmem:[%s7 + $0x80] sm:$0xff]
  %v571 = vld [vmem:[%s7 + $0x88] sm:$0xff]
  %v572 = vld [vmem:[%s7 + $0x90] sm:$0xff]
  %v573 = vld [vmem:[%s7 + $0x98] sm:$0xff]
  %v574 = vld [vmem:[%s7 + $0xa0] sm:$0xff]
  %v575 = vld [vmem:[%s7 + $0xa8] sm:$0xff]
  %v576 = vld [vmem:[%s7 + $0xb0] sm:$0xff]
  %v577 = vld [vmem:[%s7 + $0xb8] sm:$0xff]
  %v578 = vld [vmem:[%s7 + $0xc0] sm:$0xff]
  %v579 = vld [vmem:[%s7 + $0xc8] sm:$0xff]
  %v580 = vld [vmem:[%s7 + $0xd0] sm:$0xff]
  %v581 = vld [vmem:[%s7 + $0xd8] sm:$0xff]
  %v582 = vld [vmem:[%s7 + $0xe0] sm:$0xff]
  %v583 = vld [vmem:[%s7 + $0xe8] sm:$0xff]
  %v584 = vld [vmem:[%s7 + $0xf0] sm:$0xff]
  %v585 = vld [vmem:[%s7 + $0xf8] sm:$0xff]
  %v586 = vld [vmem:[%s8] sm:$0x3]
  %v588 = vlaneseq
  %v589 = vshrl.u32 %v588, 7
  %v590 = vsub.s32 0, %v589
  %v591 = vrot.slane %v586, %v590
  %v592 = vlaneseq
  %v593 = vshrl.u32 %v592, 7
  %v594 = vsub.s32 1, %v593
  %v595 = vrot.slane %v586, %v594
  %v630 = vunpack.c.l.b16 %v554
  %v631 = vunpack.c.h.b16 %v554
  %v632 = vunpack.c.l.b16 %v555
  %v633 = vunpack.c.h.b16 %v555
  %v634 = vunpack.c.l.b16 %v556
  %v635 = vunpack.c.h.b16 %v556
  %v636 = vunpack.c.l.b16 %v557
  %v637 = vunpack.c.h.b16 %v557
  %v638 = vunpack.c.l.b16 %v558
  %v639 = vunpack.c.h.b16 %v558
  %v640 = vunpack.c.l.b16 %v559
  %v641 = vunpack.c.h.b16 %v559
  %v642 = vunpack.c.l.b16 %v560
  %v643 = vunpack.c.h.b16 %v560
  %v644 = vunpack.c.l.b16 %v561
  %v645 = vunpack.c.h.b16 %v561
  %v646 = vunpack.c.l.b16 %v562
  %v647 = vunpack.c.h.b16 %v562
  %v648 = vunpack.c.l.b16 %v563
  %v649 = vunpack.c.h.b16 %v563
  %v650 = vunpack.c.l.b16 %v564
  %v651 = vunpack.c.h.b16 %v564
  %v652 = vunpack.c.l.b16 %v565
  %v653 = vunpack.c.h.b16 %v565
  %v654 = vunpack.c.l.b16 %v566
  %v655 = vunpack.c.h.b16 %v566
  %v656 = vunpack.c.l.b16 %v567
  %v657 = vunpack.c.h.b16 %v567
  %v658 = vunpack.c.l.b16 %v568
  %v659 = vunpack.c.h.b16 %v568
  %v660 = vunpack.c.l.b16 %v569
  %v661 = vunpack.c.h.b16 %v569
  %v662 = vunpack.c.l.b16 %v570
  %v663 = vunpack.c.h.b16 %v570
  %v664 = vunpack.c.l.b16 %v571
  %v665 = vunpack.c.h.b16 %v571
  %v666 = vunpack.c.l.b16 %v572
  %v667 = vunpack.c.h.b16 %v572
  %v668 = vunpack.c.l.b16 %v573
  %v669 = vunpack.c.h.b16 %v573
  %v670 = vunpack.c.l.b16 %v574
  %v671 = vunpack.c.h.b16 %v574
  %v672 = vunpack.c.l.b16 %v575
  %v673 = vunpack.c.h.b16 %v575
  %v674 = vunpack.c.l.b16 %v576
  %v675 = vunpack.c.h.b16 %v576
  %v676 = vunpack.c.l.b16 %v577
  %v677 = vunpack.c.h.b16 %v577
  %v678 = vunpack.c.l.b16 %v578
  %v679 = vunpack.c.h.b16 %v578
  %v680 = vunpack.c.l.b16 %v579
  %v681 = vunpack.c.h.b16 %v579
  %v682 = vunpack.c.l.b16 %v580
  %v683 = vunpack.c.h.b16 %v580
  %v684 = vunpack.c.l.b16 %v581
  %v685 = vunpack.c.h.b16 %v581
  %v686 = vunpack.c.l.b16 %v582
  %v687 = vunpack.c.h.b16 %v582
  %v688 = vunpack.c.l.b16 %v583
  %v689 = vunpack.c.h.b16 %v583
  %v690 = vunpack.c.l.b16 %v584
  %v691 = vunpack.c.h.b16 %v584
  %v692 = vunpack.c.l.b16 %v585
  %v693 = vunpack.c.h.b16 %v585
  %v694 = vpack.c.b16 %v632, %v630
  %v695 = vpack.c.b16 %v633, %v631
  %v696 = vpack.c.b16 %v636, %v634
  %v697 = vpack.c.b16 %v637, %v635
  %v698 = vpack.c.b16 %v640, %v638
  %v699 = vpack.c.b16 %v641, %v639
  %v700 = vpack.c.b16 %v644, %v642
  %v701 = vpack.c.b16 %v645, %v643
  %v702 = vpack.c.b16 %v648, %v646
  %v703 = vpack.c.b16 %v649, %v647
  %v704 = vpack.c.b16 %v652, %v650
  %v705 = vpack.c.b16 %v653, %v651
  %v706 = vpack.c.b16 %v656, %v654
  %v707 = vpack.c.b16 %v657, %v655
  %v708 = vpack.c.b16 %v660, %v658
  %v709 = vpack.c.b16 %v661, %v659
  %v710 = vpack.c.b16 %v664, %v662
  %v711 = vpack.c.b16 %v665, %v663
  %v712 = vpack.c.b16 %v668, %v666
  %v713 = vpack.c.b16 %v669, %v667
  %v714 = vpack.c.b16 %v672, %v670
  %v715 = vpack.c.b16 %v673, %v671
  %v716 = vpack.c.b16 %v676, %v674
  %v717 = vpack.c.b16 %v677, %v675
  %v718 = vpack.c.b16 %v680, %v678
  %v719 = vpack.c.b16 %v681, %v679
  %v720 = vpack.c.b16 %v684, %v682
  %v721 = vpack.c.b16 %v685, %v683
  %v722 = vpack.c.b16 %v688, %v686
  %v723 = vpack.c.b16 %v689, %v687
  %v724 = vpack.c.b16 %v692, %v690
  %v725 = vpack.c.b16 %v693, %v691
  %758 = vmatprep.subr.bf16.mxu0 %v709
  %759 = vmatpush1.bf16.msra.mxu0 %v708
  %760 = vmatprep.subr.bf16.mxu0 %v707
  %761 = vmatpush1.bf16.msra.mxu0 %v706
  %762 = vmatprep.subr.bf16.mxu0 %v705
  %763 = vmatpush1.bf16.msra.mxu0 %v704
  %764 = vmatprep.subr.bf16.mxu0 %v703
  %765 = vmatpush1.bf16.msra.mxu0 %v702
  %766 = vmatprep.subr.bf16.mxu0 %v701
  %767 = vmatpush1.bf16.msra.mxu0 %v700
  %768 = vmatprep.subr.bf16.mxu0 %v699
  %769 = vmatpush1.bf16.msra.mxu0 %v698
  %770 = vmatprep.subr.bf16.mxu0 %v697
  %771 = vmatpush1.bf16.msra.mxu0 %v696
  %772 = vmatprep.subr.bf16.mxu0 %v695
  %773 = vmatpush1.bf16.msra.mxu0 %v694
  %774 = vmatprep.subr.bf16.mxu0 %v725
  %775 = vmatpush2.bf16.msra.mxu0 %v724
  %776 = vmatprep.subr.bf16.mxu0 %v723
  %777 = vmatpush2.bf16.msra.mxu0 %v722
  %778 = vmatprep.subr.bf16.mxu0 %v721
  %779 = vmatpush2.bf16.msra.mxu0 %v720
  %780 = vmatprep.subr.bf16.mxu0 %v719
  %781 = vmatpush2.bf16.msra.mxu0 %v718
  %782 = vmatprep.subr.bf16.mxu0 %v717
  %783 = vmatpush2.bf16.msra.mxu0 %v716
  %784 = vmatprep.subr.bf16.mxu0 %v715
  %785 = vmatpush2.bf16.msra.mxu0 %v714
  %786 = vmatprep.subr.bf16.mxu0 %v713
  %787 = vmatpush2.bf16.msra.mxu0 %v712
  %788 = vmatprep.subr.bf16.mxu0 %v711
  %789 = vmatpush2.bf16.msra.mxu0 %v710
  %790 = vmatprep.mubr.bf16.mxu0 %v553
  %791 = vmatmul.mubr.bf16.gmra.mxu0 %v552
  %v792 = vpop.f32.mrf.mxu0
  %v793 = vadd.f32 %v591, %v792
  %v794 = vpop.f32.mrf.mxu0
  %v795 = vadd.f32 %v595, %v794
  %v796 = vpop.f32.mrf.mxu0
  %v797 = vpop.f32.mrf.mxu0
  %798 = vdwg.mxu0
  %v799 = vld [vmem:[%s4] sm:$0xf]
  %v802 = vunpack.c.l.s4 1983009808
  %v803 = vunpack.c.0.s8 %v802
  %v804 = vlaneseq
  %v805 = vshrl.u32 %v804, 7
  %v806 = vsub.s32 %v803, %v805
  %v807 = vrot.slane %v799, %v806
  %v808 = vcombine.high %v807, %v807
  %v811 = vadd.f32 %v793, %v807
  %v812 = vadd.f32 %v795, %v808
  %v813 = vxor.u32 %v811, 2147483648
  %v814 = vxor.u32 %v812, 2147483648
  %v815 = vmul.f32 %v813, 1.442695
  %v816 = vpow.pop %v815
  %v817 = vmul.f32 %v814, 1.442695
  %v818 = vpow.pop %v817
  %v819 = vadd.f32 %v816, 1.0
  %v820 = vadd.f32 %v818, 1.0
  %v821 = vrcp.pop %v819
  %v822 = vmul.f32 1.0, %v821
  %v823 = vrcp.pop %v820
  %v824 = vmul.f32 1.0, %v823
  %v825 = vpack.c.bf16 %v822, %v822
  %v826 = vpack.c.bf16 %v824, %v824
  %v827 = vld [vmem:[%s9] sm:$0xf]
  %v828 = vld [vmem:[%s9 + $0x4] sm:$0xf]
  %v829 = vld [vmem:[%s9 + $0x8] sm:$0xf]
  %v830 = vld [vmem:[%s9 + $0xc] sm:$0xf]
  %v831 = vld [vmem:[%s9 + $0x10] sm:$0xf]
  %v832 = vld [vmem:[%s9 + $0x14] sm:$0xf]
  %v833 = vld [vmem:[%s9 + $0x18] sm:$0xf]
  %v834 = vld [vmem:[%s9 + $0x1c] sm:$0xf]
  %v835 = vld [vmem:[%s9 + $0x20] sm:$0xf]
  %v836 = vld [vmem:[%s9 + $0x24] sm:$0xf]
  %v837 = vld [vmem:[%s9 + $0x28] sm:$0xf]
  %v838 = vld [vmem:[%s9 + $0x2c] sm:$0xf]
  %v839 = vld [vmem:[%s9 + $0x30] sm:$0xf]
  %v840 = vld [vmem:[%s9 + $0x34] sm:$0xf]
  %v841 = vld [vmem:[%s9 + $0x38] sm:$0xf]
  %v842 = vld [vmem:[%s9 + $0x3c] sm:$0xf]
  %v843 = vld [vmem:[%s9 + $0x40] sm:$0xf]
  %v844 = vld [vmem:[%s9 + $0x44] sm:$0xf]
  %v845 = vld [vmem:[%s9 + $0x48] sm:$0xf]
  %v846 = vld [vmem:[%s9 + $0x4c] sm:$0xf]
  %v847 = vld [vmem:[%s9 + $0x50] sm:$0xf]
  %v848 = vld [vmem:[%s9 + $0x54] sm:$0xf]
  %v849 = vld [vmem:[%s9 + $0x58] sm:$0xf]
  %v850 = vld [vmem:[%s9 + $0x5c] sm:$0xf]
  %v851 = vld [vmem:[%s9 + $0x60] sm:$0xf]
  %v852 = vld [vmem:[%s9 + $0x64] sm:$0xf]
  %v853 = vld [vmem:[%s9 + $0x68] sm:$0xf]
  %v854 = vld [vmem:[%s9 + $0x6c] sm:$0xf]
  %v855 = vld [vmem:[%s9 + $0x70] sm:$0xf]
  %v856 = vld [vmem:[%s9 + $0x74] sm:$0xf]
  %v857 = vld [vmem:[%s9 + $0x78] sm:$0xf]
  %v858 = vld [vmem:[%s9 + $0x7c] sm:$0xf]
  %v859 = vld [vmem:[%s10] sm:$0x1]
  %v861 = vlaneseq
  %v862 = vshrl.u32 %v861, 7
  %v863 = vsub.s32 0, %v862
  %v864 = vrot.slane %v859, %v863
  %v898 = vunpack.c.l.b16 %v827
  %v899 = vunpack.c.l.b16 %v828
  %v900 = vunpack.c.l.b16 %v829
  %v901 = vunpack.c.l.b16 %v830
  %v902 = vunpack.c.l.b16 %v831
  %v903 = vunpack.c.l.b16 %v832
  %v904 = vunpack.c.l.b16 %v833
  %v905 = vunpack.c.l.b16 %v834
  %v906 = vunpack.c.l.b16 %v835
  %v907 = vunpack.c.l.b16 %v836
  %v908 = vunpack.c.l.b16 %v837
  %v909 = vunpack.c.l.b16 %v838
  %v910 = vunpack.c.l.b16 %v839
  %v911 = vunpack.c.l.b16 %v840
  %v912 = vunpack.c.l.b16 %v841
  %v913 = vunpack.c.l.b16 %v842
  %v914 = vunpack.c.l.b16 %v843
  %v915 = vunpack.c.l.b16 %v844
  %v916 = vunpack.c.l.b16 %v845
  %v917 = vunpack.c.l.b16 %v846
  %v918 = vunpack.c.l.b16 %v847
  %v919 = vunpack.c.l.b16 %v848
  %v920 = vunpack.c.l.b16 %v849
  %v921 = vunpack.c.l.b16 %v850
  %v922 = vunpack.c.l.b16 %v851
  %v923 = vunpack.c.l.b16 %v852
  %v924 = vunpack.c.l.b16 %v853
  %v925 = vunpack.c.l.b16 %v854
  %v926 = vunpack.c.l.b16 %v855
  %v927 = vunpack.c.l.b16 %v856
  %v928 = vunpack.c.l.b16 %v857
  %v929 = vunpack.c.l.b16 %v858
  %v930 = vpack.c.b16 %v899, %v898
  %v931 = vpack.c.b16 %v901, %v900
  %v932 = vpack.c.b16 %v903, %v902
  %v933 = vpack.c.b16 %v905, %v904
  %v934 = vpack.c.b16 %v907, %v906
  %v935 = vpack.c.b16 %v909, %v908
  %v936 = vpack.c.b16 %v911, %v910
  %v937 = vpack.c.b16 %v913, %v912
  %v938 = vpack.c.b16 %v915, %v914
  %v939 = vpack.c.b16 %v917, %v916
  %v940 = vpack.c.b16 %v919, %v918
  %v941 = vpack.c.b16 %v921, %v920
  %v942 = vpack.c.b16 %v923, %v922
  %v943 = vpack.c.b16 %v925, %v924
  %v944 = vpack.c.b16 %v927, %v926
  %v945 = vpack.c.b16 %v929, %v928
  %962 = vmatprep.subr.bf16.mxu0 0
  %963 = vmatpush1.bf16.msra.mxu0 %v937
  %964 = vmatprep.subr.bf16.mxu0 0
  %965 = vmatpush1.bf16.msra.mxu0 %v936
  %966 = vmatprep.subr.bf16.mxu0 0
  %967 = vmatpush1.bf16.msra.mxu0 %v935
  %968 = vmatprep.subr.bf16.mxu0 0
  %969 = vmatpush1.bf16.msra.mxu0 %v934
  %970 = vmatprep.subr.bf16.mxu0 0
  %971 = vmatpush1.bf16.msra.mxu0 %v933
  %972 = vmatprep.subr.bf16.mxu0 0
  %973 = vmatpush1.bf16.msra.mxu0 %v932
  %974 = vmatprep.subr.bf16.mxu0 0
  %975 = vmatpush1.bf16.msra.mxu0 %v931
  %976 = vmatprep.subr.bf16.mxu0 0
  %977 = vmatpush1.bf16.msra.mxu0 %v930
  %978 = vmatprep.subr.bf16.mxu0 0
  %979 = vmatpush2.bf16.msra.mxu0 %v945
  %980 = vmatprep.subr.bf16.mxu0 0
  %981 = vmatpush2.bf16.msra.mxu0 %v944
  %982 = vmatprep.subr.bf16.mxu0 0
  %983 = vmatpush2.bf16.msra.mxu0 %v943
  %984 = vmatprep.subr.bf16.mxu0 0
  %985 = vmatpush2.bf16.msra.mxu0 %v942
  %986 = vmatprep.subr.bf16.mxu0 0
  %987 = vmatpush2.bf16.msra.mxu0 %v941
  %988 = vmatprep.subr.bf16.mxu0 0
  %989 = vmatpush2.bf16.msra.mxu0 %v940
  %990 = vmatprep.subr.bf16.mxu0 0
  %991 = vmatpush2.bf16.msra.mxu0 %v939
  %992 = vmatprep.subr.bf16.mxu0 0
  %993 = vmatpush2.bf16.msra.mxu0 %v938
  %994 = vmatprep.mubr.bf16.mxu0 %v826
  %995 = vmatmul.mubr.bf16.gmra.mxu0 %v825
  %v996 = vpop.f32.mrf.mxu0
  %v997 = vadd.f32 %v864, %v996
  %v998 = vpop.f32.mrf.mxu0
  %v999 = vpop.f32.mrf.mxu0
  %v1000 = vpop.f32.mrf.mxu0
  %1001 = vdwg.mxu0
  %v1002 = vld [vmem:[%s5] sm:$0x3]
  %v1003 = vadd.f32 %v997, %v1002
  %v1004 = vxor.u32 %v1003, 2147483648
  %v1005 = vmul.f32 %v1004, 1.442695
  %v1006 = vpow.pop %v1005
  %v1007 = vadd.f32 %v1006, 1.0
  %v1008 = vrcp.pop %v1007
  %v1009 = vmul.f32 1.0, %v1008
  %v1010 = vpack.c.bf16 %v1009, %v1009
  %v1011 = vld [vmem:[%s11] sm:$0xff]
  %v1012 = vld [vmem:[%s11 + $0x8] sm:$0xff]
  %v1013 = vld [vmem:[%s11 + $0x10] sm:$0xff]
  %v1014 = vld [vmem:[%s11 + $0x18] sm:$0xf]
  %v1015 = vld [vmem:[%s11 + $0x1c] sm:$0xff]
  %v1016 = vld [vmem:[%s11 + $0x24] sm:$0xff]
  %v1017 = vld [vmem:[%s11 + $0x2c] sm:$0xff]
  %v1018 = vld [vmem:[%s11 + $0x34] sm:$0xf]
  %v1019 = vld [vmem:[%s11 + $0x38] sm:$0xff]
  %v1020 = vld [vmem:[%s11 + $0x40] sm:$0xff]
  %v1021 = vld [vmem:[%s11 + $0x48] sm:$0xff]
  %v1022 = vld [vmem:[%s11 + $0x50] sm:$0xf]
  %v1023 = vld [vmem:[%s11 + $0x54] sm:$0xff]
  %v1024 = vld [vmem:[%s11 + $0x5c] sm:$0xff]
  %v1025 = vld [vmem:[%s11 + $0x64] sm:$0xff]
  %v1026 = vld [vmem:[%s11 + $0x6c] sm:$0xf]
  %v1027 = vld [vmem:[%s11 + $0x70] sm:$0xff]
  %v1028 = vld [vmem:[%s11 + $0x78] sm:$0xff]
  %v1029 = vld [vmem:[%s11 + $0x80] sm:$0xff]
  %v1030 = vld [vmem:[%s11 + $0x88] sm:$0xf]
  %v1031 = vld [vmem:[%s11 + $0x8c] sm:$0xff]
  %v1032 = vld [vmem:[%s11 + $0x94] sm:$0xff]
  %v1033 = vld [vmem:[%s11 + $0x9c] sm:$0xff]
  %v1034 = vld [vmem:[%s11 + $0xa4] sm:$0xf]
  %v1035 = vld [vmem:[%s11 + $0xa8] sm:$0xff]
  %v1036 = vld [vmem:[%s11 + $0xb0] sm:$0xff]
  %v1037 = vld [vmem:[%s11 + $0xb8] sm:$0xff]
  %v1038 = vld [vmem:[%s11 + $0xc0] sm:$0xf]
  %v1039 = vld [vmem:[%s11 + $0xc4] sm:$0xff]
  %v1040 = vld [vmem:[%s11 + $0xcc] sm:$0xff]
  %v1041 = vld [vmem:[%s11 + $0xd4] sm:$0xff]
  %v1042 = vld [vmem:[%s11 + $0xdc] sm:$0xf]
  %v1043 = vld [vmem:[%s11 + $0xe0] sm:$0xff]
  %v1044 = vld [vmem:[%s11 + $0xe8] sm:$0xff]
  %v1045 = vld [vmem:[%s11 + $0xf0] sm:$0xff]
  %v1046 = vld [vmem:[%s11 + $0xf8] sm:$0xf]
  %v1047 = vld [vmem:[%s11 + $0xfc] sm:$0xff]
  %v1048 = vld [vmem:[%s11 + $0x104] sm:$0xff]
  %v1049 = vld [vmem:[%s11 + $0x10c] sm:$0xff]
  %v1050 = vld [vmem:[%s11 + $0x114] sm:$0xf]
  %v1051 = vld [vmem:[%s11 + $0x118] sm:$0xff]
  %v1052 = vld [vmem:[%s11 + $0x120] sm:$0xff]
  %v1053 = vld [vmem:[%s11 + $0x128] sm:$0xff]
  %v1054 = vld [vmem:[%s11 + $0x130] sm:$0xf]
  %v1055 = vld [vmem:[%s11 + $0x134] sm:$0xff]
  %v1056 = vld [vmem:[%s11 + $0x13c] sm:$0xff]
  %v1057 = vld [vmem:[%s11 + $0x144] sm:$0xff]
  %v1058 = vld [vmem:[%s11 + $0x14c] sm:$0xf]
  %v1059 = vld [vmem:[%s11 + $0x150] sm:$0xff]
  %v1060 = vld [vmem:[%s11 + $0x158] sm:$0xff]
  %v1061 = vld [vmem:[%s11 + $0x160] sm:$0xff]
  %v1062 = vld [vmem:[%s11 + $0x168] sm:$0xf]
  %v1063 = vld [vmem:[%s11 + $0x16c] sm:$0xff]
  %v1064 = vld [vmem:[%s11 + $0x174] sm:$0xff]
  %v1065 = vld [vmem:[%s11 + $0x17c] sm:$0xff]
  %v1066 = vld [vmem:[%s11 + $0x184] sm:$0xf]
  %v1067 = vld [vmem:[%s11 + $0x188] sm:$0xff]
  %v1068 = vld [vmem:[%s11 + $0x190] sm:$0xff]
  %v1069 = vld [vmem:[%s11 + $0x198] sm:$0xff]
  %v1070 = vld [vmem:[%s11 + $0x1a0] sm:$0xf]
  %v1071 = vld [vmem:[%s11 + $0x1a4] sm:$0xff]
  %v1072 = vld [vmem:[%s11 + $0x1ac] sm:$0xff]
  %v1073 = vld [vmem:[%s11 + $0x1b4] sm:$0xff]
  %v1074 = vld [vmem:[%s11 + $0x1bc] sm:$0xf]
  %v1075 = vld [vmem:[%s12] sm:$0x7f]
  %v1077 = vlaneseq
  %v1078 = vshrl.u32 %v1077, 7
  %v1079 = vsub.s32 0, %v1078
  %v1080 = vrot.slane %v1075, %v1079
  %v1081 = vlaneseq
  %v1082 = vshrl.u32 %v1081, 7
  %v1083 = vsub.s32 1, %v1082
  %v1084 = vrot.slane %v1075, %v1083
  %v1085 = vlaneseq
  %v1086 = vshrl.u32 %v1085, 7
  %v1087 = vsub.s32 2, %v1086
  %v1088 = vrot.slane %v1075, %v1087
  %v1089 = vlaneseq
  %v1090 = vshrl.u32 %v1089, 7
  %v1091 = vsub.s32 3, %v1090
  %v1092 = vrot.slane %v1075, %v1091
  %v1093 = vlaneseq
  %v1094 = vshrl.u32 %v1093, 7
  %v1095 = vsub.s32 4, %v1094
  %v1096 = vrot.slane %v1075, %v1095
  %v1097 = vlaneseq
  %v1098 = vshrl.u32 %v1097, 7
  %v1099 = vsub.s32 5, %v1098
  %v1100 = vrot.slane %v1075, %v1099
  %v1101 = vlaneseq
  %v1102 = vshrl.u32 %v1101, 7
  %v1103 = vsub.s32 6, %v1102
  %v1104 = vrot.slane %v1075, %v1103
  %v1176 = vunpack.c.l.b16 %v1011
  %v1177 = vunpack.c.h.b16 %v1011
  %v1178 = vunpack.c.l.b16 %v1012
  %v1179 = vunpack.c.h.b16 %v1012
  %v1180 = vunpack.c.l.b16 %v1013
  %v1181 = vunpack.c.h.b16 %v1013
  %v1182 = vunpack.c.l.b16 %v1014
  %v1183 = vunpack.c.l.b16 %v1015
  %v1184 = vunpack.c.h.b16 %v1015
  %v1185 = vunpack.c.l.b16 %v1016
  %v1186 = vunpack.c.h.b16 %v1016
  %v1187 = vunpack.c.l.b16 %v1017
  %v1188 = vunpack.c.h.b16 %v1017
  %v1189 = vunpack.c.l.b16 %v1018
  %v1190 = vunpack.c.l.b16 %v1019
  %v1191 = vunpack.c.h.b16 %v1019
  %v1192 = vunpack.c.l.b16 %v1020
  %v1193 = vunpack.c.h.b16 %v1020
  %v1194 = vunpack.c.l.b16 %v1021
  %v1195 = vunpack.c.h.b16 %v1021
  %v1196 = vunpack.c.l.b16 %v1022
  %v1197 = vunpack.c.l.b16 %v1023
  %v1198 = vunpack.c.h.b16 %v1023
  %v1199 = vunpack.c.l.b16 %v1024
  %v1200 = vunpack.c.h.b16 %v1024
  %v1201 = vunpack.c.l.b16 %v1025
  %v1202 = vunpack.c.h.b16 %v1025
  %v1203 = vunpack.c.l.b16 %v1026
  %v1204 = vunpack.c.l.b16 %v1027
  %v1205 = vunpack.c.h.b16 %v1027
  %v1206 = vunpack.c.l.b16 %v1028
  %v1207 = vunpack.c.h.b16 %v1028
  %v1208 = vunpack.c.l.b16 %v1029
  %v1209 = vunpack.c.h.b16 %v1029
  %v1210 = vunpack.c.l.b16 %v1030
  %v1211 = vunpack.c.l.b16 %v1031
  %v1212 = vunpack.c.h.b16 %v1031
  %v1213 = vunpack.c.l.b16 %v1032
  %v1214 = vunpack.c.h.b16 %v1032
  %v1215 = vunpack.c.l.b16 %v1033
  %v1216 = vunpack.c.h.b16 %v1033
  %v1217 = vunpack.c.l.b16 %v1034
  %v1218 = vunpack.c.l.b16 %v1035
  %v1219 = vunpack.c.h.b16 %v1035
  %v1220 = vunpack.c.l.b16 %v1036
  %v1221 = vunpack.c.h.b16 %v1036
  %v1222 = vunpack.c.l.b16 %v1037
  %v1223 = vunpack.c.h.b16 %v1037
  %v1224 = vunpack.c.l.b16 %v1038
  %v1225 = vunpack.c.l.b16 %v1039
  %v1226 = vunpack.c.h.b16 %v1039
  %v1227 = vunpack.c.l.b16 %v1040
  %v1228 = vunpack.c.h.b16 %v1040
  %v1229 = vunpack.c.l.b16 %v1041
  %v1230 = vunpack.c.h.b16 %v1041
  %v1231 = vunpack.c.l.b16 %v1042
  %v1232 = vunpack.c.l.b16 %v1043
  %v1233 = vunpack.c.h.b16 %v1043
  %v1234 = vunpack.c.l.b16 %v1044
  %v1235 = vunpack.c.h.b16 %v1044
  %v1236 = vunpack.c.l.b16 %v1045
  %v1237 = vunpack.c.h.b16 %v1045
  %v1238 = vunpack.c.l.b16 %v1046
  %v1239 = vunpack.c.l.b16 %v1047
  %v1240 = vunpack.c.h.b16 %v1047
  %v1241 = vunpack.c.l.b16 %v1048
  %v1242 = vunpack.c.h.b16 %v1048
  %v1243 = vunpack.c.l.b16 %v1049
  %v1244 = vunpack.c.h.b16 %v1049
  %v1245 = vunpack.c.l.b16 %v1050
  %v1246 = vunpack.c.l.b16 %v1051
  %v1247 = vunpack.c.h.b16 %v1051
  %v1248 = vunpack.c.l.b16 %v1052
  %v1249 = vunpack.c.h.b16 %v1052
  %v1250 = vunpack.c.l.b16 %v1053
  %v1251 = vunpack.c.h.b16 %v1053
  %v1252 = vunpack.c.l.b16 %v1054
  %v1253 = vunpack.c.l.b16 %v1055
  %v1254 = vunpack.c.h.b16 %v1055
  %v1255 = vunpack.c.l.b16 %v1056
  %v1256 = vunpack.c.h.b16 %v1056
  %v1257 = vunpack.c.l.b16 %v1057
  %v1258 = vunpack.c.h.b16 %v1057
  %v1259 = vunpack.c.l.b16 %v1058
  %v1260 = vunpack.c.l.b16 %v1059
  %v1261 = vunpack.c.h.b16 %v1059
  %v1262 = vunpack.c.l.b16 %v1060
  %v1263 = vunpack.c.h.b16 %v1060
  %v1264 = vunpack.c.l.b16 %v1061
  %v1265 = vunpack.c.h.b16 %v1061
  %v1266 = vunpack.c.l.b16 %v1062
  %v1267 = vunpack.c.l.b16 %v1063
  %v1268 = vunpack.c.h.b16 %v1063
  %v1269 = vunpack.c.l.b16 %v1064
  %v1270 = vunpack.c.h.b16 %v1064
  %v1271 = vunpack.c.l.b16 %v1065
  %v1272 = vunpack.c.h.b16 %v1065
  %v1273 = vunpack.c.l.b16 %v1066
  %v1274 = vunpack.c.l.b16 %v1067
  %v1275 = vunpack.c.h.b16 %v1067
  %v1276 = vunpack.c.l.b16 %v1068
  %v1277 = vunpack.c.h.b16 %v1068
  %v1278 = vunpack.c.l.b16 %v1069
  %v1279 = vunpack.c.h.b16 %v1069
  %v1280 = vunpack.c.l.b16 %v1070
  %v1281 = vunpack.c.l.b16 %v1071
  %v1282 = vunpack.c.h.b16 %v1071
  %v1283 = vunpack.c.l.b16 %v1072
  %v1284 = vunpack.c.h.b16 %v1072
  %v1285 = vunpack.c.l.b16 %v1073
  %v1286 = vunpack.c.h.b16 %v1073
  %v1287 = vunpack.c.l.b16 %v1074
  %v1288 = vpack.c.b16 %v1183, %v1176
  %v1289 = vpack.c.b16 %v1184, %v1177
  %v1290 = vpack.c.b16 %v1185, %v1178
  %v1291 = vpack.c.b16 %v1186, %v1179
  %v1292 = vpack.c.b16 %v1187, %v1180
  %v1293 = vpack.c.b16 %v1188, %v1181
  %v1294 = vpack.c.b16 %v1189, %v1182
  %v1295 = vpack.c.b16 %v1197, %v1190
  %v1296 = vpack.c.b16 %v1198, %v1191
  %v1297 = vpack.c.b16 %v1199, %v1192
  %v1298 = vpack.c.b16 %v1200, %v1193
  %v1299 = vpack.c.b16 %v1201, %v1194
  %v1300 = vpack.c.b16 %v1202, %v1195
  %v1301 = vpack.c.b16 %v1203, %v1196
  %v1302 = vpack.c.b16 %v1211, %v1204
  %v1303 = vpack.c.b16 %v1212, %v1205
  %v1304 = vpack.c.b16 %v1213, %v1206
  %v1305 = vpack.c.b16 %v1214, %v1207
  %v1306 = vpack.c.b16 %v1215, %v1208
  %v1307 = vpack.c.b16 %v1216, %v1209
  %v1308 = vpack.c.b16 %v1217, %v1210
  %v1309 = vpack.c.b16 %v1225, %v1218
  %v1310 = vpack.c.b16 %v1226, %v1219
  %v1311 = vpack.c.b16 %v1227, %v1220
  %v1312 = vpack.c.b16 %v1228, %v1221
  %v1313 = vpack.c.b16 %v1229, %v1222
  %v1314 = vpack.c.b16 %v1230, %v1223
  %v1315 = vpack.c.b16 %v1231, %v1224
  %v1316 = vpack.c.b16 %v1239, %v1232
  %v1317 = vpack.c.b16 %v1240, %v1233
  %v1318 = vpack.c.b16 %v1241, %v1234
  %v1319 = vpack.c.b16 %v1242, %v1235
  %v1320 = vpack.c.b16 %v1243, %v1236
  %v1321 = vpack.c.b16 %v1244, %v1237
  %v1322 = vpack.c.b16 %v1245, %v1238
  %v1323 = vpack.c.b16 %v1253, %v1246
  %v1324 = vpack.c.b16 %v1254, %v1247
  %v1325 = vpack.c.b16 %v1255, %v1248
  %v1326 = vpack.c.b16 %v1256, %v1249
  %v1327 = vpack.c.b16 %v1257, %v1250
  %v1328 = vpack.c.b16 %v1258, %v1251
  %v1329 = vpack.c.b16 %v1259, %v1252
  %v1330 = vpack.c.b16 %v1267, %v1260
  %v1331 = vpack.c.b16 %v1268, %v1261
  %v1332 = vpack.c.b16 %v1269, %v1262
  %v1333 = vpack.c.b16 %v1270, %v1263
  %v1334 = vpack.c.b16 %v1271, %v1264
  %v1335 = vpack.c.b16 %v1272, %v1265
  %v1336 = vpack.c.b16 %v1273, %v1266
  %v1337 = vpack.c.b16 %v1281, %v1274
  %v1338 = vpack.c.b16 %v1282, %v1275
  %v1339 = vpack.c.b16 %v1283, %v1276
  %v1340 = vpack.c.b16 %v1284, %v1277
  %v1341 = vpack.c.b16 %v1285, %v1278
  %v1342 = vpack.c.b16 %v1286, %v1279
  %v1343 = vpack.c.b16 %v1287, %v1280
  %1400 = vmatprep.subr.bf16.mxu0 %v1338
  %1401 = vmatpush1.bf16.msra.mxu0 %v1337
  %1402 = vmatprep.subr.bf16.mxu0 %v1331
  %1403 = vmatpush1.bf16.msra.mxu0 %v1330
  %1404 = vmatprep.subr.bf16.mxu0 %v1324
  %1405 = vmatpush1.bf16.msra.mxu0 %v1323
  %1406 = vmatprep.subr.bf16.mxu0 %v1317
  %1407 = vmatpush1.bf16.msra.mxu0 %v1316
  %1408 = vmatprep.subr.bf16.mxu0 %v1310
  %1409 = vmatpush1.bf16.msra.mxu0 %v1309
  %1410 = vmatprep.subr.bf16.mxu0 %v1303
  %1411 = vmatpush1.bf16.msra.mxu0 %v1302
  %1412 = vmatprep.subr.bf16.mxu0 %v1296
  %1413 = vmatpush1.bf16.msra.mxu0 %v1295
  %1414 = vmatprep.subr.bf16.mxu0 %v1289
  %1415 = vmatpush1.bf16.msra.mxu0 %v1288
  %1416 = vmatprep.subr.bf16.mxu0 0
  %1417 = vmatpush2.bf16.msra.mxu0 0
  %1418 = vmatprep.subr.bf16.mxu0 0
  %1419 = vmatpush2.bf16.msra.mxu0 0
  %1420 = vmatprep.subr.bf16.mxu0 0
  %1421 = vmatpush2.bf16.msra.mxu0 0
  %1422 = vmatprep.subr.bf16.mxu0 0
  %1423 = vmatpush2.bf16.msra.mxu0 0
  %1424 = vmatprep.subr.bf16.mxu0 0
  %1425 = vmatpush2.bf16.msra.mxu0 0
  %1426 = vmatprep.subr.bf16.mxu0 0
  %1427 = vmatpush2.bf16.msra.mxu0 0
  %1428 = vmatprep.subr.bf16.mxu0 0
  %1429 = vmatpush2.bf16.msra.mxu0 0
  %1430 = vmatprep.subr.bf16.mxu0 0
  %1431 = vmatpush2.bf16.msra.mxu0 0
  %1432 = vmatprep.mubr.bf16.mxu0 0
  %1433 = vmatmul.mubr.bf16.gmra.mxu0 %v1010
  %v1434 = vpop.f32.mrf.mxu0
  %v1435 = vadd.f32 %v1080, %v1434
  %v1436 = vpop.f32.mrf.mxu0
  %v1437 = vadd.f32 %v1084, %v1436
  %v1438 = vpop.f32.mrf.mxu0
  %v1439 = vpop.f32.mrf.mxu0
  %1440 = vdwg.mxu0
  %1441 = vmatprep.subr.bf16.mxu0 %v1340
  %1442 = vmatpush1.bf16.msra.mxu0 %v1339
  %1443 = vmatprep.subr.bf16.mxu0 %v1333
  %1444 = vmatpush1.bf16.msra.mxu0 %v1332
  %1445 = vmatprep.subr.bf16.mxu0 %v1326
  %1446 = vmatpush1.bf16.msra.mxu0 %v1325
  %1447 = vmatprep.subr.bf16.mxu0 %v1319
  %1448 = vmatpush1.bf16.msra.mxu0 %v1318
  %1449 = vmatprep.subr.bf16.mxu0 %v1312
  %1450 = vmatpush1.bf16.msra.mxu0 %v1311
  %1451 = vmatprep.subr.bf16.mxu0 %v1305
  %1452 = vmatpush1.bf16.msra.mxu0 %v1304
  %1453 = vmatprep.subr.bf16.mxu0 %v1298
  %1454 = vmatpush1.bf16.msra.mxu0 %v1297
  %1455 = vmatprep.subr.bf16.mxu0 %v1291
  %1456 = vmatpush1.bf16.msra.mxu0 %v1290
  %1457 = vmatprep.subr.bf16.mxu0 0
  %1458 = vmatpush2.bf16.msra.mxu0 0
  %1459 = vmatprep.subr.bf16.mxu0 0
  %1460 = vmatpush2.bf16.msra.mxu0 0
  %1461 = vmatprep.subr.bf16.mxu0 0
  %1462 = vmatpush2.bf16.msra.mxu0 0
  %1463 = vmatprep.subr.bf16.mxu0 0
  %1464 = vmatpush2.bf16.msra.mxu0 0
  %1465 = vmatprep.subr.bf16.mxu0 0
  %1466 = vmatpush2.bf16.msra.mxu0 0
  %1467 = vmatprep.subr.bf16.mxu0 0
  %1468 = vmatpush2.bf16.msra.mxu0 0
  %1469 = vmatprep.subr.bf16.mxu0 0
  %1470 = vmatpush2.bf16.msra.mxu0 0
  %1471 = vmatprep.subr.bf16.mxu0 0
  %1472 = vmatpush2.bf16.msra.mxu0 0
  %1473 = vmatprep.mubr.bf16.mxu0 0
  %1474 = vmatmul.mubr.bf16.gmra.mxu0 %v1010
  %v1475 = vpop.f32.mrf.mxu0
  %v1476 = vadd.f32 %v1088, %v1475
  %v1477 = vpop.f32.mrf.mxu0
  %v1478 = vadd.f32 %v1092, %v1477
  %v1479 = vpop.f32.mrf.mxu0
  %v1480 = vpop.f32.mrf.mxu0
  %1481 = vdwg.mxu0
  %1482 = vmatprep.subr.bf16.mxu0 %v1342
  %1483 = vmatpush1.bf16.msra.mxu0 %v1341
  %1484 = vmatprep.subr.bf16.mxu0 %v1335
  %1485 = vmatpush1.bf16.msra.mxu0 %v1334
  %1486 = vmatprep.subr.bf16.mxu0 %v1328
  %1487 = vmatpush1.bf16.msra.mxu0 %v1327
  %1488 = vmatprep.subr.bf16.mxu0 %v1321
  %1489 = vmatpush1.bf16.msra.mxu0 %v1320
  %1490 = vmatprep.subr.bf16.mxu0 %v1314
  %1491 = vmatpush1.bf16.msra.mxu0 %v1313
  %1492 = vmatprep.subr.bf16.mxu0 %v1307
  %1493 = vmatpush1.bf16.msra.mxu0 %v1306
  %1494 = vmatprep.subr.bf16.mxu0 %v1300
  %1495 = vmatpush1.bf16.msra.mxu0 %v1299
  %1496 = vmatprep.subr.bf16.mxu0 %v1293
  %1497 = vmatpush1.bf16.msra.mxu0 %v1292
  %1498 = vmatprep.subr.bf16.mxu0 0
  %1499 = vmatpush2.bf16.msra.mxu0 0
  %1500 = vmatprep.subr.bf16.mxu0 0
  %1501 = vmatpush2.bf16.msra.mxu0 0
  %1502 = vmatprep.subr.bf16.mxu0 0
  %1503 = vmatpush2.bf16.msra.mxu0 0
  %1504 = vmatprep.subr.bf16.mxu0 0
  %1505 = vmatpush2.bf16.msra.mxu0 0
  %1506 = vmatprep.subr.bf16.mxu0 0
  %1507 = vmatpush2.bf16.msra.mxu0 0
  %1508 = vmatprep.subr.bf16.mxu0 0
  %1509 = vmatpush2.bf16.msra.mxu0 0
  %1510 = vmatprep.subr.bf16.mxu0 0
  %1511 = vmatpush2.bf16.msra.mxu0 0
  %1512 = vmatprep.subr.bf16.mxu0 0
  %1513 = vmatpush2.bf16.msra.mxu0 0
  %1514 = vmatprep.mubr.bf16.mxu0 0
  %1515 = vmatmul.mubr.bf16.gmra.mxu0 %v1010
  %v1516 = vpop.f32.mrf.mxu0
  %v1517 = vadd.f32 %v1096, %v1516
  %v1518 = vpop.f32.mrf.mxu0
  %v1519 = vadd.f32 %v1100, %v1518
  %v1520 = vpop.f32.mrf.mxu0
  %v1521 = vpop.f32.mrf.mxu0
  %1522 = vdwg.mxu0
  %1523 = vmatprep.subr.bf16.mxu0 0
  %1524 = vmatpush1.bf16.msra.mxu0 %v1343
  %1525 = vmatprep.subr.bf16.mxu0 0
  %1526 = vmatpush1.bf16.msra.mxu0 %v1336
  %1527 = vmatprep.subr.bf16.mxu0 0
  %1528 = vmatpush1.bf16.msra.mxu0 %v1329
  %1529 = vmatprep.subr.bf16.mxu0 0
  %1530 = vmatpush1.bf16.msra.mxu0 %v1322
  %1531 = vmatprep.subr.bf16.mxu0 0
  %1532 = vmatpush1.bf16.msra.mxu0 %v1315
  %1533 = vmatprep.subr.bf16.mxu0 0
  %1534 = vmatpush1.bf16.msra.mxu0 %v1308
  %1535 = vmatprep.subr.bf16.mxu0 0
  %1536 = vmatpush1.bf16.msra.mxu0 %v1301
  %1537 = vmatprep.subr.bf16.mxu0 0
  %1538 = vmatpush1.bf16.msra.mxu0 %v1294
  %1539 = vmatprep.subr.bf16.mxu0 0
  %1540 = vmatpush2.bf16.msra.mxu0 0
  %1541 = vmatprep.subr.bf16.mxu0 0
  %1542 = vmatpush2.bf16.msra.mxu0 0
  %1543 = vmatprep.subr.bf16.mxu0 0
  %1544 = vmatpush2.bf16.msra.mxu0 0
  %1545 = vmatprep.subr.bf16.mxu0 0
  %1546 = vmatpush2.bf16.msra.mxu0 0
  %1547 = vmatprep.subr.bf16.mxu0 0
  %1548 = vmatpush2.bf16.msra.mxu0 0
  %1549 = vmatprep.subr.bf16.mxu0 0
  %1550 = vmatpush2.bf16.msra.mxu0 0
  %1551 = vmatprep.subr.bf16.mxu0 0
  %1552 = vmatpush2.bf16.msra.mxu0 0
  %1553 = vmatprep.subr.bf16.mxu0 0
  %1554 = vmatpush2.bf16.msra.mxu0 0
  %1555 = vmatprep.mubr.bf16.mxu0 0
  %1556 = vmatmul.mubr.bf16.gmra.mxu0 %v1010
  %v1557 = vpop.f32.mrf.mxu0
  %v1558 = vadd.f32 %v1104, %v1557
  %v1559 = vpop.f32.mrf.mxu0
  %v1560 = vpop.f32.mrf.mxu0
  %v1561 = vpop.f32.mrf.mxu0
  %1562 = vdwg.mxu0
  %v1563 = vld [vmem:[%s6] sm:$0xff]
  %v1564 = vld [vmem:[%s6 + $0x8] sm:$0x3f]
  %v1567 = vcombine.high %v1563, %v1563
  %v1569 = vunpack.c.l.s4 1983009808
  %v1570 = vunpack.c.0.s8 %v1569
  %v1571 = vlaneseq
  %v1572 = vshrl.u32 %v1571, 7
  %v1573 = vsub.s32 %v1570, %v1572
  %v1574 = vrot.slane %v1563, %v1573
  %v1576 = vunpack.c.l.s4 1983009808
  %v1577 = vunpack.c.0.s8 %v1576
  %v1578 = vlaneseq
  %v1579 = vshrl.u32 %v1578, 7
  %v1580 = vsub.s32 %v1577, %v1579
  %v1581 = vrot.slane %v1567, %v1580
  %v1582 = vcombine.high %v1574, %v1574
  %v1583 = vcombine.high %v1581, %v1581
  %v1584 = vcombine.high %v1564, %v1564
  %v1586 = vunpack.c.l.s4 1983009808
  %v1587 = vunpack.c.0.s8 %v1586
  %v1588 = vlaneseq
  %v1589 = vshrl.u32 %v1588, 7
  %v1590 = vsub.s32 %v1587, %v1589
  %v1591 = vrot.slane %v1564, %v1590
  %v1593 = vunpack.c.l.s4 1983009808
  %v1594 = vunpack.c.0.s8 %v1593
  %v1595 = vlaneseq
  %v1596 = vshrl.u32 %v1595, 7
  %v1597 = vsub.s32 %v1594, %v1596
  %v1598 = vrot.slane %v1584, %v1597
  %v1599 = vcombine.high %v1591, %v1591
  %v1607 = vadd.f32 %v1435, %v1574
  %v1608 = vadd.f32 %v1437, %v1582
  %v1609 = vadd.f32 %v1476, %v1581
  %v1610 = vadd.f32 %v1478, %v1583
  %v1611 = vadd.f32 %v1517, %v1591
  %v1612 = vadd.f32 %v1519, %v1599
  %v1613 = vadd.f32 %v1558, %v1598
  %v1614 = vxor.u32 %v1607, 2147483648
  %v1615 = vxor.u32 %v1608, 2147483648
  %v1616 = vxor.u32 %v1609, 2147483648
  %v1617 = vxor.u32 %v1610, 2147483648
  %v1618 = vxor.u32 %v1611, 2147483648
  %v1619 = vxor.u32 %v1612, 2147483648
  %v1620 = vxor.u32 %v1613, 2147483648
  %v1621 = vmul.f32 %v1614, 1.442695
  %v1622 = vpow.pop %v1621
  %v1623 = vmul.f32 %v1615, 1.442695
  %v1624 = vpow.pop %v1623
  %v1625 = vmul.f32 %v1616, 1.442695
  %v1626 = vpow.pop %v1625
  %v1627 = vmul.f32 %v1617, 1.442695
  %v1628 = vpow.pop %v1627
  %v1629 = vmul.f32 %v1618, 1.442695
  %v1630 = vpow.pop %v1629
  %v1631 = vmul.f32 %v1619, 1.442695
  %v1632 = vpow.pop %v1631
  %v1633 = vmul.f32 %v1620, 1.442695
  %v1634 = vpow.pop %v1633
  %v1635 = vadd.f32 %v1622, 1.0
  %v1636 = vadd.f32 %v1624, 1.0
  %v1637 = vadd.f32 %v1626, 1.0
  %v1638 = vadd.f32 %v1628, 1.0
  %v1639 = vadd.f32 %v1630, 1.0
  %v1640 = vadd.f32 %v1632, 1.0
  %v1641 = vadd.f32 %v1634, 1.0
  %v1642 = vrcp.pop %v1635
  %v1643 = vmul.f32 1.0, %v1642
  %v1644 = vrcp.pop %v1636
  %v1645 = vmul.f32 1.0, %v1644
  %v1646 = vrcp.pop %v1637
  %v1647 = vmul.f32 1.0, %v1646
  %v1648 = vrcp.pop %v1638
  %v1649 = vmul.f32 1.0, %v1648
  %v1650 = vrcp.pop %v1639
  %v1651 = vmul.f32 1.0, %v1650
  %v1652 = vrcp.pop %v1640
  %v1653 = vmul.f32 1.0, %v1652
  %v1654 = vrcp.pop %v1641
  %v1655 = vmul.f32 1.0, %v1654
  %v1663 = vcombine.low %v1643, %v1645
  %v1664 = vcombine.low %v1647, %v1649
  %v1666 = vunpack.c.l.s4 1983009808
  %v1667 = vunpack.c.0.s8 %v1666
  %v1668 = vlaneseq
  %v1669 = vshrl.u32 %v1668, 7
  %v1670 = vsub.s32 %v1667, %v1669
  %v1671 = vrot.slane %v1663, %v1670
  %v1673 = vunpack.c.l.s4 1983009808
  %v1674 = vunpack.c.0.s8 %v1673
  %v1675 = vlaneseq
  %v1676 = vshrl.u32 %v1675, 7
  %v1677 = vsub.s32 %v1674, %v1676
  %v1678 = vrot.slane %v1664, %v1677
  %v1679 = vcombine.low %v1671, %v1678
  %v1680 = vcombine.low %v1651, %v1653
  %v1682 = vunpack.c.l.s4 1983009808
  %v1683 = vunpack.c.0.s8 %v1682
  %v1684 = vlaneseq
  %v1685 = vshrl.u32 %v1684, 7
  %v1686 = vsub.s32 %v1683, %v1685
  %v1687 = vrot.slane %v1680, %v1686
  %v1689 = vunpack.c.l.s4 1983009808
  %v1690 = vunpack.c.0.s8 %v1689
  %v1691 = vlaneseq
  %v1692 = vshrl.u32 %v1691, 7
  %v1693 = vsub.s32 %v1690, %v1692
  %v1694 = vrot.slane %v1655, %v1693
  %v1695 = vcombine.low %v1687, %v1694
  %1698 = vst [vmem:[%s13] sm:$0xff] %v1679
  %vm1699 = vcmask 1041408
  %vm1700 = vcmask 1043458
  %vm1701 = vmor %vm1700, %vm1699
  %vm1702 = vcmask 128004
  %vm1703 = vmor %vm1702, %vm1701
  %1704 = vst.msk [vmem:[%s13 + $0x8] sm:$0x3f] %vm1703, %v1695
  // Predicated region
  $region54: #{diffusion_forward.3} parent=0 // pred_check
    _
  $region55: #{diffusion_forward.3} parent=0 // pred_check_branch
    %1706 = sbr.rel (0) target = $region57
  $region56: #{diffusion_forward.3} parent=0 // pred_region
    _
  $region57: #{diffusion_forward.3} parent=0 // pred_fallthru
    _
  // Predicated region
  $region58: #{diffusion_forward.3} parent=0 // pred_check
    _
  $region59: #{diffusion_forward.3} parent=0 // pred_check_branch
    %1708 = sbr.rel (0) target = $region61
  $region60: #{diffusion_forward.3} parent=0 // pred_region
    _
  $region61: #{diffusion_forward.3} parent=0 // pred_fallthru
    _

// kernel: diffusion_forward.2
$region0: #{diffusion_forward.2}
  #allocation0 [shape = 'u32[]', space=smem, size = 0x4, offset = 0x4, fixed_abs, tag = 'smem constant byte address 0x4 - core index']
  #allocation1 [shape = 'u32[144,128]{1,0:T(1,128)}', space=vmem, size = 0x12000, scoped, tag = 'internal scratch']
  %s0 = inlined_call_operand.vmem [shape: f32[25,1536], index: 0, kind: input, shape index: {}]
  %s1 = inlined_call_operand.vmem [shape: f32[1,1536], index: 1, kind: input, shape index: {}]
  %s2 = inlined_call_operand.vmem [shape: f32[6,25], index: 2, kind: input, shape index: {}]
  %s3 = inlined_call_operand.vmem [shape: f32[6,1], index: 3, kind: input, shape index: {}]
  %s4 = inlined_call_operand.vmem [shape: f32[2,576], index: 4, kind: input, shape index: {}]
  %s5 = inlined_call_operand.vmem [shape: bf16[576,2148], index: 5, kind: input, shape index: {}]
  %s6 = inlined_call_operand.vmem [shape: f32[1,2148], index: 6, kind: input, shape index: {}]
  %s7 = inlined_call_operand.vmem [shape: bf16[1024,1024], index: 7, kind: input, shape index: {}]
  %s8 = inlined_call_operand.vmem [shape: f32[1,1024], index: 8, kind: input, shape index: {}]
  %s9 = inlined_call_operand.vmem [shape: bf16[256,256], index: 9, kind: input, shape index: {}]
  %s10 = inlined_call_operand.vmem [shape: f32[1,256], index: 10, kind: input, shape index: {}]
  %s11 = inlined_call_operand.vmem [shape: bf16[784,784], index: 11, kind: input, shape index: {}]
  %s12 = inlined_call_operand.vmem [shape: f32[1,784], index: 12, kind: input, shape index: {}]
  %s13 = inlined_call_operand.vmem [shape: bf16[84,128], index: 13, kind: input, shape index: {}]
  %s14 = inlined_call_operand.vmem [shape: f32[1,128], index: 14, kind: input, shape index: {}]
  %s15 = inlined_call_operand.vmem [shape: f32[6,384], index: 15, kind: output, shape index: {0}]
  %s16 = inlined_call_operand.vmem [shape: f32[2,1024], index: 16, kind: output, shape index: {1}]
  %s17 = inlined_call_operand.vmem [shape: f32[2,256], index: 17, kind: output, shape index: {2}]
  %s18 = inlined_call_operand.vmem [shape: f32[2,128], index: 18, kind: output, shape index: {3}]
  %s19 = inlined_call_operand.vmem [shape: f32[2,784], index: 19, kind: output, shape index: {4}]
  %20 = xla_tuple %s15, %s16, %s17, %s18, %s19
  %s21 = sld [smem:[#allocation0]]
  $region102: #{diffusion_forward.2} parent=0
    _
  %s23 = ssub.s32 1, %s21
  %s24 = scalar_select 0, %s23, %s21
  // Predicated region
  $region2: #{diffusion_forward.2} parent=0 // pred_check
    _
  $region3: #{diffusion_forward.2} parent=0 // pred_check_branch
    %26 = sbr.rel (0) target = $region5
  $region4: #{diffusion_forward.2} parent=0 // pred_region
    _
  $region5: #{diffusion_forward.2} parent=0 // pred_fallthru
    _
  // Predicated region
  $region6: #{diffusion_forward.2} parent=0 // pred_check
    _
  $region7: #{diffusion_forward.2} parent=0 // pred_check_branch
    %28 = sbr.rel (0) target = $region9
  $region8: #{diffusion_forward.2} parent=0 // pred_region
    _
  $region9: #{diffusion_forward.2} parent=0 // pred_fallthru
    _
  // Predicated region
  $region10: #{diffusion_forward.2} parent=0 // pred_check
    _
  $region11: #{diffusion_forward.2} parent=0 // pred_check_branch
    %30 = sbr.rel (0) target = $region13
  $region12: #{diffusion_forward.2} parent=0 // pred_region
    _
  $region13: #{diffusion_forward.2} parent=0 // pred_fallthru
    _
  // Predicated region
  $region14: #{diffusion_forward.2} parent=0 // pred_check
    _
  $region15: #{diffusion_forward.2} parent=0 // pred_check_branch
    %32 = sbr.rel (0) target = $region17
  $region16: #{diffusion_forward.2} parent=0 // pred_region
    _
  $region17: #{diffusion_forward.2} parent=0 // pred_fallthru
    _
  // Predicated region
  $region18: #{diffusion_forward.2} parent=0 // pred_check
    _
  $region19: #{diffusion_forward.2} parent=0 // pred_check_branch
    %34 = sbr.rel (0) target = $region21
  $region20: #{diffusion_forward.2} parent=0 // pred_region
    _
  $region21: #{diffusion_forward.2} parent=0 // pred_fallthru
    _
  // Predicated region
  $region22: #{diffusion_forward.2} parent=0 // pred_check
    _
  $region23: #{diffusion_forward.2} parent=0 // pred_check_branch
    %36 = sbr.rel (0) target = $region25
  $region24: #{diffusion_forward.2} parent=0 // pred_region
    _
  $region25: #{diffusion_forward.2} parent=0 // pred_fallthru
    _
  // Predicated region
  $region26: #{diffusion_forward.2} parent=0 // pred_check
    _
  $region27: #{diffusion_forward.2} parent=0 // pred_check_branch
    %38 = sbr.rel (0) target = $region29
  $region28: #{diffusion_forward.2} parent=0 // pred_region
    _
  $region29: #{diffusion_forward.2} parent=0 // pred_fallthru
    _
  // Predicated region
  $region30: #{diffusion_forward.2} parent=0 // pred_check
    _
  $region31: #{diffusion_forward.2} parent=0 // pred_check_branch
    %40 = sbr.rel (0) target = $region33
  $region32: #{diffusion_forward.2} parent=0 // pred_region
    _
  $region33: #{diffusion_forward.2} parent=0 // pred_fallthru
    _
  // Predicated region
  $region34: #{diffusion_forward.2} parent=0 // pred_check
    _
  $region35: #{diffusion_forward.2} parent=0 // pred_check_branch
    %42 = sbr.rel (0) target = $region37
  $region36: #{diffusion_forward.2} parent=0 // pred_region
    _
  $region37: #{diffusion_forward.2} parent=0 // pred_fallthru
    _
  // Predicated region
  $region38: #{diffusion_forward.2} parent=0 // pred_check
    _
  $region39: #{diffusion_forward.2} parent=0 // pred_check_branch
    %44 = sbr.rel (0) target = $region41
  $region40: #{diffusion_forward.2} parent=0 // pred_region
    _
  $region41: #{diffusion_forward.2} parent=0 // pred_fallthru
    _
  // Predicated region
  $region42: #{diffusion_forward.2} parent=0 // pred_check
    _
  $region43: #{diffusion_forward.2} parent=0 // pred_check_branch
    %46 = sbr.rel (0) target = $region45
  $region44: #{diffusion_forward.2} parent=0 // pred_region
    _
  $region45: #{diffusion_forward.2} parent=0 // pred_fallthru
    _
  // Predicated region
  $region46: #{diffusion_forward.2} parent=0 // pred_check
    _
  $region47: #{diffusion_forward.2} parent=0 // pred_check_branch
    %48 = sbr.rel (0) target = $region49
  $region48: #{diffusion_forward.2} parent=0 // pred_region
    _
  $region49: #{diffusion_forward.2} parent=0 // pred_fallthru
    _
  // Predicated region
  $region50: #{diffusion_forward.2} parent=0 // pred_check
    _
  $region51: #{diffusion_forward.2} parent=0 // pred_check_branch
    %50 = sbr.rel (0) target = $region53
  $region52: #{diffusion_forward.2} parent=0 // pred_region
    _
  $region53: #{diffusion_forward.2} parent=0 // pred_fallthru
    _
  // Predicated region
  $region54: #{diffusion_forward.2} parent=0 // pred_check
    _
  $region55: #{diffusion_forward.2} parent=0 // pred_check_branch
    %52 = sbr.rel (0) target = $region57
  $region56: #{diffusion_forward.2} parent=0 // pred_region
    _
  $region57: #{diffusion_forward.2} parent=0 // pred_fallthru
    _
  // Predicated region
  $region58: #{diffusion_forward.2} parent=0 // pred_check
    _
  $region59: #{diffusion_forward.2} parent=0 // pred_check_branch
    %54 = sbr.rel (0) target = $region61
  $region60: #{diffusion_forward.2} parent=0 // pred_region
    _
  $region61: #{diffusion_forward.2} parent=0 // pred_fallthru
    _
  %v56 = vld [vmem:[%s2] sm:$0x3f]
  %v57 = vld [vmem:[%s0] sm:$0xff]
  %v58 = vld [vmem:[%s0 + $0x8] sm:$0xff]
  %v59 = vld [vmem:[%s0 + $0x10] sm:$0xff]
  %v60 = vld [vmem:[%s0 + $0x18] sm:$0xff]
  %v61 = vld [vmem:[%s0 + $0x20] sm:$0xff]
  %v62 = vld [vmem:[%s0 + $0x28] sm:$0xff]
  %v63 = vld [vmem:[%s0 + $0x30] sm:$0xff]
  %v64 = vld [vmem:[%s0 + $0x38] sm:$0xff]
  %v65 = vld [vmem:[%s0 + $0x40] sm:$0xff]
  %v66 = vld [vmem:[%s0 + $0x48] sm:$0xff]
  %v67 = vld [vmem:[%s0 + $0x50] sm:$0xff]
  %v68 = vld [vmem:[%s0 + $0x58] sm:$0xff]
  %v69 = vld [vmem:[%s0 + $0x60] sm:$0xff]
  %v70 = vld [vmem:[%s0 + $0x68] sm:$0xff]
  %v71 = vld [vmem:[%s0 + $0x70] sm:$0xff]
  %v72 = vld [vmem:[%s0 + $0x78] sm:$0xff]
  %v73 = vld [vmem:[%s0 + $0x80] sm:$0xff]
  %v74 = vld [vmem:[%s0 + $0x88] sm:$0xff]
  %v75 = vld [vmem:[%s0 + $0x90] sm:$0xff]
  %v76 = vld [vmem:[%s0 + $0x98] sm:$0xff]
  %v77 = vld [vmem:[%s0 + $0xa0] sm:$0xff]
  %v78 = vld [vmem:[%s0 + $0xa8] sm:$0xff]
  %v79 = vld [vmem:[%s0 + $0xb0] sm:$0xff]
  %v80 = vld [vmem:[%s0 + $0xb8] sm:$0xff]
  %v81 = vld [vmem:[%s0 + $0xc0] sm:$0xff]
  %v82 = vld [vmem:[%s0 + $0xc8] sm:$0xff]
  %v83 = vld [vmem:[%s0 + $0xd0] sm:$0xff]
  %v84 = vld [vmem:[%s0 + $0xd8] sm:$0xff]
  %v85 = vld [vmem:[%s0 + $0xe0] sm:$0xff]
  %v86 = vld [vmem:[%s0 + $0xe8] sm:$0xff]
  %v87 = vld [vmem:[%s0 + $0xf0] sm:$0xff]
  %v88 = vld [vmem:[%s0 + $0xf8] sm:$0xff]
  %v89 = vld [vmem:[%s0 + $0x100] sm:$0xff]
  %v90 = vld [vmem:[%s0 + $0x108] sm:$0xff]
  %v91 = vld [vmem:[%s0 + $0x110] sm:$0xff]
  %v92 = vld [vmem:[%s0 + $0x118] sm:$0xff]
  %v93 = vld [vmem:[%s0 + $0x120] sm:$0x1]
  %v94 = vld [vmem:[%s0 + $0x128] sm:$0x1]
  %v95 = vld [vmem:[%s0 + $0x130] sm:$0x1]
  %v96 = vld [vmem:[%s0 + $0x138] sm:$0x1]
  %v97 = vld [vmem:[%s0 + $0x140] sm:$0x1]
  %v98 = vld [vmem:[%s0 + $0x148] sm:$0x1]
  %v99 = vld [vmem:[%s0 + $0x150] sm:$0x1]
  %v100 = vld [vmem:[%s0 + $0x158] sm:$0x1]
  %v101 = vld [vmem:[%s0 + $0x160] sm:$0x1]
  %v102 = vld [vmem:[%s0 + $0x168] sm:$0x1]
  %v103 = vld [vmem:[%s0 + $0x170] sm:$0x1]
  %v104 = vld [vmem:[%s0 + $0x178] sm:$0x1]
  %v105 = vld [vmem:[%s3] sm:$0x3f]
  %107 = vset.pattern.permute.xlu0 0
  %108 = vperm.xlu0 %107, %v105
  %v109 = vpop.permute.xlu0 %108
  %vm111 = vcmask 203776
  %v113 = vsel %vm111, %v56, 0
  %vm115 = vcmask 1040384
  %v117 = vsel %vm115, %v93, 0
  %v120 = vsel %vm115, %v94, 0
  %v123 = vsel %vm115, %v95, 0
  %v126 = vsel %vm115, %v96, 0
  %v129 = vsel %vm115, %v97, 0
  %v132 = vsel %vm115, %v98, 0
  %v135 = vsel %vm115, %v99, 0
  %v138 = vsel %vm115, %v100, 0
  %v141 = vsel %vm115, %v101, 0
  %v144 = vsel %vm115, %v102, 0
  %v147 = vsel %vm115, %v103, 0
  %v150 = vsel %vm115, %v104, 0
  %152 = vmatprep.subr.mxu0 0.0
  %153 = vmatpush1.msra.mxu0 0.0
  %154 = vmatprep.subr.mxu0 0.0
  %155 = vmatpush1.msra.mxu0 0.0
  %156 = vmatprep.subr.mxu0 0.0
  %157 = vmatpush1.msra.mxu0 0.0
  %158 = vmatprep.subr.mxu0 0.0
  %159 = vmatpush1.msra.mxu0 0.0
  %160 = vmatprep.subr.mxu0 0.0
  %161 = vmatpush1.msra.mxu0 0.0
  %162 = vmatprep.subr.mxu0 0.0
  %163 = vmatpush1.msra.mxu0 0.0
  %164 = vmatprep.subr.mxu0 0.0
  %165 = vmatpush1.msra.mxu0 0.0
  %166 = vmatprep.subr.mxu0 0.0
  %167 = vmatpush1.msra.mxu0 0.0
  %168 = vmatprep.subr.mxu0 0.0
  %169 = vmatpush1.msra.mxu0 0.0
  %170 = vmatprep.subr.mxu0 0.0
  %171 = vmatpush1.msra.mxu0 0.0
  %172 = vmatprep.subr.mxu0 0.0
  %173 = vmatpush1.msra.mxu0 0.0
  %174 = vmatprep.subr.mxu0 0.0
  %175 = vmatpush1.msra.mxu0 0.0
  %176 = vmatprep.subr.mxu0 %v120
  %177 = vmatpush1.msra.mxu0 %v117
  %178 = vmatprep.subr.mxu0 %v82
  %179 = vmatpush1.msra.mxu0 %v81
  %180 = vmatprep.subr.mxu0 %v70
  %181 = vmatpush1.msra.mxu0 %v69
  %182 = vmatprep.subr.mxu0 %v58
  %183 = vmatpush1.msra.mxu0 %v57
  %184 = vmatprep.subr.mxu0 0.0
  %185 = vmatpush2.msra.mxu0 0.0
  %186 = vmatprep.subr.mxu0 0.0
  %187 = vmatpush2.msra.mxu0 0.0
  %188 = vmatprep.subr.mxu0 0.0
  %189 = vmatpush2.msra.mxu0 0.0
  %190 = vmatprep.subr.mxu0 0.0
  %191 = vmatpush2.msra.mxu0 0.0
  %192 = vmatprep.subr.mxu0 0.0
  %193 = vmatpush2.msra.mxu0 0.0
  %194 = vmatprep.subr.mxu0 0.0
  %195 = vmatpush2.msra.mxu0 0.0
  %196 = vmatprep.subr.mxu0 0.0
  %197 = vmatpush2.msra.mxu0 0.0
  %198 = vmatprep.subr.mxu0 0.0
  %199 = vmatpush2.msra.mxu0 0.0
  %200 = vmatprep.subr.mxu0 0.0
  %201 = vmatpush2.msra.mxu0 0.0
  %202 = vmatprep.subr.mxu0 0.0
  %203 = vmatpush2.msra.mxu0 0.0
  %204 = vmatprep.subr.mxu0 0.0
  %205 = vmatpush2.msra.mxu0 0.0
  %206 = vmatprep.subr.mxu0 0.0
  %207 = vmatpush2.msra.mxu0 0.0
  %208 = vmatprep.subr.mxu0 0.0
  %209 = vmatpush2.msra.mxu0 0.0
  %210 = vmatprep.subr.mxu0 0.0
  %211 = vmatpush2.msra.mxu0 0.0
  %212 = vmatprep.subr.mxu0 0.0
  %213 = vmatpush2.msra.mxu0 0.0
  %214 = vmatprep.subr.mxu0 0.0
  %215 = vmatpush2.msra.mxu0 0.0
  %216 = vmatprep.mubr.f32.mxu0 0.0
  %217 = vmatmul.mubr.f32.gmra.mxu0 %v113
  %v218 = vpop.f32.mrf.mxu0
  %v219 = vadd.f32 %v109, %v218
  %v220 = vpop.f32.mrf.mxu0
  %v221 = vadd.f32 %v109, %v220
  %222 = vdwg.mxu0
  %223 = vmatprep.subr.mxu0 0.0
  %224 = vmatpush1.msra.mxu0 0.0
  %225 = vmatprep.subr.mxu0 0.0
  %226 = vmatpush1.msra.mxu0 0.0
  %227 = vmatprep.subr.mxu0 0.0
  %228 = vmatpush1.msra.mxu0 0.0
  %229 = vmatprep.subr.mxu0 0.0
  %230 = vmatpush1.msra.mxu0 0.0
  %231 = vmatprep.subr.mxu0 0.0
  %232 = vmatpush1.msra.mxu0 0.0
  %233 = vmatprep.subr.mxu0 0.0
  %234 = vmatpush1.msra.mxu0 0.0
  %235 = vmatprep.subr.mxu0 0.0
  %236 = vmatpush1.msra.mxu0 0.0
  %237 = vmatprep.subr.mxu0 0.0
  %238 = vmatpush1.msra.mxu0 0.0
  %239 = vmatprep.subr.mxu0 0.0
  %240 = vmatpush1.msra.mxu0 0.0
  %241 = vmatprep.subr.mxu0 0.0
  %242 = vmatpush1.msra.mxu0 0.0
  %243 = vmatprep.subr.mxu0 0.0
  %244 = vmatpush1.msra.mxu0 0.0
  %245 = vmatprep.subr.mxu0 0.0
  %246 = vmatpush1.msra.mxu0 0.0
  %247 = vmatprep.subr.mxu0 %v126
  %248 = vmatpush1.msra.mxu0 %v123
  %249 = vmatprep.subr.mxu0 %v84
  %250 = vmatpush1.msra.mxu0 %v83
  %251 = vmatprep.subr.mxu0 %v72
  %252 = vmatpush1.msra.mxu0 %v71
  %253 = vmatprep.subr.mxu0 %v60
  %254 = vmatpush1.msra.mxu0 %v59
  %255 = vmatprep.subr.mxu0 0.0
  %256 = vmatpush2.msra.mxu0 0.0
  %257 = vmatprep.subr.mxu0 0.0
  %258 = vmatpush2.msra.mxu0 0.0
  %259 = vmatprep.subr.mxu0 0.0
  %260 = vmatpush2.msra.mxu0 0.0
  %261 = vmatprep.subr.mxu0 0.0
  %262 = vmatpush2.msra.mxu0 0.0
  %263 = vmatprep.subr.mxu0 0.0
  %264 = vmatpush2.msra.mxu0 0.0
  %265 = vmatprep.subr.mxu0 0.0
  %266 = vmatpush2.msra.mxu0 0.0
  %267 = vmatprep.subr.mxu0 0.0
  %268 = vmatpush2.msra.mxu0 0.0
  %269 = vmatprep.subr.mxu0 0.0
  %270 = vmatpush2.msra.mxu0 0.0
  %271 = vmatprep.subr.mxu0 0.0
  %272 = vmatpush2.msra.mxu0 0.0
  %273 = vmatprep.subr.mxu0 0.0
  %274 = vmatpush2.msra.mxu0 0.0
  %275 = vmatprep.subr.mxu0 0.0
  %276 = vmatpush2.msra.mxu0 0.0
  %277 = vmatprep.subr.mxu0 0.0
  %278 = vmatpush2.msra.mxu0 0.0
  %279 = vmatprep.subr.mxu0 0.0
  %280 = vmatpush2.msra.mxu0 0.0
  %281 = vmatprep.subr.mxu0 0.0
  %282 = vmatpush2.msra.mxu0 0.0
  %283 = vmatprep.subr.mxu0 0.0
  %284 = vmatpush2.msra.mxu0 0.0
  %285 = vmatprep.subr.mxu0 0.0
  %286 = vmatpush2.msra.mxu0 0.0
  %287 = vmatprep.mubr.f32.mxu0 0.0
  %288 = vmatmul.mubr.f32.gmra.mxu0 %v113
  %v289 = vpop.f32.mrf.mxu0
  %v290 = vadd.f32 %v109, %v289
  %v291 = vpop.f32.mrf.mxu0
  %v292 = vadd.f32 %v109, %v291
  %293 = vdwg.mxu0
  %294 = vmatprep.subr.mxu0 0.0
  %295 = vmatpush1.msra.mxu0 0.0
  %296 = vmatprep.subr.mxu0 0.0
  %297 = vmatpush1.msra.mxu0 0.0
  %298 = vmatprep.subr.mxu0 0.0
  %299 = vmatpush1.msra.mxu0 0.0
  %300 = vmatprep.subr.mxu0 0.0
  %301 = vmatpush1.msra.mxu0 0.0
  %302 = vmatprep.subr.mxu0 0.0
  %303 = vmatpush1.msra.mxu0 0.0
  %304 = vmatprep.subr.mxu0 0.0
  %305 = vmatpush1.msra.mxu0 0.0
  %306 = vmatprep.subr.mxu0 0.0
  %307 = vmatpush1.msra.mxu0 0.0
  %308 = vmatprep.subr.mxu0 0.0
  %309 = vmatpush1.msra.mxu0 0.0
  %310 = vmatprep.subr.mxu0 0.0
  %311 = vmatpush1.msra.mxu0 0.0
  %312 = vmatprep.subr.mxu0 0.0
  %313 = vmatpush1.msra.mxu0 0.0
  %314 = vmatprep.subr.mxu0 0.0
  %315 = vmatpush1.msra.mxu0 0.0
  %316 = vmatprep.subr.mxu0 0.0
  %317 = vmatpush1.msra.mxu0 0.0
  %318 = vmatprep.subr.mxu0 %v132
  %319 = vmatpush1.msra.mxu0 %v129
  %320 = vmatprep.subr.mxu0 %v86
  %321 = vmatpush1.msra.mxu0 %v85
  %322 = vmatprep.subr.mxu0 %v74
  %323 = vmatpush1.msra.mxu0 %v73
  %324 = vmatprep.subr.mxu0 %v62
  %325 = vmatpush1.msra.mxu0 %v61
  %326 = vmatprep.subr.mxu0 0.0
  %327 = vmatpush2.msra.mxu0 0.0
  %328 = vmatprep.subr.mxu0 0.0
  %329 = vmatpush2.msra.mxu0 0.0
  %330 = vmatprep.subr.mxu0 0.0
  %331 = vmatpush2.msra.mxu0 0.0
  %332 = vmatprep.subr.mxu0 0.0
  %333 = vmatpush2.msra.mxu0 0.0
  %334 = vmatprep.subr.mxu0 0.0
  %335 = vmatpush2.msra.mxu0 0.0
  %336 = vmatprep.subr.mxu0 0.0
  %337 = vmatpush2.msra.mxu0 0.0
  %338 = vmatprep.subr.mxu0 0.0
  %339 = vmatpush2.msra.mxu0 0.0
  %340 = vmatprep.subr.mxu0 0.0
  %341 = vmatpush2.msra.mxu0 0.0
  %342 = vmatprep.subr.mxu0 0.0
  %343 = vmatpush2.msra.mxu0 0.0
  %344 = vmatprep.subr.mxu0 0.0
  %345 = vmatpush2.msra.mxu0 0.0
  %346 = vmatprep.subr.mxu0 0.0
  %347 = vmatpush2.msra.mxu0 0.0
  %348 = vmatprep.subr.mxu0 0.0
  %349 = vmatpush2.msra.mxu0 0.0
  %350 = vmatprep.subr.mxu0 0.0
  %351 = vmatpush2.msra.mxu0 0.0
  %352 = vmatprep.subr.mxu0 0.0
  %353 = vmatpush2.msra.mxu0 0.0
  %354 = vmatprep.subr.mxu0 0.0
  %355 = vmatpush2.msra.mxu0 0.0
  %356 = vmatprep.subr.mxu0 0.0
  %357 = vmatpush2.msra.mxu0 0.0
  %358 = vmatprep.mubr.f32.mxu0 0.0
  %359 = vmatmul.mubr.f32.gmra.mxu0 %v113
  %v360 = vpop.f32.mrf.mxu0
  %v361 = vadd.f32 %v109, %v360
  %v362 = vpop.f32.mrf.mxu0
  %v363 = vadd.f32 %v109, %v362
  %364 = vdwg.mxu0
  %365 = vmatprep.subr.mxu0 0.0
  %366 = vmatpush1.msra.mxu0 0.0
  %367 = vmatprep.subr.mxu0 0.0
  %368 = vmatpush1.msra.mxu0 0.0
  %369 = vmatprep.subr.mxu0 0.0
  %370 = vmatpush1.msra.mxu0 0.0
  %371 = vmatprep.subr.mxu0 0.0
  %372 = vmatpush1.msra.mxu0 0.0
  %373 = vmatprep.subr.mxu0 0.0
  %374 = vmatpush1.msra.mxu0 0.0
  %375 = vmatprep.subr.mxu0 0.0
  %376 = vmatpush1.msra.mxu0 0.0
  %377 = vmatprep.subr.mxu0 0.0
  %378 = vmatpush1.msra.mxu0 0.0
  %379 = vmatprep.subr.mxu0 0.0
  %380 = vmatpush1.msra.mxu0 0.0
  %381 = vmatprep.subr.mxu0 0.0
  %382 = vmatpush1.msra.mxu0 0.0
  %383 = vmatprep.subr.mxu0 0.0
  %384 = vmatpush1.msra.mxu0 0.0
  %385 = vmatprep.subr.mxu0 0.0
  %386 = vmatpush1.msra.mxu0 0.0
  %387 = vmatprep.subr.mxu0 0.0
  %388 = vmatpush1.msra.mxu0 0.0
  %389 = vmatprep.subr.mxu0 %v138
  %390 = vmatpush1.msra.mxu0 %v135
  %391 = vmatprep.subr.mxu0 %v88
  %392 = vmatpush1.msra.mxu0 %v87
  %393 = vmatprep.subr.mxu0 %v76
  %394 = vmatpush1.msra.mxu0 %v75
  %395 = vmatprep.subr.mxu0 %v64
  %396 = vmatpush1.msra.mxu0 %v63
  %397 = vmatprep.subr.mxu0 0.0
  %398 = vmatpush2.msra.mxu0 0.0
  %399 = vmatprep.subr.mxu0 0.0
  %400 = vmatpush2.msra.mxu0 0.0
  %401 = vmatprep.subr.mxu0 0.0
  %402 = vmatpush2.msra.mxu0 0.0
  %403 = vmatprep.subr.mxu0 0.0
  %404 = vmatpush2.msra.mxu0 0.0
  %405 = vmatprep.subr.mxu0 0.0
  %406 = vmatpush2.msra.mxu0 0.0
  %407 = vmatprep.subr.mxu0 0.0
  %408 = vmatpush2.msra.mxu0 0.0
  %409 = vmatprep.subr.mxu0 0.0
  %410 = vmatpush2.msra.mxu0 0.0
  %411 = vmatprep.subr.mxu0 0.0
  %412 = vmatpush2.msra.mxu0 0.0
  %413 = vmatprep.subr.mxu0 0.0
  %414 = vmatpush2.msra.mxu0 0.0
  %415 = vmatprep.subr.mxu0 0.0
  %416 = vmatpush2.msra.mxu0 0.0
  %417 = vmatprep.subr.mxu0 0.0
  %418 = vmatpush2.msra.mxu0 0.0
  %419 = vmatprep.subr.mxu0 0.0
  %420 = vmatpush2.msra.mxu0 0.0
  %421 = vmatprep.subr.mxu0 0.0
  %422 = vmatpush2.msra.mxu0 0.0
  %423 = vmatprep.subr.mxu0 0.0
  %424 = vmatpush2.msra.mxu0 0.0
  %425 = vmatprep.subr.mxu0 0.0
  %426 = vmatpush2.msra.mxu0 0.0
  %427 = vmatprep.subr.mxu0 0.0
  %428 = vmatpush2.msra.mxu0 0.0
  %429 = vmatprep.mubr.f32.mxu0 0.0
  %430 = vmatmul.mubr.f32.gmra.mxu0 %v113
  %v431 = vpop.f32.mrf.mxu0
  %v432 = vadd.f32 %v109, %v431
  %v433 = vpop.f32.mrf.mxu0
  %v434 = vadd.f32 %v109, %v433
  %435 = vdwg.mxu0
  %436 = vmatprep.subr.mxu0 0.0
  %437 = vmatpush1.msra.mxu0 0.0
  %438 = vmatprep.subr.mxu0 0.0
  %439 = vmatpush1.msra.mxu0 0.0
  %440 = vmatprep.subr.mxu0 0.0
  %441 = vmatpush1.msra.mxu0 0.0
  %442 = vmatprep.subr.mxu0 0.0
  %443 = vmatpush1.msra.mxu0 0.0
  %444 = vmatprep.subr.mxu0 0.0
  %445 = vmatpush1.msra.mxu0 0.0
  %446 = vmatprep.subr.mxu0 0.0
  %447 = vmatpush1.msra.mxu0 0.0
  %448 = vmatprep.subr.mxu0 0.0
  %449 = vmatpush1.msra.mxu0 0.0
  %450 = vmatprep.subr.mxu0 0.0
  %451 = vmatpush1.msra.mxu0 0.0
  %452 = vmatprep.subr.mxu0 0.0
  %453 = vmatpush1.msra.mxu0 0.0
  %454 = vmatprep.subr.mxu0 0.0
  %455 = vmatpush1.msra.mxu0 0.0
  %456 = vmatprep.subr.mxu0 0.0
  %457 = vmatpush1.msra.mxu0 0.0
  %458 = vmatprep.subr.mxu0 0.0
  %459 = vmatpush1.msra.mxu0 0.0
  %460 = vmatprep.subr.mxu0 %v144
  %461 = vmatpush1.msra.mxu0 %v141
  %462 = vmatprep.subr.mxu0 %v90
  %463 = vmatpush1.msra.mxu0 %v89
  %464 = vmatprep.subr.mxu0 %v78
  %465 = vmatpush1.msra.mxu0 %v77
  %466 = vmatprep.subr.mxu0 %v66
  %467 = vmatpush1.msra.mxu0 %v65
  %468 = vmatprep.subr.mxu0 0.0
  %469 = vmatpush2.msra.mxu0 0.0
  %470 = vmatprep.subr.mxu0 0.0
  %471 = vmatpush2.msra.mxu0 0.0
  %472 = vmatprep.subr.mxu0 0.0
  %473 = vmatpush2.msra.mxu0 0.0
  %474 = vmatprep.subr.mxu0 0.0
  %475 = vmatpush2.msra.mxu0 0.0
  %476 = vmatprep.subr.mxu0 0.0
  %477 = vmatpush2.msra.mxu0 0.0
  %478 = vmatprep.subr.mxu0 0.0
  %479 = vmatpush2.msra.mxu0 0.0
  %480 = vmatprep.subr.mxu0 0.0
  %481 = vmatpush2.msra.mxu0 0.0
  %482 = vmatprep.subr.mxu0 0.0
  %483 = vmatpush2.msra.mxu0 0.0
  %484 = vmatprep.subr.mxu0 0.0
  %485 = vmatpush2.msra.mxu0 0.0
  %486 = vmatprep.subr.mxu0 0.0
  %487 = vmatpush2.msra.mxu0 0.0
  %488 = vmatprep.subr.mxu0 0.0
  %489 = vmatpush2.msra.mxu0 0.0
  %490 = vmatprep.subr.mxu0 0.0
  %491 = vmatpush2.msra.mxu0 0.0
  %492 = vmatprep.subr.mxu0 0.0
  %493 = vmatpush2.msra.mxu0 0.0
  %494 = vmatprep.subr.mxu0 0.0
  %495 = vmatpush2.msra.mxu0 0.0
  %496 = vmatprep.subr.mxu0 0.0
  %497 = vmatpush2.msra.mxu0 0.0
  %498 = vmatprep.subr.mxu0 0.0
  %499 = vmatpush2.msra.mxu0 0.0
  %500 = vmatprep.mubr.f32.mxu0 0.0
  %501 = vmatmul.mubr.f32.gmra.mxu0 %v113
  %v502 = vpop.f32.mrf.mxu0
  %v503 = vadd.f32 %v109, %v502
  %v504 = vpop.f32.mrf.mxu0
  %v505 = vadd.f32 %v109, %v504
  %506 = vdwg.mxu0
  %507 = vmatprep.subr.mxu0 0.0
  %508 = vmatpush1.msra.mxu0 0.0
  %509 = vmatprep.subr.mxu0 0.0
  %510 = vmatpush1.msra.mxu0 0.0
  %511 = vmatprep.subr.mxu0 0.0
  %512 = vmatpush1.msra.mxu0 0.0
  %513 = vmatprep.subr.mxu0 0.0
  %514 = vmatpush1.msra.mxu0 0.0
  %515 = vmatprep.subr.mxu0 0.0
  %516 = vmatpush1.msra.mxu0 0.0
  %517 = vmatprep.subr.mxu0 0.0
  %518 = vmatpush1.msra.mxu0 0.0
  %519 = vmatprep.subr.mxu0 0.0
  %520 = vmatpush1.msra.mxu0 0.0
  %521 = vmatprep.subr.mxu0 0.0
  %522 = vmatpush1.msra.mxu0 0.0
  %523 = vmatprep.subr.mxu0 0.0
  %524 = vmatpush1.msra.mxu0 0.0
  %525 = vmatprep.subr.mxu0 0.0
  %526 = vmatpush1.msra.mxu0 0.0
  %527 = vmatprep.subr.mxu0 0.0
  %528 = vmatpush1.msra.mxu0 0.0
  %529 = vmatprep.subr.mxu0 0.0
  %530 = vmatpush1.msra.mxu0 0.0
  %531 = vmatprep.subr.mxu0 %v150
  %532 = vmatpush1.msra.mxu0 %v147
  %533 = vmatprep.subr.mxu0 %v92
  %534 = vmatpush1.msra.mxu0 %v91
  %535 = vmatprep.subr.mxu0 %v80
  %536 = vmatpush1.msra.mxu0 %v79
  %537 = vmatprep.subr.mxu0 %v68
  %538 = vmatpush1.msra.mxu0 %v67
  %539 = vmatprep.subr.mxu0 0.0
  %540 = vmatpush2.msra.mxu0 0.0
  %541 = vmatprep.subr.mxu0 0.0
  %542 = vmatpush2.msra.mxu0 0.0
  %543 = vmatprep.subr.mxu0 0.0
  %544 = vmatpush2.msra.mxu0 0.0
  %545 = vmatprep.subr.mxu0 0.0
  %546 = vmatpush2.msra.mxu0 0.0
  %547 = vmatprep.subr.mxu0 0.0
  %548 = vmatpush2.msra.mxu0 0.0
  %549 = vmatprep.subr.mxu0 0.0
  %550 = vmatpush2.msra.mxu0 0.0
  %551 = vmatprep.subr.mxu0 0.0
  %552 = vmatpush2.msra.mxu0 0.0
  %553 = vmatprep.subr.mxu0 0.0
  %554 = vmatpush2.msra.mxu0 0.0
  %555 = vmatprep.subr.mxu0 0.0
  %556 = vmatpush2.msra.mxu0 0.0
  %557 = vmatprep.subr.mxu0 0.0
  %558 = vmatpush2.msra.mxu0 0.0
  %559 = vmatprep.subr.mxu0 0.0
  %560 = vmatpush2.msra.mxu0 0.0
  %561 = vmatprep.subr.mxu0 0.0
  %562 = vmatpush2.msra.mxu0 0.0
  %563 = vmatprep.subr.mxu0 0.0
  %564 = vmatpush2.msra.mxu0 0.0
  %565 = vmatprep.subr.mxu0 0.0
  %566 = vmatpush2.msra.mxu0 0.0
  %567 = vmatprep.subr.mxu0 0.0
  %568 = vmatpush2.msra.mxu0 0.0
  %569 = vmatprep.subr.mxu0 0.0
  %570 = vmatpush2.msra.mxu0 0.0
  %571 = vmatprep.mubr.f32.mxu0 0.0
  %572 = vmatmul.mubr.f32.gmra.mxu0 %v113
  %v573 = vpop.f32.mrf.mxu0
  %v574 = vadd.f32 %v109, %v573
  %v575 = vpop.f32.mrf.mxu0
  %v576 = vadd.f32 %v109, %v575
  %577 = vdwg.mxu0
  %v578 = vld [vmem:[%s1] sm:$0xff]
  %v579 = vld [vmem:[%s1 + $0x8] sm:$0xf]
  %v582 = vlaneseq
  %v583 = vshrl.u32 %v582, 7
  %v584 = vsub.s32 0, %v583
  %v585 = vrot.slane %v578, %v584
  %v586 = vlaneseq
  %v587 = vshrl.u32 %v586, 7
  %v588 = vsub.s32 1, %v587
  %v589 = vrot.slane %v578, %v588
  %v590 = vlaneseq
  %v591 = vshrl.u32 %v590, 7
  %v592 = vsub.s32 2, %v591
  %v593 = vrot.slane %v578, %v592
  %v594 = vlaneseq
  %v595 = vshrl.u32 %v594, 7
  %v596 = vsub.s32 3, %v595
  %v597 = vrot.slane %v578, %v596
  %v598 = vlaneseq
  %v599 = vshrl.u32 %v598, 7
  %v600 = vsub.s32 4, %v599
  %v601 = vrot.slane %v578, %v600
  %v602 = vlaneseq
  %v603 = vshrl.u32 %v602, 7
  %v604 = vsub.s32 5, %v603
  %v605 = vrot.slane %v578, %v604
  %v606 = vlaneseq
  %v607 = vshrl.u32 %v606, 7
  %v608 = vsub.s32 6, %v607
  %v609 = vrot.slane %v578, %v608
  %v610 = vlaneseq
  %v611 = vshrl.u32 %v610, 7
  %v612 = vsub.s32 7, %v611
  %v613 = vrot.slane %v578, %v612
  %v614 = vlaneseq
  %v615 = vshrl.u32 %v614, 7
  %v616 = vsub.s32 0, %v615
  %v617 = vrot.slane %v579, %v616
  %v618 = vlaneseq
  %v619 = vshrl.u32 %v618, 7
  %v620 = vsub.s32 1, %v619
  %v621 = vrot.slane %v579, %v620
  %v622 = vlaneseq
  %v623 = vshrl.u32 %v622, 7
  %v624 = vsub.s32 2, %v623
  %v625 = vrot.slane %v579, %v624
  %v626 = vlaneseq
  %v627 = vshrl.u32 %v626, 7
  %v628 = vsub.s32 3, %v627
  %v629 = vrot.slane %v579, %v628
  %v642 = vadd.f32 %v219, %v585
  %v643 = vadd.f32 %v221, %v589
  %v644 = vadd.f32 %v290, %v593
  %v645 = vadd.f32 %v292, %v597
  %v646 = vadd.f32 %v361, %v601
  %v647 = vadd.f32 %v363, %v605
  %v648 = vadd.f32 %v432, %v609
  %v649 = vadd.f32 %v434, %v613
  %v650 = vadd.f32 %v503, %v617
  %v651 = vadd.f32 %v505, %v621
  %v652 = vadd.f32 %v574, %v625
  %v653 = vadd.f32 %v576, %v629
  %v654 = vtanh.pop %v642
  %v655 = vtanh.pop %v643
  %v656 = vtanh.pop %v644
  %v657 = vtanh.pop %v645
  %v658 = vtanh.pop %v646
  %v659 = vtanh.pop %v647
  %v660 = vtanh.pop %v648
  %v661 = vtanh.pop %v649
  %v662 = vtanh.pop %v650
  %v663 = vtanh.pop %v651
  %v664 = vtanh.pop %v652
  %v665 = vtanh.pop %v653
  %v666 = vmax.f32 %v654, %v657
  %v667 = vmax.f32 %v655, %v658
  %v668 = vmax.f32 %v656, %v659
  %v669 = vmax.f32 %v660, %v663
  %v670 = vmax.f32 %v661, %v664
  %v671 = vmax.f32 %v662, %v665
  %v672 = vmax.f32 %v666, %v669
  %v673 = vmax.f32 %v667, %v670
  %v674 = vmax.f32 %v668, %v671
  %675 = vst [vmem:[%s15] sm:$0x3f] %v672
  %676 = vst [vmem:[%s15 + $0x8] sm:$0x3f] %v673
  %677 = vst [vmem:[%s15 + $0x10] sm:$0x3f] %v674
  %v678 = vld [vmem:[%s4] sm:$0xff]
  %v679 = vld [vmem:[%s4 + $0x8] sm:$0x3]
  %v682 = vcombine.high %v678, %v678
  %v684 = vunpack.c.l.s4 1983009808
  %v685 = vunpack.c.0.s8 %v684
  %v686 = vlaneseq
  %v687 = vshrl.u32 %v686, 7
  %v688 = vsub.s32 %v685, %v687
  %v689 = vrot.slane %v678, %v688
  %v691 = vunpack.c.l.s4 1983009808
  %v692 = vunpack.c.0.s8 %v691
  %v693 = vlaneseq
  %v694 = vshrl.u32 %v693, 7
  %v695 = vsub.s32 %v692, %v694
  %v696 = vrot.slane %v682, %v695
  %v697 = vcombine.high %v689, %v689
  %v698 = vcombine.high %v696, %v696
  %v700 = vunpack.c.l.s4 1983009808
  %v701 = vunpack.c.0.s8 %v700
  %v702 = vlaneseq
  %v703 = vshrl.u32 %v702, 7
  %v704 = vsub.s32 %v701, %v703
  %v705 = vrot.slane %v679, %v704
  %v711 = vpack.c.bf16 %v689, %v689
  %v712 = vpack.c.bf16 %v697, %v697
  %v713 = vpack.c.bf16 %v696, %v696
  %v714 = vpack.c.bf16 %v698, %v698
  %v715 = vpack.c.bf16 %v705, %v705
  %v716 = vld [vmem:[%s5] sm:$0xff]
  %v717 = vld [vmem:[%s5 + $0x8] sm:$0xff]
  %v718 = vld [vmem:[%s5 + $0x10] sm:$0xff]
  %v719 = vld [vmem:[%s5 + $0x18] sm:$0xff]
  %v720 = vld [vmem:[%s5 + $0x20] sm:$0xff]
  %v721 = vld [vmem:[%s5 + $0x28] sm:$0xff]
  %v722 = vld [vmem:[%s5 + $0x30] sm:$0xff]
  %v723 = vld [vmem:[%s5 + $0x38] sm:$0xff]
  %v724 = vld [vmem:[%s5 + $0x40] sm:$0xf]
  %v725 = vld [vmem:[%s5 + $0x44] sm:$0xff]
  %v726 = vld [vmem:[%s5 + $0x4c] sm:$0xff]
  %v727 = vld [vmem:[%s5 + $0x54] sm:$0xff]
  %v728 = vld [vmem:[%s5 + $0x5c] sm:$0xff]
  %v729 = vld [vmem:[%s5 + $0x64] sm:$0xff]
  %v730 = vld [vmem:[%s5 + $0x6c] sm:$0xff]
  %v731 = vld [vmem:[%s5 + $0x74] sm:$0xff]
  %v732 = vld [vmem:[%s5 + $0x7c] sm:$0xff]
  %v733 = vld [vmem:[%s5 + $0x84] sm:$0xf]
  %v734 = vld [vmem:[%s5 + $0x88] sm:$0xff]
  %v735 = vld [vmem:[%s5 + $0x90] sm:$0xff]
  %v736 = vld [vmem:[%s5 + $0x98] sm:$0xff]
  %v737 = vld [vmem:[%s5 + $0xa0] sm:$0xff]
  %v738 = vld [vmem:[%s5 + $0xa8] sm:$0xff]
  %v739 = vld [vmem:[%s5 + $0xb0] sm:$0xff]
  %v740 = vld [vmem:[%s5 + $0xb8] sm:$0xff]
  %v741 = vld [vmem:[%s5 + $0xc0] sm:$0xff]
  %v742 = vld [vmem:[%s5 + $0xc8] sm:$0xf]
  %v743 = vld [vmem:[%s5 + $0xcc] sm:$0xff]
  %v744 = vld [vmem:[%s5 + $0xd4] sm:$0xff]
  %v745 = vld [vmem:[%s5 + $0xdc] sm:$0xff]
  %v746 = vld [vmem:[%s5 + $0xe4] sm:$0xff]
  %v747 = vld [vmem:[%s5 + $0xec] sm:$0xff]
  %v748 = vld [vmem:[%s5 + $0xf4] sm:$0xff]
  %v749 = vld [vmem:[%s5 + $0xfc] sm:$0xff]
  %v750 = vld [vmem:[%s5 + $0x104] sm:$0xff]
  %v751 = vld [vmem:[%s5 + $0x10c] sm:$0xf]
  %v752 = vld [vmem:[%s5 + $0x110] sm:$0xff]
  %v753 = vld [vmem:[%s5 + $0x118] sm:$0xff]
  %v754 = vld [vmem:[%s5 + $0x120] sm:$0xff]
  %v755 = vld [vmem:[%s5 + $0x128] sm:$0xff]
  %v756 = vld [vmem:[%s5 + $0x130] sm:$0xff]
  %v757 = vld [vmem:[%s5 + $0x138] sm:$0xff]
  %v758 = vld [vmem:[%s5 + $0x140] sm:$0xff]
  %v759 = vld [vmem:[%s5 + $0x148] sm:$0xff]
  %v760 = vld [vmem:[%s5 + $0x150] sm:$0xf]
  %v761 = vld [vmem:[%s5 + $0x154] sm:$0xff]
  %v762 = vld [vmem:[%s5 + $0x15c] sm:$0xff]
  %v763 = vld [vmem:[%s5 + $0x164] sm:$0xff]
  %v764 = vld [vmem:[%s5 + $0x16c] sm:$0xff]
  %v765 = vld [vmem:[%s5 + $0x174] sm:$0xff]
  %v766 = vld [vmem:[%s5 + $0x17c] sm:$0xff]
  %v767 = vld [vmem:[%s5 + $0x184] sm:$0xff]
  %v768 = vld [vmem:[%s5 + $0x18c] sm:$0xff]
  %v769 = vld [vmem:[%s5 + $0x194] sm:$0xf]
  %v770 = vld [vmem:[%s5 + $0x198] sm:$0xff]
  %v771 = vld [vmem:[%s5 + $0x1a0] sm:$0xff]
  %v772 = vld [vmem:[%s5 + $0x1a8] sm:$0xff]
  %v773 = vld [vmem:[%s5 + $0x1b0] sm:$0xff]
  %v774 = vld [vmem:[%s5 + $0x1b8] sm:$0xff]
  %v775 = vld [vmem:[%s5 + $0x1c0] sm:$0xff]
  %v776 = vld [vmem:[%s5 + $0x1c8] sm:$0xff]
  %v777 = vld [vmem:[%s5 + $0x1d0] sm:$0xff]
  %v778 = vld [vmem:[%s5 + $0x1d8] sm:$0xf]
  %v779 = vld [vmem:[%s5 + $0x1dc] sm:$0xff]
  %v780 = vld [vmem:[%s5 + $0x1e4] sm:$0xff]
  %v781 = vld [vmem:[%s5 + $0x1ec] sm:$0xff]
  %v782 = vld [vmem:[%s5 + $0x1f4] sm:$0xff]
  %v783 = vld [vmem:[%s5 + $0x1fc] sm:$0xff]
  %v784 = vld [vmem:[%s5 + $0x204] sm:$0xff]
  %v785 = vld [vmem:[%s5 + $0x20c] sm:$0xff]
  %v786 = vld [vmem:[%s5 + $0x214] sm:$0xff]
  %v787 = vld [vmem:[%s5 + $0x21c] sm:$0xf]
  %v788 = vld [vmem:[%s5 + $0x220] sm:$0xff]
  %v789 = vld [vmem:[%s5 + $0x228] sm:$0xff]
  %v790 = vld [vmem:[%s5 + $0x230] sm:$0xff]
  %v791 = vld [vmem:[%s5 + $0x238] sm:$0xff]
  %v792 = vld [vmem:[%s5 + $0x240] sm:$0xff]
  %v793 = vld [vmem:[%s5 + $0x248] sm:$0xff]
  %v794 = vld [vmem:[%s5 + $0x250] sm:$0xff]
  %v795 = vld [vmem:[%s5 + $0x258] sm:$0xff]
  %v796 = vld [vmem:[%s5 + $0x260] sm:$0xf]
  %v797 = vld [vmem:[%s5 + $0x264] sm:$0xff]
  %v798 = vld [vmem:[%s5 + $0x26c] sm:$0xff]
  %v799 = vld [vmem:[%s5 + $0x274] sm:$0xff]
  %v800 = vld [vmem:[%s5 + $0x27c] sm:$0xff]
  %v801 = vld [vmem:[%s5 + $0x284] sm:$0xff]
  %v802 = vld [vmem:[%s5 + $0x28c] sm:$0xff]
  %v803 = vld [vmem:[%s5 + $0x294] sm:$0xff]
  %v804 = vld [vmem:[%s5 + $0x29c] sm:$0xff]
  %v805 = vld [vmem:[%s5 + $0x2a4] sm:$0xf]
  %v806 = vld [vmem:[%s5 + $0x2a8] sm:$0xff]
  %v807 = vld [vmem:[%s5 + $0x2b0] sm:$0xff]
  %v808 = vld [vmem:[%s5 + $0x2b8] sm:$0xff]
  %v809 = vld [vmem:[%s5 + $0x2c0] sm:$0xff]
  %v810 = vld [vmem:[%s5 + $0x2c8] sm:$0xff]
  %v811 = vld [vmem:[%s5 + $0x2d0] sm:$0xff]
  %v812 = vld [vmem:[%s5 + $0x2d8] sm:$0xff]
  %v813 = vld [vmem:[%s5 + $0x2e0] sm:$0xff]
  %v814 = vld [vmem:[%s5 + $0x2e8] sm:$0xf]
  %v815 = vld [vmem:[%s5 + $0x2ec] sm:$0xff]
  %v816 = vld [vmem:[%s5 + $0x2f4] sm:$0xff]
  %v817 = vld [vmem:[%s5 + $0x2fc] sm:$0xff]
  %v818 = vld [vmem:[%s5 + $0x304] sm:$0xff]
  %v819 = vld [vmem:[%s5 + $0x30c] sm:$0xff]
  %v820 = vld [vmem:[%s5 + $0x314] sm:$0xff]
  %v821 = vld [vmem:[%s5 + $0x31c] sm:$0xff]
  %v822 = vld [vmem:[%s5 + $0x324] sm:$0xff]
  %v823 = vld [vmem:[%s5 + $0x32c] sm:$0xf]
  %v824 = vld [vmem:[%s5 + $0x330] sm:$0xff]
  %v825 = vld [vmem:[%s5 + $0x338] sm:$0xff]
  %v826 = vld [vmem:[%s5 + $0x340] sm:$0xff]
  %v827 = vld [vmem:[%s5 + $0x348] sm:$0xff]
  %v828 = vld [vmem:[%s5 + $0x350] sm:$0xff]
  %v829 = vld [vmem:[%s5 + $0x358] sm:$0xff]
  %v830 = vld [vmem:[%s5 + $0x360] sm:$0xff]
  %v831 = vld [vmem:[%s5 + $0x368] sm:$0xff]
  %v832 = vld [vmem:[%s5 + $0x370] sm:$0xf]
  %v833 = vld [vmem:[%s5 + $0x374] sm:$0xff]
  %v834 = vld [vmem:[%s5 + $0x37c] sm:$0xff]
  %v835 = vld [vmem:[%s5 + $0x384] sm:$0xff]
  %v836 = vld [vmem:[%s5 + $0x38c] sm:$0xff]
  %v837 = vld [vmem:[%s5 + $0x394] sm:$0xff]
  %v838 = vld [vmem:[%s5 + $0x39c] sm:$0xff]
  %v839 = vld [vmem:[%s5 + $0x3a4] sm:$0xff]
  %v840 = vld [vmem:[%s5 + $0x3ac] sm:$0xff]
  %v841 = vld [vmem:[%s5 + $0x3b4] sm:$0xf]
  %v842 = vld [vmem:[%s5 + $0x3b8] sm:$0xff]
  %v843 = vld [vmem:[%s5 + $0x3c0] sm:$0xff]
  %v844 = vld [vmem:[%s5 + $0x3c8] sm:$0xff]
  %v845 = vld [vmem:[%s5 + $0x3d0] sm:$0xff]
  %v846 = vld [vmem:[%s5 + $0x3d8] sm:$0xff]
  %v847 = vld [vmem:[%s5 + $0x3e0] sm:$0xff]
  %v848 = vld [vmem:[%s5 + $0x3e8] sm:$0xff]
  %v849 = vld [vmem:[%s5 + $0x3f0] sm:$0xff]
  %v850 = vld [vmem:[%s5 + $0x3f8] sm:$0xf]
  %v851 = vld [vmem:[%s5 + $0x3fc] sm:$0xff]
  %v852 = vld [vmem:[%s5 + $0x404] sm:$0xff]
  %v853 = vld [vmem:[%s5 + $0x40c] sm:$0xff]
  %v854 = vld [vmem:[%s5 + $0x414] sm:$0xff]
  %v855 = vld [vmem:[%s5 + $0x41c] sm:$0xff]
  %v856 = vld [vmem:[%s5 + $0x424] sm:$0xff]
  %v857 = vld [vmem:[%s5 + $0x42c] sm:$0xff]
  %v858 = vld [vmem:[%s5 + $0x434] sm:$0xff]
  %v859 = vld [vmem:[%s5 + $0x43c] sm:$0xf]
  %v860 = vld [vmem:[%s5 + $0x440] sm:$0xff]
  %v861 = vld [vmem:[%s5 + $0x448] sm:$0xff]
  %v862 = vld [vmem:[%s5 + $0x450] sm:$0xff]
  %v863 = vld [vmem:[%s5 + $0x458] sm:$0xff]
  %v864 = vld [vmem:[%s5 + $0x460] sm:$0xff]
  %v865 = vld [vmem:[%s5 + $0x468] sm:$0xff]
  %v866 = vld [vmem:[%s5 + $0x470] sm:$0xff]
  %v867 = vld [vmem:[%s5 + $0x478] sm:$0xff]
  %v868 = vld [vmem:[%s5 + $0x480] sm:$0xf]
  %v869 = vld [vmem:[%s5 + $0x484] sm:$0xff]
  %v870 = vld [vmem:[%s5 + $0x48c] sm:$0xff]
  %v871 = vld [vmem:[%s5 + $0x494] sm:$0xff]
  %v872 = vld [vmem:[%s5 + $0x49c] sm:$0xff]
  %v873 = vld [vmem:[%s5 + $0x4a4] sm:$0xff]
  %v874 = vld [vmem:[%s5 + $0x4ac] sm:$0xff]
  %v875 = vld [vmem:[%s5 + $0x4b4] sm:$0xff]
  %v876 = vld [vmem:[%s5 + $0x4bc] sm:$0xff]
  %v877 = vld [vmem:[%s5 + $0x4c4] sm:$0xf]
  %v878 = vld [vmem:[%s5 + $0x4c8] sm:$0xff]
  %v879 = vld [vmem:[%s5 + $0x4d0] sm:$0xff]
  %v880 = vld [vmem:[%s5 + $0x4d8] sm:$0xff]
  %v881 = vld [vmem:[%s5 + $0x4e0] sm:$0xff]
  %v882 = vld [vmem:[%s5 + $0x4e8] sm:$0xff]
  %v883 = vld [vmem:[%s5 + $0x4f0] sm:$0xff]
  %v884 = vld [vmem:[%s5 + $0x4f8] sm:$0xff]
  %v885 = vld [vmem:[%s5 + $0x500] sm:$0xff]
  %v886 = vld [vmem:[%s5 + $0x508] sm:$0xf]
  %v887 = vld [vmem:[%s5 + $0x50c] sm:$0xff]
  %v888 = vld [vmem:[%s5 + $0x514] sm:$0xff]
  %v889 = vld [vmem:[%s5 + $0x51c] sm:$0xff]
  %v890 = vld [vmem:[%s5 + $0x524] sm:$0xff]
  %v891 = vld [vmem:[%s5 + $0x52c] sm:$0xff]
  %v892 = vld [vmem:[%s5 + $0x534] sm:$0xff]
  %v893 = vld [vmem:[%s5 + $0x53c] sm:$0xff]
  %v894 = vld [vmem:[%s5 + $0x544] sm:$0xff]
  %v895 = vld [vmem:[%s5 + $0x54c] sm:$0xf]
  %v896 = vld [vmem:[%s5 + $0x550] sm:$0xff]
  %v897 = vld [vmem:[%s5 + $0x558] sm:$0xff]
  %v898 = vld [vmem:[%s5 + $0x560] sm:$0xff]
  %v899 = vld [vmem:[%s5 + $0x568] sm:$0xff]
  %v900 = vld [vmem:[%s5 + $0x570] sm:$0xff]
  %v901 = vld [vmem:[%s5 + $0x578] sm:$0xff]
  %v902 = vld [vmem:[%s5 + $0x580] sm:$0xff]
  %v903 = vld [vmem:[%s5 + $0x588] sm:$0xff]
  %v904 = vld [vmem:[%s5 + $0x590] sm:$0xf]
  %v905 = vld [vmem:[%s5 + $0x594] sm:$0xff]
  %v906 = vld [vmem:[%s5 + $0x59c] sm:$0xff]
  %v907 = vld [vmem:[%s5 + $0x5a4] sm:$0xff]
  %v908 = vld [vmem:[%s5 + $0x5ac] sm:$0xff]
  %v909 = vld [vmem:[%s5 + $0x5b4] sm:$0xff]
  %v910 = vld [vmem:[%s5 + $0x5bc] sm:$0xff]
  %v911 = vld [vmem:[%s5 + $0x5c4] sm:$0xff]
  %v912 = vld [vmem:[%s5 + $0x5cc] sm:$0xff]
  %v913 = vld [vmem:[%s5 + $0x5d4] sm:$0xf]
  %v914 = vld [vmem:[%s5 + $0x5d8] sm:$0xff]
  %v915 = vld [vmem:[%s5 + $0x5e0] sm:$0xff]
  %v916 = vld [vmem:[%s5 + $0x5e8] sm:$0xff]
  %v917 = vld [vmem:[%s5 + $0x5f0] sm:$0xff]
  %v918 = vld [vmem:[%s5 + $0x5f8] sm:$0xff]
  %v919 = vld [vmem:[%s5 + $0x600] sm:$0xff]
  %v920 = vld [vmem:[%s5 + $0x608] sm:$0xff]
  %v921 = vld [vmem:[%s5 + $0x610] sm:$0xff]
  %v922 = vld [vmem:[%s5 + $0x618] sm:$0xf]
  %v923 = vld [vmem:[%s5 + $0x61c] sm:$0xff]
  %v924 = vld [vmem:[%s5 + $0x624] sm:$0xff]
  %v925 = vld [vmem:[%s5 + $0x62c] sm:$0xff]
  %v926 = vld [vmem:[%s5 + $0x634] sm:$0xff]
  %v927 = vld [vmem:[%s5 + $0x63c] sm:$0xff]
  %v928 = vld [vmem:[%s5 + $0x644] sm:$0xff]
  %v929 = vld [vmem:[%s5 + $0x64c] sm:$0xff]
  %v930 = vld [vmem:[%s5 + $0x654] sm:$0xff]
  %v931 = vld [vmem:[%s5 + $0x65c] sm:$0xf]
  %v932 = vld [vmem:[%s5 + $0x660] sm:$0xff]
  %v933 = vld [vmem:[%s5 + $0x668] sm:$0xff]
  %v934 = vld [vmem:[%s5 + $0x670] sm:$0xff]
  %v935 = vld [vmem:[%s5 + $0x678] sm:$0xff]
  %v936 = vld [vmem:[%s5 + $0x680] sm:$0xff]
  %v937 = vld [vmem:[%s5 + $0x688] sm:$0xff]
  %v938 = vld [vmem:[%s5 + $0x690] sm:$0xff]
  %v939 = vld [vmem:[%s5 + $0x698] sm:$0xff]
  %v940 = vld [vmem:[%s5 + $0x6a0] sm:$0xf]
  %v941 = vld [vmem:[%s5 + $0x6a4] sm:$0xff]
  %v942 = vld [vmem:[%s5 + $0x6ac] sm:$0xff]
  %v943 = vld [vmem:[%s5 + $0x6b4] sm:$0xff]
  %v944 = vld [vmem:[%s5 + $0x6bc] sm:$0xff]
  %v945 = vld [vmem:[%s5 + $0x6c4] sm:$0xff]
  %v946 = vld [vmem:[%s5 + $0x6cc] sm:$0xff]
  %v947 = vld [vmem:[%s5 + $0x6d4] sm:$0xff]
  %v948 = vld [vmem:[%s5 + $0x6dc] sm:$0xff]
  %v949 = vld [vmem:[%s5 + $0x6e4] sm:$0xf]
  %v950 = vld [vmem:[%s5 + $0x6e8] sm:$0xff]
  %v951 = vld [vmem:[%s5 + $0x6f0] sm:$0xff]
  %v952 = vld [vmem:[%s5 + $0x6f8] sm:$0xff]
  %v953 = vld [vmem:[%s5 + $0x700] sm:$0xff]
  %v954 = vld [vmem:[%s5 + $0x708] sm:$0xff]
  %v955 = vld [vmem:[%s5 + $0x710] sm:$0xff]
  %v956 = vld [vmem:[%s5 + $0x718] sm:$0xff]
  %v957 = vld [vmem:[%s5 + $0x720] sm:$0xff]
  %v958 = vld [vmem:[%s5 + $0x728] sm:$0xf]
  %v959 = vld [vmem:[%s5 + $0x72c] sm:$0xff]
  %v960 = vld [vmem:[%s5 + $0x734] sm:$0xff]
  %v961 = vld [vmem:[%s5 + $0x73c] sm:$0xff]
  %v962 = vld [vmem:[%s5 + $0x744] sm:$0xff]
  %v963 = vld [vmem:[%s5 + $0x74c] sm:$0xff]
  %v964 = vld [vmem:[%s5 + $0x754] sm:$0xff]
  %v965 = vld [vmem:[%s5 + $0x75c] sm:$0xff]
  %v966 = vld [vmem:[%s5 + $0x764] sm:$0xff]
  %v967 = vld [vmem:[%s5 + $0x76c] sm:$0xf]
  %v968 = vld [vmem:[%s5 + $0x770] sm:$0xff]
  %v969 = vld [vmem:[%s5 + $0x778] sm:$0xff]
  %v970 = vld [vmem:[%s5 + $0x780] sm:$0xff]
  %v971 = vld [vmem:[%s5 + $0x788] sm:$0xff]
  %v972 = vld [vmem:[%s5 + $0x790] sm:$0xff]
  %v973 = vld [vmem:[%s5 + $0x798] sm:$0xff]
  %v974 = vld [vmem:[%s5 + $0x7a0] sm:$0xff]
  %v975 = vld [vmem:[%s5 + $0x7a8] sm:$0xff]
  %v976 = vld [vmem:[%s5 + $0x7b0] sm:$0xf]
  %v977 = vld [vmem:[%s5 + $0x7b4] sm:$0xff]
  %v978 = vld [vmem:[%s5 + $0x7bc] sm:$0xff]
  %v979 = vld [vmem:[%s5 + $0x7c4] sm:$0xff]
  %v980 = vld [vmem:[%s5 + $0x7cc] sm:$0xff]
  %v981 = vld [vmem:[%s5 + $0x7d4] sm:$0xff]
  %v982 = vld [vmem:[%s5 + $0x7dc] sm:$0xff]
  %v983 = vld [vmem:[%s5 + $0x7e4] sm:$0xff]
  %v984 = vld [vmem:[%s5 + $0x7ec] sm:$0xff]
  %v985 = vld [vmem:[%s5 + $0x7f4] sm:$0xf]
  %v986 = vld [vmem:[%s5 + $0x7f8] sm:$0xff]
  %v987 = vld [vmem:[%s5 + $0x800] sm:$0xff]
  %v988 = vld [vmem:[%s5 + $0x808] sm:$0xff]
  %v989 = vld [vmem:[%s5 + $0x810] sm:$0xff]
  %v990 = vld [vmem:[%s5 + $0x818] sm:$0xff]
  %v991 = vld [vmem:[%s5 + $0x820] sm:$0xff]
  %v992 = vld [vmem:[%s5 + $0x828] sm:$0xff]
  %v993 = vld [vmem:[%s5 + $0x830] sm:$0xff]
  %v994 = vld [vmem:[%s5 + $0x838] sm:$0xf]
  %v995 = vld [vmem:[%s5 + $0x83c] sm:$0xff]
  %v996 = vld [vmem:[%s5 + $0x844] sm:$0xff]
  %v997 = vld [vmem:[%s5 + $0x84c] sm:$0xff]
  %v998 = vld [vmem:[%s5 + $0x854] sm:$0xff]
  %v999 = vld [vmem:[%s5 + $0x85c] sm:$0xff]
  %v1000 = vld [vmem:[%s5 + $0x864] sm:$0xff]
  %v1001 = vld [vmem:[%s5 + $0x86c] sm:$0xff]
  %v1002 = vld [vmem:[%s5 + $0x874] sm:$0xff]
  %v1003 = vld [vmem:[%s5 + $0x87c] sm:$0xf]
  %v1004 = vld [vmem:[%s5 + $0x880] sm:$0xff]
  %v1005 = vld [vmem:[%s5 + $0x888] sm:$0xff]
  %v1006 = vld [vmem:[%s5 + $0x890] sm:$0xff]
  %v1007 = vld [vmem:[%s5 + $0x898] sm:$0xff]
  %v1008 = vld [vmem:[%s5 + $0x8a0] sm:$0xff]
  %v1009 = vld [vmem:[%s5 + $0x8a8] sm:$0xff]
  %v1010 = vld [vmem:[%s5 + $0x8b0] sm:$0xff]
  %v1011 = vld [vmem:[%s5 + $0x8b8] sm:$0xff]
  %v1012 = vld [vmem:[%s5 + $0x8c0] sm:$0xf]
  %v1013 = vld [vmem:[%s5 + $0x8c4] sm:$0xff]
  %v1014 = vld [vmem:[%s5 + $0x8cc] sm:$0xff]
  %v1015 = vld [vmem:[%s5 + $0x8d4] sm:$0xff]
  %v1016 = vld [vmem:[%s5 + $0x8dc] sm:$0xff]
  %v1017 = vld [vmem:[%s5 + $0x8e4] sm:$0xff]
  %v1018 = vld [vmem:[%s5 + $0x8ec] sm:$0xff]
  %v1019 = vld [vmem:[%s5 + $0x8f4] sm:$0xff]
  %v1020 = vld [vmem:[%s5 + $0x8fc] sm:$0xff]
  %v1021 = vld [vmem:[%s5 + $0x904] sm:$0xf]
  %v1022 = vld [vmem:[%s5 + $0x908] sm:$0xff]
  %v1023 = vld [vmem:[%s5 + $0x910] sm:$0xff]
  %v1024 = vld [vmem:[%s5 + $0x918] sm:$0xff]
  %v1025 = vld [vmem:[%s5 + $0x920] sm:$0xff]
  %v1026 = vld [vmem:[%s5 + $0x928] sm:$0xff]
  %v1027 = vld [vmem:[%s5 + $0x930] sm:$0xff]
  %v1028 = vld [vmem:[%s5 + $0x938] sm:$0xff]
  %v1029 = vld [vmem:[%s5 + $0x940] sm:$0xff]
  %v1030 = vld [vmem:[%s5 + $0x948] sm:$0xf]
  %v1031 = vld [vmem:[%s5 + $0x94c] sm:$0xff]
  %v1032 = vld [vmem:[%s5 + $0x954] sm:$0xff]
  %v1033 = vld [vmem:[%s5 + $0x95c] sm:$0xff]
  %v1034 = vld [vmem:[%s5 + $0x964] sm:$0xff]
  %v1035 = vld [vmem:[%s5 + $0x96c] sm:$0xff]
  %v1036 = vld [vmem:[%s5 + $0x974] sm:$0xff]
  %v1037 = vld [vmem:[%s5 + $0x97c] sm:$0xff]
  %v1038 = vld [vmem:[%s5 + $0x984] sm:$0xff]
  %v1039 = vld [vmem:[%s5 + $0x98c] sm:$0xf]
  %v1040 = vld [vmem:[%s5 + $0x990] sm:$0xff]
  %v1041 = vld [vmem:[%s5 + $0x998] sm:$0xff]
  %v1042 = vld [vmem:[%s5 + $0x9a0] sm:$0xff]
  %v1043 = vld [vmem:[%s5 + $0x9a8] sm:$0xff]
  %v1044 = vld [vmem:[%s5 + $0x9b0] sm:$0xff]
  %v1045 = vld [vmem:[%s5 + $0x9b8] sm:$0xff]
  %v1046 = vld [vmem:[%s5 + $0x9c0] sm:$0xff]
  %v1047 = vld [vmem:[%s5 + $0x9c8] sm:$0xff]
  %v1048 = vld [vmem:[%s5 + $0x9d0] sm:$0xf]
  %v1049 = vld [vmem:[%s5 + $0x9d4] sm:$0xff]
  %v1050 = vld [vmem:[%s5 + $0x9dc] sm:$0xff]
  %v1051 = vld [vmem:[%s5 + $0x9e4] sm:$0xff]
  %v1052 = vld [vmem:[%s5 + $0x9ec] sm:$0xff]
  %v1053 = vld [vmem:[%s5 + $0x9f4] sm:$0xff]
  %v1054 = vld [vmem:[%s5 + $0x9fc] sm:$0xff]
  %v1055 = vld [vmem:[%s5 + $0xa04] sm:$0xff]
  %v1056 = vld [vmem:[%s5 + $0xa0c] sm:$0xff]
  %v1057 = vld [vmem:[%s5 + $0xa14] sm:$0xf]
  %v1058 = vld [vmem:[%s5 + $0xa18] sm:$0xff]
  %v1059 = vld [vmem:[%s5 + $0xa20] sm:$0xff]
  %v1060 = vld [vmem:[%s5 + $0xa28] sm:$0xff]
  %v1061 = vld [vmem:[%s5 + $0xa30] sm:$0xff]
  %v1062 = vld [vmem:[%s5 + $0xa38] sm:$0xff]
  %v1063 = vld [vmem:[%s5 + $0xa40] sm:$0xff]
  %v1064 = vld [vmem:[%s5 + $0xa48] sm:$0xff]
  %v1065 = vld [vmem:[%s5 + $0xa50] sm:$0xff]
  %v1066 = vld [vmem:[%s5 + $0xa58] sm:$0xf]
  %v1067 = vld [vmem:[%s5 + $0xa5c] sm:$0xff]
  %v1068 = vld [vmem:[%s5 + $0xa64] sm:$0xff]
  %v1069 = vld [vmem:[%s5 + $0xa6c] sm:$0xff]
  %v1070 = vld [vmem:[%s5 + $0xa74] sm:$0xff]
  %v1071 = vld [vmem:[%s5 + $0xa7c] sm:$0xff]
  %v1072 = vld [vmem:[%s5 + $0xa84] sm:$0xff]
  %v1073 = vld [vmem:[%s5 + $0xa8c] sm:$0xff]
  %v1074 = vld [vmem:[%s5 + $0xa94] sm:$0xff]
  %v1075 = vld [vmem:[%s5 + $0xa9c] sm:$0xf]
  %v1076 = vld [vmem:[%s5 + $0xaa0] sm:$0xff]
  %v1077 = vld [vmem:[%s5 + $0xaa8] sm:$0xff]
  %v1078 = vld [vmem:[%s5 + $0xab0] sm:$0xff]
  %v1079 = vld [vmem:[%s5 + $0xab8] sm:$0xff]
  %v1080 = vld [vmem:[%s5 + $0xac0] sm:$0xff]
  %v1081 = vld [vmem:[%s5 + $0xac8] sm:$0xff]
  %v1082 = vld [vmem:[%s5 + $0xad0] sm:$0xff]
  %v1083 = vld [vmem:[%s5 + $0xad8] sm:$0xff]
  %v1084 = vld [vmem:[%s5 + $0xae0] sm:$0xf]
  %v1085 = vld [vmem:[%s5 + $0xae4] sm:$0xff]
  %v1086 = vld [vmem:[%s5 + $0xaec] sm:$0xff]
  %v1087 = vld [vmem:[%s5 + $0xaf4] sm:$0xff]
  %v1088 = vld [vmem:[%s5 + $0xafc] sm:$0xff]
  %v1089 = vld [vmem:[%s5 + $0xb04] sm:$0xff]
  %v1090 = vld [vmem:[%s5 + $0xb0c] sm:$0xff]
  %v1091 = vld [vmem:[%s5 + $0xb14] sm:$0xff]
  %v1092 = vld [vmem:[%s5 + $0xb1c] sm:$0xff]
  %v1093 = vld [vmem:[%s5 + $0xb24] sm:$0xf]
  %v1094 = vld [vmem:[%s5 + $0xb28] sm:$0xff]
  %v1095 = vld [vmem:[%s5 + $0xb30] sm:$0xff]
  %v1096 = vld [vmem:[%s5 + $0xb38] sm:$0xff]
  %v1097 = vld [vmem:[%s5 + $0xb40] sm:$0xff]
  %v1098 = vld [vmem:[%s5 + $0xb48] sm:$0xff]
  %v1099 = vld [vmem:[%s5 + $0xb50] sm:$0xff]
  %v1100 = vld [vmem:[%s5 + $0xb58] sm:$0xff]
  %v1101 = vld [vmem:[%s5 + $0xb60] sm:$0xff]
  %v1102 = vld [vmem:[%s5 + $0xb68] sm:$0xf]
  %v1103 = vld [vmem:[%s5 + $0xb6c] sm:$0xff]
  %v1104 = vld [vmem:[%s5 + $0xb74] sm:$0xff]
  %v1105 = vld [vmem:[%s5 + $0xb7c] sm:$0xff]
  %v1106 = vld [vmem:[%s5 + $0xb84] sm:$0xff]
  %v1107 = vld [vmem:[%s5 + $0xb8c] sm:$0xff]
  %v1108 = vld [vmem:[%s5 + $0xb94] sm:$0xff]
  %v1109 = vld [vmem:[%s5 + $0xb9c] sm:$0xff]
  %v1110 = vld [vmem:[%s5 + $0xba4] sm:$0xff]
  %v1111 = vld [vmem:[%s5 + $0xbac] sm:$0xf]
  %v1112 = vld [vmem:[%s5 + $0xbb0] sm:$0xff]
  %v1113 = vld [vmem:[%s5 + $0xbb8] sm:$0xff]
  %v1114 = vld [vmem:[%s5 + $0xbc0] sm:$0xff]
  %v1115 = vld [vmem:[%s5 + $0xbc8] sm:$0xff]
  %v1116 = vld [vmem:[%s5 + $0xbd0] sm:$0xff]
  %v1117 = vld [vmem:[%s5 + $0xbd8] sm:$0xff]
  %v1118 = vld [vmem:[%s5 + $0xbe0] sm:$0xff]
  %v1119 = vld [vmem:[%s5 + $0xbe8] sm:$0xff]
  %v1120 = vld [vmem:[%s5 + $0xbf0] sm:$0xf]
  %v1121 = vld [vmem:[%s5 + $0xbf4] sm:$0xff]
  %v1122 = vld [vmem:[%s5 + $0xbfc] sm:$0xff]
  %v1123 = vld [vmem:[%s5 + $0xc04] sm:$0xff]
  %v1124 = vld [vmem:[%s5 + $0xc0c] sm:$0xff]
  %v1125 = vld [vmem:[%s5 + $0xc14] sm:$0xff]
  %v1126 = vld [vmem:[%s5 + $0xc1c] sm:$0xff]
  %v1127 = vld [vmem:[%s5 + $0xc24] sm:$0xff]
  %v1128 = vld [vmem:[%s5 + $0xc2c] sm:$0xff]
  %v1129 = vld [vmem:[%s5 + $0xc34] sm:$0xf]
  %v1130 = vld [vmem:[%s5 + $0xc38] sm:$0xff]
  %v1131 = vld [vmem:[%s5 + $0xc40] sm:$0xff]
  %v1132 = vld [vmem:[%s5 + $0xc48] sm:$0xff]
  %v1133 = vld [vmem:[%s5 + $0xc50] sm:$0xff]
  %v1134 = vld [vmem:[%s5 + $0xc58] sm:$0xff]
  %v1135 = vld [vmem:[%s5 + $0xc60] sm:$0xff]
  %v1136 = vld [vmem:[%s5 + $0xc68] sm:$0xff]
  %v1137 = vld [vmem:[%s5 + $0xc70] sm:$0xff]
  %v1138 = vld [vmem:[%s5 + $0xc78] sm:$0xf]
  %v1139 = vld [vmem:[%s5 + $0xc7c] sm:$0xff]
  %v1140 = vld [vmem:[%s5 + $0xc84] sm:$0xff]
  %v1141 = vld [vmem:[%s5 + $0xc8c] sm:$0xff]
  %v1142 = vld [vmem:[%s5 + $0xc94] sm:$0xff]
  %v1143 = vld [vmem:[%s5 + $0xc9c] sm:$0xff]
  %v1144 = vld [vmem:[%s5 + $0xca4] sm:$0xff]
  %v1145 = vld [vmem:[%s5 + $0xcac] sm:$0xff]
  %v1146 = vld [vmem:[%s5 + $0xcb4] sm:$0xff]
  %v1147 = vld [vmem:[%s5 + $0xcbc] sm:$0xf]
  %v1148 = vld [vmem:[%s5 + $0xcc0] sm:$0xff]
  %v1149 = vld [vmem:[%s5 + $0xcc8] sm:$0xff]
  %v1150 = vld [vmem:[%s5 + $0xcd0] sm:$0xff]
  %v1151 = vld [vmem:[%s5 + $0xcd8] sm:$0xff]
  %v1152 = vld [vmem:[%s5 + $0xce0] sm:$0xff]
  %v1153 = vld [vmem:[%s5 + $0xce8] sm:$0xff]
  %v1154 = vld [vmem:[%s5 + $0xcf0] sm:$0xff]
  %v1155 = vld [vmem:[%s5 + $0xcf8] sm:$0xff]
  %v1156 = vld [vmem:[%s5 + $0xd00] sm:$0xf]
  %v1157 = vld [vmem:[%s5 + $0xd04] sm:$0xff]
  %v1158 = vld [vmem:[%s5 + $0xd0c] sm:$0xff]
  %v1159 = vld [vmem:[%s5 + $0xd14] sm:$0xff]
  %v1160 = vld [vmem:[%s5 + $0xd1c] sm:$0xff]
  %v1161 = vld [vmem:[%s5 + $0xd24] sm:$0xff]
  %v1162 = vld [vmem:[%s5 + $0xd2c] sm:$0xff]
  %v1163 = vld [vmem:[%s5 + $0xd34] sm:$0xff]
  %v1164 = vld [vmem:[%s5 + $0xd3c] sm:$0xff]
  %v1165 = vld [vmem:[%s5 + $0xd44] sm:$0xf]
  %v1166 = vld [vmem:[%s5 + $0xd48] sm:$0xff]
  %v1167 = vld [vmem:[%s5 + $0xd50] sm:$0xff]
  %v1168 = vld [vmem:[%s5 + $0xd58] sm:$0xff]
  %v1169 = vld [vmem:[%s5 + $0xd60] sm:$0xff]
  %v1170 = vld [vmem:[%s5 + $0xd68] sm:$0xff]
  %v1171 = vld [vmem:[%s5 + $0xd70] sm:$0xff]
  %v1172 = vld [vmem:[%s5 + $0xd78] sm:$0xff]
  %v1173 = vld [vmem:[%s5 + $0xd80] sm:$0xff]
  %v1174 = vld [vmem:[%s5 + $0xd88] sm:$0xf]
  %v1175 = vld [vmem:[%s5 + $0xd8c] sm:$0xff]
  %v1176 = vld [vmem:[%s5 + $0xd94] sm:$0xff]
  %v1177 = vld [vmem:[%s5 + $0xd9c] sm:$0xff]
  %v1178 = vld [vmem:[%s5 + $0xda4] sm:$0xff]
  %v1179 = vld [vmem:[%s5 + $0xdac] sm:$0xff]
  %v1180 = vld [vmem:[%s5 + $0xdb4] sm:$0xff]
  %v1181 = vld [vmem:[%s5 + $0xdbc] sm:$0xff]
  %v1182 = vld [vmem:[%s5 + $0xdc4] sm:$0xff]
  %v1183 = vld [vmem:[%s5 + $0xdcc] sm:$0xf]
  %v1184 = vld [vmem:[%s5 + $0xdd0] sm:$0xff]
  %v1185 = vld [vmem:[%s5 + $0xdd8] sm:$0xff]
  %v1186 = vld [vmem:[%s5 + $0xde0] sm:$0xff]
  %v1187 = vld [vmem:[%s5 + $0xde8] sm:$0xff]
  %v1188 = vld [vmem:[%s5 + $0xdf0] sm:$0xff]
  %v1189 = vld [vmem:[%s5 + $0xdf8] sm:$0xff]
  %v1190 = vld [vmem:[%s5 + $0xe00] sm:$0xff]
  %v1191 = vld [vmem:[%s5 + $0xe08] sm:$0xff]
  %v1192 = vld [vmem:[%s5 + $0xe10] sm:$0xf]
  %v1193 = vld [vmem:[%s5 + $0xe14] sm:$0xff]
  %v1194 = vld [vmem:[%s5 + $0xe1c] sm:$0xff]
  %v1195 = vld [vmem:[%s5 + $0xe24] sm:$0xff]
  %v1196 = vld [vmem:[%s5 + $0xe2c] sm:$0xff]
  %v1197 = vld [vmem:[%s5 + $0xe34] sm:$0xff]
  %v1198 = vld [vmem:[%s5 + $0xe3c] sm:$0xff]
  %v1199 = vld [vmem:[%s5 + $0xe44] sm:$0xff]
  %v1200 = vld [vmem:[%s5 + $0xe4c] sm:$0xff]
  %v1201 = vld [vmem:[%s5 + $0xe54] sm:$0xf]
  %v1202 = vld [vmem:[%s5 + $0xe58] sm:$0xff]
  %v1203 = vld [vmem:[%s5 + $0xe60] sm:$0xff]
  %v1204 = vld [vmem:[%s5 + $0xe68] sm:$0xff]
  %v1205 = vld [vmem:[%s5 + $0xe70] sm:$0xff]
  %v1206 = vld [vmem:[%s5 + $0xe78] sm:$0xff]
  %v1207 = vld [vmem:[%s5 + $0xe80] sm:$0xff]
  %v1208 = vld [vmem:[%s5 + $0xe88] sm:$0xff]
  %v1209 = vld [vmem:[%s5 + $0xe90] sm:$0xff]
  %v1210 = vld [vmem:[%s5 + $0xe98] sm:$0xf]
  %v1211 = vld [vmem:[%s5 + $0xe9c] sm:$0xff]
  %v1212 = vld [vmem:[%s5 + $0xea4] sm:$0xff]
  %v1213 = vld [vmem:[%s5 + $0xeac] sm:$0xff]
  %v1214 = vld [vmem:[%s5 + $0xeb4] sm:$0xff]
  %v1215 = vld [vmem:[%s5 + $0xebc] sm:$0xff]
  %v1216 = vld [vmem:[%s5 + $0xec4] sm:$0xff]
  %v1217 = vld [vmem:[%s5 + $0xecc] sm:$0xff]
  %v1218 = vld [vmem:[%s5 + $0xed4] sm:$0xff]
  %v1219 = vld [vmem:[%s5 + $0xedc] sm:$0xf]
  %v1220 = vld [vmem:[%s5 + $0xee0] sm:$0xff]
  %v1221 = vld [vmem:[%s5 + $0xee8] sm:$0xff]
  %v1222 = vld [vmem:[%s5 + $0xef0] sm:$0xff]
  %v1223 = vld [vmem:[%s5 + $0xef8] sm:$0xff]
  %v1224 = vld [vmem:[%s5 + $0xf00] sm:$0xff]
  %v1225 = vld [vmem:[%s5 + $0xf08] sm:$0xff]
  %v1226 = vld [vmem:[%s5 + $0xf10] sm:$0xff]
  %v1227 = vld [vmem:[%s5 + $0xf18] sm:$0xff]
  %v1228 = vld [vmem:[%s5 + $0xf20] sm:$0xf]
  %v1229 = vld [vmem:[%s5 + $0xf24] sm:$0xff]
  %v1230 = vld [vmem:[%s5 + $0xf2c] sm:$0xff]
  %v1231 = vld [vmem:[%s5 + $0xf34] sm:$0xff]
  %v1232 = vld [vmem:[%s5 + $0xf3c] sm:$0xff]
  %v1233 = vld [vmem:[%s5 + $0xf44] sm:$0xff]
  %v1234 = vld [vmem:[%s5 + $0xf4c] sm:$0xff]
  %v1235 = vld [vmem:[%s5 + $0xf54] sm:$0xff]
  %v1236 = vld [vmem:[%s5 + $0xf5c] sm:$0xff]
  %v1237 = vld [vmem:[%s5 + $0xf64] sm:$0xf]
  %v1238 = vld [vmem:[%s5 + $0xf68] sm:$0xff]
  %v1239 = vld [vmem:[%s5 + $0xf70] sm:$0xff]
  %v1240 = vld [vmem:[%s5 + $0xf78] sm:$0xff]
  %v1241 = vld [vmem:[%s5 + $0xf80] sm:$0xff]
  %v1242 = vld [vmem:[%s5 + $0xf88] sm:$0xff]
  %v1243 = vld [vmem:[%s5 + $0xf90] sm:$0xff]
  %v1244 = vld [vmem:[%s5 + $0xf98] sm:$0xff]
  %v1245 = vld [vmem:[%s5 + $0xfa0] sm:$0xff]
  %v1246 = vld [vmem:[%s5 + $0xfa8] sm:$0xf]
  %v1247 = vld [vmem:[%s5 + $0xfac] sm:$0xff]
  %v1248 = vld [vmem:[%s5 + $0xfb4] sm:$0xff]
  %v1249 = vld [vmem:[%s5 + $0xfbc] sm:$0xff]
  %v1250 = vld [vmem:[%s5 + $0xfc4] sm:$0xff]
  %v1251 = vld [vmem:[%s5 + $0xfcc] sm:$0xff]
  %v1252 = vld [vmem:[%s5 + $0xfd4] sm:$0xff]
  %v1253 = vld [vmem:[%s5 + $0xfdc] sm:$0xff]
  %v1254 = vld [vmem:[%s5 + $0xfe4] sm:$0xff]
  %v1255 = vld [vmem:[%s5 + $0xfec] sm:$0xf]
  %v1256 = vld [vmem:[%s5 + $0xff0] sm:$0xff]
  %v1257 = vld [vmem:[%s5 + $0xff8] sm:$0xff]
  %v1258 = vld [vmem:[%s5 + $0x1000] sm:$0xff]
  %v1259 = vld [vmem:[%s5 + $0x1008] sm:$0xff]
  %v1260 = vld [vmem:[%s5 + $0x1010] sm:$0xff]
  %v1261 = vld [vmem:[%s5 + $0x1018] sm:$0xff]
  %v1262 = vld [vmem:[%s5 + $0x1020] sm:$0xff]
  %v1263 = vld [vmem:[%s5 + $0x1028] sm:$0xff]
  %v1264 = vld [vmem:[%s5 + $0x1030] sm:$0xf]
  %v1265 = vld [vmem:[%s5 + $0x1034] sm:$0xff]
  %v1266 = vld [vmem:[%s5 + $0x103c] sm:$0xff]
  %v1267 = vld [vmem:[%s5 + $0x1044] sm:$0xff]
  %v1268 = vld [vmem:[%s5 + $0x104c] sm:$0xff]
  %v1269 = vld [vmem:[%s5 + $0x1054] sm:$0xff]
  %v1270 = vld [vmem:[%s5 + $0x105c] sm:$0xff]
  %v1271 = vld [vmem:[%s5 + $0x1064] sm:$0xff]
  %v1272 = vld [vmem:[%s5 + $0x106c] sm:$0xff]
  %v1273 = vld [vmem:[%s5 + $0x1074] sm:$0xf]
  %v1274 = vld [vmem:[%s5 + $0x1078] sm:$0xff]
  %v1275 = vld [vmem:[%s5 + $0x1080] sm:$0xff]
  %v1276 = vld [vmem:[%s5 + $0x1088] sm:$0xff]
  %v1277 = vld [vmem:[%s5 + $0x1090] sm:$0xff]
  %v1278 = vld [vmem:[%s5 + $0x1098] sm:$0xff]
  %v1279 = vld [vmem:[%s5 + $0x10a0] sm:$0xff]
  %v1280 = vld [vmem:[%s5 + $0x10a8] sm:$0xff]
  %v1281 = vld [vmem:[%s5 + $0x10b0] sm:$0xff]
  %v1282 = vld [vmem:[%s5 + $0x10b8] sm:$0xf]
  %v1283 = vld [vmem:[%s5 + $0x10bc] sm:$0xff]
  %v1284 = vld [vmem:[%s5 + $0x10c4] sm:$0xff]
  %v1285 = vld [vmem:[%s5 + $0x10cc] sm:$0xff]
  %v1286 = vld [vmem:[%s5 + $0x10d4] sm:$0xff]
  %v1287 = vld [vmem:[%s5 + $0x10dc] sm:$0xff]
  %v1288 = vld [vmem:[%s5 + $0x10e4] sm:$0xff]
  %v1289 = vld [vmem:[%s5 + $0x10ec] sm:$0xff]
  %v1290 = vld [vmem:[%s5 + $0x10f4] sm:$0xff]
  %v1291 = vld [vmem:[%s5 + $0x10fc] sm:$0xf]
  %v1292 = vld [vmem:[%s5 + $0x1100] sm:$0xff]
  %v1293 = vld [vmem:[%s5 + $0x1108] sm:$0xff]
  %v1294 = vld [vmem:[%s5 + $0x1110] sm:$0xff]
  %v1295 = vld [vmem:[%s5 + $0x1118] sm:$0xff]
  %v1296 = vld [vmem:[%s5 + $0x1120] sm:$0xff]
  %v1297 = vld [vmem:[%s5 + $0x1128] sm:$0xff]
  %v1298 = vld [vmem:[%s5 + $0x1130] sm:$0xff]
  %v1299 = vld [vmem:[%s5 + $0x1138] sm:$0xff]
  %v1300 = vld [vmem:[%s5 + $0x1140] sm:$0xf]
  %v1301 = vld [vmem:[%s5 + $0x1144] sm:$0xff]
  %v1302 = vld [vmem:[%s5 + $0x114c] sm:$0xff]
  %v1303 = vld [vmem:[%s5 + $0x1154] sm:$0xff]
  %v1304 = vld [vmem:[%s5 + $0x115c] sm:$0xff]
  %v1305 = vld [vmem:[%s5 + $0x1164] sm:$0xff]
  %v1306 = vld [vmem:[%s5 + $0x116c] sm:$0xff]
  %v1307 = vld [vmem:[%s5 + $0x1174] sm:$0xff]
  %v1308 = vld [vmem:[%s5 + $0x117c] sm:$0xff]
  %v1309 = vld [vmem:[%s5 + $0x1184] sm:$0xf]
  %v1310 = vld [vmem:[%s5 + $0x1188] sm:$0xff]
  %v1311 = vld [vmem:[%s5 + $0x1190] sm:$0xff]
  %v1312 = vld [vmem:[%s5 + $0x1198] sm:$0xff]
  %v1313 = vld [vmem:[%s5 + $0x11a0] sm:$0xff]
  %v1314 = vld [vmem:[%s5 + $0x11a8] sm:$0xff]
  %v1315 = vld [vmem:[%s5 + $0x11b0] sm:$0xff]
  %v1316 = vld [vmem:[%s5 + $0x11b8] sm:$0xff]
  %v1317 = vld [vmem:[%s5 + $0x11c0] sm:$0xff]
  %v1318 = vld [vmem:[%s5 + $0x11c8] sm:$0xf]
  %v1319 = vld [vmem:[%s5 + $0x11cc] sm:$0xff]
  %v1320 = vld [vmem:[%s5 + $0x11d4] sm:$0xff]
  %v1321 = vld [vmem:[%s5 + $0x11dc] sm:$0xff]
  %v1322 = vld [vmem:[%s5 + $0x11e4] sm:$0xff]
  %v1323 = vld [vmem:[%s5 + $0x11ec] sm:$0xff]
  %v1324 = vld [vmem:[%s5 + $0x11f4] sm:$0xff]
  %v1325 = vld [vmem:[%s5 + $0x11fc] sm:$0xff]
  %v1326 = vld [vmem:[%s5 + $0x1204] sm:$0xff]
  %v1327 = vld [vmem:[%s5 + $0x120c] sm:$0xf]
  %v1328 = vld [vmem:[%s5 + $0x1210] sm:$0xff]
  %v1329 = vld [vmem:[%s5 + $0x1218] sm:$0xff]
  %v1330 = vld [vmem:[%s5 + $0x1220] sm:$0xff]
  %v1331 = vld [vmem:[%s5 + $0x1228] sm:$0xff]
  %v1332 = vld [vmem:[%s5 + $0x1230] sm:$0xff]
  %v1333 = vld [vmem:[%s5 + $0x1238] sm:$0xff]
  %v1334 = vld [vmem:[%s5 + $0x1240] sm:$0xff]
  %v1335 = vld [vmem:[%s5 + $0x1248] sm:$0xff]
  %v1336 = vld [vmem:[%s5 + $0x1250] sm:$0xf]
  %v1337 = vld [vmem:[%s5 + $0x1254] sm:$0xff]
  %v1338 = vld [vmem:[%s5 + $0x125c] sm:$0xff]
  %v1339 = vld [vmem:[%s5 + $0x1264] sm:$0xff]
  %v1340 = vld [vmem:[%s5 + $0x126c] sm:$0xff]
  %v1341 = vld [vmem:[%s5 + $0x1274] sm:$0xff]
  %v1342 = vld [vmem:[%s5 + $0x127c] sm:$0xff]
  %v1343 = vld [vmem:[%s5 + $0x1284] sm:$0xff]
  %v1344 = vld [vmem:[%s5 + $0x128c] sm:$0xff]
  %v1345 = vld [vmem:[%s5 + $0x1294] sm:$0xf]
  %v1346 = vld [vmem:[%s5 + $0x1298] sm:$0xff]
  %v1347 = vld [vmem:[%s5 + $0x12a0] sm:$0xff]
  %v1348 = vld [vmem:[%s5 + $0x12a8] sm:$0xff]
  %v1349 = vld [vmem:[%s5 + $0x12b0] sm:$0xff]
  %v1350 = vld [vmem:[%s5 + $0x12b8] sm:$0xff]
  %v1351 = vld [vmem:[%s5 + $0x12c0] sm:$0xff]
  %v1352 = vld [vmem:[%s5 + $0x12c8] sm:$0xff]
  %v1353 = vld [vmem:[%s5 + $0x12d0] sm:$0xff]
  %v1354 = vld [vmem:[%s5 + $0x12d8] sm:$0xf]
  %v1355 = vld [vmem:[%s5 + $0x12dc] sm:$0xff]
  %v1356 = vld [vmem:[%s5 + $0x12e4] sm:$0xff]
  %v1357 = vld [vmem:[%s5 + $0x12ec] sm:$0xff]
  %v1358 = vld [vmem:[%s5 + $0x12f4] sm:$0xff]
  %v1359 = vld [vmem:[%s5 + $0x12fc] sm:$0xff]
  %v1360 = vld [vmem:[%s5 + $0x1304] sm:$0xff]
  %v1361 = vld [vmem:[%s5 + $0x130c] sm:$0xff]
  %v1362 = vld [vmem:[%s5 + $0x1314] sm:$0xff]
  %v1363 = vld [vmem:[%s5 + $0x131c] sm:$0xf]
  %v1364 = vld [vmem:[%s6] sm:$0xff]
  %v1365 = vld [vmem:[%s6 + $0x8] sm:$0xff]
  %v1366 = vld [vmem:[%s6 + $0x10] sm:$0x1]
  %v1370 = vlaneseq
  %v1371 = vshrl.u32 %v1370, 7
  %v1372 = vsub.s32 0, %v1371
  %v1373 = vrot.slane %v1364, %v1372
  %v1374 = vlaneseq
  %v1375 = vshrl.u32 %v1374, 7
  %v1376 = vsub.s32 1, %v1375
  %v1377 = vrot.slane %v1364, %v1376
  %v1378 = vlaneseq
  %v1379 = vshrl.u32 %v1378, 7
  %v1380 = vsub.s32 2, %v1379
  %v1381 = vrot.slane %v1364, %v1380
  %v1382 = vlaneseq
  %v1383 = vshrl.u32 %v1382, 7
  %v1384 = vsub.s32 3, %v1383
  %v1385 = vrot.slane %v1364, %v1384
  %v1386 = vlaneseq
  %v1387 = vshrl.u32 %v1386, 7
  %v1388 = vsub.s32 4, %v1387
  %v1389 = vrot.slane %v1364, %v1388
  %v1390 = vlaneseq
  %v1391 = vshrl.u32 %v1390, 7
  %v1392 = vsub.s32 5, %v1391
  %v1393 = vrot.slane %v1364, %v1392
  %v1394 = vlaneseq
  %v1395 = vshrl.u32 %v1394, 7
  %v1396 = vsub.s32 6, %v1395
  %v1397 = vrot.slane %v1364, %v1396
  %v1398 = vlaneseq
  %v1399 = vshrl.u32 %v1398, 7
  %v1400 = vsub.s32 7, %v1399
  %v1401 = vrot.slane %v1364, %v1400
  %v1402 = vlaneseq
  %v1403 = vshrl.u32 %v1402, 7
  %v1404 = vsub.s32 0, %v1403
  %v1405 = vrot.slane %v1365, %v1404
  %v1406 = vlaneseq
  %v1407 = vshrl.u32 %v1406, 7
  %v1408 = vsub.s32 1, %v1407
  %v1409 = vrot.slane %v1365, %v1408
  %v1410 = vlaneseq
  %v1411 = vshrl.u32 %v1410, 7
  %v1412 = vsub.s32 2, %v1411
  %v1413 = vrot.slane %v1365, %v1412
  %v1414 = vlaneseq
  %v1415 = vshrl.u32 %v1414, 7
  %v1416 = vsub.s32 3, %v1415
  %v1417 = vrot.slane %v1365, %v1416
  %v1418 = vlaneseq
  %v1419 = vshrl.u32 %v1418, 7
  %v1420 = vsub.s32 4, %v1419
  %v1421 = vrot.slane %v1365, %v1420
  %v1422 = vlaneseq
  %v1423 = vshrl.u32 %v1422, 7
  %v1424 = vsub.s32 5, %v1423
  %v1425 = vrot.slane %v1365, %v1424
  %v1426 = vlaneseq
  %v1427 = vshrl.u32 %v1426, 7
  %v1428 = vsub.s32 6, %v1427
  %v1429 = vrot.slane %v1365, %v1428
  %v1430 = vlaneseq
  %v1431 = vshrl.u32 %v1430, 7
  %v1432 = vsub.s32 7, %v1431
  %v1433 = vrot.slane %v1365, %v1432
  %v1434 = vlaneseq
  %v1435 = vshrl.u32 %v1434, 7
  %v1436 = vsub.s32 0, %v1435
  %v1437 = vrot.slane %v1366, %v1436
  %v2103 = vunpack.c.l.b16 %v716
  %v2104 = vunpack.c.h.b16 %v716
  %v2105 = vunpack.c.l.b16 %v717
  %v2106 = vunpack.c.h.b16 %v717
  %v2107 = vunpack.c.l.b16 %v718
  %v2108 = vunpack.c.h.b16 %v718
  %v2109 = vunpack.c.l.b16 %v719
  %v2110 = vunpack.c.h.b16 %v719
  %v2111 = vunpack.c.l.b16 %v720
  %v2112 = vunpack.c.h.b16 %v720
  %v2113 = vunpack.c.l.b16 %v721
  %v2114 = vunpack.c.h.b16 %v721
  %v2115 = vunpack.c.l.b16 %v722
  %v2116 = vunpack.c.h.b16 %v722
  %v2117 = vunpack.c.l.b16 %v723
  %v2118 = vunpack.c.h.b16 %v723
  %v2119 = vunpack.c.l.b16 %v724
  %v2120 = vunpack.c.l.b16 %v725
  %v2121 = vunpack.c.h.b16 %v725
  %v2122 = vunpack.c.l.b16 %v726
  %v2123 = vunpack.c.h.b16 %v726
  %v2124 = vunpack.c.l.b16 %v727
  %v2125 = vunpack.c.h.b16 %v727
  %v2126 = vunpack.c.l.b16 %v728
  %v2127 = vunpack.c.h.b16 %v728
  %v2128 = vunpack.c.l.b16 %v729
  %v2129 = vunpack.c.h.b16 %v729
  %v2130 = vunpack.c.l.b16 %v730
  %v2131 = vunpack.c.h.b16 %v730
  %v2132 = vunpack.c.l.b16 %v731
  %v2133 = vunpack.c.h.b16 %v731
  %v2134 = vunpack.c.l.b16 %v732
  %v2135 = vunpack.c.h.b16 %v732
  %v2136 = vunpack.c.l.b16 %v733
  %v2137 = vunpack.c.l.b16 %v734
  %v2138 = vunpack.c.h.b16 %v734
  %v2139 = vunpack.c.l.b16 %v735
  %v2140 = vunpack.c.h.b16 %v735
  %v2141 = vunpack.c.l.b16 %v736
  %v2142 = vunpack.c.h.b16 %v736
  %v2143 = vunpack.c.l.b16 %v737
  %v2144 = vunpack.c.h.b16 %v737
  %v2145 = vunpack.c.l.b16 %v738
  %v2146 = vunpack.c.h.b16 %v738
  %v2147 = vunpack.c.l.b16 %v739
  %v2148 = vunpack.c.h.b16 %v739
  %v2149 = vunpack.c.l.b16 %v740
  %v2150 = vunpack.c.h.b16 %v740
  %v2151 = vunpack.c.l.b16 %v741
  %v2152 = vunpack.c.h.b16 %v741
  %v2153 = vunpack.c.l.b16 %v742
  %v2154 = vunpack.c.l.b16 %v743
  %v2155 = vunpack.c.h.b16 %v743
  %v2156 = vunpack.c.l.b16 %v744
  %v2157 = vunpack.c.h.b16 %v744
  %v2158 = vunpack.c.l.b16 %v745
  %v2159 = vunpack.c.h.b16 %v745
  %v2160 = vunpack.c.l.b16 %v746
  %v2161 = vunpack.c.h.b16 %v746
  %v2162 = vunpack.c.l.b16 %v747
  %v2163 = vunpack.c.h.b16 %v747
  %v2164 = vunpack.c.l.b16 %v748
  %v2165 = vunpack.c.h.b16 %v748
  %v2166 = vunpack.c.l.b16 %v749
  %v2167 = vunpack.c.h.b16 %v749
  %v2168 = vunpack.c.l.b16 %v750
  %v2169 = vunpack.c.h.b16 %v750
  %v2170 = vunpack.c.l.b16 %v751
  %v2171 = vunpack.c.l.b16 %v752
  %v2172 = vunpack.c.h.b16 %v752
  %v2173 = vunpack.c.l.b16 %v753
  %v2174 = vunpack.c.h.b16 %v753
  %v2175 = vunpack.c.l.b16 %v754
  %v2176 = vunpack.c.h.b16 %v754
  %v2177 = vunpack.c.l.b16 %v755
  %v2178 = vunpack.c.h.b16 %v755
  %v2179 = vunpack.c.l.b16 %v756
  %v2180 = vunpack.c.h.b16 %v756
  %v2181 = vunpack.c.l.b16 %v757
  %v2182 = vunpack.c.h.b16 %v757
  %v2183 = vunpack.c.l.b16 %v758
  %v2184 = vunpack.c.h.b16 %v758
  %v2185 = vunpack.c.l.b16 %v759
  %v2186 = vunpack.c.h.b16 %v759
  %v2187 = vunpack.c.l.b16 %v760
  %v2188 = vunpack.c.l.b16 %v761
  %v2189 = vunpack.c.h.b16 %v761
  %v2190 = vunpack.c.l.b16 %v762
  %v2191 = vunpack.c.h.b16 %v762
  %v2192 = vunpack.c.l.b16 %v763
  %v2193 = vunpack.c.h.b16 %v763
  %v2194 = vunpack.c.l.b16 %v764
  %v2195 = vunpack.c.h.b16 %v764
  %v2196 = vunpack.c.l.b16 %v765
  %v2197 = vunpack.c.h.b16 %v765
  %v2198 = vunpack.c.l.b16 %v766
  %v2199 = vunpack.c.h.b16 %v766
  %v2200 = vunpack.c.l.b16 %v767
  %v2201 = vunpack.c.h.b16 %v767
  %v2202 = vunpack.c.l.b16 %v768
  %v2203 = vunpack.c.h.b16 %v768
  %v2204 = vunpack.c.l.b16 %v769
  %v2205 = vunpack.c.l.b16 %v770
  %v2206 = vunpack.c.h.b16 %v770
  %v2207 = vunpack.c.l.b16 %v771
  %v2208 = vunpack.c.h.b16 %v771
  %v2209 = vunpack.c.l.b16 %v772
  %v2210 = vunpack.c.h.b16 %v772
  %v2211 = vunpack.c.l.b16 %v773
  %v2212 = vunpack.c.h.b16 %v773
  %v2213 = vunpack.c.l.b16 %v774
  %v2214 = vunpack.c.h.b16 %v774
  %v2215 = vunpack.c.l.b16 %v775
  %v2216 = vunpack.c.h.b16 %v775
  %v2217 = vunpack.c.l.b16 %v776
  %v2218 = vunpack.c.h.b16 %v776
  %v2219 = vunpack.c.l.b16 %v777
  %v2220 = vunpack.c.h.b16 %v777
  %v2221 = vunpack.c.l.b16 %v778
  %v2222 = vunpack.c.l.b16 %v779
  %v2223 = vunpack.c.h.b16 %v779
  %v2224 = vunpack.c.l.b16 %v780
  %v2225 = vunpack.c.h.b16 %v780
  %v2226 = vunpack.c.l.b16 %v781
  %v2227 = vunpack.c.h.b16 %v781
  %v2228 = vunpack.c.l.b16 %v782
  %v2229 = vunpack.c.h.b16 %v782
  %v2230 = vunpack.c.l.b16 %v783
  %v2231 = vunpack.c.h.b16 %v783
  %v2232 = vunpack.c.l.b16 %v784
  %v2233 = vunpack.c.h.b16 %v784
  %v2234 = vunpack.c.l.b16 %v785
  %v2235 = vunpack.c.h.b16 %v785
  %v2236 = vunpack.c.l.b16 %v786
  %v2237 = vunpack.c.h.b16 %v786
  %v2238 = vunpack.c.l.b16 %v787
  %v2239 = vunpack.c.l.b16 %v788
  %v2240 = vunpack.c.h.b16 %v788
  %v2241 = vunpack.c.l.b16 %v789
  %v2242 = vunpack.c.h.b16 %v789
  %v2243 = vunpack.c.l.b16 %v790
  %v2244 = vunpack.c.h.b16 %v790
  %v2245 = vunpack.c.l.b16 %v791
  %v2246 = vunpack.c.h.b16 %v791
  %v2247 = vunpack.c.l.b16 %v792
  %v2248 = vunpack.c.h.b16 %v792
  %v2249 = vunpack.c.l.b16 %v793
  %v2250 = vunpack.c.h.b16 %v793
  %v2251 = vunpack.c.l.b16 %v794
  %v2252 = vunpack.c.h.b16 %v794
  %v2253 = vunpack.c.l.b16 %v795
  %v2254 = vunpack.c.h.b16 %v795
  %v2255 = vunpack.c.l.b16 %v796
  %v2256 = vunpack.c.l.b16 %v797
  %v2257 = vunpack.c.h.b16 %v797
  %v2258 = vunpack.c.l.b16 %v798
  %v2259 = vunpack.c.h.b16 %v798
  %v2260 = vunpack.c.l.b16 %v799
  %v2261 = vunpack.c.h.b16 %v799
  %v2262 = vunpack.c.l.b16 %v800
  %v2263 = vunpack.c.h.b16 %v800
  %v2264 = vunpack.c.l.b16 %v801
  %v2265 = vunpack.c.h.b16 %v801
  %v2266 = vunpack.c.l.b16 %v802
  %v2267 = vunpack.c.h.b16 %v802
  %v2268 = vunpack.c.l.b16 %v803
  %v2269 = vunpack.c.h.b16 %v803
  %v2270 = vunpack.c.l.b16 %v804
  %v2271 = vunpack.c.h.b16 %v804
  %v2272 = vunpack.c.l.b16 %v805
  %v2273 = vunpack.c.l.b16 %v806
  %v2274 = vunpack.c.h.b16 %v806
  %v2275 = vunpack.c.l.b16 %v807
  %v2276 = vunpack.c.h.b16 %v807
  %v2277 = vunpack.c.l.b16 %v808
  %v2278 = vunpack.c.h.b16 %v808
  %v2279 = vunpack.c.l.b16 %v809
  %v2280 = vunpack.c.h.b16 %v809
  %v2281 = vunpack.c.l.b16 %v810
  %v2282 = vunpack.c.h.b16 %v810
  %v2283 = vunpack.c.l.b16 %v811
  %v2284 = vunpack.c.h.b16 %v811
  %v2285 = vunpack.c.l.b16 %v812
  %v2286 = vunpack.c.h.b16 %v812
  %v2287 = vunpack.c.l.b16 %v813
  %v2288 = vunpack.c.h.b16 %v813
  %v2289 = vunpack.c.l.b16 %v814
  %v2290 = vunpack.c.l.b16 %v815
  %v2291 = vunpack.c.h.b16 %v815
  %v2292 = vunpack.c.l.b16 %v816
  %v2293 = vunpack.c.h.b16 %v816
  %v2294 = vunpack.c.l.b16 %v817
  %v2295 = vunpack.c.h.b16 %v817
  %v2296 = vunpack.c.l.b16 %v818
  %v2297 = vunpack.c.h.b16 %v818
  %v2298 = vunpack.c.l.b16 %v819
  %v2299 = vunpack.c.h.b16 %v819
  %v2300 = vunpack.c.l.b16 %v820
  %v2301 = vunpack.c.h.b16 %v820
  %v2302 = vunpack.c.l.b16 %v821
  %v2303 = vunpack.c.h.b16 %v821
  %v2304 = vunpack.c.l.b16 %v822
  %v2305 = vunpack.c.h.b16 %v822
  %v2306 = vunpack.c.l.b16 %v823
  %v2307 = vunpack.c.l.b16 %v824
  %v2308 = vunpack.c.h.b16 %v824
  %v2309 = vunpack.c.l.b16 %v825
  %v2310 = vunpack.c.h.b16 %v825
  %v2311 = vunpack.c.l.b16 %v826
  %v2312 = vunpack.c.h.b16 %v826
  %v2313 = vunpack.c.l.b16 %v827
  %v2314 = vunpack.c.h.b16 %v827
  %v2315 = vunpack.c.l.b16 %v828
  %v2316 = vunpack.c.h.b16 %v828
  %v2317 = vunpack.c.l.b16 %v829
  %v2318 = vunpack.c.h.b16 %v829
  %v2319 = vunpack.c.l.b16 %v830
  %v2320 = vunpack.c.h.b16 %v830
  %v2321 = vunpack.c.l.b16 %v831
  %v2322 = vunpack.c.h.b16 %v831
  %v2323 = vunpack.c.l.b16 %v832
  %v2324 = vunpack.c.l.b16 %v833
  %v2325 = vunpack.c.h.b16 %v833
  %v2326 = vunpack.c.l.b16 %v834
  %v2327 = vunpack.c.h.b16 %v834
  %v2328 = vunpack.c.l.b16 %v835
  %v2329 = vunpack.c.h.b16 %v835
  %v2330 = vunpack.c.l.b16 %v836
  %v2331 = vunpack.c.h.b16 %v836
  %v2332 = vunpack.c.l.b16 %v837
  %v2333 = vunpack.c.h.b16 %v837
  %v2334 = vunpack.c.l.b16 %v838
  %v2335 = vunpack.c.h.b16 %v838
  %v2336 = vunpack.c.l.b16 %v839
  %v2337 = vunpack.c.h.b16 %v839
  %v2338 = vunpack.c.l.b16 %v840
  %v2339 = vunpack.c.h.b16 %v840
  %v2340 = vunpack.c.l.b16 %v841
  %v2341 = vunpack.c.l.b16 %v842
  %v2342 = vunpack.c.h.b16 %v842
  %v2343 = vunpack.c.l.b16 %v843
  %v2344 = vunpack.c.h.b16 %v843
  %v2345 = vunpack.c.l.b16 %v844
  %v2346 = vunpack.c.h.b16 %v844
  %v2347 = vunpack.c.l.b16 %v845
  %v2348 = vunpack.c.h.b16 %v845
  %v2349 = vunpack.c.l.b16 %v846
  %v2350 = vunpack.c.h.b16 %v846
  %v2351 = vunpack.c.l.b16 %v847
  %v2352 = vunpack.c.h.b16 %v847
  %v2353 = vunpack.c.l.b16 %v848
  %v2354 = vunpack.c.h.b16 %v848
  %v2355 = vunpack.c.l.b16 %v849
  %v2356 = vunpack.c.h.b16 %v849
  %v2357 = vunpack.c.l.b16 %v850
  %v2358 = vunpack.c.l.b16 %v851
  %v2359 = vunpack.c.h.b16 %v851
  %v2360 = vunpack.c.l.b16 %v852
  %v2361 = vunpack.c.h.b16 %v852
  %v2362 = vunpack.c.l.b16 %v853
  %v2363 = vunpack.c.h.b16 %v853
  %v2364 = vunpack.c.l.b16 %v854
  %v2365 = vunpack.c.h.b16 %v854
  %v2366 = vunpack.c.l.b16 %v855
  %v2367 = vunpack.c.h.b16 %v855
  %v2368 = vunpack.c.l.b16 %v856
  %v2369 = vunpack.c.h.b16 %v856
  %v2370 = vunpack.c.l.b16 %v857
  %v2371 = vunpack.c.h.b16 %v857
  %v2372 = vunpack.c.l.b16 %v858
  %v2373 = vunpack.c.h.b16 %v858
  %v2374 = vunpack.c.l.b16 %v859
  %v2375 = vunpack.c.l.b16 %v860
  %v2376 = vunpack.c.h.b16 %v860
  %v2377 = vunpack.c.l.b16 %v861
  %v2378 = vunpack.c.h.b16 %v861
  %v2379 = vunpack.c.l.b16 %v862
  %v2380 = vunpack.c.h.b16 %v862
  %v2381 = vunpack.c.l.b16 %v863
  %v2382 = vunpack.c.h.b16 %v863
  %v2383 = vunpack.c.l.b16 %v864
  %v2384 = vunpack.c.h.b16 %v864
  %v2385 = vunpack.c.l.b16 %v865
  %v2386 = vunpack.c.h.b16 %v865
  %v2387 = vunpack.c.l.b16 %v866
  %v2388 = vunpack.c.h.b16 %v866
  %v2389 = vunpack.c.l.b16 %v867
  %v2390 = vunpack.c.h.b16 %v867
  %v2391 = vunpack.c.l.b16 %v868
  %v2392 = vunpack.c.l.b16 %v869
  %v2393 = vunpack.c.h.b16 %v869
  %v2394 = vunpack.c.l.b16 %v870
  %v2395 = vunpack.c.h.b16 %v870
  %v2396 = vunpack.c.l.b16 %v871
  %v2397 = vunpack.c.h.b16 %v871
  %v2398 = vunpack.c.l.b16 %v872
  %v2399 = vunpack.c.h.b16 %v872
  %v2400 = vunpack.c.l.b16 %v873
  %v2401 = vunpack.c.h.b16 %v873
  %v2402 = vunpack.c.l.b16 %v874
  %v2403 = vunpack.c.h.b16 %v874
  %v2404 = vunpack.c.l.b16 %v875
  %v2405 = vunpack.c.h.b16 %v875
  %v2406 = vunpack.c.l.b16 %v876
  %v2407 = vunpack.c.h.b16 %v876
  %v2408 = vunpack.c.l.b16 %v877
  %v2409 = vunpack.c.l.b16 %v878
  %v2410 = vunpack.c.h.b16 %v878
  %v2411 = vunpack.c.l.b16 %v879
  %v2412 = vunpack.c.h.b16 %v879
  %v2413 = vunpack.c.l.b16 %v880
  %v2414 = vunpack.c.h.b16 %v880
  %v2415 = vunpack.c.l.b16 %v881
  %v2416 = vunpack.c.h.b16 %v881
  %v2417 = vunpack.c.l.b16 %v882
  %v2418 = vunpack.c.h.b16 %v882
  %v2419 = vunpack.c.l.b16 %v883
  %v2420 = vunpack.c.h.b16 %v883
  %v2421 = vunpack.c.l.b16 %v884
  %v2422 = vunpack.c.h.b16 %v884
  %v2423 = vunpack.c.l.b16 %v885
  %v2424 = vunpack.c.h.b16 %v885
  %v2425 = vunpack.c.l.b16 %v886
  %v2426 = vunpack.c.l.b16 %v887
  %v2427 = vunpack.c.h.b16 %v887
  %v2428 = vunpack.c.l.b16 %v888
  %v2429 = vunpack.c.h.b16 %v888
  %v2430 = vunpack.c.l.b16 %v889
  %v2431 = vunpack.c.h.b16 %v889
  %v2432 = vunpack.c.l.b16 %v890
  %v2433 = vunpack.c.h.b16 %v890
  %v2434 = vunpack.c.l.b16 %v891
  %v2435 = vunpack.c.h.b16 %v891
  %v2436 = vunpack.c.l.b16 %v892
  %v2437 = vunpack.c.h.b16 %v892
  %v2438 = vunpack.c.l.b16 %v893
  %v2439 = vunpack.c.h.b16 %v893
  %v2440 = vunpack.c.l.b16 %v894
  %v2441 = vunpack.c.h.b16 %v894
  %v2442 = vunpack.c.l.b16 %v895
  %v2443 = vunpack.c.l.b16 %v896
  %v2444 = vunpack.c.h.b16 %v896
  %v2445 = vunpack.c.l.b16 %v897
  %v2446 = vunpack.c.h.b16 %v897
  %v2447 = vunpack.c.l.b16 %v898
  %v2448 = vunpack.c.h.b16 %v898
  %v2449 = vunpack.c.l.b16 %v899
  %v2450 = vunpack.c.h.b16 %v899
  %v2451 = vunpack.c.l.b16 %v900
  %v2452 = vunpack.c.h.b16 %v900
  %v2453 = vunpack.c.l.b16 %v901
  %v2454 = vunpack.c.h.b16 %v901
  %v2455 = vunpack.c.l.b16 %v902
  %v2456 = vunpack.c.h.b16 %v902
  %v2457 = vunpack.c.l.b16 %v903
  %v2458 = vunpack.c.h.b16 %v903
  %v2459 = vunpack.c.l.b16 %v904
  %v2460 = vunpack.c.l.b16 %v905
  %v2461 = vunpack.c.h.b16 %v905
  %v2462 = vunpack.c.l.b16 %v906
  %v2463 = vunpack.c.h.b16 %v906
  %v2464 = vunpack.c.l.b16 %v907
  %v2465 = vunpack.c.h.b16 %v907
  %v2466 = vunpack.c.l.b16 %v908
  %v2467 = vunpack.c.h.b16 %v908
  %v2468 = vunpack.c.l.b16 %v909
  %v2469 = vunpack.c.h.b16 %v909
  %v2470 = vunpack.c.l.b16 %v910
  %v2471 = vunpack.c.h.b16 %v910
  %v2472 = vunpack.c.l.b16 %v911
  %v2473 = vunpack.c.h.b16 %v911
  %v2474 = vunpack.c.l.b16 %v912
  %v2475 = vunpack.c.h.b16 %v912
  %v2476 = vunpack.c.l.b16 %v913
  %v2477 = vunpack.c.l.b16 %v914
  %v2478 = vunpack.c.h.b16 %v914
  %v2479 = vunpack.c.l.b16 %v915
  %v2480 = vunpack.c.h.b16 %v915
  %v2481 = vunpack.c.l.b16 %v916
  %v2482 = vunpack.c.h.b16 %v916
  %v2483 = vunpack.c.l.b16 %v917
  %v2484 = vunpack.c.h.b16 %v917
  %v2485 = vunpack.c.l.b16 %v918
  %v2486 = vunpack.c.h.b16 %v918
  %v2487 = vunpack.c.l.b16 %v919
  %v2488 = vunpack.c.h.b16 %v919
  %v2489 = vunpack.c.l.b16 %v920
  %v2490 = vunpack.c.h.b16 %v920
  %v2491 = vunpack.c.l.b16 %v921
  %v2492 = vunpack.c.h.b16 %v921
  %v2493 = vunpack.c.l.b16 %v922
  %v2494 = vunpack.c.l.b16 %v923
  %v2495 = vunpack.c.h.b16 %v923
  %v2496 = vunpack.c.l.b16 %v924
  %v2497 = vunpack.c.h.b16 %v924
  %v2498 = vunpack.c.l.b16 %v925
  %v2499 = vunpack.c.h.b16 %v925
  %v2500 = vunpack.c.l.b16 %v926
  %v2501 = vunpack.c.h.b16 %v926
  %v2502 = vunpack.c.l.b16 %v927
  %v2503 = vunpack.c.h.b16 %v927
  %v2504 = vunpack.c.l.b16 %v928
  %v2505 = vunpack.c.h.b16 %v928
  %v2506 = vunpack.c.l.b16 %v929
  %v2507 = vunpack.c.h.b16 %v929
  %v2508 = vunpack.c.l.b16 %v930
  %v2509 = vunpack.c.h.b16 %v930
  %v2510 = vunpack.c.l.b16 %v931
  %v2511 = vunpack.c.l.b16 %v932
  %v2512 = vunpack.c.h.b16 %v932
  %v2513 = vunpack.c.l.b16 %v933
  %v2514 = vunpack.c.h.b16 %v933
  %v2515 = vunpack.c.l.b16 %v934
  %v2516 = vunpack.c.h.b16 %v934
  %v2517 = vunpack.c.l.b16 %v935
  %v2518 = vunpack.c.h.b16 %v935
  %v2519 = vunpack.c.l.b16 %v936
  %v2520 = vunpack.c.h.b16 %v936
  %v2521 = vunpack.c.l.b16 %v937
  %v2522 = vunpack.c.h.b16 %v937
  %v2523 = vunpack.c.l.b16 %v938
  %v2524 = vunpack.c.h.b16 %v938
  %v2525 = vunpack.c.l.b16 %v939
  %v2526 = vunpack.c.h.b16 %v939
  %v2527 = vunpack.c.l.b16 %v940
  %v2528 = vunpack.c.l.b16 %v941
  %v2529 = vunpack.c.h.b16 %v941
  %v2530 = vunpack.c.l.b16 %v942
  %v2531 = vunpack.c.h.b16 %v942
  %v2532 = vunpack.c.l.b16 %v943
  %v2533 = vunpack.c.h.b16 %v943
  %v2534 = vunpack.c.l.b16 %v944
  %v2535 = vunpack.c.h.b16 %v944
  %v2536 = vunpack.c.l.b16 %v945
  %v2537 = vunpack.c.h.b16 %v945
  %v2538 = vunpack.c.l.b16 %v946
  %v2539 = vunpack.c.h.b16 %v946
  %v2540 = vunpack.c.l.b16 %v947
  %v2541 = vunpack.c.h.b16 %v947
  %v2542 = vunpack.c.l.b16 %v948
  %v2543 = vunpack.c.h.b16 %v948
  %v2544 = vunpack.c.l.b16 %v949
  %v2545 = vunpack.c.l.b16 %v950
  %v2546 = vunpack.c.h.b16 %v950
  %v2547 = vunpack.c.l.b16 %v951
  %v2548 = vunpack.c.h.b16 %v951
  %v2549 = vunpack.c.l.b16 %v952
  %v2550 = vunpack.c.h.b16 %v952
  %v2551 = vunpack.c.l.b16 %v953
  %v2552 = vunpack.c.h.b16 %v953
  %v2553 = vunpack.c.l.b16 %v954
  %v2554 = vunpack.c.h.b16 %v954
  %v2555 = vunpack.c.l.b16 %v955
  %v2556 = vunpack.c.h.b16 %v955
  %v2557 = vunpack.c.l.b16 %v956
  %v2558 = vunpack.c.h.b16 %v956
  %v2559 = vunpack.c.l.b16 %v957
  %v2560 = vunpack.c.h.b16 %v957
  %v2561 = vunpack.c.l.b16 %v958
  %v2562 = vunpack.c.l.b16 %v959
  %v2563 = vunpack.c.h.b16 %v959
  %v2564 = vunpack.c.l.b16 %v960
  %v2565 = vunpack.c.h.b16 %v960
  %v2566 = vunpack.c.l.b16 %v961
  %v2567 = vunpack.c.h.b16 %v961
  %v2568 = vunpack.c.l.b16 %v962
  %v2569 = vunpack.c.h.b16 %v962
  %v2570 = vunpack.c.l.b16 %v963
  %v2571 = vunpack.c.h.b16 %v963
  %v2572 = vunpack.c.l.b16 %v964
  %v2573 = vunpack.c.h.b16 %v964
  %v2574 = vunpack.c.l.b16 %v965
  %v2575 = vunpack.c.h.b16 %v965
  %v2576 = vunpack.c.l.b16 %v966
  %v2577 = vunpack.c.h.b16 %v966
  %v2578 = vunpack.c.l.b16 %v967
  %v2579 = vunpack.c.l.b16 %v968
  %v2580 = vunpack.c.h.b16 %v968
  %v2581 = vunpack.c.l.b16 %v969
  %v2582 = vunpack.c.h.b16 %v969
  %v2583 = vunpack.c.l.b16 %v970
  %v2584 = vunpack.c.h.b16 %v970
  %v2585 = vunpack.c.l.b16 %v971
  %v2586 = vunpack.c.h.b16 %v971
  %v2587 = vunpack.c.l.b16 %v972
  %v2588 = vunpack.c.h.b16 %v972
  %v2589 = vunpack.c.l.b16 %v973
  %v2590 = vunpack.c.h.b16 %v973
  %v2591 = vunpack.c.l.b16 %v974
  %v2592 = vunpack.c.h.b16 %v974
  %v2593 = vunpack.c.l.b16 %v975
  %v2594 = vunpack.c.h.b16 %v975
  %v2595 = vunpack.c.l.b16 %v976
  %v2596 = vunpack.c.l.b16 %v977
  %v2597 = vunpack.c.h.b16 %v977
  %v2598 = vunpack.c.l.b16 %v978
  %v2599 = vunpack.c.h.b16 %v978
  %v2600 = vunpack.c.l.b16 %v979
  %v2601 = vunpack.c.h.b16 %v979
  %v2602 = vunpack.c.l.b16 %v980
  %v2603 = vunpack.c.h.b16 %v980
  %v2604 = vunpack.c.l.b16 %v981
  %v2605 = vunpack.c.h.b16 %v981
  %v2606 = vunpack.c.l.b16 %v982
  %v2607 = vunpack.c.h.b16 %v982
  %v2608 = vunpack.c.l.b16 %v983
  %v2609 = vunpack.c.h.b16 %v983
  %v2610 = vunpack.c.l.b16 %v984
  %v2611 = vunpack.c.h.b16 %v984
  %v2612 = vunpack.c.l.b16 %v985
  %v2613 = vunpack.c.l.b16 %v986
  %v2614 = vunpack.c.h.b16 %v986
  %v2615 = vunpack.c.l.b16 %v987
  %v2616 = vunpack.c.h.b16 %v987
  %v2617 = vunpack.c.l.b16 %v988
  %v2618 = vunpack.c.h.b16 %v988
  %v2619 = vunpack.c.l.b16 %v989
  %v2620 = vunpack.c.h.b16 %v989
  %v2621 = vunpack.c.l.b16 %v990
  %v2622 = vunpack.c.h.b16 %v990
  %v2623 = vunpack.c.l.b16 %v991
  %v2624 = vunpack.c.h.b16 %v991
  %v2625 = vunpack.c.l.b16 %v992
  %v2626 = vunpack.c.h.b16 %v992
  %v2627 = vunpack.c.l.b16 %v993
  %v2628 = vunpack.c.h.b16 %v993
  %v2629 = vunpack.c.l.b16 %v994
  %v2630 = vunpack.c.l.b16 %v995
  %v2631 = vunpack.c.h.b16 %v995
  %v2632 = vunpack.c.l.b16 %v996
  %v2633 = vunpack.c.h.b16 %v996
  %v2634 = vunpack.c.l.b16 %v997
  %v2635 = vunpack.c.h.b16 %v997
  %v2636 = vunpack.c.l.b16 %v998
  %v2637 = vunpack.c.h.b16 %v998
  %v2638 = vunpack.c.l.b16 %v999
  %v2639 = vunpack.c.h.b16 %v999
  %v2640 = vunpack.c.l.b16 %v1000
  %v2641 = vunpack.c.h.b16 %v1000
  %v2642 = vunpack.c.l.b16 %v1001
  %v2643 = vunpack.c.h.b16 %v1001
  %v2644 = vunpack.c.l.b16 %v1002
  %v2645 = vunpack.c.h.b16 %v1002
  %v2646 = vunpack.c.l.b16 %v1003
  %v2647 = vunpack.c.l.b16 %v1004
  %v2648 = vunpack.c.h.b16 %v1004
  %v2649 = vunpack.c.l.b16 %v1005
  %v2650 = vunpack.c.h.b16 %v1005
  %v2651 = vunpack.c.l.b16 %v1006
  %v2652 = vunpack.c.h.b16 %v1006
  %v2653 = vunpack.c.l.b16 %v1007
  %v2654 = vunpack.c.h.b16 %v1007
  %v2655 = vunpack.c.l.b16 %v1008
  %v2656 = vunpack.c.h.b16 %v1008
  %v2657 = vunpack.c.l.b16 %v1009
  %v2658 = vunpack.c.h.b16 %v1009
  %v2659 = vunpack.c.l.b16 %v1010
  %v2660 = vunpack.c.h.b16 %v1010
  %v2661 = vunpack.c.l.b16 %v1011
  %v2662 = vunpack.c.h.b16 %v1011
  %v2663 = vunpack.c.l.b16 %v1012
  %v2664 = vunpack.c.l.b16 %v1013
  %v2665 = vunpack.c.h.b16 %v1013
  %v2666 = vunpack.c.l.b16 %v1014
  %v2667 = vunpack.c.h.b16 %v1014
  %v2668 = vunpack.c.l.b16 %v1015
  %v2669 = vunpack.c.h.b16 %v1015
  %v2670 = vunpack.c.l.b16 %v1016
  %v2671 = vunpack.c.h.b16 %v1016
  %v2672 = vunpack.c.l.b16 %v1017
  %v2673 = vunpack.c.h.b16 %v1017
  %v2674 = vunpack.c.l.b16 %v1018
  %v2675 = vunpack.c.h.b16 %v1018
  %v2676 = vunpack.c.l.b16 %v1019
  %v2677 = vunpack.c.h.b16 %v1019
  %v2678 = vunpack.c.l.b16 %v1020
  %v2679 = vunpack.c.h.b16 %v1020
  %v2680 = vunpack.c.l.b16 %v1021
  %v2681 = vunpack.c.l.b16 %v1022
  %v2682 = vunpack.c.h.b16 %v1022
  %v2683 = vunpack.c.l.b16 %v1023
  %v2684 = vunpack.c.h.b16 %v1023
  %v2685 = vunpack.c.l.b16 %v1024
  %v2686 = vunpack.c.h.b16 %v1024
  %v2687 = vunpack.c.l.b16 %v1025
  %v2688 = vunpack.c.h.b16 %v1025
  %v2689 = vunpack.c.l.b16 %v1026
  %v2690 = vunpack.c.h.b16 %v1026
  %v2691 = vunpack.c.l.b16 %v1027
  %v2692 = vunpack.c.h.b16 %v1027
  %v2693 = vunpack.c.l.b16 %v1028
  %v2694 = vunpack.c.h.b16 %v1028
  %v2695 = vunpack.c.l.b16 %v1029
  %v2696 = vunpack.c.h.b16 %v1029
  %v2697 = vunpack.c.l.b16 %v1030
  %v2698 = vunpack.c.l.b16 %v1031
  %v2699 = vunpack.c.h.b16 %v1031
  %v2700 = vunpack.c.l.b16 %v1032
  %v2701 = vunpack.c.h.b16 %v1032
  %v2702 = vunpack.c.l.b16 %v1033
  %v2703 = vunpack.c.h.b16 %v1033
  %v2704 = vunpack.c.l.b16 %v1034
  %v2705 = vunpack.c.h.b16 %v1034
  %v2706 = vunpack.c.l.b16 %v1035
  %v2707 = vunpack.c.h.b16 %v1035
  %v2708 = vunpack.c.l.b16 %v1036
  %v2709 = vunpack.c.h.b16 %v1036
  %v2710 = vunpack.c.l.b16 %v1037
  %v2711 = vunpack.c.h.b16 %v1037
  %v2712 = vunpack.c.l.b16 %v1038
  %v2713 = vunpack.c.h.b16 %v1038
  %v2714 = vunpack.c.l.b16 %v1039
  %v2715 = vunpack.c.l.b16 %v1040
  %v2716 = vunpack.c.h.b16 %v1040
  %v2717 = vunpack.c.l.b16 %v1041
  %v2718 = vunpack.c.h.b16 %v1041
  %v2719 = vunpack.c.l.b16 %v1042
  %v2720 = vunpack.c.h.b16 %v1042
  %v2721 = vunpack.c.l.b16 %v1043
  %v2722 = vunpack.c.h.b16 %v1043
  %v2723 = vunpack.c.l.b16 %v1044
  %v2724 = vunpack.c.h.b16 %v1044
  %v2725 = vunpack.c.l.b16 %v1045
  %v2726 = vunpack.c.h.b16 %v1045
  %v2727 = vunpack.c.l.b16 %v1046
  %v2728 = vunpack.c.h.b16 %v1046
  %v2729 = vunpack.c.l.b16 %v1047
  %v2730 = vunpack.c.h.b16 %v1047
  %v2731 = vunpack.c.l.b16 %v1048
  %v2732 = vunpack.c.l.b16 %v1049
  %v2733 = vunpack.c.h.b16 %v1049
  %v2734 = vunpack.c.l.b16 %v1050
  %v2735 = vunpack.c.h.b16 %v1050
  %v2736 = vunpack.c.l.b16 %v1051
  %v2737 = vunpack.c.h.b16 %v1051
  %v2738 = vunpack.c.l.b16 %v1052
  %v2739 = vunpack.c.h.b16 %v1052
  %v2740 = vunpack.c.l.b16 %v1053
  %v2741 = vunpack.c.h.b16 %v1053
  %v2742 = vunpack.c.l.b16 %v1054
  %v2743 = vunpack.c.h.b16 %v1054
  %v2744 = vunpack.c.l.b16 %v1055
  %v2745 = vunpack.c.h.b16 %v1055
  %v2746 = vunpack.c.l.b16 %v1056
  %v2747 = vunpack.c.h.b16 %v1056
  %v2748 = vunpack.c.l.b16 %v1057
  %v2749 = vunpack.c.l.b16 %v1058
  %v2750 = vunpack.c.h.b16 %v1058
  %v2751 = vunpack.c.l.b16 %v1059
  %v2752 = vunpack.c.h.b16 %v1059
  %v2753 = vunpack.c.l.b16 %v1060
  %v2754 = vunpack.c.h.b16 %v1060
  %v2755 = vunpack.c.l.b16 %v1061
  %v2756 = vunpack.c.h.b16 %v1061
  %v2757 = vunpack.c.l.b16 %v1062
  %v2758 = vunpack.c.h.b16 %v1062
  %v2759 = vunpack.c.l.b16 %v1063
  %v2760 = vunpack.c.h.b16 %v1063
  %v2761 = vunpack.c.l.b16 %v1064
  %v2762 = vunpack.c.h.b16 %v1064
  %v2763 = vunpack.c.l.b16 %v1065
  %v2764 = vunpack.c.h.b16 %v1065
  %v2765 = vunpack.c.l.b16 %v1066
  %v2766 = vunpack.c.l.b16 %v1067
  %v2767 = vunpack.c.h.b16 %v1067
  %v2768 = vunpack.c.l.b16 %v1068
  %v2769 = vunpack.c.h.b16 %v1068
  %v2770 = vunpack.c.l.b16 %v1069
  %v2771 = vunpack.c.h.b16 %v1069
  %v2772 = vunpack.c.l.b16 %v1070
  %v2773 = vunpack.c.h.b16 %v1070
  %v2774 = vunpack.c.l.b16 %v1071
  %v2775 = vunpack.c.h.b16 %v1071
  %v2776 = vunpack.c.l.b16 %v1072
  %v2777 = vunpack.c.h.b16 %v1072
  %v2778 = vunpack.c.l.b16 %v1073
  %v2779 = vunpack.c.h.b16 %v1073
  %v2780 = vunpack.c.l.b16 %v1074
  %v2781 = vunpack.c.h.b16 %v1074
  %v2782 = vunpack.c.l.b16 %v1075
  %v2783 = vunpack.c.l.b16 %v1076
  %v2784 = vunpack.c.h.b16 %v1076
  %v2785 = vunpack.c.l.b16 %v1077
  %v2786 = vunpack.c.h.b16 %v1077
  %v2787 = vunpack.c.l.b16 %v1078
  %v2788 = vunpack.c.h.b16 %v1078
  %v2789 = vunpack.c.l.b16 %v1079
  %v2790 = vunpack.c.h.b16 %v1079
  %v2791 = vunpack.c.l.b16 %v1080
  %v2792 = vunpack.c.h.b16 %v1080
  %v2793 = vunpack.c.l.b16 %v1081
  %v2794 = vunpack.c.h.b16 %v1081
  %v2795 = vunpack.c.l.b16 %v1082
  %v2796 = vunpack.c.h.b16 %v1082
  %v2797 = vunpack.c.l.b16 %v1083
  %v2798 = vunpack.c.h.b16 %v1083
  %v2799 = vunpack.c.l.b16 %v1084
  %v2800 = vunpack.c.l.b16 %v1085
  %v2801 = vunpack.c.h.b16 %v1085
  %v2802 = vunpack.c.l.b16 %v1086
  %v2803 = vunpack.c.h.b16 %v1086
  %v2804 = vunpack.c.l.b16 %v1087
  %v2805 = vunpack.c.h.b16 %v1087
  %v2806 = vunpack.c.l.b16 %v1088
  %v2807 = vunpack.c.h.b16 %v1088
  %v2808 = vunpack.c.l.b16 %v1089
  %v2809 = vunpack.c.h.b16 %v1089
  %v2810 = vunpack.c.l.b16 %v1090
  %v2811 = vunpack.c.h.b16 %v1090
  %v2812 = vunpack.c.l.b16 %v1091
  %v2813 = vunpack.c.h.b16 %v1091
  %v2814 = vunpack.c.l.b16 %v1092
  %v2815 = vunpack.c.h.b16 %v1092
  %v2816 = vunpack.c.l.b16 %v1093
  %v2817 = vunpack.c.l.b16 %v1094
  %v2818 = vunpack.c.h.b16 %v1094
  %v2819 = vunpack.c.l.b16 %v1095
  %v2820 = vunpack.c.h.b16 %v1095
  %v2821 = vunpack.c.l.b16 %v1096
  %v2822 = vunpack.c.h.b16 %v1096
  %v2823 = vunpack.c.l.b16 %v1097
  %v2824 = vunpack.c.h.b16 %v1097
  %v2825 = vunpack.c.l.b16 %v1098
  %v2826 = vunpack.c.h.b16 %v1098
  %v2827 = vunpack.c.l.b16 %v1099
  %v2828 = vunpack.c.h.b16 %v1099
  %v2829 = vunpack.c.l.b16 %v1100
  %v2830 = vunpack.c.h.b16 %v1100
  %v2831 = vunpack.c.l.b16 %v1101
  %v2832 = vunpack.c.h.b16 %v1101
  %v2833 = vunpack.c.l.b16 %v1102
  %v2834 = vunpack.c.l.b16 %v1103
  %v2835 = vunpack.c.h.b16 %v1103
  %v2836 = vunpack.c.l.b16 %v1104
  %v2837 = vunpack.c.h.b16 %v1104
  %v2838 = vunpack.c.l.b16 %v1105
  %v2839 = vunpack.c.h.b16 %v1105
  %v2840 = vunpack.c.l.b16 %v1106
  %v2841 = vunpack.c.h.b16 %v1106
  %v2842 = vunpack.c.l.b16 %v1107
  %v2843 = vunpack.c.h.b16 %v1107
  %v2844 = vunpack.c.l.b16 %v1108
  %v2845 = vunpack.c.h.b16 %v1108
  %v2846 = vunpack.c.l.b16 %v1109
  %v2847 = vunpack.c.h.b16 %v1109
  %v2848 = vunpack.c.l.b16 %v1110
  %v2849 = vunpack.c.h.b16 %v1110
  %v2850 = vunpack.c.l.b16 %v1111
  %v2851 = vunpack.c.l.b16 %v1112
  %v2852 = vunpack.c.h.b16 %v1112
  %v2853 = vunpack.c.l.b16 %v1113
  %v2854 = vunpack.c.h.b16 %v1113
  %v2855 = vunpack.c.l.b16 %v1114
  %v2856 = vunpack.c.h.b16 %v1114
  %v2857 = vunpack.c.l.b16 %v1115
  %v2858 = vunpack.c.h.b16 %v1115
  %v2859 = vunpack.c.l.b16 %v1116
  %v2860 = vunpack.c.h.b16 %v1116
  %v2861 = vunpack.c.l.b16 %v1117
  %v2862 = vunpack.c.h.b16 %v1117
  %v2863 = vunpack.c.l.b16 %v1118
  %v2864 = vunpack.c.h.b16 %v1118
  %v2865 = vunpack.c.l.b16 %v1119
  %v2866 = vunpack.c.h.b16 %v1119
  %v2867 = vunpack.c.l.b16 %v1120
  %v2868 = vunpack.c.l.b16 %v1121
  %v2869 = vunpack.c.h.b16 %v1121
  %v2870 = vunpack.c.l.b16 %v1122
  %v2871 = vunpack.c.h.b16 %v1122
  %v2872 = vunpack.c.l.b16 %v1123
  %v2873 = vunpack.c.h.b16 %v1123
  %v2874 = vunpack.c.l.b16 %v1124
  %v2875 = vunpack.c.h.b16 %v1124
  %v2876 = vunpack.c.l.b16 %v1125
  %v2877 = vunpack.c.h.b16 %v1125
  %v2878 = vunpack.c.l.b16 %v1126
  %v2879 = vunpack.c.h.b16 %v1126
  %v2880 = vunpack.c.l.b16 %v1127
  %v2881 = vunpack.c.h.b16 %v1127
  %v2882 = vunpack.c.l.b16 %v1128
  %v2883 = vunpack.c.h.b16 %v1128
  %v2884 = vunpack.c.l.b16 %v1129
  %v2885 = vunpack.c.l.b16 %v1130
  %v2886 = vunpack.c.h.b16 %v1130
  %v2887 = vunpack.c.l.b16 %v1131
  %v2888 = vunpack.c.h.b16 %v1131
  %v2889 = vunpack.c.l.b16 %v1132
  %v2890 = vunpack.c.h.b16 %v1132
  %v2891 = vunpack.c.l.b16 %v1133
  %v2892 = vunpack.c.h.b16 %v1133
  %v2893 = vunpack.c.l.b16 %v1134
  %v2894 = vunpack.c.h.b16 %v1134
  %v2895 = vunpack.c.l.b16 %v1135
  %v2896 = vunpack.c.h.b16 %v1135
  %v2897 = vunpack.c.l.b16 %v1136
  %v2898 = vunpack.c.h.b16 %v1136
  %v2899 = vunpack.c.l.b16 %v1137
  %v2900 = vunpack.c.h.b16 %v1137
  %v2901 = vunpack.c.l.b16 %v1138
  %v2902 = vunpack.c.l.b16 %v1139
  %v2903 = vunpack.c.h.b16 %v1139
  %v2904 = vunpack.c.l.b16 %v1140
  %v2905 = vunpack.c.h.b16 %v1140
  %v2906 = vunpack.c.l.b16 %v1141
  %v2907 = vunpack.c.h.b16 %v1141
  %v2908 = vunpack.c.l.b16 %v1142
  %v2909 = vunpack.c.h.b16 %v1142
  %v2910 = vunpack.c.l.b16 %v1143
  %v2911 = vunpack.c.h.b16 %v1143
  %v2912 = vunpack.c.l.b16 %v1144
  %v2913 = vunpack.c.h.b16 %v1144
  %v2914 = vunpack.c.l.b16 %v1145
  %v2915 = vunpack.c.h.b16 %v1145
  %v2916 = vunpack.c.l.b16 %v1146
  %v2917 = vunpack.c.h.b16 %v1146
  %v2918 = vunpack.c.l.b16 %v1147
  %v2919 = vunpack.c.l.b16 %v1148
  %v2920 = vunpack.c.h.b16 %v1148
  %v2921 = vunpack.c.l.b16 %v1149
  %v2922 = vunpack.c.h.b16 %v1149
  %v2923 = vunpack.c.l.b16 %v1150
  %v2924 = vunpack.c.h.b16 %v1150
  %v2925 = vunpack.c.l.b16 %v1151
  %v2926 = vunpack.c.h.b16 %v1151
  %v2927 = vunpack.c.l.b16 %v1152
  %v2928 = vunpack.c.h.b16 %v1152
  %v2929 = vunpack.c.l.b16 %v1153
  %v2930 = vunpack.c.h.b16 %v1153
  %v2931 = vunpack.c.l.b16 %v1154
  %v2932 = vunpack.c.h.b16 %v1154
  %v2933 = vunpack.c.l.b16 %v1155
  %v2934 = vunpack.c.h.b16 %v1155
  %v2935 = vunpack.c.l.b16 %v1156
  %v2936 = vunpack.c.l.b16 %v1157
  %v2937 = vunpack.c.h.b16 %v1157
  %v2938 = vunpack.c.l.b16 %v1158
  %v2939 = vunpack.c.h.b16 %v1158
  %v2940 = vunpack.c.l.b16 %v1159
  %v2941 = vunpack.c.h.b16 %v1159
  %v2942 = vunpack.c.l.b16 %v1160
  %v2943 = vunpack.c.h.b16 %v1160
  %v2944 = vunpack.c.l.b16 %v1161
  %v2945 = vunpack.c.h.b16 %v1161
  %v2946 = vunpack.c.l.b16 %v1162
  %v2947 = vunpack.c.h.b16 %v1162
  %v2948 = vunpack.c.l.b16 %v1163
  %v2949 = vunpack.c.h.b16 %v1163
  %v2950 = vunpack.c.l.b16 %v1164
  %v2951 = vunpack.c.h.b16 %v1164
  %v2952 = vunpack.c.l.b16 %v1165
  %v2953 = vunpack.c.l.b16 %v1166
  %v2954 = vunpack.c.h.b16 %v1166
  %v2955 = vunpack.c.l.b16 %v1167
  %v2956 = vunpack.c.h.b16 %v1167
  %v2957 = vunpack.c.l.b16 %v1168
  %v2958 = vunpack.c.h.b16 %v1168
  %v2959 = vunpack.c.l.b16 %v1169
  %v2960 = vunpack.c.h.b16 %v1169
  %v2961 = vunpack.c.l.b16 %v1170
  %v2962 = vunpack.c.h.b16 %v1170
  %v2963 = vunpack.c.l.b16 %v1171
  %v2964 = vunpack.c.h.b16 %v1171
  %v2965 = vunpack.c.l.b16 %v1172
  %v2966 = vunpack.c.h.b16 %v1172
  %v2967 = vunpack.c.l.b16 %v1173
  %v2968 = vunpack.c.h.b16 %v1173
  %v2969 = vunpack.c.l.b16 %v1174
  %v2970 = vunpack.c.l.b16 %v1175
  %v2971 = vunpack.c.h.b16 %v1175
  %v2972 = vunpack.c.l.b16 %v1176
  %v2973 = vunpack.c.h.b16 %v1176
  %v2974 = vunpack.c.l.b16 %v1177
  %v2975 = vunpack.c.h.b16 %v1177
  %v2976 = vunpack.c.l.b16 %v1178
  %v2977 = vunpack.c.h.b16 %v1178
  %v2978 = vunpack.c.l.b16 %v1179
  %v2979 = vunpack.c.h.b16 %v1179
  %v2980 = vunpack.c.l.b16 %v1180
  %v2981 = vunpack.c.h.b16 %v1180
  %v2982 = vunpack.c.l.b16 %v1181
  %v2983 = vunpack.c.h.b16 %v1181
  %v2984 = vunpack.c.l.b16 %v1182
  %v2985 = vunpack.c.h.b16 %v1182
  %v2986 = vunpack.c.l.b16 %v1183
  %v2987 = vunpack.c.l.b16 %v1184
  %v2988 = vunpack.c.h.b16 %v1184
  %v2989 = vunpack.c.l.b16 %v1185
  %v2990 = vunpack.c.h.b16 %v1185
  %v2991 = vunpack.c.l.b16 %v1186
  %v2992 = vunpack.c.h.b16 %v1186
  %v2993 = vunpack.c.l.b16 %v1187
  %v2994 = vunpack.c.h.b16 %v1187
  %v2995 = vunpack.c.l.b16 %v1188
  %v2996 = vunpack.c.h.b16 %v1188
  %v2997 = vunpack.c.l.b16 %v1189
  %v2998 = vunpack.c.h.b16 %v1189
  %v2999 = vunpack.c.l.b16 %v1190
  %v3000 = vunpack.c.h.b16 %v1190
  %v3001 = vunpack.c.l.b16 %v1191
  %v3002 = vunpack.c.h.b16 %v1191
  %v3003 = vunpack.c.l.b16 %v1192
  %v3004 = vunpack.c.l.b16 %v1193
  %v3005 = vunpack.c.h.b16 %v1193
  %v3006 = vunpack.c.l.b16 %v1194
  %v3007 = vunpack.c.h.b16 %v1194
  %v3008 = vunpack.c.l.b16 %v1195
  %v3009 = vunpack.c.h.b16 %v1195
  %v3010 = vunpack.c.l.b16 %v1196
  %v3011 = vunpack.c.h.b16 %v1196
  %v3012 = vunpack.c.l.b16 %v1197
  %v3013 = vunpack.c.h.b16 %v1197
  %v3014 = vunpack.c.l.b16 %v1198
  %v3015 = vunpack.c.h.b16 %v1198
  %v3016 = vunpack.c.l.b16 %v1199
  %v3017 = vunpack.c.h.b16 %v1199
  %v3018 = vunpack.c.l.b16 %v1200
  %v3019 = vunpack.c.h.b16 %v1200
  %v3020 = vunpack.c.l.b16 %v1201
  %v3021 = vunpack.c.l.b16 %v1202
  %v3022 = vunpack.c.h.b16 %v1202
  %v3023 = vunpack.c.l.b16 %v1203
  %v3024 = vunpack.c.h.b16 %v1203
  %v3025 = vunpack.c.l.b16 %v1204
  %v3026 = vunpack.c.h.b16 %v1204
  %v3027 = vunpack.c.l.b16 %v1205
  %v3028 = vunpack.c.h.b16 %v1205
  %v3029 = vunpack.c.l.b16 %v1206
  %v3030 = vunpack.c.h.b16 %v1206
  %v3031 = vunpack.c.l.b16 %v1207
  %v3032 = vunpack.c.h.b16 %v1207
  %v3033 = vunpack.c.l.b16 %v1208
  %v3034 = vunpack.c.h.b16 %v1208
  %v3035 = vunpack.c.l.b16 %v1209
  %v3036 = vunpack.c.h.b16 %v1209
  %v3037 = vunpack.c.l.b16 %v1210
  %v3038 = vunpack.c.l.b16 %v1211
  %v3039 = vunpack.c.h.b16 %v1211
  %v3040 = vunpack.c.l.b16 %v1212
  %v3041 = vunpack.c.h.b16 %v1212
  %v3042 = vunpack.c.l.b16 %v1213
  %v3043 = vunpack.c.h.b16 %v1213
  %v3044 = vunpack.c.l.b16 %v1214
  %v3045 = vunpack.c.h.b16 %v1214
  %v3046 = vunpack.c.l.b16 %v1215
  %v3047 = vunpack.c.h.b16 %v1215
  %v3048 = vunpack.c.l.b16 %v1216
  %v3049 = vunpack.c.h.b16 %v1216
  %v3050 = vunpack.c.l.b16 %v1217
  %v3051 = vunpack.c.h.b16 %v1217
  %v3052 = vunpack.c.l.b16 %v1218
  %v3053 = vunpack.c.h.b16 %v1218
  %v3054 = vunpack.c.l.b16 %v1219
  %v3055 = vunpack.c.l.b16 %v1220
  %v3056 = vunpack.c.h.b16 %v1220
  %v3057 = vunpack.c.l.b16 %v1221
  %v3058 = vunpack.c.h.b16 %v1221
  %v3059 = vunpack.c.l.b16 %v1222
  %v3060 = vunpack.c.h.b16 %v1222
  %v3061 = vunpack.c.l.b16 %v1223
  %v3062 = vunpack.c.h.b16 %v1223
  %v3063 = vunpack.c.l.b16 %v1224
  %v3064 = vunpack.c.h.b16 %v1224
  %v3065 = vunpack.c.l.b16 %v1225
  %v3066 = vunpack.c.h.b16 %v1225
  %v3067 = vunpack.c.l.b16 %v1226
  %v3068 = vunpack.c.h.b16 %v1226
  %v3069 = vunpack.c.l.b16 %v1227
  %v3070 = vunpack.c.h.b16 %v1227
  %v3071 = vunpack.c.l.b16 %v1228
  %v3072 = vunpack.c.l.b16 %v1229
  %v3073 = vunpack.c.h.b16 %v1229
  %v3074 = vunpack.c.l.b16 %v1230
  %v3075 = vunpack.c.h.b16 %v1230
  %v3076 = vunpack.c.l.b16 %v1231
  %v3077 = vunpack.c.h.b16 %v1231
  %v3078 = vunpack.c.l.b16 %v1232
  %v3079 = vunpack.c.h.b16 %v1232
  %v3080 = vunpack.c.l.b16 %v1233
  %v3081 = vunpack.c.h.b16 %v1233
  %v3082 = vunpack.c.l.b16 %v1234
  %v3083 = vunpack.c.h.b16 %v1234
  %v3084 = vunpack.c.l.b16 %v1235
  %v3085 = vunpack.c.h.b16 %v1235
  %v3086 = vunpack.c.l.b16 %v1236
  %v3087 = vunpack.c.h.b16 %v1236
  %v3088 = vunpack.c.l.b16 %v1237
  %v3089 = vunpack.c.l.b16 %v1238
  %v3090 = vunpack.c.h.b16 %v1238
  %v3091 = vunpack.c.l.b16 %v1239
  %v3092 = vunpack.c.h.b16 %v1239
  %v3093 = vunpack.c.l.b16 %v1240
  %v3094 = vunpack.c.h.b16 %v1240
  %v3095 = vunpack.c.l.b16 %v1241
  %v3096 = vunpack.c.h.b16 %v1241
  %v3097 = vunpack.c.l.b16 %v1242
  %v3098 = vunpack.c.h.b16 %v1242
  %v3099 = vunpack.c.l.b16 %v1243
  %v3100 = vunpack.c.h.b16 %v1243
  %v3101 = vunpack.c.l.b16 %v1244
  %v3102 = vunpack.c.h.b16 %v1244
  %v3103 = vunpack.c.l.b16 %v1245
  %v3104 = vunpack.c.h.b16 %v1245
  %v3105 = vunpack.c.l.b16 %v1246
  %v3106 = vunpack.c.l.b16 %v1247
  %v3107 = vunpack.c.h.b16 %v1247
  %v3108 = vunpack.c.l.b16 %v1248
  %v3109 = vunpack.c.h.b16 %v1248
  %v3110 = vunpack.c.l.b16 %v1249
  %v3111 = vunpack.c.h.b16 %v1249
  %v3112 = vunpack.c.l.b16 %v1250
  %v3113 = vunpack.c.h.b16 %v1250
  %v3114 = vunpack.c.l.b16 %v1251
  %v3115 = vunpack.c.h.b16 %v1251
  %v3116 = vunpack.c.l.b16 %v1252
  %v3117 = vunpack.c.h.b16 %v1252
  %v3118 = vunpack.c.l.b16 %v1253
  %v3119 = vunpack.c.h.b16 %v1253
  %v3120 = vunpack.c.l.b16 %v1254
  %v3121 = vunpack.c.h.b16 %v1254
  %v3122 = vunpack.c.l.b16 %v1255
  %v3123 = vunpack.c.l.b16 %v1256
  %v3124 = vunpack.c.h.b16 %v1256
  %v3125 = vunpack.c.l.b16 %v1257
  %v3126 = vunpack.c.h.b16 %v1257
  %v3127 = vunpack.c.l.b16 %v1258
  %v3128 = vunpack.c.h.b16 %v1258
  %v3129 = vunpack.c.l.b16 %v1259
  %v3130 = vunpack.c.h.b16 %v1259
  %v3131 = vunpack.c.l.b16 %v1260
  %v3132 = vunpack.c.h.b16 %v1260
  %v3133 = vunpack.c.l.b16 %v1261
  %v3134 = vunpack.c.h.b16 %v1261
  %v3135 = vunpack.c.l.b16 %v1262
  %v3136 = vunpack.c.h.b16 %v1262
  %v3137 = vunpack.c.l.b16 %v1263
  %v3138 = vunpack.c.h.b16 %v1263
  %v3139 = vunpack.c.l.b16 %v1264
  %v3140 = vunpack.c.l.b16 %v1265
  %v3141 = vunpack.c.h.b16 %v1265
  %v3142 = vunpack.c.l.b16 %v1266
  %v3143 = vunpack.c.h.b16 %v1266
  %v3144 = vunpack.c.l.b16 %v1267
  %v3145 = vunpack.c.h.b16 %v1267
  %v3146 = vunpack.c.l.b16 %v1268
  %v3147 = vunpack.c.h.b16 %v1268
  %v3148 = vunpack.c.l.b16 %v1269
  %v3149 = vunpack.c.h.b16 %v1269
  %v3150 = vunpack.c.l.b16 %v1270
  %v3151 = vunpack.c.h.b16 %v1270
  %v3152 = vunpack.c.l.b16 %v1271
  %v3153 = vunpack.c.h.b16 %v1271
  %v3154 = vunpack.c.l.b16 %v1272
  %v3155 = vunpack.c.h.b16 %v1272
  %v3156 = vunpack.c.l.b16 %v1273
  %v3157 = vunpack.c.l.b16 %v1274
  %v3158 = vunpack.c.h.b16 %v1274
  %v3159 = vunpack.c.l.b16 %v1275
  %v3160 = vunpack.c.h.b16 %v1275
  %v3161 = vunpack.c.l.b16 %v1276
  %v3162 = vunpack.c.h.b16 %v1276
  %v3163 = vunpack.c.l.b16 %v1277
  %v3164 = vunpack.c.h.b16 %v1277
  %v3165 = vunpack.c.l.b16 %v1278
  %v3166 = vunpack.c.h.b16 %v1278
  %v3167 = vunpack.c.l.b16 %v1279
  %v3168 = vunpack.c.h.b16 %v1279
  %v3169 = vunpack.c.l.b16 %v1280
  %v3170 = vunpack.c.h.b16 %v1280
  %v3171 = vunpack.c.l.b16 %v1281
  %v3172 = vunpack.c.h.b16 %v1281
  %v3173 = vunpack.c.l.b16 %v1282
  %v3174 = vunpack.c.l.b16 %v1283
  %v3175 = vunpack.c.h.b16 %v1283
  %v3176 = vunpack.c.l.b16 %v1284
  %v3177 = vunpack.c.h.b16 %v1284
  %v3178 = vunpack.c.l.b16 %v1285
  %v3179 = vunpack.c.h.b16 %v1285
  %v3180 = vunpack.c.l.b16 %v1286
  %v3181 = vunpack.c.h.b16 %v1286
  %v3182 = vunpack.c.l.b16 %v1287
  %v3183 = vunpack.c.h.b16 %v1287
  %v3184 = vunpack.c.l.b16 %v1288
  %v3185 = vunpack.c.h.b16 %v1288
  %v3186 = vunpack.c.l.b16 %v1289
  %v3187 = vunpack.c.h.b16 %v1289
  %v3188 = vunpack.c.l.b16 %v1290
  %v3189 = vunpack.c.h.b16 %v1290
  %v3190 = vunpack.c.l.b16 %v1291
  %v3191 = vunpack.c.l.b16 %v1292
  %v3192 = vunpack.c.h.b16 %v1292
  %v3193 = vunpack.c.l.b16 %v1293
  %v3194 = vunpack.c.h.b16 %v1293
  %v3195 = vunpack.c.l.b16 %v1294
  %v3196 = vunpack.c.h.b16 %v1294
  %v3197 = vunpack.c.l.b16 %v1295
  %v3198 = vunpack.c.h.b16 %v1295
  %v3199 = vunpack.c.l.b16 %v1296
  %v3200 = vunpack.c.h.b16 %v1296
  %v3201 = vunpack.c.l.b16 %v1297
  %v3202 = vunpack.c.h.b16 %v1297
  %v3203 = vunpack.c.l.b16 %v1298
  %v3204 = vunpack.c.h.b16 %v1298
  %v3205 = vunpack.c.l.b16 %v1299
  %v3206 = vunpack.c.h.b16 %v1299
  %v3207 = vunpack.c.l.b16 %v1300
  %v3208 = vunpack.c.l.b16 %v1301
  %v3209 = vunpack.c.h.b16 %v1301
  %v3210 = vunpack.c.l.b16 %v1302
  %v3211 = vunpack.c.h.b16 %v1302
  %v3212 = vunpack.c.l.b16 %v1303
  %v3213 = vunpack.c.h.b16 %v1303
  %v3214 = vunpack.c.l.b16 %v1304
  %v3215 = vunpack.c.h.b16 %v1304
  %v3216 = vunpack.c.l.b16 %v1305
  %v3217 = vunpack.c.h.b16 %v1305
  %v3218 = vunpack.c.l.b16 %v1306
  %v3219 = vunpack.c.h.b16 %v1306
  %v3220 = vunpack.c.l.b16 %v1307
  %v3221 = vunpack.c.h.b16 %v1307
  %v3222 = vunpack.c.l.b16 %v1308
  %v3223 = vunpack.c.h.b16 %v1308
  %v3224 = vunpack.c.l.b16 %v1309
  %v3225 = vunpack.c.l.b16 %v1310
  %v3226 = vunpack.c.h.b16 %v1310
  %v3227 = vunpack.c.l.b16 %v1311
  %v3228 = vunpack.c.h.b16 %v1311
  %v3229 = vunpack.c.l.b16 %v1312
  %v3230 = vunpack.c.h.b16 %v1312
  %v3231 = vunpack.c.l.b16 %v1313
  %v3232 = vunpack.c.h.b16 %v1313
  %v3233 = vunpack.c.l.b16 %v1314
  %v3234 = vunpack.c.h.b16 %v1314
  %v3235 = vunpack.c.l.b16 %v1315
  %v3236 = vunpack.c.h.b16 %v1315
  %v3237 = vunpack.c.l.b16 %v1316
  %v3238 = vunpack.c.h.b16 %v1316
  %v3239 = vunpack.c.l.b16 %v1317
  %v3240 = vunpack.c.h.b16 %v1317
  %v3241 = vunpack.c.l.b16 %v1318
  %v3242 = vunpack.c.l.b16 %v1319
  %v3243 = vunpack.c.h.b16 %v1319
  %v3244 = vunpack.c.l.b16 %v1320
  %v3245 = vunpack.c.h.b16 %v1320
  %v3246 = vunpack.c.l.b16 %v1321
  %v3247 = vunpack.c.h.b16 %v1321
  %v3248 = vunpack.c.l.b16 %v1322
  %v3249 = vunpack.c.h.b16 %v1322
  %v3250 = vunpack.c.l.b16 %v1323
  %v3251 = vunpack.c.h.b16 %v1323
  %v3252 = vunpack.c.l.b16 %v1324
  %v3253 = vunpack.c.h.b16 %v1324
  %v3254 = vunpack.c.l.b16 %v1325
  %v3255 = vunpack.c.h.b16 %v1325
  %v3256 = vunpack.c.l.b16 %v1326
  %v3257 = vunpack.c.h.b16 %v1326
  %v3258 = vunpack.c.l.b16 %v1327
  %v3259 = vunpack.c.l.b16 %v1328
  %v3260 = vunpack.c.h.b16 %v1328
  %v3261 = vunpack.c.l.b16 %v1329
  %v3262 = vunpack.c.h.b16 %v1329
  %v3263 = vunpack.c.l.b16 %v1330
  %v3264 = vunpack.c.h.b16 %v1330
  %v3265 = vunpack.c.l.b16 %v1331
  %v3266 = vunpack.c.h.b16 %v1331
  %v3267 = vunpack.c.l.b16 %v1332
  %v3268 = vunpack.c.h.b16 %v1332
  %v3269 = vunpack.c.l.b16 %v1333
  %v3270 = vunpack.c.h.b16 %v1333
  %v3271 = vunpack.c.l.b16 %v1334
  %v3272 = vunpack.c.h.b16 %v1334
  %v3273 = vunpack.c.l.b16 %v1335
  %v3274 = vunpack.c.h.b16 %v1335
  %v3275 = vunpack.c.l.b16 %v1336
  %v3276 = vunpack.c.l.b16 %v1337
  %v3277 = vunpack.c.h.b16 %v1337
  %v3278 = vunpack.c.l.b16 %v1338
  %v3279 = vunpack.c.h.b16 %v1338
  %v3280 = vunpack.c.l.b16 %v1339
  %v3281 = vunpack.c.h.b16 %v1339
  %v3282 = vunpack.c.l.b16 %v1340
  %v3283 = vunpack.c.h.b16 %v1340
  %v3284 = vunpack.c.l.b16 %v1341
  %v3285 = vunpack.c.h.b16 %v1341
  %v3286 = vunpack.c.l.b16 %v1342
  %v3287 = vunpack.c.h.b16 %v1342
  %v3288 = vunpack.c.l.b16 %v1343
  %v3289 = vunpack.c.h.b16 %v1343
  %v3290 = vunpack.c.l.b16 %v1344
  %v3291 = vunpack.c.h.b16 %v1344
  %v3292 = vunpack.c.l.b16 %v1345
  %v3293 = vunpack.c.l.b16 %v1346
  %v3294 = vunpack.c.h.b16 %v1346
  %v3295 = vunpack.c.l.b16 %v1347
  %v3296 = vunpack.c.h.b16 %v1347
  %v3297 = vunpack.c.l.b16 %v1348
  %v3298 = vunpack.c.h.b16 %v1348
  %v3299 = vunpack.c.l.b16 %v1349
  %v3300 = vunpack.c.h.b16 %v1349
  %v3301 = vunpack.c.l.b16 %v1350
  %v3302 = vunpack.c.h.b16 %v1350
  %v3303 = vunpack.c.l.b16 %v1351
  %v3304 = vunpack.c.h.b16 %v1351
  %v3305 = vunpack.c.l.b16 %v1352
  %v3306 = vunpack.c.h.b16 %v1352
  %v3307 = vunpack.c.l.b16 %v1353
  %v3308 = vunpack.c.h.b16 %v1353
  %v3309 = vunpack.c.l.b16 %v1354
  %v3310 = vunpack.c.l.b16 %v1355
  %v3311 = vunpack.c.h.b16 %v1355
  %v3312 = vunpack.c.l.b16 %v1356
  %v3313 = vunpack.c.h.b16 %v1356
  %v3314 = vunpack.c.l.b16 %v1357
  %v3315 = vunpack.c.h.b16 %v1357
  %v3316 = vunpack.c.l.b16 %v1358
  %v3317 = vunpack.c.h.b16 %v1358
  %v3318 = vunpack.c.l.b16 %v1359
  %v3319 = vunpack.c.h.b16 %v1359
  %v3320 = vunpack.c.l.b16 %v1360
  %v3321 = vunpack.c.h.b16 %v1360
  %v3322 = vunpack.c.l.b16 %v1361
  %v3323 = vunpack.c.h.b16 %v1361
  %v3324 = vunpack.c.l.b16 %v1362
  %v3325 = vunpack.c.h.b16 %v1362
  %v3326 = vunpack.c.l.b16 %v1363
  %v3327 = vpack.c.b16 %v2120, %v2103
  %v3328 = vpack.c.b16 %v2121, %v2104
  %v3329 = vpack.c.b16 %v2122, %v2105
  %v3330 = vpack.c.b16 %v2123, %v2106
  %v3331 = vpack.c.b16 %v2124, %v2107
  %v3332 = vpack.c.b16 %v2125, %v2108
  %v3333 = vpack.c.b16 %v2126, %v2109
  %v3334 = vpack.c.b16 %v2127, %v2110
  %v3335 = vpack.c.b16 %v2128, %v2111
  %v3336 = vpack.c.b16 %v2129, %v2112
  %v3337 = vpack.c.b16 %v2130, %v2113
  %v3338 = vpack.c.b16 %v2131, %v2114
  %v3339 = vpack.c.b16 %v2132, %v2115
  %v3340 = vpack.c.b16 %v2133, %v2116
  %v3341 = vpack.c.b16 %v2134, %v2117
  %v3342 = vpack.c.b16 %v2135, %v2118
  %v3343 = vpack.c.b16 %v2136, %v2119
  %v3344 = vpack.c.b16 %v2154, %v2137
  %v3345 = vpack.c.b16 %v2155, %v2138
  %v3346 = vpack.c.b16 %v2156, %v2139
  %v3347 = vpack.c.b16 %v2157, %v2140
  %v3348 = vpack.c.b16 %v2158, %v2141
  %v3349 = vpack.c.b16 %v2159, %v2142
  %v3350 = vpack.c.b16 %v2160, %v2143
  %v3351 = vpack.c.b16 %v2161, %v2144
  %v3352 = vpack.c.b16 %v2162, %v2145
  %v3353 = vpack.c.b16 %v2163, %v2146
  %v3354 = vpack.c.b16 %v2164, %v2147
  %v3355 = vpack.c.b16 %v2165, %v2148
  %v3356 = vpack.c.b16 %v2166, %v2149
  %v3357 = vpack.c.b16 %v2167, %v2150
  %v3358 = vpack.c.b16 %v2168, %v2151
  %v3359 = vpack.c.b16 %v2169, %v2152
  %v3360 = vpack.c.b16 %v2170, %v2153
  %v3361 = vpack.c.b16 %v2188, %v2171
  %v3362 = vpack.c.b16 %v2189, %v2172
  %v3363 = vpack.c.b16 %v2190, %v2173
  %v3364 = vpack.c.b16 %v2191, %v2174
  %v3365 = vpack.c.b16 %v2192, %v2175
  %v3366 = vpack.c.b16 %v2193, %v2176
  %v3367 = vpack.c.b16 %v2194, %v2177
  %v3368 = vpack.c.b16 %v2195, %v2178
  %v3369 = vpack.c.b16 %v2196, %v2179
  %v3370 = vpack.c.b16 %v2197, %v2180
  %v3371 = vpack.c.b16 %v2198, %v2181
  %v3372 = vpack.c.b16 %v2199, %v2182
  %v3373 = vpack.c.b16 %v2200, %v2183
  %v3374 = vpack.c.b16 %v2201, %v2184
  %v3375 = vpack.c.b16 %v2202, %v2185
  %v3376 = vpack.c.b16 %v2203, %v2186
  %v3377 = vpack.c.b16 %v2204, %v2187
  %v3378 = vpack.c.b16 %v2222, %v2205
  %v3379 = vpack.c.b16 %v2223, %v2206
  %v3380 = vpack.c.b16 %v2224, %v2207
  %v3381 = vpack.c.b16 %v2225, %v2208
  %v3382 = vpack.c.b16 %v2226, %v2209
  %v3383 = vpack.c.b16 %v2227, %v2210
  %v3384 = vpack.c.b16 %v2228, %v2211
  %v3385 = vpack.c.b16 %v2229, %v2212
  %v3386 = vpack.c.b16 %v2230, %v2213
  %v3387 = vpack.c.b16 %v2231, %v2214
  %v3388 = vpack.c.b16 %v2232, %v2215
  %v3389 = vpack.c.b16 %v2233, %v2216
  %v3390 = vpack.c.b16 %v2234, %v2217
  %v3391 = vpack.c.b16 %v2235, %v2218
  %v3392 = vpack.c.b16 %v2236, %v2219
  %v3393 = vpack.c.b16 %v2237, %v2220
  %v3394 = vpack.c.b16 %v2238, %v2221
  %v3395 = vpack.c.b16 %v2256, %v2239
  %v3396 = vpack.c.b16 %v2257, %v2240
  %v3397 = vpack.c.b16 %v2258, %v2241
  %v3398 = vpack.c.b16 %v2259, %v2242
  %v3399 = vpack.c.b16 %v2260, %v2243
  %v3400 = vpack.c.b16 %v2261, %v2244
  %v3401 = vpack.c.b16 %v2262, %v2245
  %v3402 = vpack.c.b16 %v2263, %v2246
  %v3403 = vpack.c.b16 %v2264, %v2247
  %v3404 = vpack.c.b16 %v2265, %v2248
  %v3405 = vpack.c.b16 %v2266, %v2249
  %v3406 = vpack.c.b16 %v2267, %v2250
  %v3407 = vpack.c.b16 %v2268, %v2251
  %v3408 = vpack.c.b16 %v2269, %v2252
  %v3409 = vpack.c.b16 %v2270, %v2253
  %v3410 = vpack.c.b16 %v2271, %v2254
  %v3411 = vpack.c.b16 %v2272, %v2255
  %v3412 = vpack.c.b16 %v2290, %v2273
  %v3413 = vpack.c.b16 %v2291, %v2274
  %v3414 = vpack.c.b16 %v2292, %v2275
  %v3415 = vpack.c.b16 %v2293, %v2276
  %v3416 = vpack.c.b16 %v2294, %v2277
  %v3417 = vpack.c.b16 %v2295, %v2278
  %v3418 = vpack.c.b16 %v2296, %v2279
  %v3419 = vpack.c.b16 %v2297, %v2280
  %v3420 = vpack.c.b16 %v2298, %v2281
  %v3421 = vpack.c.b16 %v2299, %v2282
  %v3422 = vpack.c.b16 %v2300, %v2283
  %v3423 = vpack.c.b16 %v2301, %v2284
  %v3424 = vpack.c.b16 %v2302, %v2285
  %v3425 = vpack.c.b16 %v2303, %v2286
  %v3426 = vpack.c.b16 %v2304, %v2287
  %v3427 = vpack.c.b16 %v2305, %v2288
  %v3428 = vpack.c.b16 %v2306, %v2289
  %v3429 = vpack.c.b16 %v2324, %v2307
  %v3430 = vpack.c.b16 %v2325, %v2308
  %v3431 = vpack.c.b16 %v2326, %v2309
  %v3432 = vpack.c.b16 %v2327, %v2310
  %v3433 = vpack.c.b16 %v2328, %v2311
  %v3434 = vpack.c.b16 %v2329, %v2312
  %v3435 = vpack.c.b16 %v2330, %v2313
  %v3436 = vpack.c.b16 %v2331, %v2314
  %v3437 = vpack.c.b16 %v2332, %v2315
  %v3438 = vpack.c.b16 %v2333, %v2316
  %v3439 = vpack.c.b16 %v2334, %v2317
  %v3440 = vpack.c.b16 %v2335, %v2318
  %v3441 = vpack.c.b16 %v2336, %v2319
  %v3442 = vpack.c.b16 %v2337, %v2320
  %v3443 = vpack.c.b16 %v2338, %v2321
  %v3444 = vpack.c.b16 %v2339, %v2322
  %v3445 = vpack.c.b16 %v2340, %v2323
  %v3446 = vpack.c.b16 %v2358, %v2341
  %v3447 = vpack.c.b16 %v2359, %v2342
  %v3448 = vpack.c.b16 %v2360, %v2343
  %v3449 = vpack.c.b16 %v2361, %v2344
  %v3450 = vpack.c.b16 %v2362, %v2345
  %v3451 = vpack.c.b16 %v2363, %v2346
  %v3452 = vpack.c.b16 %v2364, %v2347
  %v3453 = vpack.c.b16 %v2365, %v2348
  %v3454 = vpack.c.b16 %v2366, %v2349
  %v3455 = vpack.c.b16 %v2367, %v2350
  %v3456 = vpack.c.b16 %v2368, %v2351
  %v3457 = vpack.c.b16 %v2369, %v2352
  %v3458 = vpack.c.b16 %v2370, %v2353
  %v3459 = vpack.c.b16 %v2371, %v2354
  %v3460 = vpack.c.b16 %v2372, %v2355
  %v3461 = vpack.c.b16 %v2373, %v2356
  %v3462 = vpack.c.b16 %v2374, %v2357
  %v3463 = vpack.c.b16 %v2392, %v2375
  %v3464 = vpack.c.b16 %v2393, %v2376
  %v3465 = vpack.c.b16 %v2394, %v2377
  %v3466 = vpack.c.b16 %v2395, %v2378
  %v3467 = vpack.c.b16 %v2396, %v2379
  %v3468 = vpack.c.b16 %v2397, %v2380
  %v3469 = vpack.c.b16 %v2398, %v2381
  %v3470 = vpack.c.b16 %v2399, %v2382
  %v3471 = vpack.c.b16 %v2400, %v2383
  %v3472 = vpack.c.b16 %v2401, %v2384
  %v3473 = vpack.c.b16 %v2402, %v2385
  %v3474 = vpack.c.b16 %v2403, %v2386
  %v3475 = vpack.c.b16 %v2404, %v2387
  %v3476 = vpack.c.b16 %v2405, %v2388
  %v3477 = vpack.c.b16 %v2406, %v2389
  %v3478 = vpack.c.b16 %v2407, %v2390
  %v3479 = vpack.c.b16 %v2408, %v2391
  %v3480 = vpack.c.b16 %v2426, %v2409
  %v3481 = vpack.c.b16 %v2427, %v2410
  %v3482 = vpack.c.b16 %v2428, %v2411
  %v3483 = vpack.c.b16 %v2429, %v2412
  %v3484 = vpack.c.b16 %v2430, %v2413
  %v3485 = vpack.c.b16 %v2431, %v2414
  %v3486 = vpack.c.b16 %v2432, %v2415
  %v3487 = vpack.c.b16 %v2433, %v2416
  %v3488 = vpack.c.b16 %v2434, %v2417
  %v3489 = vpack.c.b16 %v2435, %v2418
  %v3490 = vpack.c.b16 %v2436, %v2419
  %v3491 = vpack.c.b16 %v2437, %v2420
  %v3492 = vpack.c.b16 %v2438, %v2421
  %v3493 = vpack.c.b16 %v2439, %v2422
  %v3494 = vpack.c.b16 %v2440, %v2423
  %v3495 = vpack.c.b16 %v2441, %v2424
  %v3496 = vpack.c.b16 %v2442, %v2425
  %v3497 = vpack.c.b16 %v2460, %v2443
  %v3498 = vpack.c.b16 %v2461, %v2444
  %v3499 = vpack.c.b16 %v2462, %v2445
  %v3500 = vpack.c.b16 %v2463, %v2446
  %v3501 = vpack.c.b16 %v2464, %v2447
  %v3502 = vpack.c.b16 %v2465, %v2448
  %v3503 = vpack.c.b16 %v2466, %v2449
  %v3504 = vpack.c.b16 %v2467, %v2450
  %v3505 = vpack.c.b16 %v2468, %v2451
  %v3506 = vpack.c.b16 %v2469, %v2452
  %v3507 = vpack.c.b16 %v2470, %v2453
  %v3508 = vpack.c.b16 %v2471, %v2454
  %v3509 = vpack.c.b16 %v2472, %v2455
  %v3510 = vpack.c.b16 %v2473, %v2456
  %v3511 = vpack.c.b16 %v2474, %v2457
  %v3512 = vpack.c.b16 %v2475, %v2458
  %v3513 = vpack.c.b16 %v2476, %v2459
  %v3514 = vpack.c.b16 %v2494, %v2477
  %v3515 = vpack.c.b16 %v2495, %v2478
  %v3516 = vpack.c.b16 %v2496, %v2479
  %v3517 = vpack.c.b16 %v2497, %v2480
  %v3518 = vpack.c.b16 %v2498, %v2481
  %v3519 = vpack.c.b16 %v2499, %v2482
  %v3520 = vpack.c.b16 %v2500, %v2483
  %v3521 = vpack.c.b16 %v2501, %v2484
  %v3522 = vpack.c.b16 %v2502, %v2485
  %v3523 = vpack.c.b16 %v2503, %v2486
  %v3524 = vpack.c.b16 %v2504, %v2487
  %v3525 = vpack.c.b16 %v2505, %v2488
  %v3526 = vpack.c.b16 %v2506, %v2489
  %v3527 = vpack.c.b16 %v2507, %v2490
  %v3528 = vpack.c.b16 %v2508, %v2491
  %v3529 = vpack.c.b16 %v2509, %v2492
  %v3530 = vpack.c.b16 %v2510, %v2493
  %v3531 = vpack.c.b16 %v2528, %v2511
  %v3532 = vpack.c.b16 %v2529, %v2512
  %v3533 = vpack.c.b16 %v2530, %v2513
  %v3534 = vpack.c.b16 %v2531, %v2514
  %v3535 = vpack.c.b16 %v2532, %v2515
  %v3536 = vpack.c.b16 %v2533, %v2516
  %v3537 = vpack.c.b16 %v2534, %v2517
  %v3538 = vpack.c.b16 %v2535, %v2518
  %v3539 = vpack.c.b16 %v2536, %v2519
  %v3540 = vpack.c.b16 %v2537, %v2520
  %v3541 = vpack.c.b16 %v2538, %v2521
  %v3542 = vpack.c.b16 %v2539, %v2522
  %v3543 = vpack.c.b16 %v2540, %v2523
  %v3544 = vpack.c.b16 %v2541, %v2524
  %v3545 = vpack.c.b16 %v2542, %v2525
  %v3546 = vpack.c.b16 %v2543, %v2526
  %v3547 = vpack.c.b16 %v2544, %v2527
  %v3548 = vpack.c.b16 %v2562, %v2545
  %v3549 = vpack.c.b16 %v2563, %v2546
  %v3550 = vpack.c.b16 %v2564, %v2547
  %v3551 = vpack.c.b16 %v2565, %v2548
  %v3552 = vpack.c.b16 %v2566, %v2549
  %v3553 = vpack.c.b16 %v2567, %v2550
  %v3554 = vpack.c.b16 %v2568, %v2551
  %v3555 = vpack.c.b16 %v2569, %v2552
  %v3556 = vpack.c.b16 %v2570, %v2553
  %v3557 = vpack.c.b16 %v2571, %v2554
  %v3558 = vpack.c.b16 %v2572, %v2555
  %v3559 = vpack.c.b16 %v2573, %v2556
  %v3560 = vpack.c.b16 %v2574, %v2557
  %v3561 = vpack.c.b16 %v2575, %v2558
  %v3562 = vpack.c.b16 %v2576, %v2559
  %v3563 = vpack.c.b16 %v2577, %v2560
  %v3564 = vpack.c.b16 %v2578, %v2561
  %v3565 = vpack.c.b16 %v2596, %v2579
  %v3566 = vpack.c.b16 %v2597, %v2580
  %v3567 = vpack.c.b16 %v2598, %v2581
  %v3568 = vpack.c.b16 %v2599, %v2582
  %v3569 = vpack.c.b16 %v2600, %v2583
  %v3570 = vpack.c.b16 %v2601, %v2584
  %v3571 = vpack.c.b16 %v2602, %v2585
  %v3572 = vpack.c.b16 %v2603, %v2586
  %v3573 = vpack.c.b16 %v2604, %v2587
  %v3574 = vpack.c.b16 %v2605, %v2588
  %v3575 = vpack.c.b16 %v2606, %v2589
  %v3576 = vpack.c.b16 %v2607, %v2590
  %v3577 = vpack.c.b16 %v2608, %v2591
  %v3578 = vpack.c.b16 %v2609, %v2592
  %v3579 = vpack.c.b16 %v2610, %v2593
  %v3580 = vpack.c.b16 %v2611, %v2594
  %v3581 = vpack.c.b16 %v2612, %v2595
  %v3582 = vpack.c.b16 %v2630, %v2613
  %v3583 = vpack.c.b16 %v2631, %v2614
  %v3584 = vpack.c.b16 %v2632, %v2615
  %v3585 = vpack.c.b16 %v2633, %v2616
  %v3586 = vpack.c.b16 %v2634, %v2617
  %v3587 = vpack.c.b16 %v2635, %v2618
  %v3588 = vpack.c.b16 %v2636, %v2619
  %v3589 = vpack.c.b16 %v2637, %v2620
  %v3590 = vpack.c.b16 %v2638, %v2621
  %v3591 = vpack.c.b16 %v2639, %v2622
  %v3592 = vpack.c.b16 %v2640, %v2623
  %v3593 = vpack.c.b16 %v2641, %v2624
  %v3594 = vpack.c.b16 %v2642, %v2625
  %v3595 = vpack.c.b16 %v2643, %v2626
  %v3596 = vpack.c.b16 %v2644, %v2627
  %v3597 = vpack.c.b16 %v2645, %v2628
  %v3598 = vpack.c.b16 %v2646, %v2629
  %v3599 = vpack.c.b16 %v2664, %v2647
  %v3600 = vpack.c.b16 %v2665, %v2648
  %v3601 = vpack.c.b16 %v2666, %v2649
  %v3602 = vpack.c.b16 %v2667, %v2650
  %v3603 = vpack.c.b16 %v2668, %v2651
  %v3604 = vpack.c.b16 %v2669, %v2652
  %v3605 = vpack.c.b16 %v2670, %v2653
  %v3606 = vpack.c.b16 %v2671, %v2654
  %v3607 = vpack.c.b16 %v2672, %v2655
  %v3608 = vpack.c.b16 %v2673, %v2656
  %v3609 = vpack.c.b16 %v2674, %v2657
  %v3610 = vpack.c.b16 %v2675, %v2658
  %v3611 = vpack.c.b16 %v2676, %v2659
  %v3612 = vpack.c.b16 %v2677, %v2660
  %v3613 = vpack.c.b16 %v2678, %v2661
  %v3614 = vpack.c.b16 %v2679, %v2662
  %v3615 = vpack.c.b16 %v2680, %v2663
  %v3616 = vpack.c.b16 %v2698, %v2681
  %v3617 = vpack.c.b16 %v2699, %v2682
  %v3618 = vpack.c.b16 %v2700, %v2683
  %v3619 = vpack.c.b16 %v2701, %v2684
  %v3620 = vpack.c.b16 %v2702, %v2685
  %v3621 = vpack.c.b16 %v2703, %v2686
  %v3622 = vpack.c.b16 %v2704, %v2687
  %v3623 = vpack.c.b16 %v2705, %v2688
  %v3624 = vpack.c.b16 %v2706, %v2689
  %v3625 = vpack.c.b16 %v2707, %v2690
  %v3626 = vpack.c.b16 %v2708, %v2691
  %v3627 = vpack.c.b16 %v2709, %v2692
  %v3628 = vpack.c.b16 %v2710, %v2693
  %v3629 = vpack.c.b16 %v2711, %v2694
  %v3630 = vpack.c.b16 %v2712, %v2695
  %v3631 = vpack.c.b16 %v2713, %v2696
  %v3632 = vpack.c.b16 %v2714, %v2697
  %v3633 = vpack.c.b16 %v2732, %v2715
  %v3634 = vpack.c.b16 %v2733, %v2716
  %v3635 = vpack.c.b16 %v2734, %v2717
  %v3636 = vpack.c.b16 %v2735, %v2718
  %v3637 = vpack.c.b16 %v2736, %v2719
  %v3638 = vpack.c.b16 %v2737, %v2720
  %v3639 = vpack.c.b16 %v2738, %v2721
  %v3640 = vpack.c.b16 %v2739, %v2722
  %v3641 = vpack.c.b16 %v2740, %v2723
  %v3642 = vpack.c.b16 %v2741, %v2724
  %v3643 = vpack.c.b16 %v2742, %v2725
  %v3644 = vpack.c.b16 %v2743, %v2726
  %v3645 = vpack.c.b16 %v2744, %v2727
  %v3646 = vpack.c.b16 %v2745, %v2728
  %v3647 = vpack.c.b16 %v2746, %v2729
  %v3648 = vpack.c.b16 %v2747, %v2730
  %v3649 = vpack.c.b16 %v2748, %v2731
  %v3650 = vpack.c.b16 %v2766, %v2749
  %v3651 = vpack.c.b16 %v2767, %v2750
  %v3652 = vpack.c.b16 %v2768, %v2751
  %v3653 = vpack.c.b16 %v2769, %v2752
  %v3654 = vpack.c.b16 %v2770, %v2753
  %v3655 = vpack.c.b16 %v2771, %v2754
  %v3656 = vpack.c.b16 %v2772, %v2755
  %v3657 = vpack.c.b16 %v2773, %v2756
  %v3658 = vpack.c.b16 %v2774, %v2757
  %v3659 = vpack.c.b16 %v2775, %v2758
  %v3660 = vpack.c.b16 %v2776, %v2759
  %v3661 = vpack.c.b16 %v2777, %v2760
  %v3662 = vpack.c.b16 %v2778, %v2761
  %v3663 = vpack.c.b16 %v2779, %v2762
  %v3664 = vpack.c.b16 %v2780, %v2763
  %v3665 = vpack.c.b16 %v2781, %v2764
  %v3666 = vpack.c.b16 %v2782, %v2765
  %v3667 = vpack.c.b16 %v2800, %v2783
  %v3668 = vpack.c.b16 %v2801, %v2784
  %v3669 = vpack.c.b16 %v2802, %v2785
  %v3670 = vpack.c.b16 %v2803, %v2786
  %v3671 = vpack.c.b16 %v2804, %v2787
  %v3672 = vpack.c.b16 %v2805, %v2788
  %v3673 = vpack.c.b16 %v2806, %v2789
  %v3674 = vpack.c.b16 %v2807, %v2790
  %v3675 = vpack.c.b16 %v2808, %v2791
  %v3676 = vpack.c.b16 %v2809, %v2792
  %v3677 = vpack.c.b16 %v2810, %v2793
  %v3678 = vpack.c.b16 %v2811, %v2794
  %v3679 = vpack.c.b16 %v2812, %v2795
  %v3680 = vpack.c.b16 %v2813, %v2796
  %v3681 = vpack.c.b16 %v2814, %v2797
  %v3682 = vpack.c.b16 %v2815, %v2798
  %v3683 = vpack.c.b16 %v2816, %v2799
  %v3684 = vpack.c.b16 %v2834, %v2817
  %v3685 = vpack.c.b16 %v2835, %v2818
  %v3686 = vpack.c.b16 %v2836, %v2819
  %v3687 = vpack.c.b16 %v2837, %v2820
  %v3688 = vpack.c.b16 %v2838, %v2821
  %v3689 = vpack.c.b16 %v2839, %v2822
  %v3690 = vpack.c.b16 %v2840, %v2823
  %v3691 = vpack.c.b16 %v2841, %v2824
  %v3692 = vpack.c.b16 %v2842, %v2825
  %v3693 = vpack.c.b16 %v2843, %v2826
  %v3694 = vpack.c.b16 %v2844, %v2827
  %v3695 = vpack.c.b16 %v2845, %v2828
  %v3696 = vpack.c.b16 %v2846, %v2829
  %v3697 = vpack.c.b16 %v2847, %v2830
  %v3698 = vpack.c.b16 %v2848, %v2831
  %v3699 = vpack.c.b16 %v2849, %v2832
  %v3700 = vpack.c.b16 %v2850, %v2833
  %v3701 = vpack.c.b16 %v2868, %v2851
  %v3702 = vpack.c.b16 %v2869, %v2852
  %v3703 = vpack.c.b16 %v2870, %v2853
  %v3704 = vpack.c.b16 %v2871, %v2854
  %v3705 = vpack.c.b16 %v2872, %v2855
  %v3706 = vpack.c.b16 %v2873, %v2856
  %v3707 = vpack.c.b16 %v2874, %v2857
  %v3708 = vpack.c.b16 %v2875, %v2858
  %v3709 = vpack.c.b16 %v2876, %v2859
  %v3710 = vpack.c.b16 %v2877, %v2860
  %v3711 = vpack.c.b16 %v2878, %v2861
  %v3712 = vpack.c.b16 %v2879, %v2862
  %v3713 = vpack.c.b16 %v2880, %v2863
  %v3714 = vpack.c.b16 %v2881, %v2864
  %v3715 = vpack.c.b16 %v2882, %v2865
  %v3716 = vpack.c.b16 %v2883, %v2866
  %v3717 = vpack.c.b16 %v2884, %v2867
  %v3718 = vpack.c.b16 %v2902, %v2885
  %v3719 = vpack.c.b16 %v2903, %v2886
  %v3720 = vpack.c.b16 %v2904, %v2887
  %v3721 = vpack.c.b16 %v2905, %v2888
  %v3722 = vpack.c.b16 %v2906, %v2889
  %v3723 = vpack.c.b16 %v2907, %v2890
  %v3724 = vpack.c.b16 %v2908, %v2891
  %v3725 = vpack.c.b16 %v2909, %v2892
  %v3726 = vpack.c.b16 %v2910, %v2893
  %v3727 = vpack.c.b16 %v2911, %v2894
  %v3728 = vpack.c.b16 %v2912, %v2895
  %v3729 = vpack.c.b16 %v2913, %v2896
  %v3730 = vpack.c.b16 %v2914, %v2897
  %v3731 = vpack.c.b16 %v2915, %v2898
  %v3732 = vpack.c.b16 %v2916, %v2899
  %v3733 = vpack.c.b16 %v2917, %v2900
  %v3734 = vpack.c.b16 %v2918, %v2901
  %v3735 = vpack.c.b16 %v2936, %v2919
  %v3736 = vpack.c.b16 %v2937, %v2920
  %v3737 = vpack.c.b16 %v2938, %v2921
  %v3738 = vpack.c.b16 %v2939, %v2922
  %v3739 = vpack.c.b16 %v2940, %v2923
  %v3740 = vpack.c.b16 %v2941, %v2924
  %v3741 = vpack.c.b16 %v2942, %v2925
  %v3742 = vpack.c.b16 %v2943, %v2926
  %v3743 = vpack.c.b16 %v2944, %v2927
  %v3744 = vpack.c.b16 %v2945, %v2928
  %v3745 = vpack.c.b16 %v2946, %v2929
  %v3746 = vpack.c.b16 %v2947, %v2930
  %v3747 = vpack.c.b16 %v2948, %v2931
  %v3748 = vpack.c.b16 %v2949, %v2932
  %v3749 = vpack.c.b16 %v2950, %v2933
  %v3750 = vpack.c.b16 %v2951, %v2934
  %v3751 = vpack.c.b16 %v2952, %v2935
  %v3752 = vpack.c.b16 %v2970, %v2953
  %v3753 = vpack.c.b16 %v2971, %v2954
  %v3754 = vpack.c.b16 %v2972, %v2955
  %v3755 = vpack.c.b16 %v2973, %v2956
  %v3756 = vpack.c.b16 %v2974, %v2957
  %v3757 = vpack.c.b16 %v2975, %v2958
  %v3758 = vpack.c.b16 %v2976, %v2959
  %v3759 = vpack.c.b16 %v2977, %v2960
  %v3760 = vpack.c.b16 %v2978, %v2961
  %v3761 = vpack.c.b16 %v2979, %v2962
  %v3762 = vpack.c.b16 %v2980, %v2963
  %v3763 = vpack.c.b16 %v2981, %v2964
  %v3764 = vpack.c.b16 %v2982, %v2965
  %v3765 = vpack.c.b16 %v2983, %v2966
  %v3766 = vpack.c.b16 %v2984, %v2967
  %v3767 = vpack.c.b16 %v2985, %v2968
  %v3768 = vpack.c.b16 %v2986, %v2969
  %v3769 = vpack.c.b16 %v3004, %v2987
  %v3770 = vpack.c.b16 %v3005, %v2988
  %v3771 = vpack.c.b16 %v3006, %v2989
  %v3772 = vpack.c.b16 %v3007, %v2990
  %v3773 = vpack.c.b16 %v3008, %v2991
  %v3774 = vpack.c.b16 %v3009, %v2992
  %v3775 = vpack.c.b16 %v3010, %v2993
  %v3776 = vpack.c.b16 %v3011, %v2994
  %v3777 = vpack.c.b16 %v3012, %v2995
  %v3778 = vpack.c.b16 %v3013, %v2996
  %v3779 = vpack.c.b16 %v3014, %v2997
  %v3780 = vpack.c.b16 %v3015, %v2998
  %v3781 = vpack.c.b16 %v3016, %v2999
  %v3782 = vpack.c.b16 %v3017, %v3000
  %v3783 = vpack.c.b16 %v3018, %v3001
  %v3784 = vpack.c.b16 %v3019, %v3002
  %v3785 = vpack.c.b16 %v3020, %v3003
  %v3786 = vpack.c.b16 %v3038, %v3021
  %v3787 = vpack.c.b16 %v3039, %v3022
  %v3788 = vpack.c.b16 %v3040, %v3023
  %v3789 = vpack.c.b16 %v3041, %v3024
  %v3790 = vpack.c.b16 %v3042, %v3025
  %v3791 = vpack.c.b16 %v3043, %v3026
  %v3792 = vpack.c.b16 %v3044, %v3027
  %v3793 = vpack.c.b16 %v3045, %v3028
  %v3794 = vpack.c.b16 %v3046, %v3029
  %v3795 = vpack.c.b16 %v3047, %v3030
  %v3796 = vpack.c.b16 %v3048, %v3031
  %v3797 = vpack.c.b16 %v3049, %v3032
  %v3798 = vpack.c.b16 %v3050, %v3033
  %v3799 = vpack.c.b16 %v3051, %v3034
  %v3800 = vpack.c.b16 %v3052, %v3035
  %v3801 = vpack.c.b16 %v3053, %v3036
  %v3802 = vpack.c.b16 %v3054, %v3037
  %v3803 = vpack.c.b16 %v3072, %v3055
  %v3804 = vpack.c.b16 %v3073, %v3056
  %v3805 = vpack.c.b16 %v3074, %v3057
  %v3806 = vpack.c.b16 %v3075, %v3058
  %v3807 = vpack.c.b16 %v3076, %v3059
  %v3808 = vpack.c.b16 %v3077, %v3060
  %v3809 = vpack.c.b16 %v3078, %v3061
  %v3810 = vpack.c.b16 %v3079, %v3062
  %v3811 = vpack.c.b16 %v3080, %v3063
  %v3812 = vpack.c.b16 %v3081, %v3064
  %v3813 = vpack.c.b16 %v3082, %v3065
  %v3814 = vpack.c.b16 %v3083, %v3066
  %v3815 = vpack.c.b16 %v3084, %v3067
  %v3816 = vpack.c.b16 %v3085, %v3068
  %v3817 = vpack.c.b16 %v3086, %v3069
  %v3818 = vpack.c.b16 %v3087, %v3070
  %v3819 = vpack.c.b16 %v3088, %v3071
  %v3820 = vpack.c.b16 %v3106, %v3089
  %v3821 = vpack.c.b16 %v3107, %v3090
  %v3822 = vpack.c.b16 %v3108, %v3091
  %v3823 = vpack.c.b16 %v3109, %v3092
  %v3824 = vpack.c.b16 %v3110, %v3093
  %v3825 = vpack.c.b16 %v3111, %v3094
  %v3826 = vpack.c.b16 %v3112, %v3095
  %v3827 = vpack.c.b16 %v3113, %v3096
  %v3828 = vpack.c.b16 %v3114, %v3097
  %v3829 = vpack.c.b16 %v3115, %v3098
  %v3830 = vpack.c.b16 %v3116, %v3099
  %v3831 = vpack.c.b16 %v3117, %v3100
  %v3832 = vpack.c.b16 %v3118, %v3101
  %v3833 = vpack.c.b16 %v3119, %v3102
  %v3834 = vpack.c.b16 %v3120, %v3103
  %v3835 = vpack.c.b16 %v3121, %v3104
  %v3836 = vpack.c.b16 %v3122, %v3105
  %v3837 = vpack.c.b16 %v3140, %v3123
  %v3838 = vpack.c.b16 %v3141, %v3124
  %v3839 = vpack.c.b16 %v3142, %v3125
  %v3840 = vpack.c.b16 %v3143, %v3126
  %v3841 = vpack.c.b16 %v3144, %v3127
  %v3842 = vpack.c.b16 %v3145, %v3128
  %v3843 = vpack.c.b16 %v3146, %v3129
  %v3844 = vpack.c.b16 %v3147, %v3130
  %v3845 = vpack.c.b16 %v3148, %v3131
  %v3846 = vpack.c.b16 %v3149, %v3132
  %v3847 = vpack.c.b16 %v3150, %v3133
  %v3848 = vpack.c.b16 %v3151, %v3134
  %v3849 = vpack.c.b16 %v3152, %v3135
  %v3850 = vpack.c.b16 %v3153, %v3136
  %v3851 = vpack.c.b16 %v3154, %v3137
  %v3852 = vpack.c.b16 %v3155, %v3138
  %v3853 = vpack.c.b16 %v3156, %v3139
  %v3854 = vpack.c.b16 %v3174, %v3157
  %v3855 = vpack.c.b16 %v3175, %v3158
  %v3856 = vpack.c.b16 %v3176, %v3159
  %v3857 = vpack.c.b16 %v3177, %v3160
  %v3858 = vpack.c.b16 %v3178, %v3161
  %v3859 = vpack.c.b16 %v3179, %v3162
  %v3860 = vpack.c.b16 %v3180, %v3163
  %v3861 = vpack.c.b16 %v3181, %v3164
  %v3862 = vpack.c.b16 %v3182, %v3165
  %v3863 = vpack.c.b16 %v3183, %v3166
  %v3864 = vpack.c.b16 %v3184, %v3167
  %v3865 = vpack.c.b16 %v3185, %v3168
  %v3866 = vpack.c.b16 %v3186, %v3169
  %v3867 = vpack.c.b16 %v3187, %v3170
  %v3868 = vpack.c.b16 %v3188, %v3171
  %v3869 = vpack.c.b16 %v3189, %v3172
  %v3870 = vpack.c.b16 %v3190, %v3173
  %v3871 = vpack.c.b16 %v3208, %v3191
  %v3872 = vpack.c.b16 %v3209, %v3192
  %v3873 = vpack.c.b16 %v3210, %v3193
  %v3874 = vpack.c.b16 %v3211, %v3194
  %v3875 = vpack.c.b16 %v3212, %v3195
  %v3876 = vpack.c.b16 %v3213, %v3196
  %v3877 = vpack.c.b16 %v3214, %v3197
  %v3878 = vpack.c.b16 %v3215, %v3198
  %v3879 = vpack.c.b16 %v3216, %v3199
  %v3880 = vpack.c.b16 %v3217, %v3200
  %v3881 = vpack.c.b16 %v3218, %v3201
  %v3882 = vpack.c.b16 %v3219, %v3202
  %v3883 = vpack.c.b16 %v3220, %v3203
  %v3884 = vpack.c.b16 %v3221, %v3204
  %v3885 = vpack.c.b16 %v3222, %v3205
  %v3886 = vpack.c.b16 %v3223, %v3206
  %v3887 = vpack.c.b16 %v3224, %v3207
  %v3888 = vpack.c.b16 %v3242, %v3225
  %v3889 = vpack.c.b16 %v3243, %v3226
  %v3890 = vpack.c.b16 %v3244, %v3227
  %v3891 = vpack.c.b16 %v3245, %v3228
  %v3892 = vpack.c.b16 %v3246, %v3229
  %v3893 = vpack.c.b16 %v3247, %v3230
  %v3894 = vpack.c.b16 %v3248, %v3231
  %v3895 = vpack.c.b16 %v3249, %v3232
  %v3896 = vpack.c.b16 %v3250, %v3233
  %v3897 = vpack.c.b16 %v3251, %v3234
  %v3898 = vpack.c.b16 %v3252, %v3235
  %v3899 = vpack.c.b16 %v3253, %v3236
  %v3900 = vpack.c.b16 %v3254, %v3237
  %v3901 = vpack.c.b16 %v3255, %v3238
  %v3902 = vpack.c.b16 %v3256, %v3239
  %v3903 = vpack.c.b16 %v3257, %v3240
  %v3904 = vpack.c.b16 %v3258, %v3241
  %v3905 = vpack.c.b16 %v3276, %v3259
  %v3906 = vpack.c.b16 %v3277, %v3260
  %v3907 = vpack.c.b16 %v3278, %v3261
  %v3908 = vpack.c.b16 %v3279, %v3262
  %v3909 = vpack.c.b16 %v3280, %v3263
  %v3910 = vpack.c.b16 %v3281, %v3264
  %v3911 = vpack.c.b16 %v3282, %v3265
  %v3912 = vpack.c.b16 %v3283, %v3266
  %v3913 = vpack.c.b16 %v3284, %v3267
  %v3914 = vpack.c.b16 %v3285, %v3268
  %v3915 = vpack.c.b16 %v3286, %v3269
  %v3916 = vpack.c.b16 %v3287, %v3270
  %v3917 = vpack.c.b16 %v3288, %v3271
  %v3918 = vpack.c.b16 %v3289, %v3272
  %v3919 = vpack.c.b16 %v3290, %v3273
  %v3920 = vpack.c.b16 %v3291, %v3274
  %v3921 = vpack.c.b16 %v3292, %v3275
  %v3922 = vpack.c.b16 %v3310, %v3293
  %v3923 = vpack.c.b16 %v3311, %v3294
  %v3924 = vpack.c.b16 %v3312, %v3295
  %v3925 = vpack.c.b16 %v3313, %v3296
  %v3926 = vpack.c.b16 %v3314, %v3297
  %v3927 = vpack.c.b16 %v3315, %v3298
  %v3928 = vpack.c.b16 %v3316, %v3299
  %v3929 = vpack.c.b16 %v3317, %v3300
  %v3930 = vpack.c.b16 %v3318, %v3301
  %v3931 = vpack.c.b16 %v3319, %v3302
  %v3932 = vpack.c.b16 %v3320, %v3303
  %v3933 = vpack.c.b16 %v3321, %v3304
  %v3934 = vpack.c.b16 %v3322, %v3305
  %v3935 = vpack.c.b16 %v3323, %v3306
  %v3936 = vpack.c.b16 %v3324, %v3307
  %v3937 = vpack.c.b16 %v3325, %v3308
  %v3938 = vpack.c.b16 %v3326, %v3309
  %vm4551 = vcmask 523264
  %v4553 = vsel %vm4551, %v715, 0
  %4555 = vmatprep.subr.bf16.mxu0 %v3447
  %4556 = vmatpush1.bf16.msra.mxu0 %v3446
  %4557 = vmatprep.subr.bf16.mxu0 %v3430
  %4558 = vmatpush1.bf16.msra.mxu0 %v3429
  %4559 = vmatprep.subr.bf16.mxu0 %v3413
  %4560 = vmatpush1.bf16.msra.mxu0 %v3412
  %4561 = vmatprep.subr.bf16.mxu0 %v3396
  %4562 = vmatpush1.bf16.msra.mxu0 %v3395
  %4563 = vmatprep.subr.bf16.mxu0 %v3379
  %4564 = vmatpush1.bf16.msra.mxu0 %v3378
  %4565 = vmatprep.subr.bf16.mxu0 %v3362
  %4566 = vmatpush1.bf16.msra.mxu0 %v3361
  %4567 = vmatprep.subr.bf16.mxu0 %v3345
  %4568 = vmatpush1.bf16.msra.mxu0 %v3344
  %4569 = vmatprep.subr.bf16.mxu0 %v3328
  %4570 = vmatpush1.bf16.msra.mxu0 %v3327
  %4571 = vmatprep.subr.bf16.mxu0 %v3583
  %4572 = vmatpush2.bf16.msra.mxu0 %v3582
  %4573 = vmatprep.subr.bf16.mxu0 %v3566
  %4574 = vmatpush2.bf16.msra.mxu0 %v3565
  %4575 = vmatprep.subr.bf16.mxu0 %v3549
  %4576 = vmatpush2.bf16.msra.mxu0 %v3548
  %4577 = vmatprep.subr.bf16.mxu0 %v3532
  %4578 = vmatpush2.bf16.msra.mxu0 %v3531
  %4579 = vmatprep.subr.bf16.mxu0 %v3515
  %4580 = vmatpush2.bf16.msra.mxu0 %v3514
  %4581 = vmatprep.subr.bf16.mxu0 %v3498
  %4582 = vmatpush2.bf16.msra.mxu0 %v3497
  %4583 = vmatprep.subr.bf16.mxu0 %v3481
  %4584 = vmatpush2.bf16.msra.mxu0 %v3480
  %4585 = vmatprep.subr.bf16.mxu0 %v3464
  %4586 = vmatpush2.bf16.msra.mxu0 %v3463
  %4587 = vmatprep.mubr.bf16.mxu0 %v712
  %4588 = vmatmul.mubr.bf16.gmra.mxu0 %v711
  %v4589 = vpop.f32.mrf.mxu0
  %v4590 = vadd.f32 %v1373, %v4589
  %v4591 = vpop.f32.mrf.mxu0
  %v4592 = vadd.f32 %v1377, %v4591
  %v4593 = vpop.f32.mrf.mxu0
  %v4594 = vpop.f32.mrf.mxu0
  %4595 = vdwg.mxu0
  %4596 = vmatprep.subr.bf16.mxu0 %v3719
  %4597 = vmatpush1.bf16.msra.mxu0 %v3718
  %4598 = vmatprep.subr.bf16.mxu0 %v3702
  %4599 = vmatpush1.bf16.msra.mxu0 %v3701
  %4600 = vmatprep.subr.bf16.mxu0 %v3685
  %4601 = vmatpush1.bf16.msra.mxu0 %v3684
  %4602 = vmatprep.subr.bf16.mxu0 %v3668
  %4603 = vmatpush1.bf16.msra.mxu0 %v3667
  %4604 = vmatprep.subr.bf16.mxu0 %v3651
  %4605 = vmatpush1.bf16.msra.mxu0 %v3650
  %4606 = vmatprep.subr.bf16.mxu0 %v3634
  %4607 = vmatpush1.bf16.msra.mxu0 %v3633
  %4608 = vmatprep.subr.bf16.mxu0 %v3617
  %4609 = vmatpush1.bf16.msra.mxu0 %v3616
  %4610 = vmatprep.subr.bf16.mxu0 %v3600
  %4611 = vmatpush1.bf16.msra.mxu0 %v3599
  %4612 = vmatprep.subr.bf16.mxu0 %v3855
  %4613 = vmatpush2.bf16.msra.mxu0 %v3854
  %4614 = vmatprep.subr.bf16.mxu0 %v3838
  %4615 = vmatpush2.bf16.msra.mxu0 %v3837
  %4616 = vmatprep.subr.bf16.mxu0 %v3821
  %4617 = vmatpush2.bf16.msra.mxu0 %v3820
  %4618 = vmatprep.subr.bf16.mxu0 %v3804
  %4619 = vmatpush2.bf16.msra.mxu0 %v3803
  %4620 = vmatprep.subr.bf16.mxu0 %v3787
  %4621 = vmatpush2.bf16.msra.mxu0 %v3786
  %4622 = vmatprep.subr.bf16.mxu0 %v3770
  %4623 = vmatpush2.bf16.msra.mxu0 %v3769
  %4624 = vmatprep.subr.bf16.mxu0 %v3753
  %4625 = vmatpush2.bf16.msra.mxu0 %v3752
  %4626 = vmatprep.subr.bf16.mxu0 %v3736
  %4627 = vmatpush2.bf16.msra.mxu0 %v3735
  %4628 = vmatprep.mubr.bf16.mxu0 %v714
  %4629 = vmatmul.mubr.bf16.gmra.mxu0 %v713
  %v4630 = vpop.f32.mrf.mxu0
  %v4631 = vadd.f32 %v4590, %v4630
  %v4632 = vpop.f32.mrf.mxu0
  %v4633 = vadd.f32 %v4592, %v4632
  %v4634 = vpop.f32.mrf.mxu0
  %v4635 = vpop.f32.mrf.mxu0
  %4636 = vdwg.mxu0
  %4637 = vmatprep.subr.bf16.mxu0 0
  %4638 = vmatpush1.bf16.msra.mxu0 0
  %4639 = vmatprep.subr.bf16.mxu0 0
  %4640 = vmatpush1.bf16.msra.mxu0 0
  %4641 = vmatprep.subr.bf16.mxu0 0
  %4642 = vmatpush1.bf16.msra.mxu0 0
  %4643 = vmatprep.subr.bf16.mxu0 0
  %4644 = vmatpush1.bf16.msra.mxu0 0
  %4645 = vmatprep.subr.bf16.mxu0 %v3923
  %4646 = vmatpush1.bf16.msra.mxu0 %v3922
  %4647 = vmatprep.subr.bf16.mxu0 %v3906
  %4648 = vmatpush1.bf16.msra.mxu0 %v3905
  %4649 = vmatprep.subr.bf16.mxu0 %v3889
  %4650 = vmatpush1.bf16.msra.mxu0 %v3888
  %4651 = vmatprep.subr.bf16.mxu0 %v3872
  %4652 = vmatpush1.bf16.msra.mxu0 %v3871
  %4653 = vmatprep.subr.bf16.mxu0 0
  %4654 = vmatpush2.bf16.msra.mxu0 0
  %4655 = vmatprep.subr.bf16.mxu0 0
  %4656 = vmatpush2.bf16.msra.mxu0 0
  %4657 = vmatprep.subr.bf16.mxu0 0
  %4658 = vmatpush2.bf16.msra.mxu0 0
  %4659 = vmatprep.subr.bf16.mxu0 0
  %4660 = vmatpush2.bf16.msra.mxu0 0
  %4661 = vmatprep.subr.bf16.mxu0 0
  %4662 = vmatpush2.bf16.msra.mxu0 0
  %4663 = vmatprep.subr.bf16.mxu0 0
  %4664 = vmatpush2.bf16.msra.mxu0 0
  %4665 = vmatprep.subr.bf16.mxu0 0
  %4666 = vmatpush2.bf16.msra.mxu0 0
  %4667 = vmatprep.subr.bf16.mxu0 0
  %4668 = vmatpush2.bf16.msra.mxu0 0
  %4669 = vmatprep.mubr.bf16.mxu0 0
  %4670 = vmatmul.mubr.bf16.gmra.mxu0 %v4553
  %v4671 = vpop.f32.mrf.mxu0
  %v4672 = vadd.f32 %v4631, %v4671
  %v4673 = vpop.f32.mrf.mxu0
  %v4674 = vadd.f32 %v4633, %v4673
  %v4675 = vpop.f32.mrf.mxu0
  %v4676 = vpop.f32.mrf.mxu0
  %4677 = vdwg.mxu0
  %4678 = vmatprep.subr.bf16.mxu0 %v3449
  %4679 = vmatpush1.bf16.msra.mxu0 %v3448
  %4680 = vmatprep.subr.bf16.mxu0 %v3432
  %4681 = vmatpush1.bf16.msra.mxu0 %v3431
  %4682 = vmatprep.subr.bf16.mxu0 %v3415
  %4683 = vmatpush1.bf16.msra.mxu0 %v3414
  %4684 = vmatprep.subr.bf16.mxu0 %v3398
  %4685 = vmatpush1.bf16.msra.mxu0 %v3397
  %4686 = vmatprep.subr.bf16.mxu0 %v3381
  %4687 = vmatpush1.bf16.msra.mxu0 %v3380
  %4688 = vmatprep.subr.bf16.mxu0 %v3364
  %4689 = vmatpush1.bf16.msra.mxu0 %v3363
  %4690 = vmatprep.subr.bf16.mxu0 %v3347
  %4691 = vmatpush1.bf16.msra.mxu0 %v3346
  %4692 = vmatprep.subr.bf16.mxu0 %v3330
  %4693 = vmatpush1.bf16.msra.mxu0 %v3329
  %4694 = vmatprep.subr.bf16.mxu0 %v3585
  %4695 = vmatpush2.bf16.msra.mxu0 %v3584
  %4696 = vmatprep.subr.bf16.mxu0 %v3568
  %4697 = vmatpush2.bf16.msra.mxu0 %v3567
  %4698 = vmatprep.subr.bf16.mxu0 %v3551
  %4699 = vmatpush2.bf16.msra.mxu0 %v3550
  %4700 = vmatprep.subr.bf16.mxu0 %v3534
  %4701 = vmatpush2.bf16.msra.mxu0 %v3533
  %4702 = vmatprep.subr.bf16.mxu0 %v3517
  %4703 = vmatpush2.bf16.msra.mxu0 %v3516
  %4704 = vmatprep.subr.bf16.mxu0 %v3500
  %4705 = vmatpush2.bf16.msra.mxu0 %v3499
  %4706 = vmatprep.subr.bf16.mxu0 %v3483
  %4707 = vmatpush2.bf16.msra.mxu0 %v3482
  %4708 = vmatprep.subr.bf16.mxu0 %v3466
  %4709 = vmatpush2.bf16.msra.mxu0 %v3465
  %4710 = vmatprep.mubr.bf16.mxu0 %v712
  %4711 = vmatmul.mubr.bf16.gmra.mxu0 %v711
  %v4712 = vpop.f32.mrf.mxu0
  %v4713 = vadd.f32 %v1381, %v4712
  %v4714 = vpop.f32.mrf.mxu0
  %v4715 = vadd.f32 %v1385, %v4714
  %v4716 = vpop.f32.mrf.mxu0
  %v4717 = vpop.f32.mrf.mxu0
  %4718 = vdwg.mxu0
  %4719 = vmatprep.subr.bf16.mxu0 %v3721
  %4720 = vmatpush1.bf16.msra.mxu0 %v3720
  %4721 = vmatprep.subr.bf16.mxu0 %v3704
  %4722 = vmatpush1.bf16.msra.mxu0 %v3703
  %4723 = vmatprep.subr.bf16.mxu0 %v3687
  %4724 = vmatpush1.bf16.msra.mxu0 %v3686
  %4725 = vmatprep.subr.bf16.mxu0 %v3670
  %4726 = vmatpush1.bf16.msra.mxu0 %v3669
  %4727 = vmatprep.subr.bf16.mxu0 %v3653
  %4728 = vmatpush1.bf16.msra.mxu0 %v3652
  %4729 = vmatprep.subr.bf16.mxu0 %v3636
  %4730 = vmatpush1.bf16.msra.mxu0 %v3635
  %4731 = vmatprep.subr.bf16.mxu0 %v3619
  %4732 = vmatpush1.bf16.msra.mxu0 %v3618
  %4733 = vmatprep.subr.bf16.mxu0 %v3602
  %4734 = vmatpush1.bf16.msra.mxu0 %v3601
  %4735 = vmatprep.subr.bf16.mxu0 %v3857
  %4736 = vmatpush2.bf16.msra.mxu0 %v3856
  %4737 = vmatprep.subr.bf16.mxu0 %v3840
  %4738 = vmatpush2.bf16.msra.mxu0 %v3839
  %4739 = vmatprep.subr.bf16.mxu0 %v3823
  %4740 = vmatpush2.bf16.msra.mxu0 %v3822
  %4741 = vmatprep.subr.bf16.mxu0 %v3806
  %4742 = vmatpush2.bf16.msra.mxu0 %v3805
  %4743 = vmatprep.subr.bf16.mxu0 %v3789
  %4744 = vmatpush2.bf16.msra.mxu0 %v3788
  %4745 = vmatprep.subr.bf16.mxu0 %v3772
  %4746 = vmatpush2.bf16.msra.mxu0 %v3771
  %4747 = vmatprep.subr.bf16.mxu0 %v3755
  %4748 = vmatpush2.bf16.msra.mxu0 %v3754
  %4749 = vmatprep.subr.bf16.mxu0 %v3738
  %4750 = vmatpush2.bf16.msra.mxu0 %v3737
  %4751 = vmatprep.mubr.bf16.mxu0 %v714
  %4752 = vmatmul.mubr.bf16.gmra.mxu0 %v713
  %v4753 = vpop.f32.mrf.mxu0
  %v4754 = vadd.f32 %v4713, %v4753
  %v4755 = vpop.f32.mrf.mxu0
  %v4756 = vadd.f32 %v4715, %v4755
  %v4757 = vpop.f32.mrf.mxu0
  %v4758 = vpop.f32.mrf.mxu0
  %4759 = vdwg.mxu0
  %4760 = vmatprep.subr.bf16.mxu0 0
  %4761 = vmatpush1.bf16.msra.mxu0 0
  %4762 = vmatprep.subr.bf16.mxu0 0
  %4763 = vmatpush1.bf16.msra.mxu0 0
  %4764 = vmatprep.subr.bf16.mxu0 0
  %4765 = vmatpush1.bf16.msra.mxu0 0
  %4766 = vmatprep.subr.bf16.mxu0 0
  %4767 = vmatpush1.bf16.msra.mxu0 0
  %4768 = vmatprep.subr.bf16.mxu0 %v3925
  %4769 = vmatpush1.bf16.msra.mxu0 %v3924
  %4770 = vmatprep.subr.bf16.mxu0 %v3908
  %4771 = vmatpush1.bf16.msra.mxu0 %v3907
  %4772 = vmatprep.subr.bf16.mxu0 %v3891
  %4773 = vmatpush1.bf16.msra.mxu0 %v3890
  %4774 = vmatprep.subr.bf16.mxu0 %v3874
  %4775 = vmatpush1.bf16.msra.mxu0 %v3873
  %4776 = vmatprep.subr.bf16.mxu0 0
  %4777 = vmatpush2.bf16.msra.mxu0 0
  %4778 = vmatprep.subr.bf16.mxu0 0
  %4779 = vmatpush2.bf16.msra.mxu0 0
  %4780 = vmatprep.subr.bf16.mxu0 0
  %4781 = vmatpush2.bf16.msra.mxu0 0
  %4782 = vmatprep.subr.bf16.mxu0 0
  %4783 = vmatpush2.bf16.msra.mxu0 0
  %4784 = vmatprep.subr.bf16.mxu0 0
  %4785 = vmatpush2.bf16.msra.mxu0 0
  %4786 = vmatprep.subr.bf16.mxu0 0
  %4787 = vmatpush2.bf16.msra.mxu0 0
  %4788 = vmatprep.subr.bf16.mxu0 0
  %4789 = vmatpush2.bf16.msra.mxu0 0
  %4790 = vmatprep.subr.bf16.mxu0 0
  %4791 = vmatpush2.bf16.msra.mxu0 0
  %4792 = vmatprep.mubr.bf16.mxu0 0
  %4793 = vmatmul.mubr.bf16.gmra.mxu0 %v4553
  %v4794 = vpop.f32.mrf.mxu0
  %v4795 = vadd.f32 %v4754, %v4794
  %v4796 = vpop.f32.mrf.mxu0
  %v4797 = vadd.f32 %v4756, %v4796
  %v4798 = vpop.f32.mrf.mxu0
  %v4799 = vpop.f32.mrf.mxu0
  %4800 = vdwg.mxu0
  %4801 = vmatprep.subr.bf16.mxu0 %v3451
  %4802 = vmatpush1.bf16.msra.mxu0 %v3450
  %4803 = vmatprep.subr.bf16.mxu0 %v3434
  %4804 = vmatpush1.bf16.msra.mxu0 %v3433
  %4805 = vmatprep.subr.bf16.mxu0 %v3417
  %4806 = vmatpush1.bf16.msra.mxu0 %v3416
  %4807 = vmatprep.subr.bf16.mxu0 %v3400
  %4808 = vmatpush1.bf16.msra.mxu0 %v3399
  %4809 = vmatprep.subr.bf16.mxu0 %v3383
  %4810 = vmatpush1.bf16.msra.mxu0 %v3382
  %4811 = vmatprep.subr.bf16.mxu0 %v3366
  %4812 = vmatpush1.bf16.msra.mxu0 %v3365
  %4813 = vmatprep.subr.bf16.mxu0 %v3349
  %4814 = vmatpush1.bf16.msra.mxu0 %v3348
  %4815 = vmatprep.subr.bf16.mxu0 %v3332
  %4816 = vmatpush1.bf16.msra.mxu0 %v3331
  %4817 = vmatprep.subr.bf16.mxu0 %v3587
  %4818 = vmatpush2.bf16.msra.mxu0 %v3586
  %4819 = vmatprep.subr.bf16.mxu0 %v3570
  %4820 = vmatpush2.bf16.msra.mxu0 %v3569
  %4821 = vmatprep.subr.bf16.mxu0 %v3553
  %4822 = vmatpush2.bf16.msra.mxu0 %v3552
  %4823 = vmatprep.subr.bf16.mxu0 %v3536
  %4824 = vmatpush2.bf16.msra.mxu0 %v3535
  %4825 = vmatprep.subr.bf16.mxu0 %v3519
  %4826 = vmatpush2.bf16.msra.mxu0 %v3518
  %4827 = vmatprep.subr.bf16.mxu0 %v3502
  %4828 = vmatpush2.bf16.msra.mxu0 %v3501
  %4829 = vmatprep.subr.bf16.mxu0 %v3485
  %4830 = vmatpush2.bf16.msra.mxu0 %v3484
  %4831 = vmatprep.subr.bf16.mxu0 %v3468
  %4832 = vmatpush2.bf16.msra.mxu0 %v3467
  %4833 = vmatprep.mubr.bf16.mxu0 %v712
  %4834 = vmatmul.mubr.bf16.gmra.mxu0 %v711
  %v4835 = vpop.f32.mrf.mxu0
  %v4836 = vadd.f32 %v1389, %v4835
  %v4837 = vpop.f32.mrf.mxu0
  %v4838 = vadd.f32 %v1393, %v4837
  %v4839 = vpop.f32.mrf.mxu0
  %v4840 = vpop.f32.mrf.mxu0
  %4841 = vdwg.mxu0
  %4842 = vmatprep.subr.bf16.mxu0 %v3723
  %4843 = vmatpush1.bf16.msra.mxu0 %v3722
  %4844 = vmatprep.subr.bf16.mxu0 %v3706
  %4845 = vmatpush1.bf16.msra.mxu0 %v3705
  %4846 = vmatprep.subr.bf16.mxu0 %v3689
  %4847 = vmatpush1.bf16.msra.mxu0 %v3688
  %4848 = vmatprep.subr.bf16.mxu0 %v3672
  %4849 = vmatpush1.bf16.msra.mxu0 %v3671
  %4850 = vmatprep.subr.bf16.mxu0 %v3655
  %4851 = vmatpush1.bf16.msra.mxu0 %v3654
  %4852 = vmatprep.subr.bf16.mxu0 %v3638
  %4853 = vmatpush1.bf16.msra.mxu0 %v3637
  %4854 = vmatprep.subr.bf16.mxu0 %v3621
  %4855 = vmatpush1.bf16.msra.mxu0 %v3620
  %4856 = vmatprep.subr.bf16.mxu0 %v3604
  %4857 = vmatpush1.bf16.msra.mxu0 %v3603
  %4858 = vmatprep.subr.bf16.mxu0 %v3859
  %4859 = vmatpush2.bf16.msra.mxu0 %v3858
  %4860 = vmatprep.subr.bf16.mxu0 %v3842
  %4861 = vmatpush2.bf16.msra.mxu0 %v3841
  %4862 = vmatprep.subr.bf16.mxu0 %v3825
  %4863 = vmatpush2.bf16.msra.mxu0 %v3824
  %4864 = vmatprep.subr.bf16.mxu0 %v3808
  %4865 = vmatpush2.bf16.msra.mxu0 %v3807
  %4866 = vmatprep.subr.bf16.mxu0 %v3791
  %4867 = vmatpush2.bf16.msra.mxu0 %v3790
  %4868 = vmatprep.subr.bf16.mxu0 %v3774
  %4869 = vmatpush2.bf16.msra.mxu0 %v3773
  %4870 = vmatprep.subr.bf16.mxu0 %v3757
  %4871 = vmatpush2.bf16.msra.mxu0 %v3756
  %4872 = vmatprep.subr.bf16.mxu0 %v3740
  %4873 = vmatpush2.bf16.msra.mxu0 %v3739
  %4874 = vmatprep.mubr.bf16.mxu0 %v714
  %4875 = vmatmul.mubr.bf16.gmra.mxu0 %v713
  %v4876 = vpop.f32.mrf.mxu0
  %v4877 = vadd.f32 %v4836, %v4876
  %v4878 = vpop.f32.mrf.mxu0
  %v4879 = vadd.f32 %v4838, %v4878
  %v4880 = vpop.f32.mrf.mxu0
  %v4881 = vpop.f32.mrf.mxu0
  %4882 = vdwg.mxu0
  %4883 = vmatprep.subr.bf16.mxu0 0
  %4884 = vmatpush1.bf16.msra.mxu0 0
  %4885 = vmatprep.subr.bf16.mxu0 0
  %4886 = vmatpush1.bf16.msra.mxu0 0
  %4887 = vmatprep.subr.bf16.mxu0 0
  %4888 = vmatpush1.bf16.msra.mxu0 0
  %4889 = vmatprep.subr.bf16.mxu0 0
  %4890 = vmatpush1.bf16.msra.mxu0 0
  %4891 = vmatprep.subr.bf16.mxu0 %v3927
  %4892 = vmatpush1.bf16.msra.mxu0 %v3926
  %4893 = vmatprep.subr.bf16.mxu0 %v3910
  %4894 = vmatpush1.bf16.msra.mxu0 %v3909
  %4895 = vmatprep.subr.bf16.mxu0 %v3893
  %4896 = vmatpush1.bf16.msra.mxu0 %v3892
  %4897 = vmatprep.subr.bf16.mxu0 %v3876
  %4898 = vmatpush1.bf16.msra.mxu0 %v3875
  %4899 = vmatprep.subr.bf16.mxu0 0
  %4900 = vmatpush2.bf16.msra.mxu0 0
  %4901 = vmatprep.subr.bf16.mxu0 0
  %4902 = vmatpush2.bf16.msra.mxu0 0
  %4903 = vmatprep.subr.bf16.mxu0 0
  %4904 = vmatpush2.bf16.msra.mxu0 0
  %4905 = vmatprep.subr.bf16.mxu0 0
  %4906 = vmatpush2.bf16.msra.mxu0 0
  %4907 = vmatprep.subr.bf16.mxu0 0
  %4908 = vmatpush2.bf16.msra.mxu0 0
  %4909 = vmatprep.subr.bf16.mxu0 0
  %4910 = vmatpush2.bf16.msra.mxu0 0
  %4911 = vmatprep.subr.bf16.mxu0 0
  %4912 = vmatpush2.bf16.msra.mxu0 0
  %4913 = vmatprep.subr.bf16.mxu0 0
  %4914 = vmatpush2.bf16.msra.mxu0 0
  %4915 = vmatprep.mubr.bf16.mxu0 0
  %4916 = vmatmul.mubr.bf16.gmra.mxu0 %v4553
  %v4917 = vpop.f32.mrf.mxu0
  %v4918 = vadd.f32 %v4877, %v4917
  %v4919 = vpop.f32.mrf.mxu0
  %v4920 = vadd.f32 %v4879, %v4919
  %v4921 = vpop.f32.mrf.mxu0
  %v4922 = vpop.f32.mrf.mxu0
  %4923 = vdwg.mxu0
  %4924 = vmatprep.subr.bf16.mxu0 %v3453
  %4925 = vmatpush1.bf16.msra.mxu0 %v3452
  %4926 = vmatprep.subr.bf16.mxu0 %v3436
  %4927 = vmatpush1.bf16.msra.mxu0 %v3435
  %4928 = vmatprep.subr.bf16.mxu0 %v3419
  %4929 = vmatpush1.bf16.msra.mxu0 %v3418
  %4930 = vmatprep.subr.bf16.mxu0 %v3402
  %4931 = vmatpush1.bf16.msra.mxu0 %v3401
  %4932 = vmatprep.subr.bf16.mxu0 %v3385
  %4933 = vmatpush1.bf16.msra.mxu0 %v3384
  %4934 = vmatprep.subr.bf16.mxu0 %v3368
  %4935 = vmatpush1.bf16.msra.mxu0 %v3367
  %4936 = vmatprep.subr.bf16.mxu0 %v3351
  %4937 = vmatpush1.bf16.msra.mxu0 %v3350
  %4938 = vmatprep.subr.bf16.mxu0 %v3334
  %4939 = vmatpush1.bf16.msra.mxu0 %v3333
  %4940 = vmatprep.subr.bf16.mxu0 %v3589
  %4941 = vmatpush2.bf16.msra.mxu0 %v3588
  %4942 = vmatprep.subr.bf16.mxu0 %v3572
  %4943 = vmatpush2.bf16.msra.mxu0 %v3571
  %4944 = vmatprep.subr.bf16.mxu0 %v3555
  %4945 = vmatpush2.bf16.msra.mxu0 %v3554
  %4946 = vmatprep.subr.bf16.mxu0 %v3538
  %4947 = vmatpush2.bf16.msra.mxu0 %v3537
  %4948 = vmatprep.subr.bf16.mxu0 %v3521
  %4949 = vmatpush2.bf16.msra.mxu0 %v3520
  %4950 = vmatprep.subr.bf16.mxu0 %v3504
  %4951 = vmatpush2.bf16.msra.mxu0 %v3503
  %4952 = vmatprep.subr.bf16.mxu0 %v3487
  %4953 = vmatpush2.bf16.msra.mxu0 %v3486
  %4954 = vmatprep.subr.bf16.mxu0 %v3470
  %4955 = vmatpush2.bf16.msra.mxu0 %v3469
  %4956 = vmatprep.mubr.bf16.mxu0 %v712
  %4957 = vmatmul.mubr.bf16.gmra.mxu0 %v711
  %v4958 = vpop.f32.mrf.mxu0
  %v4959 = vadd.f32 %v1397, %v4958
  %v4960 = vpop.f32.mrf.mxu0
  %v4961 = vadd.f32 %v1401, %v4960
  %v4962 = vpop.f32.mrf.mxu0
  %v4963 = vpop.f32.mrf.mxu0
  %4964 = vdwg.mxu0
  %4965 = vmatprep.subr.bf16.mxu0 %v3725
  %4966 = vmatpush1.bf16.msra.mxu0 %v3724
  %4967 = vmatprep.subr.bf16.mxu0 %v3708
  %4968 = vmatpush1.bf16.msra.mxu0 %v3707
  %4969 = vmatprep.subr.bf16.mxu0 %v3691
  %4970 = vmatpush1.bf16.msra.mxu0 %v3690
  %4971 = vmatprep.subr.bf16.mxu0 %v3674
  %4972 = vmatpush1.bf16.msra.mxu0 %v3673
  %4973 = vmatprep.subr.bf16.mxu0 %v3657
  %4974 = vmatpush1.bf16.msra.mxu0 %v3656
  %4975 = vmatprep.subr.bf16.mxu0 %v3640
  %4976 = vmatpush1.bf16.msra.mxu0 %v3639
  %4977 = vmatprep.subr.bf16.mxu0 %v3623
  %4978 = vmatpush1.bf16.msra.mxu0 %v3622
  %4979 = vmatprep.subr.bf16.mxu0 %v3606
  %4980 = vmatpush1.bf16.msra.mxu0 %v3605
  %4981 = vmatprep.subr.bf16.mxu0 %v3861
  %4982 = vmatpush2.bf16.msra.mxu0 %v3860
  %4983 = vmatprep.subr.bf16.mxu0 %v3844
  %4984 = vmatpush2.bf16.msra.mxu0 %v3843
  %4985 = vmatprep.subr.bf16.mxu0 %v3827
  %4986 = vmatpush2.bf16.msra.mxu0 %v3826
  %4987 = vmatprep.subr.bf16.mxu0 %v3810
  %4988 = vmatpush2.bf16.msra.mxu0 %v3809
  %4989 = vmatprep.subr.bf16.mxu0 %v3793
  %4990 = vmatpush2.bf16.msra.mxu0 %v3792
  %4991 = vmatprep.subr.bf16.mxu0 %v3776
  %4992 = vmatpush2.bf16.msra.mxu0 %v3775
  %4993 = vmatprep.subr.bf16.mxu0 %v3759
  %4994 = vmatpush2.bf16.msra.mxu0 %v3758
  %4995 = vmatprep.subr.bf16.mxu0 %v3742
  %4996 = vmatpush2.bf16.msra.mxu0 %v3741
  %4997 = vmatprep.mubr.bf16.mxu0 %v714
  %4998 = vmatmul.mubr.bf16.gmra.mxu0 %v713
  %v4999 = vpop.f32.mrf.mxu0
  %v5000 = vadd.f32 %v4959, %v4999
  %v5001 = vpop.f32.mrf.mxu0
  %v5002 = vadd.f32 %v4961, %v5001
  %v5003 = vpop.f32.mrf.mxu0
  %v5004 = vpop.f32.mrf.mxu0
  %5005 = vdwg.mxu0
  %5006 = vmatprep.subr.bf16.mxu0 0
  %5007 = vmatpush1.bf16.msra.mxu0 0
  %5008 = vmatprep.subr.bf16.mxu0 0
  %5009 = vmatpush1.bf16.msra.mxu0 0
  %5010 = vmatprep.subr.bf16.mxu0 0
  %5011 = vmatpush1.bf16.msra.mxu0 0
  %5012 = vmatprep.subr.bf16.mxu0 0
  %5013 = vmatpush1.bf16.msra.mxu0 0
  %5014 = vmatprep.subr.bf16.mxu0 %v3929
  %5015 = vmatpush1.bf16.msra.mxu0 %v3928
  %5016 = vmatprep.subr.bf16.mxu0 %v3912
  %5017 = vmatpush1.bf16.msra.mxu0 %v3911
  %5018 = vmatprep.subr.bf16.mxu0 %v3895
  %5019 = vmatpush1.bf16.msra.mxu0 %v3894
  %5020 = vmatprep.subr.bf16.mxu0 %v3878
  %5021 = vmatpush1.bf16.msra.mxu0 %v3877
  %5022 = vmatprep.subr.bf16.mxu0 0
  %5023 = vmatpush2.bf16.msra.mxu0 0
  %5024 = vmatprep.subr.bf16.mxu0 0
  %5025 = vmatpush2.bf16.msra.mxu0 0
  %5026 = vmatprep.subr.bf16.mxu0 0
  %5027 = vmatpush2.bf16.msra.mxu0 0
  %5028 = vmatprep.subr.bf16.mxu0 0
  %5029 = vmatpush2.bf16.msra.mxu0 0
  %5030 = vmatprep.subr.bf16.mxu0 0
  %5031 = vmatpush2.bf16.msra.mxu0 0
  %5032 = vmatprep.subr.bf16.mxu0 0
  %5033 = vmatpush2.bf16.msra.mxu0 0
  %5034 = vmatprep.subr.bf16.mxu0 0
  %5035 = vmatpush2.bf16.msra.mxu0 0
  %5036 = vmatprep.subr.bf16.mxu0 0
  %5037 = vmatpush2.bf16.msra.mxu0 0
  %5038 = vmatprep.mubr.bf16.mxu0 0
  %5039 = vmatmul.mubr.bf16.gmra.mxu0 %v4553
  %v5040 = vpop.f32.mrf.mxu0
  %v5041 = vadd.f32 %v5000, %v5040
  %v5042 = vpop.f32.mrf.mxu0
  %v5043 = vadd.f32 %v5002, %v5042
  %v5044 = vpop.f32.mrf.mxu0
  %v5045 = vpop.f32.mrf.mxu0
  %5046 = vdwg.mxu0
  %5047 = vmatprep.subr.bf16.mxu0 %v3455
  %5048 = vmatpush1.bf16.msra.mxu0 %v3454
  %5049 = vmatprep.subr.bf16.mxu0 %v3438
  %5050 = vmatpush1.bf16.msra.mxu0 %v3437
  %5051 = vmatprep.subr.bf16.mxu0 %v3421
  %5052 = vmatpush1.bf16.msra.mxu0 %v3420
  %5053 = vmatprep.subr.bf16.mxu0 %v3404
  %5054 = vmatpush1.bf16.msra.mxu0 %v3403
  %5055 = vmatprep.subr.bf16.mxu0 %v3387
  %5056 = vmatpush1.bf16.msra.mxu0 %v3386
  %5057 = vmatprep.subr.bf16.mxu0 %v3370
  %5058 = vmatpush1.bf16.msra.mxu0 %v3369
  %5059 = vmatprep.subr.bf16.mxu0 %v3353
  %5060 = vmatpush1.bf16.msra.mxu0 %v3352
  %5061 = vmatprep.subr.bf16.mxu0 %v3336
  %5062 = vmatpush1.bf16.msra.mxu0 %v3335
  %5063 = vmatprep.subr.bf16.mxu0 %v3591
  %5064 = vmatpush2.bf16.msra.mxu0 %v3590
  %5065 = vmatprep.subr.bf16.mxu0 %v3574
  %5066 = vmatpush2.bf16.msra.mxu0 %v3573
  %5067 = vmatprep.subr.bf16.mxu0 %v3557
  %5068 = vmatpush2.bf16.msra.mxu0 %v3556
  %5069 = vmatprep.subr.bf16.mxu0 %v3540
  %5070 = vmatpush2.bf16.msra.mxu0 %v3539
  %5071 = vmatprep.subr.bf16.mxu0 %v3523
  %5072 = vmatpush2.bf16.msra.mxu0 %v3522
  %5073 = vmatprep.subr.bf16.mxu0 %v3506
  %5074 = vmatpush2.bf16.msra.mxu0 %v3505
  %5075 = vmatprep.subr.bf16.mxu0 %v3489
  %5076 = vmatpush2.bf16.msra.mxu0 %v3488
  %5077 = vmatprep.subr.bf16.mxu0 %v3472
  %5078 = vmatpush2.bf16.msra.mxu0 %v3471
  %5079 = vmatprep.mubr.bf16.mxu0 %v712
  %5080 = vmatmul.mubr.bf16.gmra.mxu0 %v711
  %v5081 = vpop.f32.mrf.mxu0
  %v5082 = vadd.f32 %v1405, %v5081
  %v5083 = vpop.f32.mrf.mxu0
  %v5084 = vadd.f32 %v1409, %v5083
  %v5085 = vpop.f32.mrf.mxu0
  %v5086 = vpop.f32.mrf.mxu0
  %5087 = vdwg.mxu0
  %5088 = vmatprep.subr.bf16.mxu0 %v3727
  %5089 = vmatpush1.bf16.msra.mxu0 %v3726
  %5090 = vmatprep.subr.bf16.mxu0 %v3710
  %5091 = vmatpush1.bf16.msra.mxu0 %v3709
  %5092 = vmatprep.subr.bf16.mxu0 %v3693
  %5093 = vmatpush1.bf16.msra.mxu0 %v3692
  %5094 = vmatprep.subr.bf16.mxu0 %v3676
  %5095 = vmatpush1.bf16.msra.mxu0 %v3675
  %5096 = vmatprep.subr.bf16.mxu0 %v3659
  %5097 = vmatpush1.bf16.msra.mxu0 %v3658
  %5098 = vmatprep.subr.bf16.mxu0 %v3642
  %5099 = vmatpush1.bf16.msra.mxu0 %v3641
  %5100 = vmatprep.subr.bf16.mxu0 %v3625
  %5101 = vmatpush1.bf16.msra.mxu0 %v3624
  %5102 = vmatprep.subr.bf16.mxu0 %v3608
  %5103 = vmatpush1.bf16.msra.mxu0 %v3607
  %5104 = vmatprep.subr.bf16.mxu0 %v3863
  %5105 = vmatpush2.bf16.msra.mxu0 %v3862
  %5106 = vmatprep.subr.bf16.mxu0 %v3846
  %5107 = vmatpush2.bf16.msra.mxu0 %v3845
  %5108 = vmatprep.subr.bf16.mxu0 %v3829
  %5109 = vmatpush2.bf16.msra.mxu0 %v3828
  %5110 = vmatprep.subr.bf16.mxu0 %v3812
  %5111 = vmatpush2.bf16.msra.mxu0 %v3811
  %5112 = vmatprep.subr.bf16.mxu0 %v3795
  %5113 = vmatpush2.bf16.msra.mxu0 %v3794
  %5114 = vmatprep.subr.bf16.mxu0 %v3778
  %5115 = vmatpush2.bf16.msra.mxu0 %v3777
  %5116 = vmatprep.subr.bf16.mxu0 %v3761
  %5117 = vmatpush2.bf16.msra.mxu0 %v3760
  %5118 = vmatprep.subr.bf16.mxu0 %v3744
  %5119 = vmatpush2.bf16.msra.mxu0 %v3743
  %5120 = vmatprep.mubr.bf16.mxu0 %v714
  %5121 = vmatmul.mubr.bf16.gmra.mxu0 %v713
  %v5122 = vpop.f32.mrf.mxu0
  %v5123 = vadd.f32 %v5082, %v5122
  %v5124 = vpop.f32.mrf.mxu0
  %v5125 = vadd.f32 %v5084, %v5124
  %v5126 = vpop.f32.mrf.mxu0
  %v5127 = vpop.f32.mrf.mxu0
  %5128 = vdwg.mxu0
  %5129 = vmatprep.subr.bf16.mxu0 0
  %5130 = vmatpush1.bf16.msra.mxu0 0
  %5131 = vmatprep.subr.bf16.mxu0 0
  %5132 = vmatpush1.bf16.msra.mxu0 0
  %5133 = vmatprep.subr.bf16.mxu0 0
  %5134 = vmatpush1.bf16.msra.mxu0 0
  %5135 = vmatprep.subr.bf16.mxu0 0
  %5136 = vmatpush1.bf16.msra.mxu0 0
  %5137 = vmatprep.subr.bf16.mxu0 %v3931
  %5138 = vmatpush1.bf16.msra.mxu0 %v3930
  %5139 = vmatprep.subr.bf16.mxu0 %v3914
  %5140 = vmatpush1.bf16.msra.mxu0 %v3913
  %5141 = vmatprep.subr.bf16.mxu0 %v3897
  %5142 = vmatpush1.bf16.msra.mxu0 %v3896
  %5143 = vmatprep.subr.bf16.mxu0 %v3880
  %5144 = vmatpush1.bf16.msra.mxu0 %v3879
  %5145 = vmatprep.subr.bf16.mxu0 0
  %5146 = vmatpush2.bf16.msra.mxu0 0
  %5147 = vmatprep.subr.bf16.mxu0 0
  %5148 = vmatpush2.bf16.msra.mxu0 0
  %5149 = vmatprep.subr.bf16.mxu0 0
  %5150 = vmatpush2.bf16.msra.mxu0 0
  %5151 = vmatprep.subr.bf16.mxu0 0
  %5152 = vmatpush2.bf16.msra.mxu0 0
  %5153 = vmatprep.subr.bf16.mxu0 0
  %5154 = vmatpush2.bf16.msra.mxu0 0
  %5155 = vmatprep.subr.bf16.mxu0 0
  %5156 = vmatpush2.bf16.msra.mxu0 0
  %5157 = vmatprep.subr.bf16.mxu0 0
  %5158 = vmatpush2.bf16.msra.mxu0 0
  %5159 = vmatprep.subr.bf16.mxu0 0
  %5160 = vmatpush2.bf16.msra.mxu0 0
  %5161 = vmatprep.mubr.bf16.mxu0 0
  %5162 = vmatmul.mubr.bf16.gmra.mxu0 %v4553
  %v5163 = vpop.f32.mrf.mxu0
  %v5164 = vadd.f32 %v5123, %v5163
  %v5165 = vpop.f32.mrf.mxu0
  %v5166 = vadd.f32 %v5125, %v5165
  %v5167 = vpop.f32.mrf.mxu0
  %v5168 = vpop.f32.mrf.mxu0
  %5169 = vdwg.mxu0
  %5170 = vmatprep.subr.bf16.mxu0 %v3457
  %5171 = vmatpush1.bf16.msra.mxu0 %v3456
  %5172 = vmatprep.subr.bf16.mxu0 %v3440
  %5173 = vmatpush1.bf16.msra.mxu0 %v3439
  %5174 = vmatprep.subr.bf16.mxu0 %v3423
  %5175 = vmatpush1.bf16.msra.mxu0 %v3422
  %5176 = vmatprep.subr.bf16.mxu0 %v3406
  %5177 = vmatpush1.bf16.msra.mxu0 %v3405
  %5178 = vmatprep.subr.bf16.mxu0 %v3389
  %5179 = vmatpush1.bf16.msra.mxu0 %v3388
  %5180 = vmatprep.subr.bf16.mxu0 %v3372
  %5181 = vmatpush1.bf16.msra.mxu0 %v3371
  %5182 = vmatprep.subr.bf16.mxu0 %v3355
  %5183 = vmatpush1.bf16.msra.mxu0 %v3354
  %5184 = vmatprep.subr.bf16.mxu0 %v3338
  %5185 = vmatpush1.bf16.msra.mxu0 %v3337
  %5186 = vmatprep.subr.bf16.mxu0 %v3593
  %5187 = vmatpush2.bf16.msra.mxu0 %v3592
  %5188 = vmatprep.subr.bf16.mxu0 %v3576
  %5189 = vmatpush2.bf16.msra.mxu0 %v3575
  %5190 = vmatprep.subr.bf16.mxu0 %v3559
  %5191 = vmatpush2.bf16.msra.mxu0 %v3558
  %5192 = vmatprep.subr.bf16.mxu0 %v3542
  %5193 = vmatpush2.bf16.msra.mxu0 %v3541
  %5194 = vmatprep.subr.bf16.mxu0 %v3525
  %5195 = vmatpush2.bf16.msra.mxu0 %v3524
  %5196 = vmatprep.subr.bf16.mxu0 %v3508
  %5197 = vmatpush2.bf16.msra.mxu0 %v3507
  %5198 = vmatprep.subr.bf16.mxu0 %v3491
  %5199 = vmatpush2.bf16.msra.mxu0 %v3490
  %5200 = vmatprep.subr.bf16.mxu0 %v3474
  %5201 = vmatpush2.bf16.msra.mxu0 %v3473
  %5202 = vmatprep.mubr.bf16.mxu0 %v712
  %5203 = vmatmul.mubr.bf16.gmra.mxu0 %v711
  %v5204 = vpop.f32.mrf.mxu0
  %v5205 = vadd.f32 %v1413, %v5204
  %v5206 = vpop.f32.mrf.mxu0
  %v5207 = vadd.f32 %v1417, %v5206
  %v5208 = vpop.f32.mrf.mxu0
  %v5209 = vpop.f32.mrf.mxu0
  %5210 = vdwg.mxu0
  %5211 = vmatprep.subr.bf16.mxu0 %v3729
  %5212 = vmatpush1.bf16.msra.mxu0 %v3728
  %5213 = vmatprep.subr.bf16.mxu0 %v3712
  %5214 = vmatpush1.bf16.msra.mxu0 %v3711
  %5215 = vmatprep.subr.bf16.mxu0 %v3695
  %5216 = vmatpush1.bf16.msra.mxu0 %v3694
  %5217 = vmatprep.subr.bf16.mxu0 %v3678
  %5218 = vmatpush1.bf16.msra.mxu0 %v3677
  %5219 = vmatprep.subr.bf16.mxu0 %v3661
  %5220 = vmatpush1.bf16.msra.mxu0 %v3660
  %5221 = vmatprep.subr.bf16.mxu0 %v3644
  %5222 = vmatpush1.bf16.msra.mxu0 %v3643
  %5223 = vmatprep.subr.bf16.mxu0 %v3627
  %5224 = vmatpush1.bf16.msra.mxu0 %v3626
  %5225 = vmatprep.subr.bf16.mxu0 %v3610
  %5226 = vmatpush1.bf16.msra.mxu0 %v3609
  %5227 = vmatprep.subr.bf16.mxu0 %v3865
  %5228 = vmatpush2.bf16.msra.mxu0 %v3864
  %5229 = vmatprep.subr.bf16.mxu0 %v3848
  %5230 = vmatpush2.bf16.msra.mxu0 %v3847
  %5231 = vmatprep.subr.bf16.mxu0 %v3831
  %5232 = vmatpush2.bf16.msra.mxu0 %v3830
  %5233 = vmatprep.subr.bf16.mxu0 %v3814
  %5234 = vmatpush2.bf16.msra.mxu0 %v3813
  %5235 = vmatprep.subr.bf16.mxu0 %v3797
  %5236 = vmatpush2.bf16.msra.mxu0 %v3796
  %5237 = vmatprep.subr.bf16.mxu0 %v3780
  %5238 = vmatpush2.bf16.msra.mxu0 %v3779
  %5239 = vmatprep.subr.bf16.mxu0 %v3763
  %5240 = vmatpush2.bf16.msra.mxu0 %v3762
  %5241 = vmatprep.subr.bf16.mxu0 %v3746
  %5242 = vmatpush2.bf16.msra.mxu0 %v3745
  %5243 = vmatprep.mubr.bf16.mxu0 %v714
  %5244 = vmatmul.mubr.bf16.gmra.mxu0 %v713
  %v5245 = vpop.f32.mrf.mxu0
  %v5246 = vadd.f32 %v5205, %v5245
  %v5247 = vpop.f32.mrf.mxu0
  %v5248 = vadd.f32 %v5207, %v5247
  %v5249 = vpop.f32.mrf.mxu0
  %v5250 = vpop.f32.mrf.mxu0
  %5251 = vdwg.mxu0
  %5252 = vmatprep.subr.bf16.mxu0 0
  %5253 = vmatpush1.bf16.msra.mxu0 0
  %5254 = vmatprep.subr.bf16.mxu0 0
  %5255 = vmatpush1.bf16.msra.mxu0 0
  %5256 = vmatprep.subr.bf16.mxu0 0
  %5257 = vmatpush1.bf16.msra.mxu0 0
  %5258 = vmatprep.subr.bf16.mxu0 0
  %5259 = vmatpush1.bf16.msra.mxu0 0
  %5260 = vmatprep.subr.bf16.mxu0 %v3933
  %5261 = vmatpush1.bf16.msra.mxu0 %v3932
  %5262 = vmatprep.subr.bf16.mxu0 %v3916
  %5263 = vmatpush1.bf16.msra.mxu0 %v3915
  %5264 = vmatprep.subr.bf16.mxu0 %v3899
  %5265 = vmatpush1.bf16.msra.mxu0 %v3898
  %5266 = vmatprep.subr.bf16.mxu0 %v3882
  %5267 = vmatpush1.bf16.msra.mxu0 %v3881
  %5268 = vmatprep.subr.bf16.mxu0 0
  %5269 = vmatpush2.bf16.msra.mxu0 0
  %5270 = vmatprep.subr.bf16.mxu0 0
  %5271 = vmatpush2.bf16.msra.mxu0 0
  %5272 = vmatprep.subr.bf16.mxu0 0
  %5273 = vmatpush2.bf16.msra.mxu0 0
  %5274 = vmatprep.subr.bf16.mxu0 0
  %5275 = vmatpush2.bf16.msra.mxu0 0
  %5276 = vmatprep.subr.bf16.mxu0 0
  %5277 = vmatpush2.bf16.msra.mxu0 0
  %5278 = vmatprep.subr.bf16.mxu0 0
  %5279 = vmatpush2.bf16.msra.mxu0 0
  %5280 = vmatprep.subr.bf16.mxu0 0
  %5281 = vmatpush2.bf16.msra.mxu0 0
  %5282 = vmatprep.subr.bf16.mxu0 0
  %5283 = vmatpush2.bf16.msra.mxu0 0
  %5284 = vmatprep.mubr.bf16.mxu0 0
  %5285 = vmatmul.mubr.bf16.gmra.mxu0 %v4553
  %v5286 = vpop.f32.mrf.mxu0
  %v5287 = vadd.f32 %v5246, %v5286
  %v5288 = vpop.f32.mrf.mxu0
  %v5289 = vadd.f32 %v5248, %v5288
  %v5290 = vpop.f32.mrf.mxu0
  %v5291 = vpop.f32.mrf.mxu0
  %5292 = vdwg.mxu0
  %5293 = vmatprep.subr.bf16.mxu0 %v3459
  %5294 = vmatpush1.bf16.msra.mxu0 %v3458
  %5295 = vmatprep.subr.bf16.mxu0 %v3442
  %5296 = vmatpush1.bf16.msra.mxu0 %v3441
  %5297 = vmatprep.subr.bf16.mxu0 %v3425
  %5298 = vmatpush1.bf16.msra.mxu0 %v3424
  %5299 = vmatprep.subr.bf16.mxu0 %v3408
  %5300 = vmatpush1.bf16.msra.mxu0 %v3407
  %5301 = vmatprep.subr.bf16.mxu0 %v3391
  %5302 = vmatpush1.bf16.msra.mxu0 %v3390
  %5303 = vmatprep.subr.bf16.mxu0 %v3374
  %5304 = vmatpush1.bf16.msra.mxu0 %v3373
  %5305 = vmatprep.subr.bf16.mxu0 %v3357
  %5306 = vmatpush1.bf16.msra.mxu0 %v3356
  %5307 = vmatprep.subr.bf16.mxu0 %v3340
  %5308 = vmatpush1.bf16.msra.mxu0 %v3339
  %5309 = vmatprep.subr.bf16.mxu0 %v3595
  %5310 = vmatpush2.bf16.msra.mxu0 %v3594
  %5311 = vmatprep.subr.bf16.mxu0 %v3578
  %5312 = vmatpush2.bf16.msra.mxu0 %v3577
  %5313 = vmatprep.subr.bf16.mxu0 %v3561
  %5314 = vmatpush2.bf16.msra.mxu0 %v3560
  %5315 = vmatprep.subr.bf16.mxu0 %v3544
  %5316 = vmatpush2.bf16.msra.mxu0 %v3543
  %5317 = vmatprep.subr.bf16.mxu0 %v3527
  %5318 = vmatpush2.bf16.msra.mxu0 %v3526
  %5319 = vmatprep.subr.bf16.mxu0 %v3510
  %5320 = vmatpush2.bf16.msra.mxu0 %v3509
  %5321 = vmatprep.subr.bf16.mxu0 %v3493
  %5322 = vmatpush2.bf16.msra.mxu0 %v3492
  %5323 = vmatprep.subr.bf16.mxu0 %v3476
  %5324 = vmatpush2.bf16.msra.mxu0 %v3475
  %5325 = vmatprep.mubr.bf16.mxu0 %v712
  %5326 = vmatmul.mubr.bf16.gmra.mxu0 %v711
  %v5327 = vpop.f32.mrf.mxu0
  %v5328 = vadd.f32 %v1421, %v5327
  %v5329 = vpop.f32.mrf.mxu0
  %v5330 = vadd.f32 %v1425, %v5329
  %v5331 = vpop.f32.mrf.mxu0
  %v5332 = vpop.f32.mrf.mxu0
  %5333 = vdwg.mxu0
  %5334 = vmatprep.subr.bf16.mxu0 %v3731
  %5335 = vmatpush1.bf16.msra.mxu0 %v3730
  %5336 = vmatprep.subr.bf16.mxu0 %v3714
  %5337 = vmatpush1.bf16.msra.mxu0 %v3713
  %5338 = vmatprep.subr.bf16.mxu0 %v3697
  %5339 = vmatpush1.bf16.msra.mxu0 %v3696
  %5340 = vmatprep.subr.bf16.mxu0 %v3680
  %5341 = vmatpush1.bf16.msra.mxu0 %v3679
  %5342 = vmatprep.subr.bf16.mxu0 %v3663
  %5343 = vmatpush1.bf16.msra.mxu0 %v3662
  %5344 = vmatprep.subr.bf16.mxu0 %v3646
  %5345 = vmatpush1.bf16.msra.mxu0 %v3645
  %5346 = vmatprep.subr.bf16.mxu0 %v3629
  %5347 = vmatpush1.bf16.msra.mxu0 %v3628
  %5348 = vmatprep.subr.bf16.mxu0 %v3612
  %5349 = vmatpush1.bf16.msra.mxu0 %v3611
  %5350 = vmatprep.subr.bf16.mxu0 %v3867
  %5351 = vmatpush2.bf16.msra.mxu0 %v3866
  %5352 = vmatprep.subr.bf16.mxu0 %v3850
  %5353 = vmatpush2.bf16.msra.mxu0 %v3849
  %5354 = vmatprep.subr.bf16.mxu0 %v3833
  %5355 = vmatpush2.bf16.msra.mxu0 %v3832
  %5356 = vmatprep.subr.bf16.mxu0 %v3816
  %5357 = vmatpush2.bf16.msra.mxu0 %v3815
  %5358 = vmatprep.subr.bf16.mxu0 %v3799
  %5359 = vmatpush2.bf16.msra.mxu0 %v3798
  %5360 = vmatprep.subr.bf16.mxu0 %v3782
  %5361 = vmatpush2.bf16.msra.mxu0 %v3781
  %5362 = vmatprep.subr.bf16.mxu0 %v3765
  %5363 = vmatpush2.bf16.msra.mxu0 %v3764
  %5364 = vmatprep.subr.bf16.mxu0 %v3748
  %5365 = vmatpush2.bf16.msra.mxu0 %v3747
  %5366 = vmatprep.mubr.bf16.mxu0 %v714
  %5367 = vmatmul.mubr.bf16.gmra.mxu0 %v713
  %v5368 = vpop.f32.mrf.mxu0
  %v5369 = vadd.f32 %v5328, %v5368
  %v5370 = vpop.f32.mrf.mxu0
  %v5371 = vadd.f32 %v5330, %v5370
  %v5372 = vpop.f32.mrf.mxu0
  %v5373 = vpop.f32.mrf.mxu0
  %5374 = vdwg.mxu0
  %5375 = vmatprep.subr.bf16.mxu0 0
  %5376 = vmatpush1.bf16.msra.mxu0 0
  %5377 = vmatprep.subr.bf16.mxu0 0
  %5378 = vmatpush1.bf16.msra.mxu0 0
  %5379 = vmatprep.subr.bf16.mxu0 0
  %5380 = vmatpush1.bf16.msra.mxu0 0
  %5381 = vmatprep.subr.bf16.mxu0 0
  %5382 = vmatpush1.bf16.msra.mxu0 0
  %5383 = vmatprep.subr.bf16.mxu0 %v3935
  %5384 = vmatpush1.bf16.msra.mxu0 %v3934
  %5385 = vmatprep.subr.bf16.mxu0 %v3918
  %5386 = vmatpush1.bf16.msra.mxu0 %v3917
  %5387 = vmatprep.subr.bf16.mxu0 %v3901
  %5388 = vmatpush1.bf16.msra.mxu0 %v3900
  %5389 = vmatprep.subr.bf16.mxu0 %v3884
  %5390 = vmatpush1.bf16.msra.mxu0 %v3883
  %5391 = vmatprep.subr.bf16.mxu0 0
  %5392 = vmatpush2.bf16.msra.mxu0 0
  %5393 = vmatprep.subr.bf16.mxu0 0
  %5394 = vmatpush2.bf16.msra.mxu0 0
  %5395 = vmatprep.subr.bf16.mxu0 0
  %5396 = vmatpush2.bf16.msra.mxu0 0
  %5397 = vmatprep.subr.bf16.mxu0 0
  %5398 = vmatpush2.bf16.msra.mxu0 0
  %5399 = vmatprep.subr.bf16.mxu0 0
  %5400 = vmatpush2.bf16.msra.mxu0 0
  %5401 = vmatprep.subr.bf16.mxu0 0
  %5402 = vmatpush2.bf16.msra.mxu0 0
  %5403 = vmatprep.subr.bf16.mxu0 0
  %5404 = vmatpush2.bf16.msra.mxu0 0
  %5405 = vmatprep.subr.bf16.mxu0 0
  %5406 = vmatpush2.bf16.msra.mxu0 0
  %5407 = vmatprep.mubr.bf16.mxu0 0
  %5408 = vmatmul.mubr.bf16.gmra.mxu0 %v4553
  %v5409 = vpop.f32.mrf.mxu0
  %v5410 = vadd.f32 %v5369, %v5409
  %v5411 = vpop.f32.mrf.mxu0
  %v5412 = vadd.f32 %v5371, %v5411
  %v5413 = vpop.f32.mrf.mxu0
  %v5414 = vpop.f32.mrf.mxu0
  %5415 = vdwg.mxu0
  %5416 = vmatprep.subr.bf16.mxu0 %v3461
  %5417 = vmatpush1.bf16.msra.mxu0 %v3460
  %5418 = vmatprep.subr.bf16.mxu0 %v3444
  %5419 = vmatpush1.bf16.msra.mxu0 %v3443
  %5420 = vmatprep.subr.bf16.mxu0 %v3427
  %5421 = vmatpush1.bf16.msra.mxu0 %v3426
  %5422 = vmatprep.subr.bf16.mxu0 %v3410
  %5423 = vmatpush1.bf16.msra.mxu0 %v3409
  %5424 = vmatprep.subr.bf16.mxu0 %v3393
  %5425 = vmatpush1.bf16.msra.mxu0 %v3392
  %5426 = vmatprep.subr.bf16.mxu0 %v3376
  %5427 = vmatpush1.bf16.msra.mxu0 %v3375
  %5428 = vmatprep.subr.bf16.mxu0 %v3359
  %5429 = vmatpush1.bf16.msra.mxu0 %v3358
  %5430 = vmatprep.subr.bf16.mxu0 %v3342
  %5431 = vmatpush1.bf16.msra.mxu0 %v3341
  %5432 = vmatprep.subr.bf16.mxu0 %v3597
  %5433 = vmatpush2.bf16.msra.mxu0 %v3596
  %5434 = vmatprep.subr.bf16.mxu0 %v3580
  %5435 = vmatpush2.bf16.msra.mxu0 %v3579
  %5436 = vmatprep.subr.bf16.mxu0 %v3563
  %5437 = vmatpush2.bf16.msra.mxu0 %v3562
  %5438 = vmatprep.subr.bf16.mxu0 %v3546
  %5439 = vmatpush2.bf16.msra.mxu0 %v3545
  %5440 = vmatprep.subr.bf16.mxu0 %v3529
  %5441 = vmatpush2.bf16.msra.mxu0 %v3528
  %5442 = vmatprep.subr.bf16.mxu0 %v3512
  %5443 = vmatpush2.bf16.msra.mxu0 %v3511
  %5444 = vmatprep.subr.bf16.mxu0 %v3495
  %5445 = vmatpush2.bf16.msra.mxu0 %v3494
  %5446 = vmatprep.subr.bf16.mxu0 %v3478
  %5447 = vmatpush2.bf16.msra.mxu0 %v3477
  %5448 = vmatprep.mubr.bf16.mxu0 %v712
  %5449 = vmatmul.mubr.bf16.gmra.mxu0 %v711
  %v5450 = vpop.f32.mrf.mxu0
  %v5451 = vadd.f32 %v1429, %v5450
  %v5452 = vpop.f32.mrf.mxu0
  %v5453 = vadd.f32 %v1433, %v5452
  %v5454 = vpop.f32.mrf.mxu0
  %v5455 = vpop.f32.mrf.mxu0
  %5456 = vdwg.mxu0
  %5457 = vmatprep.subr.bf16.mxu0 %v3733
  %5458 = vmatpush1.bf16.msra.mxu0 %v3732
  %5459 = vmatprep.subr.bf16.mxu0 %v3716
  %5460 = vmatpush1.bf16.msra.mxu0 %v3715
  %5461 = vmatprep.subr.bf16.mxu0 %v3699
  %5462 = vmatpush1.bf16.msra.mxu0 %v3698
  %5463 = vmatprep.subr.bf16.mxu0 %v3682
  %5464 = vmatpush1.bf16.msra.mxu0 %v3681
  %5465 = vmatprep.subr.bf16.mxu0 %v3665
  %5466 = vmatpush1.bf16.msra.mxu0 %v3664
  %5467 = vmatprep.subr.bf16.mxu0 %v3648
  %5468 = vmatpush1.bf16.msra.mxu0 %v3647
  %5469 = vmatprep.subr.bf16.mxu0 %v3631
  %5470 = vmatpush1.bf16.msra.mxu0 %v3630
  %5471 = vmatprep.subr.bf16.mxu0 %v3614
  %5472 = vmatpush1.bf16.msra.mxu0 %v3613
  %5473 = vmatprep.subr.bf16.mxu0 %v3869
  %5474 = vmatpush2.bf16.msra.mxu0 %v3868
  %5475 = vmatprep.subr.bf16.mxu0 %v3852
  %5476 = vmatpush2.bf16.msra.mxu0 %v3851
  %5477 = vmatprep.subr.bf16.mxu0 %v3835
  %5478 = vmatpush2.bf16.msra.mxu0 %v3834
  %5479 = vmatprep.subr.bf16.mxu0 %v3818
  %5480 = vmatpush2.bf16.msra.mxu0 %v3817
  %5481 = vmatprep.subr.bf16.mxu0 %v3801
  %5482 = vmatpush2.bf16.msra.mxu0 %v3800
  %5483 = vmatprep.subr.bf16.mxu0 %v3784
  %5484 = vmatpush2.bf16.msra.mxu0 %v3783
  %5485 = vmatprep.subr.bf16.mxu0 %v3767
  %5486 = vmatpush2.bf16.msra.mxu0 %v3766
  %5487 = vmatprep.subr.bf16.mxu0 %v3750
  %5488 = vmatpush2.bf16.msra.mxu0 %v3749
  %5489 = vmatprep.mubr.bf16.mxu0 %v714
  %5490 = vmatmul.mubr.bf16.gmra.mxu0 %v713
  %v5491 = vpop.f32.mrf.mxu0
  %v5492 = vadd.f32 %v5451, %v5491
  %v5493 = vpop.f32.mrf.mxu0
  %v5494 = vadd.f32 %v5453, %v5493
  %v5495 = vpop.f32.mrf.mxu0
  %v5496 = vpop.f32.mrf.mxu0
  %5497 = vdwg.mxu0
  %5498 = vmatprep.subr.bf16.mxu0 0
  %5499 = vmatpush1.bf16.msra.mxu0 0
  %5500 = vmatprep.subr.bf16.mxu0 0
  %5501 = vmatpush1.bf16.msra.mxu0 0
  %5502 = vmatprep.subr.bf16.mxu0 0
  %5503 = vmatpush1.bf16.msra.mxu0 0
  %5504 = vmatprep.subr.bf16.mxu0 0
  %5505 = vmatpush1.bf16.msra.mxu0 0
  %5506 = vmatprep.subr.bf16.mxu0 %v3937
  %5507 = vmatpush1.bf16.msra.mxu0 %v3936
  %5508 = vmatprep.subr.bf16.mxu0 %v3920
  %5509 = vmatpush1.bf16.msra.mxu0 %v3919
  %5510 = vmatprep.subr.bf16.mxu0 %v3903
  %5511 = vmatpush1.bf16.msra.mxu0 %v3902
  %5512 = vmatprep.subr.bf16.mxu0 %v3886
  %5513 = vmatpush1.bf16.msra.mxu0 %v3885
  %5514 = vmatprep.subr.bf16.mxu0 0
  %5515 = vmatpush2.bf16.msra.mxu0 0
  %5516 = vmatprep.subr.bf16.mxu0 0
  %5517 = vmatpush2.bf16.msra.mxu0 0
  %5518 = vmatprep.subr.bf16.mxu0 0
  %5519 = vmatpush2.bf16.msra.mxu0 0
  %5520 = vmatprep.subr.bf16.mxu0 0
  %5521 = vmatpush2.bf16.msra.mxu0 0
  %5522 = vmatprep.subr.bf16.mxu0 0
  %5523 = vmatpush2.bf16.msra.mxu0 0
  %5524 = vmatprep.subr.bf16.mxu0 0
  %5525 = vmatpush2.bf16.msra.mxu0 0
  %5526 = vmatprep.subr.bf16.mxu0 0
  %5527 = vmatpush2.bf16.msra.mxu0 0
  %5528 = vmatprep.subr.bf16.mxu0 0
  %5529 = vmatpush2.bf16.msra.mxu0 0
  %5530 = vmatprep.mubr.bf16.mxu0 0
  %5531 = vmatmul.mubr.bf16.gmra.mxu0 %v4553
  %v5532 = vpop.f32.mrf.mxu0
  %v5533 = vadd.f32 %v5492, %v5532
  %v5534 = vpop.f32.mrf.mxu0
  %v5535 = vadd.f32 %v5494, %v5534
  %v5536 = vpop.f32.mrf.mxu0
  %v5537 = vpop.f32.mrf.mxu0
  %5538 = vdwg.mxu0
  %5539 = vmatprep.subr.bf16.mxu0 0
  %5540 = vmatpush1.bf16.msra.mxu0 %v3462
  %5541 = vmatprep.subr.bf16.mxu0 0
  %5542 = vmatpush1.bf16.msra.mxu0 %v3445
  %5543 = vmatprep.subr.bf16.mxu0 0
  %5544 = vmatpush1.bf16.msra.mxu0 %v3428
  %5545 = vmatprep.subr.bf16.mxu0 0
  %5546 = vmatpush1.bf16.msra.mxu0 %v3411
  %5547 = vmatprep.subr.bf16.mxu0 0
  %5548 = vmatpush1.bf16.msra.mxu0 %v3394
  %5549 = vmatprep.subr.bf16.mxu0 0
  %5550 = vmatpush1.bf16.msra.mxu0 %v3377
  %5551 = vmatprep.subr.bf16.mxu0 0
  %5552 = vmatpush1.bf16.msra.mxu0 %v3360
  %5553 = vmatprep.subr.bf16.mxu0 0
  %5554 = vmatpush1.bf16.msra.mxu0 %v3343
  %5555 = vmatprep.subr.bf16.mxu0 0
  %5556 = vmatpush2.bf16.msra.mxu0 %v3598
  %5557 = vmatprep.subr.bf16.mxu0 0
  %5558 = vmatpush2.bf16.msra.mxu0 %v3581
  %5559 = vmatprep.subr.bf16.mxu0 0
  %5560 = vmatpush2.bf16.msra.mxu0 %v3564
  %5561 = vmatprep.subr.bf16.mxu0 0
  %5562 = vmatpush2.bf16.msra.mxu0 %v3547
  %5563 = vmatprep.subr.bf16.mxu0 0
  %5564 = vmatpush2.bf16.msra.mxu0 %v3530
  %5565 = vmatprep.subr.bf16.mxu0 0
  %5566 = vmatpush2.bf16.msra.mxu0 %v3513
  %5567 = vmatprep.subr.bf16.mxu0 0
  %5568 = vmatpush2.bf16.msra.mxu0 %v3496
  %5569 = vmatprep.subr.bf16.mxu0 0
  %5570 = vmatpush2.bf16.msra.mxu0 %v3479
  %5571 = vmatprep.mubr.bf16.mxu0 %v712
  %5572 = vmatmul.mubr.bf16.gmra.mxu0 %v711
  %v5573 = vpop.f32.mrf.mxu0
  %v5574 = vadd.f32 %v1437, %v5573
  %v5575 = vpop.f32.mrf.mxu0
  %v5576 = vpop.f32.mrf.mxu0
  %v5577 = vpop.f32.mrf.mxu0
  %5578 = vdwg.mxu0
  %5579 = vmatprep.subr.bf16.mxu0 0
  %5580 = vmatpush1.bf16.msra.mxu0 %v3734
  %5581 = vmatprep.subr.bf16.mxu0 0
  %5582 = vmatpush1.bf16.msra.mxu0 %v3717
  %5583 = vmatprep.subr.bf16.mxu0 0
  %5584 = vmatpush1.bf16.msra.mxu0 %v3700
  %5585 = vmatprep.subr.bf16.mxu0 0
  %5586 = vmatpush1.bf16.msra.mxu0 %v3683
  %5587 = vmatprep.subr.bf16.mxu0 0
  %5588 = vmatpush1.bf16.msra.mxu0 %v3666
  %5589 = vmatprep.subr.bf16.mxu0 0
  %5590 = vmatpush1.bf16.msra.mxu0 %v3649
  %5591 = vmatprep.subr.bf16.mxu0 0
  %5592 = vmatpush1.bf16.msra.mxu0 %v3632
  %5593 = vmatprep.subr.bf16.mxu0 0
  %5594 = vmatpush1.bf16.msra.mxu0 %v3615
  %5595 = vmatprep.subr.bf16.mxu0 0
  %5596 = vmatpush2.bf16.msra.mxu0 %v3870
  %5597 = vmatprep.subr.bf16.mxu0 0
  %5598 = vmatpush2.bf16.msra.mxu0 %v3853
  %5599 = vmatprep.subr.bf16.mxu0 0
  %5600 = vmatpush2.bf16.msra.mxu0 %v3836
  %5601 = vmatprep.subr.bf16.mxu0 0
  %5602 = vmatpush2.bf16.msra.mxu0 %v3819
  %5603 = vmatprep.subr.bf16.mxu0 0
  %5604 = vmatpush2.bf16.msra.mxu0 %v3802
  %5605 = vmatprep.subr.bf16.mxu0 0
  %5606 = vmatpush2.bf16.msra.mxu0 %v3785
  %5607 = vmatprep.subr.bf16.mxu0 0
  %5608 = vmatpush2.bf16.msra.mxu0 %v3768
  %5609 = vmatprep.subr.bf16.mxu0 0
  %5610 = vmatpush2.bf16.msra.mxu0 %v3751
  %5611 = vmatprep.mubr.bf16.mxu0 %v714
  %5612 = vmatmul.mubr.bf16.gmra.mxu0 %v713
  %v5613 = vpop.f32.mrf.mxu0
  %v5614 = vadd.f32 %v5574, %v5613
  %v5615 = vpop.f32.mrf.mxu0
  %v5616 = vpop.f32.mrf.mxu0
  %v5617 = vpop.f32.mrf.mxu0
  %5618 = vdwg.mxu0
  %5619 = vmatprep.subr.bf16.mxu0 0
  %5620 = vmatpush1.bf16.msra.mxu0 0
  %5621 = vmatprep.subr.bf16.mxu0 0
  %5622 = vmatpush1.bf16.msra.mxu0 0
  %5623 = vmatprep.subr.bf16.mxu0 0
  %5624 = vmatpush1.bf16.msra.mxu0 0
  %5625 = vmatprep.subr.bf16.mxu0 0
  %5626 = vmatpush1.bf16.msra.mxu0 0
  %5627 = vmatprep.subr.bf16.mxu0 0
  %5628 = vmatpush1.bf16.msra.mxu0 %v3938
  %5629 = vmatprep.subr.bf16.mxu0 0
  %5630 = vmatpush1.bf16.msra.mxu0 %v3921
  %5631 = vmatprep.subr.bf16.mxu0 0
  %5632 = vmatpush1.bf16.msra.mxu0 %v3904
  %5633 = vmatprep.subr.bf16.mxu0 0
  %5634 = vmatpush1.bf16.msra.mxu0 %v3887
  %5635 = vmatprep.subr.bf16.mxu0 0
  %5636 = vmatpush2.bf16.msra.mxu0 0
  %5637 = vmatprep.subr.bf16.mxu0 0
  %5638 = vmatpush2.bf16.msra.mxu0 0
  %5639 = vmatprep.subr.bf16.mxu0 0
  %5640 = vmatpush2.bf16.msra.mxu0 0
  %5641 = vmatprep.subr.bf16.mxu0 0
  %5642 = vmatpush2.bf16.msra.mxu0 0
  %5643 = vmatprep.subr.bf16.mxu0 0
  %5644 = vmatpush2.bf16.msra.mxu0 0
  %5645 = vmatprep.subr.bf16.mxu0 0
  %5646 = vmatpush2.bf16.msra.mxu0 0
  %5647 = vmatprep.subr.bf16.mxu0 0
  %5648 = vmatpush2.bf16.msra.mxu0 0
  %5649 = vmatprep.subr.bf16.mxu0 0
  %5650 = vmatpush2.bf16.msra.mxu0 0
  %5651 = vmatprep.mubr.bf16.mxu0 0
  %5652 = vmatmul.mubr.bf16.gmra.mxu0 %v4553
  %v5653 = vpop.f32.mrf.mxu0
  %v5654 = vadd.f32 %v5614, %v5653
  %v5655 = vpop.f32.mrf.mxu0
  %v5656 = vpop.f32.mrf.mxu0
  %v5657 = vpop.f32.mrf.mxu0
  %5658 = vdwg.mxu0
  %v5659 = vtanh.pop %v4672
  %v5660 = vtanh.pop %v4674
  %v5661 = vtanh.pop %v4795
  %v5662 = vtanh.pop %v4797
  %v5663 = vtanh.pop %v4918
  %v5664 = vtanh.pop %v4920
  %v5665 = vtanh.pop %v5041
  %v5666 = vtanh.pop %v5043
  %v5667 = vtanh.pop %v5164
  %v5668 = vtanh.pop %v5166
  %v5669 = vtanh.pop %v5287
  %v5670 = vtanh.pop %v5289
  %v5671 = vtanh.pop %v5410
  %v5672 = vtanh.pop %v5412
  %v5673 = vtanh.pop %v5533
  %v5674 = vtanh.pop %v5535
  %v5675 = vtanh.pop %v5654
  %v5676 = vpack.c.bf16 %v5659, %v5659
  %v5677 = vpack.c.bf16 %v5660, %v5660
  %v5678 = vpack.c.bf16 %v5661, %v5661
  %v5679 = vpack.c.bf16 %v5662, %v5662
  %v5680 = vpack.c.bf16 %v5663, %v5663
  %v5681 = vpack.c.bf16 %v5664, %v5664
  %v5682 = vpack.c.bf16 %v5665, %v5665
  %v5683 = vpack.c.bf16 %v5666, %v5666
  %v5684 = vpack.c.bf16 %v5667, %v5667
  %v5685 = vpack.c.bf16 %v5668, %v5668
  %v5686 = vpack.c.bf16 %v5669, %v5669
  %v5687 = vpack.c.bf16 %v5670, %v5670
  %v5688 = vpack.c.bf16 %v5671, %v5671
  %v5689 = vpack.c.bf16 %v5672, %v5672
  %v5690 = vpack.c.bf16 %v5673, %v5673
  %v5691 = vpack.c.bf16 %v5674, %v5674
  %v5692 = vpack.c.bf16 %v5675, %v5675
  %v5693 = vld [vmem:[%s7] sm:$0xff]
  %v5694 = vld [vmem:[%s7 + $0x8] sm:$0xff]
  %v5695 = vld [vmem:[%s7 + $0x10] sm:$0xff]
  %v5696 = vld [vmem:[%s7 + $0x18] sm:$0xff]
  %v5697 = vld [vmem:[%s7 + $0x20] sm:$0xff]
  %v5698 = vld [vmem:[%s7 + $0x28] sm:$0xff]
  %v5699 = vld [vmem:[%s7 + $0x30] sm:$0xff]
  %v5700 = vld [vmem:[%s7 + $0x38] sm:$0xff]
  %v5701 = vld [vmem:[%s7 + $0x40] sm:$0xff]
  %v5702 = vld [vmem:[%s7 + $0x48] sm:$0xff]
  %v5703 = vld [vmem:[%s7 + $0x50] sm:$0xff]
  %v5704 = vld [vmem:[%s7 + $0x58] sm:$0xff]
  %v5705 = vld [vmem:[%s7 + $0x60] sm:$0xff]
  %v5706 = vld [vmem:[%s7 + $0x68] sm:$0xff]
  %v5707 = vld [vmem:[%s7 + $0x70] sm:$0xff]
  %v5708 = vld [vmem:[%s7 + $0x78] sm:$0xff]
  %v5709 = vld [vmem:[%s7 + $0x80] sm:$0xff]
  %v5710 = vld [vmem:[%s7 + $0x88] sm:$0xff]
  %v5711 = vld [vmem:[%s7 + $0x90] sm:$0xff]
  %v5712 = vld [vmem:[%s7 + $0x98] sm:$0xff]
  %v5713 = vld [vmem:[%s7 + $0xa0] sm:$0xff]
  %v5714 = vld [vmem:[%s7 + $0xa8] sm:$0xff]
  %v5715 = vld [vmem:[%s7 + $0xb0] sm:$0xff]
  %v5716 = vld [vmem:[%s7 + $0xb8] sm:$0xff]
  %v5717 = vld [vmem:[%s7 + $0xc0] sm:$0xff]
  %v5718 = vld [vmem:[%s7 + $0xc8] sm:$0xff]
  %v5719 = vld [vmem:[%s7 + $0xd0] sm:$0xff]
  %v5720 = vld [vmem:[%s7 + $0xd8] sm:$0xff]
  %v5721 = vld [vmem:[%s7 + $0xe0] sm:$0xff]
  %v5722 = vld [vmem:[%s7 + $0xe8] sm:$0xff]
  %v5723 = vld [vmem:[%s7 + $0xf0] sm:$0xff]
  %v5724 = vld [vmem:[%s7 + $0xf8] sm:$0xff]
  %v5725 = vld [vmem:[%s7 + $0x100] sm:$0xff]
  %v5726 = vld [vmem:[%s7 + $0x108] sm:$0xff]
  %v5727 = vld [vmem:[%s7 + $0x110] sm:$0xff]
  %v5728 = vld [vmem:[%s7 + $0x118] sm:$0xff]
  %v5729 = vld [vmem:[%s7 + $0x120] sm:$0xff]
  %v5730 = vld [vmem:[%s7 + $0x128] sm:$0xff]
  %v5731 = vld [vmem:[%s7 + $0x130] sm:$0xff]
  %v5732 = vld [vmem:[%s7 + $0x138] sm:$0xff]
  %v5733 = vld [vmem:[%s7 + $0x140] sm:$0xff]
  %v5734 = vld [vmem:[%s7 + $0x148] sm:$0xff]
  %v5735 = vld [vmem:[%s7 + $0x150] sm:$0xff]
  %v5736 = vld [vmem:[%s7 + $0x158] sm:$0xff]
  %v5737 = vld [vmem:[%s7 + $0x160] sm:$0xff]
  %v5738 = vld [vmem:[%s7 + $0x168] sm:$0xff]
  %v5739 = vld [vmem:[%s7 + $0x170] sm:$0xff]
  %v5740 = vld [vmem:[%s7 + $0x178] sm:$0xff]
  %v5741 = vld [vmem:[%s7 + $0x180] sm:$0xff]
  %v5742 = vld [vmem:[%s7 + $0x188] sm:$0xff]
  %v5743 = vld [vmem:[%s7 + $0x190] sm:$0xff]
  %v5744 = vld [vmem:[%s7 + $0x198] sm:$0xff]
  %v5745 = vld [vmem:[%s7 + $0x1a0] sm:$0xff]
  %v5746 = vld [vmem:[%s7 + $0x1a8] sm:$0xff]
  %v5747 = vld [vmem:[%s7 + $0x1b0] sm:$0xff]
  %v5748 = vld [vmem:[%s7 + $0x1b8] sm:$0xff]
  %v5749 = vld [vmem:[%s7 + $0x1c0] sm:$0xff]
  %v5750 = vld [vmem:[%s7 + $0x1c8] sm:$0xff]
  %v5751 = vld [vmem:[%s7 + $0x1d0] sm:$0xff]
  %v5752 = vld [vmem:[%s7 + $0x1d8] sm:$0xff]
  %v5753 = vld [vmem:[%s7 + $0x1e0] sm:$0xff]
  %v5754 = vld [vmem:[%s7 + $0x1e8] sm:$0xff]
  %v5755 = vld [vmem:[%s7 + $0x1f0] sm:$0xff]
  %v5756 = vld [vmem:[%s7 + $0x1f8] sm:$0xff]
  %v5757 = vld [vmem:[%s7 + $0x200] sm:$0xff]
  %v5758 = vld [vmem:[%s7 + $0x208] sm:$0xff]
  %v5759 = vld [vmem:[%s7 + $0x210] sm:$0xff]
  %v5760 = vld [vmem:[%s7 + $0x218] sm:$0xff]
  %v5761 = vld [vmem:[%s7 + $0x220] sm:$0xff]
  %v5762 = vld [vmem:[%s7 + $0x228] sm:$0xff]
  %v5763 = vld [vmem:[%s7 + $0x230] sm:$0xff]
  %v5764 = vld [vmem:[%s7 + $0x238] sm:$0xff]
  %v5765 = vld [vmem:[%s7 + $0x240] sm:$0xff]
  %v5766 = vld [vmem:[%s7 + $0x248] sm:$0xff]
  %v5767 = vld [vmem:[%s7 + $0x250] sm:$0xff]
  %v5768 = vld [vmem:[%s7 + $0x258] sm:$0xff]
  %v5769 = vld [vmem:[%s7 + $0x260] sm:$0xff]
  %v5770 = vld [vmem:[%s7 + $0x268] sm:$0xff]
  %v5771 = vld [vmem:[%s7 + $0x270] sm:$0xff]
  %v5772 = vld [vmem:[%s7 + $0x278] sm:$0xff]
  %v5773 = vld [vmem:[%s7 + $0x280] sm:$0xff]
  %v5774 = vld [vmem:[%s7 + $0x288] sm:$0xff]
  %v5775 = vld [vmem:[%s7 + $0x290] sm:$0xff]
  %v5776 = vld [vmem:[%s7 + $0x298] sm:$0xff]
  %v5777 = vld [vmem:[%s7 + $0x2a0] sm:$0xff]
  %v5778 = vld [vmem:[%s7 + $0x2a8] sm:$0xff]
  %v5779 = vld [vmem:[%s7 + $0x2b0] sm:$0xff]
  %v5780 = vld [vmem:[%s7 + $0x2b8] sm:$0xff]
  %v5781 = vld [vmem:[%s7 + $0x2c0] sm:$0xff]
  %v5782 = vld [vmem:[%s7 + $0x2c8] sm:$0xff]
  %v5783 = vld [vmem:[%s7 + $0x2d0] sm:$0xff]
  %v5784 = vld [vmem:[%s7 + $0x2d8] sm:$0xff]
  %v5785 = vld [vmem:[%s7 + $0x2e0] sm:$0xff]
  %v5786 = vld [vmem:[%s7 + $0x2e8] sm:$0xff]
  %v5787 = vld [vmem:[%s7 + $0x2f0] sm:$0xff]
  %v5788 = vld [vmem:[%s7 + $0x2f8] sm:$0xff]
  %v5789 = vld [vmem:[%s7 + $0x300] sm:$0xff]
  %v5790 = vld [vmem:[%s7 + $0x308] sm:$0xff]
  %v5791 = vld [vmem:[%s7 + $0x310] sm:$0xff]
  %v5792 = vld [vmem:[%s7 + $0x318] sm:$0xff]
  %v5793 = vld [vmem:[%s7 + $0x320] sm:$0xff]
  %v5794 = vld [vmem:[%s7 + $0x328] sm:$0xff]
  %v5795 = vld [vmem:[%s7 + $0x330] sm:$0xff]
  %v5796 = vld [vmem:[%s7 + $0x338] sm:$0xff]
  %v5797 = vld [vmem:[%s7 + $0x340] sm:$0xff]
  %v5798 = vld [vmem:[%s7 + $0x348] sm:$0xff]
  %v5799 = vld [vmem:[%s7 + $0x350] sm:$0xff]
  %v5800 = vld [vmem:[%s7 + $0x358] sm:$0xff]
  %v5801 = vld [vmem:[%s7 + $0x360] sm:$0xff]
  %v5802 = vld [vmem:[%s7 + $0x368] sm:$0xff]
  %v5803 = vld [vmem:[%s7 + $0x370] sm:$0xff]
  %v5804 = vld [vmem:[%s7 + $0x378] sm:$0xff]
  %v5805 = vld [vmem:[%s7 + $0x380] sm:$0xff]
  %v5806 = vld [vmem:[%s7 + $0x388] sm:$0xff]
  %v5807 = vld [vmem:[%s7 + $0x390] sm:$0xff]
  %v5808 = vld [vmem:[%s7 + $0x398] sm:$0xff]
  %v5809 = vld [vmem:[%s7 + $0x3a0] sm:$0xff]
  %v5810 = vld [vmem:[%s7 + $0x3a8] sm:$0xff]
  %v5811 = vld [vmem:[%s7 + $0x3b0] sm:$0xff]
  %v5812 = vld [vmem:[%s7 + $0x3b8] sm:$0xff]
  %v5813 = vld [vmem:[%s7 + $0x3c0] sm:$0xff]
  %v5814 = vld [vmem:[%s7 + $0x3c8] sm:$0xff]
  %v5815 = vld [vmem:[%s7 + $0x3d0] sm:$0xff]
  %v5816 = vld [vmem:[%s7 + $0x3d8] sm:$0xff]
  %v5817 = vld [vmem:[%s7 + $0x3e0] sm:$0xff]
  %v5818 = vld [vmem:[%s7 + $0x3e8] sm:$0xff]
  %v5819 = vld [vmem:[%s7 + $0x3f0] sm:$0xff]
  %v5820 = vld [vmem:[%s7 + $0x3f8] sm:$0xff]
  %v5821 = vld [vmem:[%s7 + $0x400] sm:$0xff]
  %v5822 = vld [vmem:[%s7 + $0x408] sm:$0xff]
  %v5823 = vld [vmem:[%s7 + $0x410] sm:$0xff]
  %v5824 = vld [vmem:[%s7 + $0x418] sm:$0xff]
  %v5825 = vld [vmem:[%s7 + $0x420] sm:$0xff]
  %v5826 = vld [vmem:[%s7 + $0x428] sm:$0xff]
  %v5827 = vld [vmem:[%s7 + $0x430] sm:$0xff]
  %v5828 = vld [vmem:[%s7 + $0x438] sm:$0xff]
  %v5829 = vld [vmem:[%s7 + $0x440] sm:$0xff]
  %v5830 = vld [vmem:[%s7 + $0x448] sm:$0xff]
  %v5831 = vld [vmem:[%s7 + $0x450] sm:$0xff]
  %v5832 = vld [vmem:[%s7 + $0x458] sm:$0xff]
  %v5833 = vld [vmem:[%s7 + $0x460] sm:$0xff]
  %v5834 = vld [vmem:[%s7 + $0x468] sm:$0xff]
  %v5835 = vld [vmem:[%s7 + $0x470] sm:$0xff]
  %v5836 = vld [vmem:[%s7 + $0x478] sm:$0xff]
  %v5837 = vld [vmem:[%s7 + $0x480] sm:$0xff]
  %v5838 = vld [vmem:[%s7 + $0x488] sm:$0xff]
  %v5839 = vld [vmem:[%s7 + $0x490] sm:$0xff]
  %v5840 = vld [vmem:[%s7 + $0x498] sm:$0xff]
  %v5841 = vld [vmem:[%s7 + $0x4a0] sm:$0xff]
  %v5842 = vld [vmem:[%s7 + $0x4a8] sm:$0xff]
  %v5843 = vld [vmem:[%s7 + $0x4b0] sm:$0xff]
  %v5844 = vld [vmem:[%s7 + $0x4b8] sm:$0xff]
  %v5845 = vld [vmem:[%s7 + $0x4c0] sm:$0xff]
  %v5846 = vld [vmem:[%s7 + $0x4c8] sm:$0xff]
  %v5847 = vld [vmem:[%s7 + $0x4d0] sm:$0xff]
  %v5848 = vld [vmem:[%s7 + $0x4d8] sm:$0xff]
  %v5849 = vld [vmem:[%s7 + $0x4e0] sm:$0xff]
  %v5850 = vld [vmem:[%s7 + $0x4e8] sm:$0xff]
  %v5851 = vld [vmem:[%s7 + $0x4f0] sm:$0xff]
  %v5852 = vld [vmem:[%s7 + $0x4f8] sm:$0xff]
  %v5853 = vld [vmem:[%s7 + $0x500] sm:$0xff]
  %v5854 = vld [vmem:[%s7 + $0x508] sm:$0xff]
  %v5855 = vld [vmem:[%s7 + $0x510] sm:$0xff]
  %v5856 = vld [vmem:[%s7 + $0x518] sm:$0xff]
  %v5857 = vld [vmem:[%s7 + $0x520] sm:$0xff]
  %v5858 = vld [vmem:[%s7 + $0x528] sm:$0xff]
  %v5859 = vld [vmem:[%s7 + $0x530] sm:$0xff]
  %v5860 = vld [vmem:[%s7 + $0x538] sm:$0xff]
  %v5861 = vld [vmem:[%s7 + $0x540] sm:$0xff]
  %v5862 = vld [vmem:[%s7 + $0x548] sm:$0xff]
  %v5863 = vld [vmem:[%s7 + $0x550] sm:$0xff]
  %v5864 = vld [vmem:[%s7 + $0x558] sm:$0xff]
  %v5865 = vld [vmem:[%s7 + $0x560] sm:$0xff]
  %v5866 = vld [vmem:[%s7 + $0x568] sm:$0xff]
  %v5867 = vld [vmem:[%s7 + $0x570] sm:$0xff]
  %v5868 = vld [vmem:[%s7 + $0x578] sm:$0xff]
  %v5869 = vld [vmem:[%s7 + $0x580] sm:$0xff]
  %v5870 = vld [vmem:[%s7 + $0x588] sm:$0xff]
  %v5871 = vld [vmem:[%s7 + $0x590] sm:$0xff]
  %v5872 = vld [vmem:[%s7 + $0x598] sm:$0xff]
  %v5873 = vld [vmem:[%s7 + $0x5a0] sm:$0xff]
  %v5874 = vld [vmem:[%s7 + $0x5a8] sm:$0xff]
  %v5875 = vld [vmem:[%s7 + $0x5b0] sm:$0xff]
  %v5876 = vld [vmem:[%s7 + $0x5b8] sm:$0xff]
  %v5877 = vld [vmem:[%s7 + $0x5c0] sm:$0xff]
  %v5878 = vld [vmem:[%s7 + $0x5c8] sm:$0xff]
  %v5879 = vld [vmem:[%s7 + $0x5d0] sm:$0xff]
  %v5880 = vld [vmem:[%s7 + $0x5d8] sm:$0xff]
  %v5881 = vld [vmem:[%s7 + $0x5e0] sm:$0xff]
  %v5882 = vld [vmem:[%s7 + $0x5e8] sm:$0xff]
  %v5883 = vld [vmem:[%s7 + $0x5f0] sm:$0xff]
  %v5884 = vld [vmem:[%s7 + $0x5f8] sm:$0xff]
  %v5885 = vld [vmem:[%s7 + $0x600] sm:$0xff]
  %v5886 = vld [vmem:[%s7 + $0x608] sm:$0xff]
  %v5887 = vld [vmem:[%s7 + $0x610] sm:$0xff]
  %v5888 = vld [vmem:[%s7 + $0x618] sm:$0xff]
  %v5889 = vld [vmem:[%s7 + $0x620] sm:$0xff]
  %v5890 = vld [vmem:[%s7 + $0x628] sm:$0xff]
  %v5891 = vld [vmem:[%s7 + $0x630] sm:$0xff]
  %v5892 = vld [vmem:[%s7 + $0x638] sm:$0xff]
  %v5893 = vld [vmem:[%s7 + $0x640] sm:$0xff]
  %v5894 = vld [vmem:[%s7 + $0x648] sm:$0xff]
  %v5895 = vld [vmem:[%s7 + $0x650] sm:$0xff]
  %v5896 = vld [vmem:[%s7 + $0x658] sm:$0xff]
  %v5897 = vld [vmem:[%s7 + $0x660] sm:$0xff]
  %v5898 = vld [vmem:[%s7 + $0x668] sm:$0xff]
  %v5899 = vld [vmem:[%s7 + $0x670] sm:$0xff]
  %v5900 = vld [vmem:[%s7 + $0x678] sm:$0xff]
  %v5901 = vld [vmem:[%s7 + $0x680] sm:$0xff]
  %v5902 = vld [vmem:[%s7 + $0x688] sm:$0xff]
  %v5903 = vld [vmem:[%s7 + $0x690] sm:$0xff]
  %v5904 = vld [vmem:[%s7 + $0x698] sm:$0xff]
  %v5905 = vld [vmem:[%s7 + $0x6a0] sm:$0xff]
  %v5906 = vld [vmem:[%s7 + $0x6a8] sm:$0xff]
  %v5907 = vld [vmem:[%s7 + $0x6b0] sm:$0xff]
  %v5908 = vld [vmem:[%s7 + $0x6b8] sm:$0xff]
  %v5909 = vld [vmem:[%s7 + $0x6c0] sm:$0xff]
  %v5910 = vld [vmem:[%s7 + $0x6c8] sm:$0xff]
  %v5911 = vld [vmem:[%s7 + $0x6d0] sm:$0xff]
  %v5912 = vld [vmem:[%s7 + $0x6d8] sm:$0xff]
  %v5913 = vld [vmem:[%s7 + $0x6e0] sm:$0xff]
  %v5914 = vld [vmem:[%s7 + $0x6e8] sm:$0xff]
  %v5915 = vld [vmem:[%s7 + $0x6f0] sm:$0xff]
  %v5916 = vld [vmem:[%s7 + $0x6f8] sm:$0xff]
  %v5917 = vld [vmem:[%s7 + $0x700] sm:$0xff]
  %v5918 = vld [vmem:[%s7 + $0x708] sm:$0xff]
  %v5919 = vld [vmem:[%s7 + $0x710] sm:$0xff]
  %v5920 = vld [vmem:[%s7 + $0x718] sm:$0xff]
  %v5921 = vld [vmem:[%s7 + $0x720] sm:$0xff]
  %v5922 = vld [vmem:[%s7 + $0x728] sm:$0xff]
  %v5923 = vld [vmem:[%s7 + $0x730] sm:$0xff]
  %v5924 = vld [vmem:[%s7 + $0x738] sm:$0xff]
  %v5925 = vld [vmem:[%s7 + $0x740] sm:$0xff]
  %v5926 = vld [vmem:[%s7 + $0x748] sm:$0xff]
  %v5927 = vld [vmem:[%s7 + $0x750] sm:$0xff]
  %v5928 = vld [vmem:[%s7 + $0x758] sm:$0xff]
  %v5929 = vld [vmem:[%s7 + $0x760] sm:$0xff]
  %v5930 = vld [vmem:[%s7 + $0x768] sm:$0xff]
  %v5931 = vld [vmem:[%s7 + $0x770] sm:$0xff]
  %v5932 = vld [vmem:[%s7 + $0x778] sm:$0xff]
  %v5933 = vld [vmem:[%s7 + $0x780] sm:$0xff]
  %v5934 = vld [vmem:[%s7 + $0x788] sm:$0xff]
  %v5935 = vld [vmem:[%s7 + $0x790] sm:$0xff]
  %v5936 = vld [vmem:[%s7 + $0x798] sm:$0xff]
  %v5937 = vld [vmem:[%s7 + $0x7a0] sm:$0xff]
  %v5938 = vld [vmem:[%s7 + $0x7a8] sm:$0xff]
  %v5939 = vld [vmem:[%s7 + $0x7b0] sm:$0xff]
  %v5940 = vld [vmem:[%s7 + $0x7b8] sm:$0xff]
  %v5941 = vld [vmem:[%s7 + $0x7c0] sm:$0xff]
  %v5942 = vld [vmem:[%s7 + $0x7c8] sm:$0xff]
  %v5943 = vld [vmem:[%s7 + $0x7d0] sm:$0xff]
  %v5944 = vld [vmem:[%s7 + $0x7d8] sm:$0xff]
  %v5945 = vld [vmem:[%s7 + $0x7e0] sm:$0xff]
  %v5946 = vld [vmem:[%s7 + $0x7e8] sm:$0xff]
  %v5947 = vld [vmem:[%s7 + $0x7f0] sm:$0xff]
  %v5948 = vld [vmem:[%s7 + $0x7f8] sm:$0xff]
  %v5949 = vld [vmem:[%s7 + $0x800] sm:$0xff]
  %v5950 = vld [vmem:[%s7 + $0x808] sm:$0xff]
  %v5951 = vld [vmem:[%s7 + $0x810] sm:$0xff]
  %v5952 = vld [vmem:[%s7 + $0x818] sm:$0xff]
  %v5953 = vld [vmem:[%s7 + $0x820] sm:$0xff]
  %v5954 = vld [vmem:[%s7 + $0x828] sm:$0xff]
  %v5955 = vld [vmem:[%s7 + $0x830] sm:$0xff]
  %v5956 = vld [vmem:[%s7 + $0x838] sm:$0xff]
  %v5957 = vld [vmem:[%s7 + $0x840] sm:$0xff]
  %v5958 = vld [vmem:[%s7 + $0x848] sm:$0xff]
  %v5959 = vld [vmem:[%s7 + $0x850] sm:$0xff]
  %v5960 = vld [vmem:[%s7 + $0x858] sm:$0xff]
  %v5961 = vld [vmem:[%s7 + $0x860] sm:$0xff]
  %v5962 = vld [vmem:[%s7 + $0x868] sm:$0xff]
  %v5963 = vld [vmem:[%s7 + $0x870] sm:$0xff]
  %v5964 = vld [vmem:[%s7 + $0x878] sm:$0xff]
  %v5965 = vld [vmem:[%s7 + $0x880] sm:$0xff]
  %v5966 = vld [vmem:[%s7 + $0x888] sm:$0xff]
  %v5967 = vld [vmem:[%s7 + $0x890] sm:$0xff]
  %v5968 = vld [vmem:[%s7 + $0x898] sm:$0xff]
  %v5969 = vld [vmem:[%s7 + $0x8a0] sm:$0xff]
  %v5970 = vld [vmem:[%s7 + $0x8a8] sm:$0xff]
  %v5971 = vld [vmem:[%s7 + $0x8b0] sm:$0xff]
  %v5972 = vld [vmem:[%s7 + $0x8b8] sm:$0xff]
  %v5973 = vld [vmem:[%s7 + $0x8c0] sm:$0xff]
  %v5974 = vld [vmem:[%s7 + $0x8c8] sm:$0xff]
  %v5975 = vld [vmem:[%s7 + $0x8d0] sm:$0xff]
  %v5976 = vld [vmem:[%s7 + $0x8d8] sm:$0xff]
  %v5977 = vld [vmem:[%s7 + $0x8e0] sm:$0xff]
  %v5978 = vld [vmem:[%s7 + $0x8e8] sm:$0xff]
  %v5979 = vld [vmem:[%s7 + $0x8f0] sm:$0xff]
  %v5980 = vld [vmem:[%s7 + $0x8f8] sm:$0xff]
  %v5981 = vld [vmem:[%s7 + $0x900] sm:$0xff]
  %v5982 = vld [vmem:[%s7 + $0x908] sm:$0xff]
  %v5983 = vld [vmem:[%s7 + $0x910] sm:$0xff]
  %v5984 = vld [vmem:[%s7 + $0x918] sm:$0xff]
  %v5985 = vld [vmem:[%s7 + $0x920] sm:$0xff]
  %v5986 = vld [vmem:[%s7 + $0x928] sm:$0xff]
  %v5987 = vld [vmem:[%s7 + $0x930] sm:$0xff]
  %v5988 = vld [vmem:[%s7 + $0x938] sm:$0xff]
  %v5989 = vld [vmem:[%s7 + $0x940] sm:$0xff]
  %v5990 = vld [vmem:[%s7 + $0x948] sm:$0xff]
  %v5991 = vld [vmem:[%s7 + $0x950] sm:$0xff]
  %v5992 = vld [vmem:[%s7 + $0x958] sm:$0xff]
  %v5993 = vld [vmem:[%s7 + $0x960] sm:$0xff]
  %v5994 = vld [vmem:[%s7 + $0x968] sm:$0xff]
  %v5995 = vld [vmem:[%s7 + $0x970] sm:$0xff]
  %v5996 = vld [vmem:[%s7 + $0x978] sm:$0xff]
  %v5997 = vld [vmem:[%s7 + $0x980] sm:$0xff]
  %v5998 = vld [vmem:[%s7 + $0x988] sm:$0xff]
  %v5999 = vld [vmem:[%s7 + $0x990] sm:$0xff]
  %v6000 = vld [vmem:[%s7 + $0x998] sm:$0xff]
  %v6001 = vld [vmem:[%s7 + $0x9a0] sm:$0xff]
  %v6002 = vld [vmem:[%s7 + $0x9a8] sm:$0xff]
  %v6003 = vld [vmem:[%s7 + $0x9b0] sm:$0xff]
  %v6004 = vld [vmem:[%s7 + $0x9b8] sm:$0xff]
  %v6005 = vld [vmem:[%s7 + $0x9c0] sm:$0xff]
  %v6006 = vld [vmem:[%s7 + $0x9c8] sm:$0xff]
  %v6007 = vld [vmem:[%s7 + $0x9d0] sm:$0xff]
  %v6008 = vld [vmem:[%s7 + $0x9d8] sm:$0xff]
  %v6009 = vld [vmem:[%s7 + $0x9e0] sm:$0xff]
  %v6010 = vld [vmem:[%s7 + $0x9e8] sm:$0xff]
  %v6011 = vld [vmem:[%s7 + $0x9f0] sm:$0xff]
  %v6012 = vld [vmem:[%s7 + $0x9f8] sm:$0xff]
  %v6013 = vld [vmem:[%s7 + $0xa00] sm:$0xff]
  %v6014 = vld [vmem:[%s7 + $0xa08] sm:$0xff]
  %v6015 = vld [vmem:[%s7 + $0xa10] sm:$0xff]
  %v6016 = vld [vmem:[%s7 + $0xa18] sm:$0xff]
  %v6017 = vld [vmem:[%s7 + $0xa20] sm:$0xff]
  %v6018 = vld [vmem:[%s7 + $0xa28] sm:$0xff]
  %v6019 = vld [vmem:[%s7 + $0xa30] sm:$0xff]
  %v6020 = vld [vmem:[%s7 + $0xa38] sm:$0xff]
  %v6021 = vld [vmem:[%s7 + $0xa40] sm:$0xff]
  %v6022 = vld [vmem:[%s7 + $0xa48] sm:$0xff]
  %v6023 = vld [vmem:[%s7 + $0xa50] sm:$0xff]
  %v6024 = vld [vmem:[%s7 + $0xa58] sm:$0xff]
  %v6025 = vld [vmem:[%s7 + $0xa60] sm:$0xff]
  %v6026 = vld [vmem:[%s7 + $0xa68] sm:$0xff]
  %v6027 = vld [vmem:[%s7 + $0xa70] sm:$0xff]
  %v6028 = vld [vmem:[%s7 + $0xa78] sm:$0xff]
  %v6029 = vld [vmem:[%s7 + $0xa80] sm:$0xff]
  %v6030 = vld [vmem:[%s7 + $0xa88] sm:$0xff]
  %v6031 = vld [vmem:[%s7 + $0xa90] sm:$0xff]
  %v6032 = vld [vmem:[%s7 + $0xa98] sm:$0xff]
  %v6033 = vld [vmem:[%s7 + $0xaa0] sm:$0xff]
  %v6034 = vld [vmem:[%s7 + $0xaa8] sm:$0xff]
  %v6035 = vld [vmem:[%s7 + $0xab0] sm:$0xff]
  %v6036 = vld [vmem:[%s7 + $0xab8] sm:$0xff]
  %v6037 = vld [vmem:[%s7 + $0xac0] sm:$0xff]
  %v6038 = vld [vmem:[%s7 + $0xac8] sm:$0xff]
  %v6039 = vld [vmem:[%s7 + $0xad0] sm:$0xff]
  %v6040 = vld [vmem:[%s7 + $0xad8] sm:$0xff]
  %v6041 = vld [vmem:[%s7 + $0xae0] sm:$0xff]
  %v6042 = vld [vmem:[%s7 + $0xae8] sm:$0xff]
  %v6043 = vld [vmem:[%s7 + $0xaf0] sm:$0xff]
  %v6044 = vld [vmem:[%s7 + $0xaf8] sm:$0xff]
  %v6045 = vld [vmem:[%s7 + $0xb00] sm:$0xff]
  %v6046 = vld [vmem:[%s7 + $0xb08] sm:$0xff]
  %v6047 = vld [vmem:[%s7 + $0xb10] sm:$0xff]
  %v6048 = vld [vmem:[%s7 + $0xb18] sm:$0xff]
  %v6049 = vld [vmem:[%s7 + $0xb20] sm:$0xff]
  %v6050 = vld [vmem:[%s7 + $0xb28] sm:$0xff]
  %v6051 = vld [vmem:[%s7 + $0xb30] sm:$0xff]
  %v6052 = vld [vmem:[%s7 + $0xb38] sm:$0xff]
  %v6053 = vld [vmem:[%s7 + $0xb40] sm:$0xff]
  %v6054 = vld [vmem:[%s7 + $0xb48] sm:$0xff]
  %v6055 = vld [vmem:[%s7 + $0xb50] sm:$0xff]
  %v6056 = vld [vmem:[%s7 + $0xb58] sm:$0xff]
  %v6057 = vld [vmem:[%s7 + $0xb60] sm:$0xff]
  %v6058 = vld [vmem:[%s7 + $0xb68] sm:$0xff]
  %v6059 = vld [vmem:[%s7 + $0xb70] sm:$0xff]
  %v6060 = vld [vmem:[%s7 + $0xb78] sm:$0xff]
  %v6061 = vld [vmem:[%s7 + $0xb80] sm:$0xff]
  %v6062 = vld [vmem:[%s7 + $0xb88] sm:$0xff]
  %v6063 = vld [vmem:[%s7 + $0xb90] sm:$0xff]
  %v6064 = vld [vmem:[%s7 + $0xb98] sm:$0xff]
  %v6065 = vld [vmem:[%s7 + $0xba0] sm:$0xff]
  %v6066 = vld [vmem:[%s7 + $0xba8] sm:$0xff]
  %v6067 = vld [vmem:[%s7 + $0xbb0] sm:$0xff]
  %v6068 = vld [vmem:[%s7 + $0xbb8] sm:$0xff]
  %v6069 = vld [vmem:[%s7 + $0xbc0] sm:$0xff]
  %v6070 = vld [vmem:[%s7 + $0xbc8] sm:$0xff]
  %v6071 = vld [vmem:[%s7 + $0xbd0] sm:$0xff]
  %v6072 = vld [vmem:[%s7 + $0xbd8] sm:$0xff]
  %v6073 = vld [vmem:[%s7 + $0xbe0] sm:$0xff]
  %v6074 = vld [vmem:[%s7 + $0xbe8] sm:$0xff]
  %v6075 = vld [vmem:[%s7 + $0xbf0] sm:$0xff]
  %v6076 = vld [vmem:[%s7 + $0xbf8] sm:$0xff]
  %v6077 = vld [vmem:[%s7 + $0xc00] sm:$0xff]
  %v6078 = vld [vmem:[%s7 + $0xc08] sm:$0xff]
  %v6079 = vld [vmem:[%s7 + $0xc10] sm:$0xff]
  %v6080 = vld [vmem:[%s7 + $0xc18] sm:$0xff]
  %v6081 = vld [vmem:[%s7 + $0xc20] sm:$0xff]
  %v6082 = vld [vmem:[%s7 + $0xc28] sm:$0xff]
  %v6083 = vld [vmem:[%s7 + $0xc30] sm:$0xff]
  %v6084 = vld [vmem:[%s7 + $0xc38] sm:$0xff]
  %v6085 = vld [vmem:[%s7 + $0xc40] sm:$0xff]
  %v6086 = vld [vmem:[%s7 + $0xc48] sm:$0xff]
  %v6087 = vld [vmem:[%s7 + $0xc50] sm:$0xff]
  %v6088 = vld [vmem:[%s7 + $0xc58] sm:$0xff]
  %v6089 = vld [vmem:[%s7 + $0xc60] sm:$0xff]
  %v6090 = vld [vmem:[%s7 + $0xc68] sm:$0xff]
  %v6091 = vld [vmem:[%s7 + $0xc70] sm:$0xff]
  %v6092 = vld [vmem:[%s7 + $0xc78] sm:$0xff]
  %v6093 = vld [vmem:[%s7 + $0xc80] sm:$0xff]
  %v6094 = vld [vmem:[%s7 + $0xc88] sm:$0xff]
  %v6095 = vld [vmem:[%s7 + $0xc90] sm:$0xff]
  %v6096 = vld [vmem:[%s7 + $0xc98] sm:$0xff]
  %v6097 = vld [vmem:[%s7 + $0xca0] sm:$0xff]
  %v6098 = vld [vmem:[%s7 + $0xca8] sm:$0xff]
  %v6099 = vld [vmem:[%s7 + $0xcb0] sm:$0xff]
  %v6100 = vld [vmem:[%s7 + $0xcb8] sm:$0xff]
  %v6101 = vld [vmem:[%s7 + $0xcc0] sm:$0xff]
  %v6102 = vld [vmem:[%s7 + $0xcc8] sm:$0xff]
  %v6103 = vld [vmem:[%s7 + $0xcd0] sm:$0xff]
  %v6104 = vld [vmem:[%s7 + $0xcd8] sm:$0xff]
  %v6105 = vld [vmem:[%s7 + $0xce0] sm:$0xff]
  %v6106 = vld [vmem:[%s7 + $0xce8] sm:$0xff]
  %v6107 = vld [vmem:[%s7 + $0xcf0] sm:$0xff]
  %v6108 = vld [vmem:[%s7 + $0xcf8] sm:$0xff]
  %v6109 = vld [vmem:[%s7 + $0xd00] sm:$0xff]
  %v6110 = vld [vmem:[%s7 + $0xd08] sm:$0xff]
  %v6111 = vld [vmem:[%s7 + $0xd10] sm:$0xff]
  %v6112 = vld [vmem:[%s7 + $0xd18] sm:$0xff]
  %v6113 = vld [vmem:[%s7 + $0xd20] sm:$0xff]
  %v6114 = vld [vmem:[%s7 + $0xd28] sm:$0xff]
  %v6115 = vld [vmem:[%s7 + $0xd30] sm:$0xff]
  %v6116 = vld [vmem:[%s7 + $0xd38] sm:$0xff]
  %v6117 = vld [vmem:[%s7 + $0xd40] sm:$0xff]
  %v6118 = vld [vmem:[%s7 + $0xd48] sm:$0xff]
  %v6119 = vld [vmem:[%s7 + $0xd50] sm:$0xff]
  %v6120 = vld [vmem:[%s7 + $0xd58] sm:$0xff]
  %v6121 = vld [vmem:[%s7 + $0xd60] sm:$0xff]
  %v6122 = vld [vmem:[%s7 + $0xd68] sm:$0xff]
  %v6123 = vld [vmem:[%s7 + $0xd70] sm:$0xff]
  %v6124 = vld [vmem:[%s7 + $0xd78] sm:$0xff]
  %v6125 = vld [vmem:[%s7 + $0xd80] sm:$0xff]
  %v6126 = vld [vmem:[%s7 + $0xd88] sm:$0xff]
  %v6127 = vld [vmem:[%s7 + $0xd90] sm:$0xff]
  %v6128 = vld [vmem:[%s7 + $0xd98] sm:$0xff]
  %v6129 = vld [vmem:[%s7 + $0xda0] sm:$0xff]
  %v6130 = vld [vmem:[%s7 + $0xda8] sm:$0xff]
  %v6131 = vld [vmem:[%s7 + $0xdb0] sm:$0xff]
  %v6132 = vld [vmem:[%s7 + $0xdb8] sm:$0xff]
  %v6133 = vld [vmem:[%s7 + $0xdc0] sm:$0xff]
  %v6134 = vld [vmem:[%s7 + $0xdc8] sm:$0xff]
  %v6135 = vld [vmem:[%s7 + $0xdd0] sm:$0xff]
  %v6136 = vld [vmem:[%s7 + $0xdd8] sm:$0xff]
  %v6137 = vld [vmem:[%s7 + $0xde0] sm:$0xff]
  %v6138 = vld [vmem:[%s7 + $0xde8] sm:$0xff]
  %v6139 = vld [vmem:[%s7 + $0xdf0] sm:$0xff]
  %v6140 = vld [vmem:[%s7 + $0xdf8] sm:$0xff]
  %v6141 = vld [vmem:[%s7 + $0xe00] sm:$0xff]
  %v6142 = vld [vmem:[%s7 + $0xe08] sm:$0xff]
  %v6143 = vld [vmem:[%s7 + $0xe10] sm:$0xff]
  %v6144 = vld [vmem:[%s7 + $0xe18] sm:$0xff]
  %v6145 = vld [vmem:[%s7 + $0xe20] sm:$0xff]
  %v6146 = vld [vmem:[%s7 + $0xe28] sm:$0xff]
  %v6147 = vld [vmem:[%s7 + $0xe30] sm:$0xff]
  %v6148 = vld [vmem:[%s7 + $0xe38] sm:$0xff]
  %v6149 = vld [vmem:[%s7 + $0xe40] sm:$0xff]
  %v6150 = vld [vmem:[%s7 + $0xe48] sm:$0xff]
  %v6151 = vld [vmem:[%s7 + $0xe50] sm:$0xff]
  %v6152 = vld [vmem:[%s7 + $0xe58] sm:$0xff]
  %v6153 = vld [vmem:[%s7 + $0xe60] sm:$0xff]
  %v6154 = vld [vmem:[%s7 + $0xe68] sm:$0xff]
  %v6155 = vld [vmem:[%s7 + $0xe70] sm:$0xff]
  %v6156 = vld [vmem:[%s7 + $0xe78] sm:$0xff]
  %v6157 = vld [vmem:[%s7 + $0xe80] sm:$0xff]
  %v6158 = vld [vmem:[%s7 + $0xe88] sm:$0xff]
  %v6159 = vld [vmem:[%s7 + $0xe90] sm:$0xff]
  %v6160 = vld [vmem:[%s7 + $0xe98] sm:$0xff]
  %v6161 = vld [vmem:[%s7 + $0xea0] sm:$0xff]
  %v6162 = vld [vmem:[%s7 + $0xea8] sm:$0xff]
  %v6163 = vld [vmem:[%s7 + $0xeb0] sm:$0xff]
  %v6164 = vld [vmem:[%s7 + $0xeb8] sm:$0xff]
  %v6165 = vld [vmem:[%s7 + $0xec0] sm:$0xff]
  %v6166 = vld [vmem:[%s7 + $0xec8] sm:$0xff]
  %v6167 = vld [vmem:[%s7 + $0xed0] sm:$0xff]
  %v6168 = vld [vmem:[%s7 + $0xed8] sm:$0xff]
  %v6169 = vld [vmem:[%s7 + $0xee0] sm:$0xff]
  %v6170 = vld [vmem:[%s7 + $0xee8] sm:$0xff]
  %v6171 = vld [vmem:[%s7 + $0xef0] sm:$0xff]
  %v6172 = vld [vmem:[%s7 + $0xef8] sm:$0xff]
  %v6173 = vld [vmem:[%s7 + $0xf00] sm:$0xff]
  %v6174 = vld [vmem:[%s7 + $0xf08] sm:$0xff]
  %v6175 = vld [vmem:[%s7 + $0xf10] sm:$0xff]
  %v6176 = vld [vmem:[%s7 + $0xf18] sm:$0xff]
  %v6177 = vld [vmem:[%s7 + $0xf20] sm:$0xff]
  %v6178 = vld [vmem:[%s7 + $0xf28] sm:$0xff]
  %v6179 = vld [vmem:[%s7 + $0xf30] sm:$0xff]
  %v6180 = vld [vmem:[%s7 + $0xf38] sm:$0xff]
  %v6181 = vld [vmem:[%s7 + $0xf40] sm:$0xff]
  %v6182 = vld [vmem:[%s7 + $0xf48] sm:$0xff]
  %v6183 = vld [vmem:[%s7 + $0xf50] sm:$0xff]
  %v6184 = vld [vmem:[%s7 + $0xf58] sm:$0xff]
  %v6185 = vld [vmem:[%s7 + $0xf60] sm:$0xff]
  %v6186 = vld [vmem:[%s7 + $0xf68] sm:$0xff]
  %v6187 = vld [vmem:[%s7 + $0xf70] sm:$0xff]
  %v6188 = vld [vmem:[%s7 + $0xf78] sm:$0xff]
  %v6189 = vld [vmem:[%s7 + $0xf80] sm:$0xff]
  %v6190 = vld [vmem:[%s7 + $0xf88] sm:$0xff]
  %v6191 = vld [vmem:[%s7 + $0xf90] sm:$0xff]
  %v6192 = vld [vmem:[%s7 + $0xf98] sm:$0xff]
  %v6193 = vld [vmem:[%s7 + $0xfa0] sm:$0xff]
  %v6194 = vld [vmem:[%s7 + $0xfa8] sm:$0xff]
  %v6195 = vld [vmem:[%s7 + $0xfb0] sm:$0xff]
  %v6196 = vld [vmem:[%s7 + $0xfb8] sm:$0xff]
  %v6197 = vld [vmem:[%s7 + $0xfc0] sm:$0xff]
  %v6198 = vld [vmem:[%s7 + $0xfc8] sm:$0xff]
  %v6199 = vld [vmem:[%s7 + $0xfd0] sm:$0xff]
  %v6200 = vld [vmem:[%s7 + $0xfd8] sm:$0xff]
  %v6201 = vld [vmem:[%s7 + $0xfe0] sm:$0xff]
  %v6202 = vld [vmem:[%s7 + $0xfe8] sm:$0xff]
  %v6203 = vld [vmem:[%s7 + $0xff0] sm:$0xff]
  %v6204 = vld [vmem:[%s7 + $0xff8] sm:$0xff]
  %v6205 = vld [vmem:[%s8] sm:$0xff]
  %v6207 = vlaneseq
  %v6208 = vshrl.u32 %v6207, 7
  %v6209 = vsub.s32 0, %v6208
  %v6210 = vrot.slane %v6205, %v6209
  %v6211 = vlaneseq
  %v6212 = vshrl.u32 %v6211, 7
  %v6213 = vsub.s32 1, %v6212
  %v6214 = vrot.slane %v6205, %v6213
  %v6215 = vlaneseq
  %v6216 = vshrl.u32 %v6215, 7
  %v6217 = vsub.s32 2, %v6216
  %v6218 = vrot.slane %v6205, %v6217
  %v6219 = vlaneseq
  %v6220 = vshrl.u32 %v6219, 7
  %v6221 = vsub.s32 3, %v6220
  %v6222 = vrot.slane %v6205, %v6221
  %v6223 = vlaneseq
  %v6224 = vshrl.u32 %v6223, 7
  %v6225 = vsub.s32 4, %v6224
  %v6226 = vrot.slane %v6205, %v6225
  %v6227 = vlaneseq
  %v6228 = vshrl.u32 %v6227, 7
  %v6229 = vsub.s32 5, %v6228
  %v6230 = vrot.slane %v6205, %v6229
  %v6231 = vlaneseq
  %v6232 = vshrl.u32 %v6231, 7
  %v6233 = vsub.s32 6, %v6232
  %v6234 = vrot.slane %v6205, %v6233
  %v6235 = vlaneseq
  %v6236 = vshrl.u32 %v6235, 7
  %v6237 = vsub.s32 7, %v6236
  %v6238 = vrot.slane %v6205, %v6237
  %v6759 = vunpack.c.l.b16 %v5693
  %v6760 = vunpack.c.h.b16 %v5693
  %v6761 = vunpack.c.l.b16 %v5694
  %v6762 = vunpack.c.h.b16 %v5694
  %v6763 = vunpack.c.l.b16 %v5695
  %v6764 = vunpack.c.h.b16 %v5695
  %v6765 = vunpack.c.l.b16 %v5696
  %v6766 = vunpack.c.h.b16 %v5696
  %v6767 = vunpack.c.l.b16 %v5697
  %v6768 = vunpack.c.h.b16 %v5697
  %v6769 = vunpack.c.l.b16 %v5698
  %v6770 = vunpack.c.h.b16 %v5698
  %v6771 = vunpack.c.l.b16 %v5699
  %v6772 = vunpack.c.h.b16 %v5699
  %v6773 = vunpack.c.l.b16 %v5700
  %v6774 = vunpack.c.h.b16 %v5700
  %v6775 = vunpack.c.l.b16 %v5701
  %v6776 = vunpack.c.h.b16 %v5701
  %v6777 = vunpack.c.l.b16 %v5702
  %v6778 = vunpack.c.h.b16 %v5702
  %v6779 = vunpack.c.l.b16 %v5703
  %v6780 = vunpack.c.h.b16 %v5703
  %v6781 = vunpack.c.l.b16 %v5704
  %v6782 = vunpack.c.h.b16 %v5704
  %v6783 = vunpack.c.l.b16 %v5705
  %v6784 = vunpack.c.h.b16 %v5705
  %v6785 = vunpack.c.l.b16 %v5706
  %v6786 = vunpack.c.h.b16 %v5706
  %v6787 = vunpack.c.l.b16 %v5707
  %v6788 = vunpack.c.h.b16 %v5707
  %v6789 = vunpack.c.l.b16 %v5708
  %v6790 = vunpack.c.h.b16 %v5708
  %v6791 = vunpack.c.l.b16 %v5709
  %v6792 = vunpack.c.h.b16 %v5709
  %v6793 = vunpack.c.l.b16 %v5710
  %v6794 = vunpack.c.h.b16 %v5710
  %v6795 = vunpack.c.l.b16 %v5711
  %v6796 = vunpack.c.h.b16 %v5711
  %v6797 = vunpack.c.l.b16 %v5712
  %v6798 = vunpack.c.h.b16 %v5712
  %v6799 = vunpack.c.l.b16 %v5713
  %v6800 = vunpack.c.h.b16 %v5713
  %v6801 = vunpack.c.l.b16 %v5714
  %v6802 = vunpack.c.h.b16 %v5714
  %v6803 = vunpack.c.l.b16 %v5715
  %v6804 = vunpack.c.h.b16 %v5715
  %v6805 = vunpack.c.l.b16 %v5716
  %v6806 = vunpack.c.h.b16 %v5716
  %v6807 = vunpack.c.l.b16 %v5717
  %v6808 = vunpack.c.h.b16 %v5717
  %v6809 = vunpack.c.l.b16 %v5718
  %v6810 = vunpack.c.h.b16 %v5718
  %v6811 = vunpack.c.l.b16 %v5719
  %v6812 = vunpack.c.h.b16 %v5719
  %v6813 = vunpack.c.l.b16 %v5720
  %v6814 = vunpack.c.h.b16 %v5720
  %v6815 = vunpack.c.l.b16 %v5721
  %v6816 = vunpack.c.h.b16 %v5721
  %v6817 = vunpack.c.l.b16 %v5722
  %v6818 = vunpack.c.h.b16 %v5722
  %v6819 = vunpack.c.l.b16 %v5723
  %v6820 = vunpack.c.h.b16 %v5723
  %v6821 = vunpack.c.l.b16 %v5724
  %v6822 = vunpack.c.h.b16 %v5724
  %v6823 = vunpack.c.l.b16 %v5725
  %v6824 = vunpack.c.h.b16 %v5725
  %v6825 = vunpack.c.l.b16 %v5726
  %v6826 = vunpack.c.h.b16 %v5726
  %v6827 = vunpack.c.l.b16 %v5727
  %v6828 = vunpack.c.h.b16 %v5727
  %v6829 = vunpack.c.l.b16 %v5728
  %v6830 = vunpack.c.h.b16 %v5728
  %v6831 = vunpack.c.l.b16 %v5729
  %v6832 = vunpack.c.h.b16 %v5729
  %v6833 = vunpack.c.l.b16 %v5730
  %v6834 = vunpack.c.h.b16 %v5730
  %v6835 = vunpack.c.l.b16 %v5731
  %v6836 = vunpack.c.h.b16 %v5731
  %v6837 = vunpack.c.l.b16 %v5732
  %v6838 = vunpack.c.h.b16 %v5732
  %v6839 = vunpack.c.l.b16 %v5733
  %v6840 = vunpack.c.h.b16 %v5733
  %v6841 = vunpack.c.l.b16 %v5734
  %v6842 = vunpack.c.h.b16 %v5734
  %v6843 = vunpack.c.l.b16 %v5735
  %v6844 = vunpack.c.h.b16 %v5735
  %v6845 = vunpack.c.l.b16 %v5736
  %v6846 = vunpack.c.h.b16 %v5736
  %v6847 = vunpack.c.l.b16 %v5737
  %v6848 = vunpack.c.h.b16 %v5737
  %v6849 = vunpack.c.l.b16 %v5738
  %v6850 = vunpack.c.h.b16 %v5738
  %v6851 = vunpack.c.l.b16 %v5739
  %v6852 = vunpack.c.h.b16 %v5739
  %v6853 = vunpack.c.l.b16 %v5740
  %v6854 = vunpack.c.h.b16 %v5740
  %v6855 = vunpack.c.l.b16 %v5741
  %v6856 = vunpack.c.h.b16 %v5741
  %v6857 = vunpack.c.l.b16 %v5742
  %v6858 = vunpack.c.h.b16 %v5742
  %v6859 = vunpack.c.l.b16 %v5743
  %v6860 = vunpack.c.h.b16 %v5743
  %v6861 = vunpack.c.l.b16 %v5744
  %v6862 = vunpack.c.h.b16 %v5744
  %v6863 = vunpack.c.l.b16 %v5745
  %v6864 = vunpack.c.h.b16 %v5745
  %v6865 = vunpack.c.l.b16 %v5746
  %v6866 = vunpack.c.h.b16 %v5746
  %v6867 = vunpack.c.l.b16 %v5747
  %v6868 = vunpack.c.h.b16 %v5747
  %v6869 = vunpack.c.l.b16 %v5748
  %v6870 = vunpack.c.h.b16 %v5748
  %v6871 = vunpack.c.l.b16 %v5749
  %v6872 = vunpack.c.h.b16 %v5749
  %v6873 = vunpack.c.l.b16 %v5750
  %v6874 = vunpack.c.h.b16 %v5750
  %v6875 = vunpack.c.l.b16 %v5751
  %v6876 = vunpack.c.h.b16 %v5751
  %v6877 = vunpack.c.l.b16 %v5752
  %v6878 = vunpack.c.h.b16 %v5752
  %v6879 = vunpack.c.l.b16 %v5753
  %v6880 = vunpack.c.h.b16 %v5753
  %v6881 = vunpack.c.l.b16 %v5754
  %v6882 = vunpack.c.h.b16 %v5754
  %v6883 = vunpack.c.l.b16 %v5755
  %v6884 = vunpack.c.h.b16 %v5755
  %v6885 = vunpack.c.l.b16 %v5756
  %v6886 = vunpack.c.h.b16 %v5756
  %v6887 = vunpack.c.l.b16 %v5757
  %v6888 = vunpack.c.h.b16 %v5757
  %v6889 = vunpack.c.l.b16 %v5758
  %v6890 = vunpack.c.h.b16 %v5758
  %v6891 = vunpack.c.l.b16 %v5759
  %v6892 = vunpack.c.h.b16 %v5759
  %v6893 = vunpack.c.l.b16 %v5760
  %v6894 = vunpack.c.h.b16 %v5760
  %v6895 = vunpack.c.l.b16 %v5761
  %v6896 = vunpack.c.h.b16 %v5761
  %v6897 = vunpack.c.l.b16 %v5762
  %v6898 = vunpack.c.h.b16 %v5762
  %v6899 = vunpack.c.l.b16 %v5763
  %v6900 = vunpack.c.h.b16 %v5763
  %v6901 = vunpack.c.l.b16 %v5764
  %v6902 = vunpack.c.h.b16 %v5764
  %v6903 = vunpack.c.l.b16 %v5765
  %v6904 = vunpack.c.h.b16 %v5765
  %v6905 = vunpack.c.l.b16 %v5766
  %v6906 = vunpack.c.h.b16 %v5766
  %v6907 = vunpack.c.l.b16 %v5767
  %v6908 = vunpack.c.h.b16 %v5767
  %v6909 = vunpack.c.l.b16 %v5768
  %v6910 = vunpack.c.h.b16 %v5768
  %v6911 = vunpack.c.l.b16 %v5769
  %v6912 = vunpack.c.h.b16 %v5769
  %v6913 = vunpack.c.l.b16 %v5770
  %v6914 = vunpack.c.h.b16 %v5770
  %v6915 = vunpack.c.l.b16 %v5771
  %v6916 = vunpack.c.h.b16 %v5771
  %v6917 = vunpack.c.l.b16 %v5772
  %v6918 = vunpack.c.h.b16 %v5772
  %v6919 = vunpack.c.l.b16 %v5773
  %v6920 = vunpack.c.h.b16 %v5773
  %v6921 = vunpack.c.l.b16 %v5774
  %v6922 = vunpack.c.h.b16 %v5774
  %v6923 = vunpack.c.l.b16 %v5775
  %v6924 = vunpack.c.h.b16 %v5775
  %v6925 = vunpack.c.l.b16 %v5776
  %v6926 = vunpack.c.h.b16 %v5776
  %v6927 = vunpack.c.l.b16 %v5777
  %v6928 = vunpack.c.h.b16 %v5777
  %v6929 = vunpack.c.l.b16 %v5778
  %v6930 = vunpack.c.h.b16 %v5778
  %v6931 = vunpack.c.l.b16 %v5779
  %v6932 = vunpack.c.h.b16 %v5779
  %v6933 = vunpack.c.l.b16 %v5780
  %v6934 = vunpack.c.h.b16 %v5780
  %v6935 = vunpack.c.l.b16 %v5781
  %v6936 = vunpack.c.h.b16 %v5781
  %v6937 = vunpack.c.l.b16 %v5782
  %v6938 = vunpack.c.h.b16 %v5782
  %v6939 = vunpack.c.l.b16 %v5783
  %v6940 = vunpack.c.h.b16 %v5783
  %v6941 = vunpack.c.l.b16 %v5784
  %v6942 = vunpack.c.h.b16 %v5784
  %v6943 = vunpack.c.l.b16 %v5785
  %v6944 = vunpack.c.h.b16 %v5785
  %v6945 = vunpack.c.l.b16 %v5786
  %v6946 = vunpack.c.h.b16 %v5786
  %v6947 = vunpack.c.l.b16 %v5787
  %v6948 = vunpack.c.h.b16 %v5787
  %v6949 = vunpack.c.l.b16 %v5788
  %v6950 = vunpack.c.h.b16 %v5788
  %v6951 = vunpack.c.l.b16 %v5789
  %v6952 = vunpack.c.h.b16 %v5789
  %v6953 = vunpack.c.l.b16 %v5790
  %v6954 = vunpack.c.h.b16 %v5790
  %v6955 = vunpack.c.l.b16 %v5791
  %v6956 = vunpack.c.h.b16 %v5791
  %v6957 = vunpack.c.l.b16 %v5792
  %v6958 = vunpack.c.h.b16 %v5792
  %v6959 = vunpack.c.l.b16 %v5793
  %v6960 = vunpack.c.h.b16 %v5793
  %v6961 = vunpack.c.l.b16 %v5794
  %v6962 = vunpack.c.h.b16 %v5794
  %v6963 = vunpack.c.l.b16 %v5795
  %v6964 = vunpack.c.h.b16 %v5795
  %v6965 = vunpack.c.l.b16 %v5796
  %v6966 = vunpack.c.h.b16 %v5796
  %v6967 = vunpack.c.l.b16 %v5797
  %v6968 = vunpack.c.h.b16 %v5797
  %v6969 = vunpack.c.l.b16 %v5798
  %v6970 = vunpack.c.h.b16 %v5798
  %v6971 = vunpack.c.l.b16 %v5799
  %v6972 = vunpack.c.h.b16 %v5799
  %v6973 = vunpack.c.l.b16 %v5800
  %v6974 = vunpack.c.h.b16 %v5800
  %v6975 = vunpack.c.l.b16 %v5801
  %v6976 = vunpack.c.h.b16 %v5801
  %v6977 = vunpack.c.l.b16 %v5802
  %v6978 = vunpack.c.h.b16 %v5802
  %v6979 = vunpack.c.l.b16 %v5803
  %v6980 = vunpack.c.h.b16 %v5803
  %v6981 = vunpack.c.l.b16 %v5804
  %v6982 = vunpack.c.h.b16 %v5804
  %v6983 = vunpack.c.l.b16 %v5805
  %v6984 = vunpack.c.h.b16 %v5805
  %v6985 = vunpack.c.l.b16 %v5806
  %v6986 = vunpack.c.h.b16 %v5806
  %v6987 = vunpack.c.l.b16 %v5807
  %v6988 = vunpack.c.h.b16 %v5807
  %v6989 = vunpack.c.l.b16 %v5808
  %v6990 = vunpack.c.h.b16 %v5808
  %v6991 = vunpack.c.l.b16 %v5809
  %v6992 = vunpack.c.h.b16 %v5809
  %v6993 = vunpack.c.l.b16 %v5810
  %v6994 = vunpack.c.h.b16 %v5810
  %v6995 = vunpack.c.l.b16 %v5811
  %v6996 = vunpack.c.h.b16 %v5811
  %v6997 = vunpack.c.l.b16 %v5812
  %v6998 = vunpack.c.h.b16 %v5812
  %v6999 = vunpack.c.l.b16 %v5813
  %v7000 = vunpack.c.h.b16 %v5813
  %v7001 = vunpack.c.l.b16 %v5814
  %v7002 = vunpack.c.h.b16 %v5814
  %v7003 = vunpack.c.l.b16 %v5815
  %v7004 = vunpack.c.h.b16 %v5815
  %v7005 = vunpack.c.l.b16 %v5816
  %v7006 = vunpack.c.h.b16 %v5816
  %v7007 = vunpack.c.l.b16 %v5817
  %v7008 = vunpack.c.h.b16 %v5817
  %v7009 = vunpack.c.l.b16 %v5818
  %v7010 = vunpack.c.h.b16 %v5818
  %v7011 = vunpack.c.l.b16 %v5819
  %v7012 = vunpack.c.h.b16 %v5819
  %v7013 = vunpack.c.l.b16 %v5820
  %v7014 = vunpack.c.h.b16 %v5820
  %v7015 = vunpack.c.l.b16 %v5821
  %v7016 = vunpack.c.h.b16 %v5821
  %v7017 = vunpack.c.l.b16 %v5822
  %v7018 = vunpack.c.h.b16 %v5822
  %v7019 = vunpack.c.l.b16 %v5823
  %v7020 = vunpack.c.h.b16 %v5823
  %v7021 = vunpack.c.l.b16 %v5824
  %v7022 = vunpack.c.h.b16 %v5824
  %v7023 = vunpack.c.l.b16 %v5825
  %v7024 = vunpack.c.h.b16 %v5825
  %v7025 = vunpack.c.l.b16 %v5826
  %v7026 = vunpack.c.h.b16 %v5826
  %v7027 = vunpack.c.l.b16 %v5827
  %v7028 = vunpack.c.h.b16 %v5827
  %v7029 = vunpack.c.l.b16 %v5828
  %v7030 = vunpack.c.h.b16 %v5828
  %v7031 = vunpack.c.l.b16 %v5829
  %v7032 = vunpack.c.h.b16 %v5829
  %v7033 = vunpack.c.l.b16 %v5830
  %v7034 = vunpack.c.h.b16 %v5830
  %v7035 = vunpack.c.l.b16 %v5831
  %v7036 = vunpack.c.h.b16 %v5831
  %v7037 = vunpack.c.l.b16 %v5832
  %v7038 = vunpack.c.h.b16 %v5832
  %v7039 = vunpack.c.l.b16 %v5833
  %v7040 = vunpack.c.h.b16 %v5833
  %v7041 = vunpack.c.l.b16 %v5834
  %v7042 = vunpack.c.h.b16 %v5834
  %v7043 = vunpack.c.l.b16 %v5835
  %v7044 = vunpack.c.h.b16 %v5835
  %v7045 = vunpack.c.l.b16 %v5836
  %v7046 = vunpack.c.h.b16 %v5836
  %v7047 = vunpack.c.l.b16 %v5837
  %v7048 = vunpack.c.h.b16 %v5837
  %v7049 = vunpack.c.l.b16 %v5838
  %v7050 = vunpack.c.h.b16 %v5838
  %v7051 = vunpack.c.l.b16 %v5839
  %v7052 = vunpack.c.h.b16 %v5839
  %v7053 = vunpack.c.l.b16 %v5840
  %v7054 = vunpack.c.h.b16 %v5840
  %v7055 = vunpack.c.l.b16 %v5841
  %v7056 = vunpack.c.h.b16 %v5841
  %v7057 = vunpack.c.l.b16 %v5842
  %v7058 = vunpack.c.h.b16 %v5842
  %v7059 = vunpack.c.l.b16 %v5843
  %v7060 = vunpack.c.h.b16 %v5843
  %v7061 = vunpack.c.l.b16 %v5844
  %v7062 = vunpack.c.h.b16 %v5844
  %v7063 = vunpack.c.l.b16 %v5845
  %v7064 = vunpack.c.h.b16 %v5845
  %v7065 = vunpack.c.l.b16 %v5846
  %v7066 = vunpack.c.h.b16 %v5846
  %v7067 = vunpack.c.l.b16 %v5847
  %v7068 = vunpack.c.h.b16 %v5847
  %v7069 = vunpack.c.l.b16 %v5848
  %v7070 = vunpack.c.h.b16 %v5848
  %v7071 = vunpack.c.l.b16 %v5849
  %v7072 = vunpack.c.h.b16 %v5849
  %v7073 = vunpack.c.l.b16 %v5850
  %v7074 = vunpack.c.h.b16 %v5850
  %v7075 = vunpack.c.l.b16 %v5851
  %v7076 = vunpack.c.h.b16 %v5851
  %v7077 = vunpack.c.l.b16 %v5852
  %v7078 = vunpack.c.h.b16 %v5852
  %v7079 = vunpack.c.l.b16 %v5853
  %v7080 = vunpack.c.h.b16 %v5853
  %v7081 = vunpack.c.l.b16 %v5854
  %v7082 = vunpack.c.h.b16 %v5854
  %v7083 = vunpack.c.l.b16 %v5855
  %v7084 = vunpack.c.h.b16 %v5855
  %v7085 = vunpack.c.l.b16 %v5856
  %v7086 = vunpack.c.h.b16 %v5856
  %v7087 = vunpack.c.l.b16 %v5857
  %v7088 = vunpack.c.h.b16 %v5857
  %v7089 = vunpack.c.l.b16 %v5858
  %v7090 = vunpack.c.h.b16 %v5858
  %v7091 = vunpack.c.l.b16 %v5859
  %v7092 = vunpack.c.h.b16 %v5859
  %v7093 = vunpack.c.l.b16 %v5860
  %v7094 = vunpack.c.h.b16 %v5860
  %v7095 = vunpack.c.l.b16 %v5861
  %v7096 = vunpack.c.h.b16 %v5861
  %v7097 = vunpack.c.l.b16 %v5862
  %v7098 = vunpack.c.h.b16 %v5862
  %v7099 = vunpack.c.l.b16 %v5863
  %v7100 = vunpack.c.h.b16 %v5863
  %v7101 = vunpack.c.l.b16 %v5864
  %v7102 = vunpack.c.h.b16 %v5864
  %v7103 = vunpack.c.l.b16 %v5865
  %v7104 = vunpack.c.h.b16 %v5865
  %v7105 = vunpack.c.l.b16 %v5866
  %v7106 = vunpack.c.h.b16 %v5866
  %v7107 = vunpack.c.l.b16 %v5867
  %v7108 = vunpack.c.h.b16 %v5867
  %v7109 = vunpack.c.l.b16 %v5868
  %v7110 = vunpack.c.h.b16 %v5868
  %v7111 = vunpack.c.l.b16 %v5869
  %v7112 = vunpack.c.h.b16 %v5869
  %v7113 = vunpack.c.l.b16 %v5870
  %v7114 = vunpack.c.h.b16 %v5870
  %v7115 = vunpack.c.l.b16 %v5871
  %v7116 = vunpack.c.h.b16 %v5871
  %v7117 = vunpack.c.l.b16 %v5872
  %v7118 = vunpack.c.h.b16 %v5872
  %v7119 = vunpack.c.l.b16 %v5873
  %v7120 = vunpack.c.h.b16 %v5873
  %v7121 = vunpack.c.l.b16 %v5874
  %v7122 = vunpack.c.h.b16 %v5874
  %v7123 = vunpack.c.l.b16 %v5875
  %v7124 = vunpack.c.h.b16 %v5875
  %v7125 = vunpack.c.l.b16 %v5876
  %v7126 = vunpack.c.h.b16 %v5876
  %v7127 = vunpack.c.l.b16 %v5877
  %v7128 = vunpack.c.h.b16 %v5877
  %v7129 = vunpack.c.l.b16 %v5878
  %v7130 = vunpack.c.h.b16 %v5878
  %v7131 = vunpack.c.l.b16 %v5879
  %v7132 = vunpack.c.h.b16 %v5879
  %v7133 = vunpack.c.l.b16 %v5880
  %v7134 = vunpack.c.h.b16 %v5880
  %v7135 = vunpack.c.l.b16 %v5881
  %v7136 = vunpack.c.h.b16 %v5881
  %v7137 = vunpack.c.l.b16 %v5882
  %v7138 = vunpack.c.h.b16 %v5882
  %v7139 = vunpack.c.l.b16 %v5883
  %v7140 = vunpack.c.h.b16 %v5883
  %v7141 = vunpack.c.l.b16 %v5884
  %v7142 = vunpack.c.h.b16 %v5884
  %v7143 = vunpack.c.l.b16 %v5885
  %v7144 = vunpack.c.h.b16 %v5885
  %v7145 = vunpack.c.l.b16 %v5886
  %v7146 = vunpack.c.h.b16 %v5886
  %v7147 = vunpack.c.l.b16 %v5887
  %v7148 = vunpack.c.h.b16 %v5887
  %v7149 = vunpack.c.l.b16 %v5888
  %v7150 = vunpack.c.h.b16 %v5888
  %v7151 = vunpack.c.l.b16 %v5889
  %v7152 = vunpack.c.h.b16 %v5889
  %v7153 = vunpack.c.l.b16 %v5890
  %v7154 = vunpack.c.h.b16 %v5890
  %v7155 = vunpack.c.l.b16 %v5891
  %v7156 = vunpack.c.h.b16 %v5891
  %v7157 = vunpack.c.l.b16 %v5892
  %v7158 = vunpack.c.h.b16 %v5892
  %v7159 = vunpack.c.l.b16 %v5893
  %v7160 = vunpack.c.h.b16 %v5893
  %v7161 = vunpack.c.l.b16 %v5894
  %v7162 = vunpack.c.h.b16 %v5894
  %v7163 = vunpack.c.l.b16 %v5895
  %v7164 = vunpack.c.h.b16 %v5895
  %v7165 = vunpack.c.l.b16 %v5896
  %v7166 = vunpack.c.h.b16 %v5896
  %v7167 = vunpack.c.l.b16 %v5897
  %v7168 = vunpack.c.h.b16 %v5897
  %v7169 = vunpack.c.l.b16 %v5898
  %v7170 = vunpack.c.h.b16 %v5898
  %v7171 = vunpack.c.l.b16 %v5899
  %v7172 = vunpack.c.h.b16 %v5899
  %v7173 = vunpack.c.l.b16 %v5900
  %v7174 = vunpack.c.h.b16 %v5900
  %v7175 = vunpack.c.l.b16 %v5901
  %v7176 = vunpack.c.h.b16 %v5901
  %v7177 = vunpack.c.l.b16 %v5902
  %v7178 = vunpack.c.h.b16 %v5902
  %v7179 = vunpack.c.l.b16 %v5903
  %v7180 = vunpack.c.h.b16 %v5903
  %v7181 = vunpack.c.l.b16 %v5904
  %v7182 = vunpack.c.h.b16 %v5904
  %v7183 = vunpack.c.l.b16 %v5905
  %v7184 = vunpack.c.h.b16 %v5905
  %v7185 = vunpack.c.l.b16 %v5906
  %v7186 = vunpack.c.h.b16 %v5906
  %v7187 = vunpack.c.l.b16 %v5907
  %v7188 = vunpack.c.h.b16 %v5907
  %v7189 = vunpack.c.l.b16 %v5908
  %v7190 = vunpack.c.h.b16 %v5908
  %v7191 = vunpack.c.l.b16 %v5909
  %v7192 = vunpack.c.h.b16 %v5909
  %v7193 = vunpack.c.l.b16 %v5910
  %v7194 = vunpack.c.h.b16 %v5910
  %v7195 = vunpack.c.l.b16 %v5911
  %v7196 = vunpack.c.h.b16 %v5911
  %v7197 = vunpack.c.l.b16 %v5912
  %v7198 = vunpack.c.h.b16 %v5912
  %v7199 = vunpack.c.l.b16 %v5913
  %v7200 = vunpack.c.h.b16 %v5913
  %v7201 = vunpack.c.l.b16 %v5914
  %v7202 = vunpack.c.h.b16 %v5914
  %v7203 = vunpack.c.l.b16 %v5915
  %v7204 = vunpack.c.h.b16 %v5915
  %v7205 = vunpack.c.l.b16 %v5916
  %v7206 = vunpack.c.h.b16 %v5916
  %v7207 = vunpack.c.l.b16 %v5917
  %v7208 = vunpack.c.h.b16 %v5917
  %v7209 = vunpack.c.l.b16 %v5918
  %v7210 = vunpack.c.h.b16 %v5918
  %v7211 = vunpack.c.l.b16 %v5919
  %v7212 = vunpack.c.h.b16 %v5919
  %v7213 = vunpack.c.l.b16 %v5920
  %v7214 = vunpack.c.h.b16 %v5920
  %v7215 = vunpack.c.l.b16 %v5921
  %v7216 = vunpack.c.h.b16 %v5921
  %v7217 = vunpack.c.l.b16 %v5922
  %v7218 = vunpack.c.h.b16 %v5922
  %v7219 = vunpack.c.l.b16 %v5923
  %v7220 = vunpack.c.h.b16 %v5923
  %v7221 = vunpack.c.l.b16 %v5924
  %v7222 = vunpack.c.h.b16 %v5924
  %v7223 = vunpack.c.l.b16 %v5925
  %v7224 = vunpack.c.h.b16 %v5925
  %v7225 = vunpack.c.l.b16 %v5926
  %v7226 = vunpack.c.h.b16 %v5926
  %v7227 = vunpack.c.l.b16 %v5927
  %v7228 = vunpack.c.h.b16 %v5927
  %v7229 = vunpack.c.l.b16 %v5928
  %v7230 = vunpack.c.h.b16 %v5928
  %v7231 = vunpack.c.l.b16 %v5929
  %v7232 = vunpack.c.h.b16 %v5929
  %v7233 = vunpack.c.l.b16 %v5930
  %v7234 = vunpack.c.h.b16 %v5930
  %v7235 = vunpack.c.l.b16 %v5931
  %v7236 = vunpack.c.h.b16 %v5931
  %v7237 = vunpack.c.l.b16 %v5932
  %v7238 = vunpack.c.h.b16 %v5932
  %v7239 = vunpack.c.l.b16 %v5933
  %v7240 = vunpack.c.h.b16 %v5933
  %v7241 = vunpack.c.l.b16 %v5934
  %v7242 = vunpack.c.h.b16 %v5934
  %v7243 = vunpack.c.l.b16 %v5935
  %v7244 = vunpack.c.h.b16 %v5935
  %v7245 = vunpack.c.l.b16 %v5936
  %v7246 = vunpack.c.h.b16 %v5936
  %v7247 = vunpack.c.l.b16 %v5937
  %v7248 = vunpack.c.h.b16 %v5937
  %v7249 = vunpack.c.l.b16 %v5938
  %v7250 = vunpack.c.h.b16 %v5938
  %v7251 = vunpack.c.l.b16 %v5939
  %v7252 = vunpack.c.h.b16 %v5939
  %v7253 = vunpack.c.l.b16 %v5940
  %v7254 = vunpack.c.h.b16 %v5940
  %v7255 = vunpack.c.l.b16 %v5941
  %v7256 = vunpack.c.h.b16 %v5941
  %v7257 = vunpack.c.l.b16 %v5942
  %v7258 = vunpack.c.h.b16 %v5942
  %v7259 = vunpack.c.l.b16 %v5943
  %v7260 = vunpack.c.h.b16 %v5943
  %v7261 = vunpack.c.l.b16 %v5944
  %v7262 = vunpack.c.h.b16 %v5944
  %v7263 = vunpack.c.l.b16 %v5945
  %v7264 = vunpack.c.h.b16 %v5945
  %v7265 = vunpack.c.l.b16 %v5946
  %v7266 = vunpack.c.h.b16 %v5946
  %v7267 = vunpack.c.l.b16 %v5947
  %v7268 = vunpack.c.h.b16 %v5947
  %v7269 = vunpack.c.l.b16 %v5948
  %v7270 = vunpack.c.h.b16 %v5948
  %v7271 = vunpack.c.l.b16 %v5949
  %v7272 = vunpack.c.h.b16 %v5949
  %v7273 = vunpack.c.l.b16 %v5950
  %v7274 = vunpack.c.h.b16 %v5950
  %v7275 = vunpack.c.l.b16 %v5951
  %v7276 = vunpack.c.h.b16 %v5951
  %v7277 = vunpack.c.l.b16 %v5952
  %v7278 = vunpack.c.h.b16 %v5952
  %v7279 = vunpack.c.l.b16 %v5953
  %v7280 = vunpack.c.h.b16 %v5953
  %v7281 = vunpack.c.l.b16 %v5954
  %v7282 = vunpack.c.h.b16 %v5954
  %v7283 = vunpack.c.l.b16 %v5955
  %v7284 = vunpack.c.h.b16 %v5955
  %v7285 = vunpack.c.l.b16 %v5956
  %v7286 = vunpack.c.h.b16 %v5956
  %v7287 = vunpack.c.l.b16 %v5957
  %v7288 = vunpack.c.h.b16 %v5957
  %v7289 = vunpack.c.l.b16 %v5958
  %v7290 = vunpack.c.h.b16 %v5958
  %v7291 = vunpack.c.l.b16 %v5959
  %v7292 = vunpack.c.h.b16 %v5959
  %v7293 = vunpack.c.l.b16 %v5960
  %v7294 = vunpack.c.h.b16 %v5960
  %v7295 = vunpack.c.l.b16 %v5961
  %v7296 = vunpack.c.h.b16 %v5961
  %v7297 = vunpack.c.l.b16 %v5962
  %v7298 = vunpack.c.h.b16 %v5962
  %v7299 = vunpack.c.l.b16 %v5963
  %v7300 = vunpack.c.h.b16 %v5963
  %v7301 = vunpack.c.l.b16 %v5964
  %v7302 = vunpack.c.h.b16 %v5964
  %v7303 = vunpack.c.l.b16 %v5965
  %v7304 = vunpack.c.h.b16 %v5965
  %v7305 = vunpack.c.l.b16 %v5966
  %v7306 = vunpack.c.h.b16 %v5966
  %v7307 = vunpack.c.l.b16 %v5967
  %v7308 = vunpack.c.h.b16 %v5967
  %v7309 = vunpack.c.l.b16 %v5968
  %v7310 = vunpack.c.h.b16 %v5968
  %v7311 = vunpack.c.l.b16 %v5969
  %v7312 = vunpack.c.h.b16 %v5969
  %v7313 = vunpack.c.l.b16 %v5970
  %v7314 = vunpack.c.h.b16 %v5970
  %v7315 = vunpack.c.l.b16 %v5971
  %v7316 = vunpack.c.h.b16 %v5971
  %v7317 = vunpack.c.l.b16 %v5972
  %v7318 = vunpack.c.h.b16 %v5972
  %v7319 = vunpack.c.l.b16 %v5973
  %v7320 = vunpack.c.h.b16 %v5973
  %v7321 = vunpack.c.l.b16 %v5974
  %v7322 = vunpack.c.h.b16 %v5974
  %v7323 = vunpack.c.l.b16 %v5975
  %v7324 = vunpack.c.h.b16 %v5975
  %v7325 = vunpack.c.l.b16 %v5976
  %v7326 = vunpack.c.h.b16 %v5976
  %v7327 = vunpack.c.l.b16 %v5977
  %v7328 = vunpack.c.h.b16 %v5977
  %v7329 = vunpack.c.l.b16 %v5978
  %v7330 = vunpack.c.h.b16 %v5978
  %v7331 = vunpack.c.l.b16 %v5979
  %v7332 = vunpack.c.h.b16 %v5979
  %v7333 = vunpack.c.l.b16 %v5980
  %v7334 = vunpack.c.h.b16 %v5980
  %v7335 = vunpack.c.l.b16 %v5981
  %v7336 = vunpack.c.h.b16 %v5981
  %v7337 = vunpack.c.l.b16 %v5982
  %v7338 = vunpack.c.h.b16 %v5982
  %v7339 = vunpack.c.l.b16 %v5983
  %v7340 = vunpack.c.h.b16 %v5983
  %v7341 = vunpack.c.l.b16 %v5984
  %v7342 = vunpack.c.h.b16 %v5984
  %v7343 = vunpack.c.l.b16 %v5985
  %v7344 = vunpack.c.h.b16 %v5985
  %v7345 = vunpack.c.l.b16 %v5986
  %v7346 = vunpack.c.h.b16 %v5986
  %v7347 = vunpack.c.l.b16 %v5987
  %v7348 = vunpack.c.h.b16 %v5987
  %v7349 = vunpack.c.l.b16 %v5988
  %v7350 = vunpack.c.h.b16 %v5988
  %v7351 = vunpack.c.l.b16 %v5989
  %v7352 = vunpack.c.h.b16 %v5989
  %v7353 = vunpack.c.l.b16 %v5990
  %v7354 = vunpack.c.h.b16 %v5990
  %v7355 = vunpack.c.l.b16 %v5991
  %v7356 = vunpack.c.h.b16 %v5991
  %v7357 = vunpack.c.l.b16 %v5992
  %v7358 = vunpack.c.h.b16 %v5992
  %v7359 = vunpack.c.l.b16 %v5993
  %v7360 = vunpack.c.h.b16 %v5993
  %v7361 = vunpack.c.l.b16 %v5994
  %v7362 = vunpack.c.h.b16 %v5994
  %v7363 = vunpack.c.l.b16 %v5995
  %v7364 = vunpack.c.h.b16 %v5995
  %v7365 = vunpack.c.l.b16 %v5996
  %v7366 = vunpack.c.h.b16 %v5996
  %v7367 = vunpack.c.l.b16 %v5997
  %v7368 = vunpack.c.h.b16 %v5997
  %v7369 = vunpack.c.l.b16 %v5998
  %v7370 = vunpack.c.h.b16 %v5998
  %v7371 = vunpack.c.l.b16 %v5999
  %v7372 = vunpack.c.h.b16 %v5999
  %v7373 = vunpack.c.l.b16 %v6000
  %v7374 = vunpack.c.h.b16 %v6000
  %v7375 = vunpack.c.l.b16 %v6001
  %v7376 = vunpack.c.h.b16 %v6001
  %v7377 = vunpack.c.l.b16 %v6002
  %v7378 = vunpack.c.h.b16 %v6002
  %v7379 = vunpack.c.l.b16 %v6003
  %v7380 = vunpack.c.h.b16 %v6003
  %v7381 = vunpack.c.l.b16 %v6004
  %v7382 = vunpack.c.h.b16 %v6004
  %v7383 = vunpack.c.l.b16 %v6005
  %v7384 = vunpack.c.h.b16 %v6005
  %v7385 = vunpack.c.l.b16 %v6006
  %v7386 = vunpack.c.h.b16 %v6006
  %v7387 = vunpack.c.l.b16 %v6007
  %v7388 = vunpack.c.h.b16 %v6007
  %v7389 = vunpack.c.l.b16 %v6008
  %v7390 = vunpack.c.h.b16 %v6008
  %v7391 = vunpack.c.l.b16 %v6009
  %v7392 = vunpack.c.h.b16 %v6009
  %v7393 = vunpack.c.l.b16 %v6010
  %v7394 = vunpack.c.h.b16 %v6010
  %v7395 = vunpack.c.l.b16 %v6011
  %v7396 = vunpack.c.h.b16 %v6011
  %v7397 = vunpack.c.l.b16 %v6012
  %v7398 = vunpack.c.h.b16 %v6012
  %v7399 = vunpack.c.l.b16 %v6013
  %v7400 = vunpack.c.h.b16 %v6013
  %v7401 = vunpack.c.l.b16 %v6014
  %v7402 = vunpack.c.h.b16 %v6014
  %v7403 = vunpack.c.l.b16 %v6015
  %v7404 = vunpack.c.h.b16 %v6015
  %v7405 = vunpack.c.l.b16 %v6016
  %v7406 = vunpack.c.h.b16 %v6016
  %v7407 = vunpack.c.l.b16 %v6017
  %v7408 = vunpack.c.h.b16 %v6017
  %v7409 = vunpack.c.l.b16 %v6018
  %v7410 = vunpack.c.h.b16 %v6018
  %v7411 = vunpack.c.l.b16 %v6019
  %v7412 = vunpack.c.h.b16 %v6019
  %v7413 = vunpack.c.l.b16 %v6020
  %v7414 = vunpack.c.h.b16 %v6020
  %v7415 = vunpack.c.l.b16 %v6021
  %v7416 = vunpack.c.h.b16 %v6021
  %v7417 = vunpack.c.l.b16 %v6022
  %v7418 = vunpack.c.h.b16 %v6022
  %v7419 = vunpack.c.l.b16 %v6023
  %v7420 = vunpack.c.h.b16 %v6023
  %v7421 = vunpack.c.l.b16 %v6024
  %v7422 = vunpack.c.h.b16 %v6024
  %v7423 = vunpack.c.l.b16 %v6025
  %v7424 = vunpack.c.h.b16 %v6025
  %v7425 = vunpack.c.l.b16 %v6026
  %v7426 = vunpack.c.h.b16 %v6026
  %v7427 = vunpack.c.l.b16 %v6027
  %v7428 = vunpack.c.h.b16 %v6027
  %v7429 = vunpack.c.l.b16 %v6028
  %v7430 = vunpack.c.h.b16 %v6028
  %v7431 = vunpack.c.l.b16 %v6029
  %v7432 = vunpack.c.h.b16 %v6029
  %v7433 = vunpack.c.l.b16 %v6030
  %v7434 = vunpack.c.h.b16 %v6030
  %v7435 = vunpack.c.l.b16 %v6031
  %v7436 = vunpack.c.h.b16 %v6031
  %v7437 = vunpack.c.l.b16 %v6032
  %v7438 = vunpack.c.h.b16 %v6032
  %v7439 = vunpack.c.l.b16 %v6033
  %v7440 = vunpack.c.h.b16 %v6033
  %v7441 = vunpack.c.l.b16 %v6034
  %v7442 = vunpack.c.h.b16 %v6034
  %v7443 = vunpack.c.l.b16 %v6035
  %v7444 = vunpack.c.h.b16 %v6035
  %v7445 = vunpack.c.l.b16 %v6036
  %v7446 = vunpack.c.h.b16 %v6036
  %v7447 = vunpack.c.l.b16 %v6037
  %v7448 = vunpack.c.h.b16 %v6037
  %v7449 = vunpack.c.l.b16 %v6038
  %v7450 = vunpack.c.h.b16 %v6038
  %v7451 = vunpack.c.l.b16 %v6039
  %v7452 = vunpack.c.h.b16 %v6039
  %v7453 = vunpack.c.l.b16 %v6040
  %v7454 = vunpack.c.h.b16 %v6040
  %v7455 = vunpack.c.l.b16 %v6041
  %v7456 = vunpack.c.h.b16 %v6041
  %v7457 = vunpack.c.l.b16 %v6042
  %v7458 = vunpack.c.h.b16 %v6042
  %v7459 = vunpack.c.l.b16 %v6043
  %v7460 = vunpack.c.h.b16 %v6043
  %v7461 = vunpack.c.l.b16 %v6044
  %v7462 = vunpack.c.h.b16 %v6044
  %v7463 = vunpack.c.l.b16 %v6045
  %v7464 = vunpack.c.h.b16 %v6045
  %v7465 = vunpack.c.l.b16 %v6046
  %v7466 = vunpack.c.h.b16 %v6046
  %v7467 = vunpack.c.l.b16 %v6047
  %v7468 = vunpack.c.h.b16 %v6047
  %v7469 = vunpack.c.l.b16 %v6048
  %v7470 = vunpack.c.h.b16 %v6048
  %v7471 = vunpack.c.l.b16 %v6049
  %v7472 = vunpack.c.h.b16 %v6049
  %v7473 = vunpack.c.l.b16 %v6050
  %v7474 = vunpack.c.h.b16 %v6050
  %v7475 = vunpack.c.l.b16 %v6051
  %v7476 = vunpack.c.h.b16 %v6051
  %v7477 = vunpack.c.l.b16 %v6052
  %v7478 = vunpack.c.h.b16 %v6052
  %v7479 = vunpack.c.l.b16 %v6053
  %v7480 = vunpack.c.h.b16 %v6053
  %v7481 = vunpack.c.l.b16 %v6054
  %v7482 = vunpack.c.h.b16 %v6054
  %v7483 = vunpack.c.l.b16 %v6055
  %v7484 = vunpack.c.h.b16 %v6055
  %v7485 = vunpack.c.l.b16 %v6056
  %v7486 = vunpack.c.h.b16 %v6056
  %v7487 = vunpack.c.l.b16 %v6057
  %v7488 = vunpack.c.h.b16 %v6057
  %v7489 = vunpack.c.l.b16 %v6058
  %v7490 = vunpack.c.h.b16 %v6058
  %v7491 = vunpack.c.l.b16 %v6059
  %v7492 = vunpack.c.h.b16 %v6059
  %v7493 = vunpack.c.l.b16 %v6060
  %v7494 = vunpack.c.h.b16 %v6060
  %v7495 = vunpack.c.l.b16 %v6061
  %v7496 = vunpack.c.h.b16 %v6061
  %v7497 = vunpack.c.l.b16 %v6062
  %v7498 = vunpack.c.h.b16 %v6062
  %v7499 = vunpack.c.l.b16 %v6063
  %v7500 = vunpack.c.h.b16 %v6063
  %v7501 = vunpack.c.l.b16 %v6064
  %v7502 = vunpack.c.h.b16 %v6064
  %v7503 = vunpack.c.l.b16 %v6065
  %v7504 = vunpack.c.h.b16 %v6065
  %v7505 = vunpack.c.l.b16 %v6066
  %v7506 = vunpack.c.h.b16 %v6066
  %v7507 = vunpack.c.l.b16 %v6067
  %v7508 = vunpack.c.h.b16 %v6067
  %v7509 = vunpack.c.l.b16 %v6068
  %v7510 = vunpack.c.h.b16 %v6068
  %v7511 = vunpack.c.l.b16 %v6069
  %v7512 = vunpack.c.h.b16 %v6069
  %v7513 = vunpack.c.l.b16 %v6070
  %v7514 = vunpack.c.h.b16 %v6070
  %v7515 = vunpack.c.l.b16 %v6071
  %v7516 = vunpack.c.h.b16 %v6071
  %v7517 = vunpack.c.l.b16 %v6072
  %v7518 = vunpack.c.h.b16 %v6072
  %v7519 = vunpack.c.l.b16 %v6073
  %v7520 = vunpack.c.h.b16 %v6073
  %v7521 = vunpack.c.l.b16 %v6074
  %v7522 = vunpack.c.h.b16 %v6074
  %v7523 = vunpack.c.l.b16 %v6075
  %v7524 = vunpack.c.h.b16 %v6075
  %v7525 = vunpack.c.l.b16 %v6076
  %v7526 = vunpack.c.h.b16 %v6076
  %v7527 = vunpack.c.l.b16 %v6077
  %v7528 = vunpack.c.h.b16 %v6077
  %v7529 = vunpack.c.l.b16 %v6078
  %v7530 = vunpack.c.h.b16 %v6078
  %v7531 = vunpack.c.l.b16 %v6079
  %v7532 = vunpack.c.h.b16 %v6079
  %v7533 = vunpack.c.l.b16 %v6080
  %v7534 = vunpack.c.h.b16 %v6080
  %v7535 = vunpack.c.l.b16 %v6081
  %v7536 = vunpack.c.h.b16 %v6081
  %v7537 = vunpack.c.l.b16 %v6082
  %v7538 = vunpack.c.h.b16 %v6082
  %v7539 = vunpack.c.l.b16 %v6083
  %v7540 = vunpack.c.h.b16 %v6083
  %v7541 = vunpack.c.l.b16 %v6084
  %v7542 = vunpack.c.h.b16 %v6084
  %v7543 = vunpack.c.l.b16 %v6085
  %v7544 = vunpack.c.h.b16 %v6085
  %v7545 = vunpack.c.l.b16 %v6086
  %v7546 = vunpack.c.h.b16 %v6086
  %v7547 = vunpack.c.l.b16 %v6087
  %v7548 = vunpack.c.h.b16 %v6087
  %v7549 = vunpack.c.l.b16 %v6088
  %v7550 = vunpack.c.h.b16 %v6088
  %v7551 = vunpack.c.l.b16 %v6089
  %v7552 = vunpack.c.h.b16 %v6089
  %v7553 = vunpack.c.l.b16 %v6090
  %v7554 = vunpack.c.h.b16 %v6090
  %v7555 = vunpack.c.l.b16 %v6091
  %v7556 = vunpack.c.h.b16 %v6091
  %v7557 = vunpack.c.l.b16 %v6092
  %v7558 = vunpack.c.h.b16 %v6092
  %v7559 = vunpack.c.l.b16 %v6093
  %v7560 = vunpack.c.h.b16 %v6093
  %v7561 = vunpack.c.l.b16 %v6094
  %v7562 = vunpack.c.h.b16 %v6094
  %v7563 = vunpack.c.l.b16 %v6095
  %v7564 = vunpack.c.h.b16 %v6095
  %v7565 = vunpack.c.l.b16 %v6096
  %v7566 = vunpack.c.h.b16 %v6096
  %v7567 = vunpack.c.l.b16 %v6097
  %v7568 = vunpack.c.h.b16 %v6097
  %v7569 = vunpack.c.l.b16 %v6098
  %v7570 = vunpack.c.h.b16 %v6098
  %v7571 = vunpack.c.l.b16 %v6099
  %v7572 = vunpack.c.h.b16 %v6099
  %v7573 = vunpack.c.l.b16 %v6100
  %v7574 = vunpack.c.h.b16 %v6100
  %v7575 = vunpack.c.l.b16 %v6101
  %v7576 = vunpack.c.h.b16 %v6101
  %v7577 = vunpack.c.l.b16 %v6102
  %v7578 = vunpack.c.h.b16 %v6102
  %v7579 = vunpack.c.l.b16 %v6103
  %v7580 = vunpack.c.h.b16 %v6103
  %v7581 = vunpack.c.l.b16 %v6104
  %v7582 = vunpack.c.h.b16 %v6104
  %v7583 = vunpack.c.l.b16 %v6105
  %v7584 = vunpack.c.h.b16 %v6105
  %v7585 = vunpack.c.l.b16 %v6106
  %v7586 = vunpack.c.h.b16 %v6106
  %v7587 = vunpack.c.l.b16 %v6107
  %v7588 = vunpack.c.h.b16 %v6107
  %v7589 = vunpack.c.l.b16 %v6108
  %v7590 = vunpack.c.h.b16 %v6108
  %v7591 = vunpack.c.l.b16 %v6109
  %v7592 = vunpack.c.h.b16 %v6109
  %v7593 = vunpack.c.l.b16 %v6110
  %v7594 = vunpack.c.h.b16 %v6110
  %v7595 = vunpack.c.l.b16 %v6111
  %v7596 = vunpack.c.h.b16 %v6111
  %v7597 = vunpack.c.l.b16 %v6112
  %v7598 = vunpack.c.h.b16 %v6112
  %v7599 = vunpack.c.l.b16 %v6113
  %v7600 = vunpack.c.h.b16 %v6113
  %v7601 = vunpack.c.l.b16 %v6114
  %v7602 = vunpack.c.h.b16 %v6114
  %v7603 = vunpack.c.l.b16 %v6115
  %v7604 = vunpack.c.h.b16 %v6115
  %v7605 = vunpack.c.l.b16 %v6116
  %v7606 = vunpack.c.h.b16 %v6116
  %v7607 = vunpack.c.l.b16 %v6117
  %v7608 = vunpack.c.h.b16 %v6117
  %v7609 = vunpack.c.l.b16 %v6118
  %v7610 = vunpack.c.h.b16 %v6118
  %v7611 = vunpack.c.l.b16 %v6119
  %v7612 = vunpack.c.h.b16 %v6119
  %v7613 = vunpack.c.l.b16 %v6120
  %v7614 = vunpack.c.h.b16 %v6120
  %v7615 = vunpack.c.l.b16 %v6121
  %v7616 = vunpack.c.h.b16 %v6121
  %v7617 = vunpack.c.l.b16 %v6122
  %v7618 = vunpack.c.h.b16 %v6122
  %v7619 = vunpack.c.l.b16 %v6123
  %v7620 = vunpack.c.h.b16 %v6123
  %v7621 = vunpack.c.l.b16 %v6124
  %v7622 = vunpack.c.h.b16 %v6124
  %v7623 = vunpack.c.l.b16 %v6125
  %v7624 = vunpack.c.h.b16 %v6125
  %v7625 = vunpack.c.l.b16 %v6126
  %v7626 = vunpack.c.h.b16 %v6126
  %v7627 = vunpack.c.l.b16 %v6127
  %v7628 = vunpack.c.h.b16 %v6127
  %v7629 = vunpack.c.l.b16 %v6128
  %v7630 = vunpack.c.h.b16 %v6128
  %v7631 = vunpack.c.l.b16 %v6129
  %v7632 = vunpack.c.h.b16 %v6129
  %v7633 = vunpack.c.l.b16 %v6130
  %v7634 = vunpack.c.h.b16 %v6130
  %v7635 = vunpack.c.l.b16 %v6131
  %v7636 = vunpack.c.h.b16 %v6131
  %v7637 = vunpack.c.l.b16 %v6132
  %v7638 = vunpack.c.h.b16 %v6132
  %v7639 = vunpack.c.l.b16 %v6133
  %v7640 = vunpack.c.h.b16 %v6133
  %v7641 = vunpack.c.l.b16 %v6134
  %v7642 = vunpack.c.h.b16 %v6134
  %v7643 = vunpack.c.l.b16 %v6135
  %v7644 = vunpack.c.h.b16 %v6135
  %v7645 = vunpack.c.l.b16 %v6136
  %v7646 = vunpack.c.h.b16 %v6136
  %v7647 = vunpack.c.l.b16 %v6137
  %v7648 = vunpack.c.h.b16 %v6137
  %v7649 = vunpack.c.l.b16 %v6138
  %v7650 = vunpack.c.h.b16 %v6138
  %v7651 = vunpack.c.l.b16 %v6139
  %v7652 = vunpack.c.h.b16 %v6139
  %v7653 = vunpack.c.l.b16 %v6140
  %v7654 = vunpack.c.h.b16 %v6140
  %v7655 = vunpack.c.l.b16 %v6141
  %v7656 = vunpack.c.h.b16 %v6141
  %v7657 = vunpack.c.l.b16 %v6142
  %v7658 = vunpack.c.h.b16 %v6142
  %v7659 = vunpack.c.l.b16 %v6143
  %v7660 = vunpack.c.h.b16 %v6143
  %v7661 = vunpack.c.l.b16 %v6144
  %v7662 = vunpack.c.h.b16 %v6144
  %v7663 = vunpack.c.l.b16 %v6145
  %v7664 = vunpack.c.h.b16 %v6145
  %v7665 = vunpack.c.l.b16 %v6146
  %v7666 = vunpack.c.h.b16 %v6146
  %v7667 = vunpack.c.l.b16 %v6147
  %v7668 = vunpack.c.h.b16 %v6147
  %v7669 = vunpack.c.l.b16 %v6148
  %v7670 = vunpack.c.h.b16 %v6148
  %v7671 = vunpack.c.l.b16 %v6149
  %v7672 = vunpack.c.h.b16 %v6149
  %v7673 = vunpack.c.l.b16 %v6150
  %v7674 = vunpack.c.h.b16 %v6150
  %v7675 = vunpack.c.l.b16 %v6151
  %v7676 = vunpack.c.h.b16 %v6151
  %v7677 = vunpack.c.l.b16 %v6152
  %v7678 = vunpack.c.h.b16 %v6152
  %v7679 = vunpack.c.l.b16 %v6153
  %v7680 = vunpack.c.h.b16 %v6153
  %v7681 = vunpack.c.l.b16 %v6154
  %v7682 = vunpack.c.h.b16 %v6154
  %v7683 = vunpack.c.l.b16 %v6155
  %v7684 = vunpack.c.h.b16 %v6155
  %v7685 = vunpack.c.l.b16 %v6156
  %v7686 = vunpack.c.h.b16 %v6156
  %v7687 = vunpack.c.l.b16 %v6157
  %v7688 = vunpack.c.h.b16 %v6157
  %v7689 = vunpack.c.l.b16 %v6158
  %v7690 = vunpack.c.h.b16 %v6158
  %v7691 = vunpack.c.l.b16 %v6159
  %v7692 = vunpack.c.h.b16 %v6159
  %v7693 = vunpack.c.l.b16 %v6160
  %v7694 = vunpack.c.h.b16 %v6160
  %v7695 = vunpack.c.l.b16 %v6161
  %v7696 = vunpack.c.h.b16 %v6161
  %v7697 = vunpack.c.l.b16 %v6162
  %v7698 = vunpack.c.h.b16 %v6162
  %v7699 = vunpack.c.l.b16 %v6163
  %v7700 = vunpack.c.h.b16 %v6163
  %v7701 = vunpack.c.l.b16 %v6164
  %v7702 = vunpack.c.h.b16 %v6164
  %v7703 = vunpack.c.l.b16 %v6165
  %v7704 = vunpack.c.h.b16 %v6165
  %v7705 = vunpack.c.l.b16 %v6166
  %v7706 = vunpack.c.h.b16 %v6166
  %v7707 = vunpack.c.l.b16 %v6167
  %v7708 = vunpack.c.h.b16 %v6167
  %v7709 = vunpack.c.l.b16 %v6168
  %v7710 = vunpack.c.h.b16 %v6168
  %v7711 = vunpack.c.l.b16 %v6169
  %v7712 = vunpack.c.h.b16 %v6169
  %v7713 = vunpack.c.l.b16 %v6170
  %v7714 = vunpack.c.h.b16 %v6170
  %v7715 = vunpack.c.l.b16 %v6171
  %v7716 = vunpack.c.h.b16 %v6171
  %v7717 = vunpack.c.l.b16 %v6172
  %v7718 = vunpack.c.h.b16 %v6172
  %v7719 = vunpack.c.l.b16 %v6173
  %v7720 = vunpack.c.h.b16 %v6173
  %v7721 = vunpack.c.l.b16 %v6174
  %v7722 = vunpack.c.h.b16 %v6174
  %v7723 = vunpack.c.l.b16 %v6175
  %v7724 = vunpack.c.h.b16 %v6175
  %v7725 = vunpack.c.l.b16 %v6176
  %v7726 = vunpack.c.h.b16 %v6176
  %v7727 = vunpack.c.l.b16 %v6177
  %v7728 = vunpack.c.h.b16 %v6177
  %v7729 = vunpack.c.l.b16 %v6178
  %v7730 = vunpack.c.h.b16 %v6178
  %v7731 = vunpack.c.l.b16 %v6179
  %v7732 = vunpack.c.h.b16 %v6179
  %v7733 = vunpack.c.l.b16 %v6180
  %v7734 = vunpack.c.h.b16 %v6180
  %v7735 = vunpack.c.l.b16 %v6181
  %v7736 = vunpack.c.h.b16 %v6181
  %v7737 = vunpack.c.l.b16 %v6182
  %v7738 = vunpack.c.h.b16 %v6182
  %v7739 = vunpack.c.l.b16 %v6183
  %v7740 = vunpack.c.h.b16 %v6183
  %v7741 = vunpack.c.l.b16 %v6184
  %v7742 = vunpack.c.h.b16 %v6184
  %v7743 = vunpack.c.l.b16 %v6185
  %v7744 = vunpack.c.h.b16 %v6185
  %v7745 = vunpack.c.l.b16 %v6186
  %v7746 = vunpack.c.h.b16 %v6186
  %v7747 = vunpack.c.l.b16 %v6187
  %v7748 = vunpack.c.h.b16 %v6187
  %v7749 = vunpack.c.l.b16 %v6188
  %v7750 = vunpack.c.h.b16 %v6188
  %v7751 = vunpack.c.l.b16 %v6189
  %v7752 = vunpack.c.h.b16 %v6189
  %v7753 = vunpack.c.l.b16 %v6190
  %v7754 = vunpack.c.h.b16 %v6190
  %v7755 = vunpack.c.l.b16 %v6191
  %v7756 = vunpack.c.h.b16 %v6191
  %v7757 = vunpack.c.l.b16 %v6192
  %v7758 = vunpack.c.h.b16 %v6192
  %v7759 = vunpack.c.l.b16 %v6193
  %v7760 = vunpack.c.h.b16 %v6193
  %v7761 = vunpack.c.l.b16 %v6194
  %v7762 = vunpack.c.h.b16 %v6194
  %v7763 = vunpack.c.l.b16 %v6195
  %v7764 = vunpack.c.h.b16 %v6195
  %v7765 = vunpack.c.l.b16 %v6196
  %v7766 = vunpack.c.h.b16 %v6196
  %v7767 = vunpack.c.l.b16 %v6197
  %v7768 = vunpack.c.h.b16 %v6197
  %v7769 = vunpack.c.l.b16 %v6198
  %v7770 = vunpack.c.h.b16 %v6198
  %v7771 = vunpack.c.l.b16 %v6199
  %v7772 = vunpack.c.h.b16 %v6199
  %v7773 = vunpack.c.l.b16 %v6200
  %v7774 = vunpack.c.h.b16 %v6200
  %v7775 = vunpack.c.l.b16 %v6201
  %v7776 = vunpack.c.h.b16 %v6201
  %v7777 = vunpack.c.l.b16 %v6202
  %v7778 = vunpack.c.h.b16 %v6202
  %v7779 = vunpack.c.l.b16 %v6203
  %v7780 = vunpack.c.h.b16 %v6203
  %v7781 = vunpack.c.l.b16 %v6204
  %v7782 = vunpack.c.h.b16 %v6204
  %v7783 = vpack.c.b16 %v6767, %v6759
  %v7784 = vpack.c.b16 %v6768, %v6760
  %v7785 = vpack.c.b16 %v6769, %v6761
  %v7786 = vpack.c.b16 %v6770, %v6762
  %v7787 = vpack.c.b16 %v6771, %v6763
  %v7788 = vpack.c.b16 %v6772, %v6764
  %v7789 = vpack.c.b16 %v6773, %v6765
  %v7790 = vpack.c.b16 %v6774, %v6766
  %v7791 = vpack.c.b16 %v6783, %v6775
  %v7792 = vpack.c.b16 %v6784, %v6776
  %v7793 = vpack.c.b16 %v6785, %v6777
  %v7794 = vpack.c.b16 %v6786, %v6778
  %v7795 = vpack.c.b16 %v6787, %v6779
  %v7796 = vpack.c.b16 %v6788, %v6780
  %v7797 = vpack.c.b16 %v6789, %v6781
  %v7798 = vpack.c.b16 %v6790, %v6782
  %v7799 = vpack.c.b16 %v6799, %v6791
  %v7800 = vpack.c.b16 %v6800, %v6792
  %v7801 = vpack.c.b16 %v6801, %v6793
  %v7802 = vpack.c.b16 %v6802, %v6794
  %v7803 = vpack.c.b16 %v6803, %v6795
  %v7804 = vpack.c.b16 %v6804, %v6796
  %v7805 = vpack.c.b16 %v6805, %v6797
  %v7806 = vpack.c.b16 %v6806, %v6798
  %v7807 = vpack.c.b16 %v6815, %v6807
  %v7808 = vpack.c.b16 %v6816, %v6808
  %v7809 = vpack.c.b16 %v6817, %v6809
  %v7810 = vpack.c.b16 %v6818, %v6810
  %v7811 = vpack.c.b16 %v6819, %v6811
  %v7812 = vpack.c.b16 %v6820, %v6812
  %v7813 = vpack.c.b16 %v6821, %v6813
  %v7814 = vpack.c.b16 %v6822, %v6814
  %v7815 = vpack.c.b16 %v6831, %v6823
  %v7816 = vpack.c.b16 %v6832, %v6824
  %v7817 = vpack.c.b16 %v6833, %v6825
  %v7818 = vpack.c.b16 %v6834, %v6826
  %v7819 = vpack.c.b16 %v6835, %v6827
  %v7820 = vpack.c.b16 %v6836, %v6828
  %v7821 = vpack.c.b16 %v6837, %v6829
  %v7822 = vpack.c.b16 %v6838, %v6830
  %v7823 = vpack.c.b16 %v6847, %v6839
  %v7824 = vpack.c.b16 %v6848, %v6840
  %v7825 = vpack.c.b16 %v6849, %v6841
  %v7826 = vpack.c.b16 %v6850, %v6842
  %v7827 = vpack.c.b16 %v6851, %v6843
  %v7828 = vpack.c.b16 %v6852, %v6844
  %v7829 = vpack.c.b16 %v6853, %v6845
  %v7830 = vpack.c.b16 %v6854, %v6846
  %v7831 = vpack.c.b16 %v6863, %v6855
  %v7832 = vpack.c.b16 %v6864, %v6856
  %v7833 = vpack.c.b16 %v6865, %v6857
  %v7834 = vpack.c.b16 %v6866, %v6858
  %v7835 = vpack.c.b16 %v6867, %v6859
  %v7836 = vpack.c.b16 %v6868, %v6860
  %v7837 = vpack.c.b16 %v6869, %v6861
  %v7838 = vpack.c.b16 %v6870, %v6862
  %v7839 = vpack.c.b16 %v6879, %v6871
  %v7840 = vpack.c.b16 %v6880, %v6872
  %v7841 = vpack.c.b16 %v6881, %v6873
  %v7842 = vpack.c.b16 %v6882, %v6874
  %v7843 = vpack.c.b16 %v6883, %v6875
  %v7844 = vpack.c.b16 %v6884, %v6876
  %v7845 = vpack.c.b16 %v6885, %v6877
  %v7846 = vpack.c.b16 %v6886, %v6878
  %v7847 = vpack.c.b16 %v6895, %v6887
  %v7848 = vpack.c.b16 %v6896, %v6888
  %v7849 = vpack.c.b16 %v6897, %v6889
  %v7850 = vpack.c.b16 %v6898, %v6890
  %v7851 = vpack.c.b16 %v6899, %v6891
  %v7852 = vpack.c.b16 %v6900, %v6892
  %v7853 = vpack.c.b16 %v6901, %v6893
  %v7854 = vpack.c.b16 %v6902, %v6894
  %v7855 = vpack.c.b16 %v6911, %v6903
  %v7856 = vpack.c.b16 %v6912, %v6904
  %v7857 = vpack.c.b16 %v6913, %v6905
  %v7858 = vpack.c.b16 %v6914, %v6906
  %v7859 = vpack.c.b16 %v6915, %v6907
  %v7860 = vpack.c.b16 %v6916, %v6908
  %v7861 = vpack.c.b16 %v6917, %v6909
  %v7862 = vpack.c.b16 %v6918, %v6910
  %v7863 = vpack.c.b16 %v6927, %v6919
  %v7864 = vpack.c.b16 %v6928, %v6920
  %v7865 = vpack.c.b16 %v6929, %v6921
  %v7866 = vpack.c.b16 %v6930, %v6922
  %v7867 = vpack.c.b16 %v6931, %v6923
  %v7868 = vpack.c.b16 %v6932, %v6924
  %v7869 = vpack.c.b16 %v6933, %v6925
  %v7870 = vpack.c.b16 %v6934, %v6926
  %v7871 = vpack.c.b16 %v6943, %v6935
  %v7872 = vpack.c.b16 %v6944, %v6936
  %v7873 = vpack.c.b16 %v6945, %v6937
  %v7874 = vpack.c.b16 %v6946, %v6938
  %v7875 = vpack.c.b16 %v6947, %v6939
  %v7876 = vpack.c.b16 %v6948, %v6940
  %v7877 = vpack.c.b16 %v6949, %v6941
  %v7878 = vpack.c.b16 %v6950, %v6942
  %v7879 = vpack.c.b16 %v6959, %v6951
  %v7880 = vpack.c.b16 %v6960, %v6952
  %v7881 = vpack.c.b16 %v6961, %v6953
  %v7882 = vpack.c.b16 %v6962, %v6954
  %v7883 = vpack.c.b16 %v6963, %v6955
  %v7884 = vpack.c.b16 %v6964, %v6956
  %v7885 = vpack.c.b16 %v6965, %v6957
  %v7886 = vpack.c.b16 %v6966, %v6958
  %v7887 = vpack.c.b16 %v6975, %v6967
  %v7888 = vpack.c.b16 %v6976, %v6968
  %v7889 = vpack.c.b16 %v6977, %v6969
  %v7890 = vpack.c.b16 %v6978, %v6970
  %v7891 = vpack.c.b16 %v6979, %v6971
  %v7892 = vpack.c.b16 %v6980, %v6972
  %v7893 = vpack.c.b16 %v6981, %v6973
  %v7894 = vpack.c.b16 %v6982, %v6974
  %v7895 = vpack.c.b16 %v6991, %v6983
  %v7896 = vpack.c.b16 %v6992, %v6984
  %v7897 = vpack.c.b16 %v6993, %v6985
  %v7898 = vpack.c.b16 %v6994, %v6986
  %v7899 = vpack.c.b16 %v6995, %v6987
  %v7900 = vpack.c.b16 %v6996, %v6988
  %v7901 = vpack.c.b16 %v6997, %v6989
  %v7902 = vpack.c.b16 %v6998, %v6990
  %v7903 = vpack.c.b16 %v7007, %v6999
  %v7904 = vpack.c.b16 %v7008, %v7000
  %v7905 = vpack.c.b16 %v7009, %v7001
  %v7906 = vpack.c.b16 %v7010, %v7002
  %v7907 = vpack.c.b16 %v7011, %v7003
  %v7908 = vpack.c.b16 %v7012, %v7004
  %v7909 = vpack.c.b16 %v7013, %v7005
  %v7910 = vpack.c.b16 %v7014, %v7006
  %v7911 = vpack.c.b16 %v7023, %v7015
  %v7912 = vpack.c.b16 %v7024, %v7016
  %v7913 = vpack.c.b16 %v7025, %v7017
  %v7914 = vpack.c.b16 %v7026, %v7018
  %v7915 = vpack.c.b16 %v7027, %v7019
  %v7916 = vpack.c.b16 %v7028, %v7020
  %v7917 = vpack.c.b16 %v7029, %v7021
  %v7918 = vpack.c.b16 %v7030, %v7022
  %v7919 = vpack.c.b16 %v7039, %v7031
  %v7920 = vpack.c.b16 %v7040, %v7032
  %v7921 = vpack.c.b16 %v7041, %v7033
  %v7922 = vpack.c.b16 %v7042, %v7034
  %v7923 = vpack.c.b16 %v7043, %v7035
  %v7924 = vpack.c.b16 %v7044, %v7036
  %v7925 = vpack.c.b16 %v7045, %v7037
  %v7926 = vpack.c.b16 %v7046, %v7038
  %v7927 = vpack.c.b16 %v7055, %v7047
  %v7928 = vpack.c.b16 %v7056, %v7048
  %v7929 = vpack.c.b16 %v7057, %v7049
  %v7930 = vpack.c.b16 %v7058, %v7050
  %v7931 = vpack.c.b16 %v7059, %v7051
  %v7932 = vpack.c.b16 %v7060, %v7052
  %v7933 = vpack.c.b16 %v7061, %v7053
  %v7934 = vpack.c.b16 %v7062, %v7054
  %v7935 = vpack.c.b16 %v7071, %v7063
  %v7936 = vpack.c.b16 %v7072, %v7064
  %v7937 = vpack.c.b16 %v7073, %v7065
  %v7938 = vpack.c.b16 %v7074, %v7066
  %v7939 = vpack.c.b16 %v7075, %v7067
  %v7940 = vpack.c.b16 %v7076, %v7068
  %v7941 = vpack.c.b16 %v7077, %v7069
  %v7942 = vpack.c.b16 %v7078, %v7070
  %v7943 = vpack.c.b16 %v7087, %v7079
  %v7944 = vpack.c.b16 %v7088, %v7080
  %v7945 = vpack.c.b16 %v7089, %v7081
  %v7946 = vpack.c.b16 %v7090, %v7082
  %v7947 = vpack.c.b16 %v7091, %v7083
  %v7948 = vpack.c.b16 %v7092, %v7084
  %v7949 = vpack.c.b16 %v7093, %v7085
  %v7950 = vpack.c.b16 %v7094, %v7086
  %v7951 = vpack.c.b16 %v7103, %v7095
  %v7952 = vpack.c.b16 %v7104, %v7096
  %v7953 = vpack.c.b16 %v7105, %v7097
  %v7954 = vpack.c.b16 %v7106, %v7098
  %v7955 = vpack.c.b16 %v7107, %v7099
  %v7956 = vpack.c.b16 %v7108, %v7100
  %v7957 = vpack.c.b16 %v7109, %v7101
  %v7958 = vpack.c.b16 %v7110, %v7102
  %v7959 = vpack.c.b16 %v7119, %v7111
  %v7960 = vpack.c.b16 %v7120, %v7112
  %v7961 = vpack.c.b16 %v7121, %v7113
  %v7962 = vpack.c.b16 %v7122, %v7114
  %v7963 = vpack.c.b16 %v7123, %v7115
  %v7964 = vpack.c.b16 %v7124, %v7116
  %v7965 = vpack.c.b16 %v7125, %v7117
  %v7966 = vpack.c.b16 %v7126, %v7118
  %v7967 = vpack.c.b16 %v7135, %v7127
  %v7968 = vpack.c.b16 %v7136, %v7128
  %v7969 = vpack.c.b16 %v7137, %v7129
  %v7970 = vpack.c.b16 %v7138, %v7130
  %v7971 = vpack.c.b16 %v7139, %v7131
  %v7972 = vpack.c.b16 %v7140, %v7132
  %v7973 = vpack.c.b16 %v7141, %v7133
  %v7974 = vpack.c.b16 %v7142, %v7134
  %v7975 = vpack.c.b16 %v7151, %v7143
  %v7976 = vpack.c.b16 %v7152, %v7144
  %v7977 = vpack.c.b16 %v7153, %v7145
  %v7978 = vpack.c.b16 %v7154, %v7146
  %v7979 = vpack.c.b16 %v7155, %v7147
  %v7980 = vpack.c.b16 %v7156, %v7148
  %v7981 = vpack.c.b16 %v7157, %v7149
  %v7982 = vpack.c.b16 %v7158, %v7150
  %v7983 = vpack.c.b16 %v7167, %v7159
  %v7984 = vpack.c.b16 %v7168, %v7160
  %v7985 = vpack.c.b16 %v7169, %v7161
  %v7986 = vpack.c.b16 %v7170, %v7162
  %v7987 = vpack.c.b16 %v7171, %v7163
  %v7988 = vpack.c.b16 %v7172, %v7164
  %v7989 = vpack.c.b16 %v7173, %v7165
  %v7990 = vpack.c.b16 %v7174, %v7166
  %v7991 = vpack.c.b16 %v7183, %v7175
  %v7992 = vpack.c.b16 %v7184, %v7176
  %v7993 = vpack.c.b16 %v7185, %v7177
  %v7994 = vpack.c.b16 %v7186, %v7178
  %v7995 = vpack.c.b16 %v7187, %v7179
  %v7996 = vpack.c.b16 %v7188, %v7180
  %v7997 = vpack.c.b16 %v7189, %v7181
  %v7998 = vpack.c.b16 %v7190, %v7182
  %v7999 = vpack.c.b16 %v7199, %v7191
  %v8000 = vpack.c.b16 %v7200, %v7192
  %v8001 = vpack.c.b16 %v7201, %v7193
  %v8002 = vpack.c.b16 %v7202, %v7194
  %v8003 = vpack.c.b16 %v7203, %v7195
  %v8004 = vpack.c.b16 %v7204, %v7196
  %v8005 = vpack.c.b16 %v7205, %v7197
  %v8006 = vpack.c.b16 %v7206, %v7198
  %v8007 = vpack.c.b16 %v7215, %v7207
  %v8008 = vpack.c.b16 %v7216, %v7208
  %v8009 = vpack.c.b16 %v7217, %v7209
  %v8010 = vpack.c.b16 %v7218, %v7210
  %v8011 = vpack.c.b16 %v7219, %v7211
  %v8012 = vpack.c.b16 %v7220, %v7212
  %v8013 = vpack.c.b16 %v7221, %v7213
  %v8014 = vpack.c.b16 %v7222, %v7214
  %v8015 = vpack.c.b16 %v7231, %v7223
  %v8016 = vpack.c.b16 %v7232, %v7224
  %v8017 = vpack.c.b16 %v7233, %v7225
  %v8018 = vpack.c.b16 %v7234, %v7226
  %v8019 = vpack.c.b16 %v7235, %v7227
  %v8020 = vpack.c.b16 %v7236, %v7228
  %v8021 = vpack.c.b16 %v7237, %v7229
  %v8022 = vpack.c.b16 %v7238, %v7230
  %v8023 = vpack.c.b16 %v7247, %v7239
  %v8024 = vpack.c.b16 %v7248, %v7240
  %v8025 = vpack.c.b16 %v7249, %v7241
  %v8026 = vpack.c.b16 %v7250, %v7242
  %v8027 = vpack.c.b16 %v7251, %v7243
  %v8028 = vpack.c.b16 %v7252, %v7244
  %v8029 = vpack.c.b16 %v7253, %v7245
  %v8030 = vpack.c.b16 %v7254, %v7246
  %v8031 = vpack.c.b16 %v7263, %v7255
  %v8032 = vpack.c.b16 %v7264, %v7256
  %v8033 = vpack.c.b16 %v7265, %v7257
  %v8034 = vpack.c.b16 %v7266, %v7258
  %v8035 = vpack.c.b16 %v7267, %v7259
  %v8036 = vpack.c.b16 %v7268, %v7260
  %v8037 = vpack.c.b16 %v7269, %v7261
  %v8038 = vpack.c.b16 %v7270, %v7262
  %v8039 = vpack.c.b16 %v7279, %v7271
  %v8040 = vpack.c.b16 %v7280, %v7272
  %v8041 = vpack.c.b16 %v7281, %v7273
  %v8042 = vpack.c.b16 %v7282, %v7274
  %v8043 = vpack.c.b16 %v7283, %v7275
  %v8044 = vpack.c.b16 %v7284, %v7276
  %v8045 = vpack.c.b16 %v7285, %v7277
  %v8046 = vpack.c.b16 %v7286, %v7278
  %v8047 = vpack.c.b16 %v7295, %v7287
  %v8048 = vpack.c.b16 %v7296, %v7288
  %v8049 = vpack.c.b16 %v7297, %v7289
  %v8050 = vpack.c.b16 %v7298, %v7290
  %v8051 = vpack.c.b16 %v7299, %v7291
  %v8052 = vpack.c.b16 %v7300, %v7292
  %v8053 = vpack.c.b16 %v7301, %v7293
  %v8054 = vpack.c.b16 %v7302, %v7294
  %v8055 = vpack.c.b16 %v7311, %v7303
  %v8056 = vpack.c.b16 %v7312, %v7304
  %v8057 = vpack.c.b16 %v7313, %v7305
  %v8058 = vpack.c.b16 %v7314, %v7306
  %v8059 = vpack.c.b16 %v7315, %v7307
  %v8060 = vpack.c.b16 %v7316, %v7308
  %v8061 = vpack.c.b16 %v7317, %v7309
  %v8062 = vpack.c.b16 %v7318, %v7310
  %v8063 = vpack.c.b16 %v7327, %v7319
  %v8064 = vpack.c.b16 %v7328, %v7320
  %v8065 = vpack.c.b16 %v7329, %v7321
  %v8066 = vpack.c.b16 %v7330, %v7322
  %v8067 = vpack.c.b16 %v7331, %v7323
  %v8068 = vpack.c.b16 %v7332, %v7324
  %v8069 = vpack.c.b16 %v7333, %v7325
  %v8070 = vpack.c.b16 %v7334, %v7326
  %v8071 = vpack.c.b16 %v7343, %v7335
  %v8072 = vpack.c.b16 %v7344, %v7336
  %v8073 = vpack.c.b16 %v7345, %v7337
  %v8074 = vpack.c.b16 %v7346, %v7338
  %v8075 = vpack.c.b16 %v7347, %v7339
  %v8076 = vpack.c.b16 %v7348, %v7340
  %v8077 = vpack.c.b16 %v7349, %v7341
  %v8078 = vpack.c.b16 %v7350, %v7342
  %v8079 = vpack.c.b16 %v7359, %v7351
  %v8080 = vpack.c.b16 %v7360, %v7352
  %v8081 = vpack.c.b16 %v7361, %v7353
  %v8082 = vpack.c.b16 %v7362, %v7354
  %v8083 = vpack.c.b16 %v7363, %v7355
  %v8084 = vpack.c.b16 %v7364, %v7356
  %v8085 = vpack.c.b16 %v7365, %v7357
  %v8086 = vpack.c.b16 %v7366, %v7358
  %v8087 = vpack.c.b16 %v7375, %v7367
  %v8088 = vpack.c.b16 %v7376, %v7368
  %v8089 = vpack.c.b16 %v7377, %v7369
  %v8090 = vpack.c.b16 %v7378, %v7370
  %v8091 = vpack.c.b16 %v7379, %v7371
  %v8092 = vpack.c.b16 %v7380, %v7372
  %v8093 = vpack.c.b16 %v7381, %v7373
  %v8094 = vpack.c.b16 %v7382, %v7374
  %v8095 = vpack.c.b16 %v7391, %v7383
  %v8096 = vpack.c.b16 %v7392, %v7384
  %v8097 = vpack.c.b16 %v7393, %v7385
  %v8098 = vpack.c.b16 %v7394, %v7386
  %v8099 = vpack.c.b16 %v7395, %v7387
  %v8100 = vpack.c.b16 %v7396, %v7388
  %v8101 = vpack.c.b16 %v7397, %v7389
  %v8102 = vpack.c.b16 %v7398, %v7390
  %v8103 = vpack.c.b16 %v7407, %v7399
  %v8104 = vpack.c.b16 %v7408, %v7400
  %v8105 = vpack.c.b16 %v7409, %v7401
  %v8106 = vpack.c.b16 %v7410, %v7402
  %v8107 = vpack.c.b16 %v7411, %v7403
  %v8108 = vpack.c.b16 %v7412, %v7404
  %v8109 = vpack.c.b16 %v7413, %v7405
  %v8110 = vpack.c.b16 %v7414, %v7406
  %v8111 = vpack.c.b16 %v7423, %v7415
  %v8112 = vpack.c.b16 %v7424, %v7416
  %v8113 = vpack.c.b16 %v7425, %v7417
  %v8114 = vpack.c.b16 %v7426, %v7418
  %v8115 = vpack.c.b16 %v7427, %v7419
  %v8116 = vpack.c.b16 %v7428, %v7420
  %v8117 = vpack.c.b16 %v7429, %v7421
  %v8118 = vpack.c.b16 %v7430, %v7422
  %v8119 = vpack.c.b16 %v7439, %v7431
  %v8120 = vpack.c.b16 %v7440, %v7432
  %v8121 = vpack.c.b16 %v7441, %v7433
  %v8122 = vpack.c.b16 %v7442, %v7434
  %v8123 = vpack.c.b16 %v7443, %v7435
  %v8124 = vpack.c.b16 %v7444, %v7436
  %v8125 = vpack.c.b16 %v7445, %v7437
  %v8126 = vpack.c.b16 %v7446, %v7438
  %v8127 = vpack.c.b16 %v7455, %v7447
  %v8128 = vpack.c.b16 %v7456, %v7448
  %v8129 = vpack.c.b16 %v7457, %v7449
  %v8130 = vpack.c.b16 %v7458, %v7450
  %v8131 = vpack.c.b16 %v7459, %v7451
  %v8132 = vpack.c.b16 %v7460, %v7452
  %v8133 = vpack.c.b16 %v7461, %v7453
  %v8134 = vpack.c.b16 %v7462, %v7454
  %v8135 = vpack.c.b16 %v7471, %v7463
  %v8136 = vpack.c.b16 %v7472, %v7464
  %v8137 = vpack.c.b16 %v7473, %v7465
  %v8138 = vpack.c.b16 %v7474, %v7466
  %v8139 = vpack.c.b16 %v7475, %v7467
  %v8140 = vpack.c.b16 %v7476, %v7468
  %v8141 = vpack.c.b16 %v7477, %v7469
  %v8142 = vpack.c.b16 %v7478, %v7470
  %v8143 = vpack.c.b16 %v7487, %v7479
  %v8144 = vpack.c.b16 %v7488, %v7480
  %v8145 = vpack.c.b16 %v7489, %v7481
  %v8146 = vpack.c.b16 %v7490, %v7482
  %v8147 = vpack.c.b16 %v7491, %v7483
  %v8148 = vpack.c.b16 %v7492, %v7484
  %v8149 = vpack.c.b16 %v7493, %v7485
  %v8150 = vpack.c.b16 %v7494, %v7486
  %v8151 = vpack.c.b16 %v7503, %v7495
  %v8152 = vpack.c.b16 %v7504, %v7496
  %v8153 = vpack.c.b16 %v7505, %v7497
  %v8154 = vpack.c.b16 %v7506, %v7498
  %v8155 = vpack.c.b16 %v7507, %v7499
  %v8156 = vpack.c.b16 %v7508, %v7500
  %v8157 = vpack.c.b16 %v7509, %v7501
  %v8158 = vpack.c.b16 %v7510, %v7502
  %v8159 = vpack.c.b16 %v7519, %v7511
  %v8160 = vpack.c.b16 %v7520, %v7512
  %v8161 = vpack.c.b16 %v7521, %v7513
  %v8162 = vpack.c.b16 %v7522, %v7514
  %v8163 = vpack.c.b16 %v7523, %v7515
  %v8164 = vpack.c.b16 %v7524, %v7516
  %v8165 = vpack.c.b16 %v7525, %v7517
  %v8166 = vpack.c.b16 %v7526, %v7518
  %v8167 = vpack.c.b16 %v7535, %v7527
  %v8168 = vpack.c.b16 %v7536, %v7528
  %v8169 = vpack.c.b16 %v7537, %v7529
  %v8170 = vpack.c.b16 %v7538, %v7530
  %v8171 = vpack.c.b16 %v7539, %v7531
  %v8172 = vpack.c.b16 %v7540, %v7532
  %v8173 = vpack.c.b16 %v7541, %v7533
  %v8174 = vpack.c.b16 %v7542, %v7534
  %v8175 = vpack.c.b16 %v7551, %v7543
  %v8176 = vpack.c.b16 %v7552, %v7544
  %v8177 = vpack.c.b16 %v7553, %v7545
  %v8178 = vpack.c.b16 %v7554, %v7546
  %v8179 = vpack.c.b16 %v7555, %v7547
  %v8180 = vpack.c.b16 %v7556, %v7548
  %v8181 = vpack.c.b16 %v7557, %v7549
  %v8182 = vpack.c.b16 %v7558, %v7550
  %v8183 = vpack.c.b16 %v7567, %v7559
  %v8184 = vpack.c.b16 %v7568, %v7560
  %v8185 = vpack.c.b16 %v7569, %v7561
  %v8186 = vpack.c.b16 %v7570, %v7562
  %v8187 = vpack.c.b16 %v7571, %v7563
  %v8188 = vpack.c.b16 %v7572, %v7564
  %v8189 = vpack.c.b16 %v7573, %v7565
  %v8190 = vpack.c.b16 %v7574, %v7566
  %v8191 = vpack.c.b16 %v7583, %v7575
  %v8192 = vpack.c.b16 %v7584, %v7576
  %v8193 = vpack.c.b16 %v7585, %v7577
  %v8194 = vpack.c.b16 %v7586, %v7578
  %v8195 = vpack.c.b16 %v7587, %v7579
  %v8196 = vpack.c.b16 %v7588, %v7580
  %v8197 = vpack.c.b16 %v7589, %v7581
  %v8198 = vpack.c.b16 %v7590, %v7582
  %v8199 = vpack.c.b16 %v7599, %v7591
  %v8200 = vpack.c.b16 %v7600, %v7592
  %v8201 = vpack.c.b16 %v7601, %v7593
  %v8202 = vpack.c.b16 %v7602, %v7594
  %v8203 = vpack.c.b16 %v7603, %v7595
  %v8204 = vpack.c.b16 %v7604, %v7596
  %v8205 = vpack.c.b16 %v7605, %v7597
  %v8206 = vpack.c.b16 %v7606, %v7598
  %v8207 = vpack.c.b16 %v7615, %v7607
  %v8208 = vpack.c.b16 %v7616, %v7608
  %v8209 = vpack.c.b16 %v7617, %v7609
  %v8210 = vpack.c.b16 %v7618, %v7610
  %v8211 = vpack.c.b16 %v7619, %v7611
  %v8212 = vpack.c.b16 %v7620, %v7612
  %v8213 = vpack.c.b16 %v7621, %v7613
  %v8214 = vpack.c.b16 %v7622, %v7614
  %v8215 = vpack.c.b16 %v7631, %v7623
  %v8216 = vpack.c.b16 %v7632, %v7624
  %v8217 = vpack.c.b16 %v7633, %v7625
  %v8218 = vpack.c.b16 %v7634, %v7626
  %v8219 = vpack.c.b16 %v7635, %v7627
  %v8220 = vpack.c.b16 %v7636, %v7628
  %v8221 = vpack.c.b16 %v7637, %v7629
  %v8222 = vpack.c.b16 %v7638, %v7630
  %v8223 = vpack.c.b16 %v7647, %v7639
  %v8224 = vpack.c.b16 %v7648, %v7640
  %v8225 = vpack.c.b16 %v7649, %v7641
  %v8226 = vpack.c.b16 %v7650, %v7642
  %v8227 = vpack.c.b16 %v7651, %v7643
  %v8228 = vpack.c.b16 %v7652, %v7644
  %v8229 = vpack.c.b16 %v7653, %v7645
  %v8230 = vpack.c.b16 %v7654, %v7646
  %v8231 = vpack.c.b16 %v7663, %v7655
  %v8232 = vpack.c.b16 %v7664, %v7656
  %v8233 = vpack.c.b16 %v7665, %v7657
  %v8234 = vpack.c.b16 %v7666, %v7658
  %v8235 = vpack.c.b16 %v7667, %v7659
  %v8236 = vpack.c.b16 %v7668, %v7660
  %v8237 = vpack.c.b16 %v7669, %v7661
  %v8238 = vpack.c.b16 %v7670, %v7662
  %v8239 = vpack.c.b16 %v7679, %v7671
  %v8240 = vpack.c.b16 %v7680, %v7672
  %v8241 = vpack.c.b16 %v7681, %v7673
  %v8242 = vpack.c.b16 %v7682, %v7674
  %v8243 = vpack.c.b16 %v7683, %v7675
  %v8244 = vpack.c.b16 %v7684, %v7676
  %v8245 = vpack.c.b16 %v7685, %v7677
  %v8246 = vpack.c.b16 %v7686, %v7678
  %v8247 = vpack.c.b16 %v7695, %v7687
  %v8248 = vpack.c.b16 %v7696, %v7688
  %v8249 = vpack.c.b16 %v7697, %v7689
  %v8250 = vpack.c.b16 %v7698, %v7690
  %v8251 = vpack.c.b16 %v7699, %v7691
  %v8252 = vpack.c.b16 %v7700, %v7692
  %v8253 = vpack.c.b16 %v7701, %v7693
  %v8254 = vpack.c.b16 %v7702, %v7694
  %v8255 = vpack.c.b16 %v7711, %v7703
  %v8256 = vpack.c.b16 %v7712, %v7704
  %v8257 = vpack.c.b16 %v7713, %v7705
  %v8258 = vpack.c.b16 %v7714, %v7706
  %v8259 = vpack.c.b16 %v7715, %v7707
  %v8260 = vpack.c.b16 %v7716, %v7708
  %v8261 = vpack.c.b16 %v7717, %v7709
  %v8262 = vpack.c.b16 %v7718, %v7710
  %v8263 = vpack.c.b16 %v7727, %v7719
  %v8264 = vpack.c.b16 %v7728, %v7720
  %v8265 = vpack.c.b16 %v7729, %v7721
  %v8266 = vpack.c.b16 %v7730, %v7722
  %v8267 = vpack.c.b16 %v7731, %v7723
  %v8268 = vpack.c.b16 %v7732, %v7724
  %v8269 = vpack.c.b16 %v7733, %v7725
  %v8270 = vpack.c.b16 %v7734, %v7726
  %v8271 = vpack.c.b16 %v7743, %v7735
  %v8272 = vpack.c.b16 %v7744, %v7736
  %v8273 = vpack.c.b16 %v7745, %v7737
  %v8274 = vpack.c.b16 %v7746, %v7738
  %v8275 = vpack.c.b16 %v7747, %v7739
  %v8276 = vpack.c.b16 %v7748, %v7740
  %v8277 = vpack.c.b16 %v7749, %v7741
  %v8278 = vpack.c.b16 %v7750, %v7742
  %v8279 = vpack.c.b16 %v7759, %v7751
  %v8280 = vpack.c.b16 %v7760, %v7752
  %v8281 = vpack.c.b16 %v7761, %v7753
  %v8282 = vpack.c.b16 %v7762, %v7754
  %v8283 = vpack.c.b16 %v7763, %v7755
  %v8284 = vpack.c.b16 %v7764, %v7756
  %v8285 = vpack.c.b16 %v7765, %v7757
  %v8286 = vpack.c.b16 %v7766, %v7758
  %v8287 = vpack.c.b16 %v7775, %v7767
  %v8288 = vpack.c.b16 %v7776, %v7768
  %v8289 = vpack.c.b16 %v7777, %v7769
  %v8290 = vpack.c.b16 %v7778, %v7770
  %v8291 = vpack.c.b16 %v7779, %v7771
  %v8292 = vpack.c.b16 %v7780, %v7772
  %v8293 = vpack.c.b16 %v7781, %v7773
  %v8294 = vpack.c.b16 %v7782, %v7774
  %8807 = vmatprep.subr.bf16.mxu0 %v7840
  %8808 = vmatpush1.bf16.msra.mxu0 %v7839
  %8809 = vmatprep.subr.bf16.mxu0 %v7832
  %8810 = vmatpush1.bf16.msra.mxu0 %v7831
  %8811 = vmatprep.subr.bf16.mxu0 %v7824
  %8812 = vmatpush1.bf16.msra.mxu0 %v7823
  %8813 = vmatprep.subr.bf16.mxu0 %v7816
  %8814 = vmatpush1.bf16.msra.mxu0 %v7815
  %8815 = vmatprep.subr.bf16.mxu0 %v7808
  %8816 = vmatpush1.bf16.msra.mxu0 %v7807
  %8817 = vmatprep.subr.bf16.mxu0 %v7800
  %8818 = vmatpush1.bf16.msra.mxu0 %v7799
  %8819 = vmatprep.subr.bf16.mxu0 %v7792
  %8820 = vmatpush1.bf16.msra.mxu0 %v7791
  %8821 = vmatprep.subr.bf16.mxu0 %v7784
  %8822 = vmatpush1.bf16.msra.mxu0 %v7783
  %8823 = vmatprep.subr.bf16.mxu0 %v7904
  %8824 = vmatpush2.bf16.msra.mxu0 %v7903
  %8825 = vmatprep.subr.bf16.mxu0 %v7896
  %8826 = vmatpush2.bf16.msra.mxu0 %v7895
  %8827 = vmatprep.subr.bf16.mxu0 %v7888
  %8828 = vmatpush2.bf16.msra.mxu0 %v7887
  %8829 = vmatprep.subr.bf16.mxu0 %v7880
  %8830 = vmatpush2.bf16.msra.mxu0 %v7879
  %8831 = vmatprep.subr.bf16.mxu0 %v7872
  %8832 = vmatpush2.bf16.msra.mxu0 %v7871
  %8833 = vmatprep.subr.bf16.mxu0 %v7864
  %8834 = vmatpush2.bf16.msra.mxu0 %v7863
  %8835 = vmatprep.subr.bf16.mxu0 %v7856
  %8836 = vmatpush2.bf16.msra.mxu0 %v7855
  %8837 = vmatprep.subr.bf16.mxu0 %v7848
  %8838 = vmatpush2.bf16.msra.mxu0 %v7847
  %8839 = vmatprep.mubr.bf16.mxu0 %v5677
  %8840 = vmatmul.mubr.bf16.gmra.mxu0 %v5676
  %v8841 = vpop.f32.mrf.mxu0
  %v8842 = vadd.f32 %v6210, %v8841
  %v8843 = vpop.f32.mrf.mxu0
  %v8844 = vadd.f32 %v6214, %v8843
  %v8845 = vpop.f32.mrf.mxu0
  %v8846 = vpop.f32.mrf.mxu0
  %8847 = vdwg.mxu0
  %8848 = vmatprep.subr.bf16.mxu0 %v7968
  %8849 = vmatpush1.bf16.msra.mxu0 %v7967
  %8850 = vmatprep.subr.bf16.mxu0 %v7960
  %8851 = vmatpush1.bf16.msra.mxu0 %v7959
  %8852 = vmatprep.subr.bf16.mxu0 %v7952
  %8853 = vmatpush1.bf16.msra.mxu0 %v7951
  %8854 = vmatprep.subr.bf16.mxu0 %v7944
  %8855 = vmatpush1.bf16.msra.mxu0 %v7943
  %8856 = vmatprep.subr.bf16.mxu0 %v7936
  %8857 = vmatpush1.bf16.msra.mxu0 %v7935
  %8858 = vmatprep.subr.bf16.mxu0 %v7928
  %8859 = vmatpush1.bf16.msra.mxu0 %v7927
  %8860 = vmatprep.subr.bf16.mxu0 %v7920
  %8861 = vmatpush1.bf16.msra.mxu0 %v7919
  %8862 = vmatprep.subr.bf16.mxu0 %v7912
  %8863 = vmatpush1.bf16.msra.mxu0 %v7911
  %8864 = vmatprep.subr.bf16.mxu0 %v8032
  %8865 = vmatpush2.bf16.msra.mxu0 %v8031
  %8866 = vmatprep.subr.bf16.mxu0 %v8024
  %8867 = vmatpush2.bf16.msra.mxu0 %v8023
  %8868 = vmatprep.subr.bf16.mxu0 %v8016
  %8869 = vmatpush2.bf16.msra.mxu0 %v8015
  %8870 = vmatprep.subr.bf16.mxu0 %v8008
  %8871 = vmatpush2.bf16.msra.mxu0 %v8007
  %8872 = vmatprep.subr.bf16.mxu0 %v8000
  %8873 = vmatpush2.bf16.msra.mxu0 %v7999
  %8874 = vmatprep.subr.bf16.mxu0 %v7992
  %8875 = vmatpush2.bf16.msra.mxu0 %v7991
  %8876 = vmatprep.subr.bf16.mxu0 %v7984
  %8877 = vmatpush2.bf16.msra.mxu0 %v7983
  %8878 = vmatprep.subr.bf16.mxu0 %v7976
  %8879 = vmatpush2.bf16.msra.mxu0 %v7975
  %8880 = vmatprep.mubr.bf16.mxu0 %v5679
  %8881 = vmatmul.mubr.bf16.gmra.mxu0 %v5678
  %v8882 = vpop.f32.mrf.mxu0
  %v8883 = vadd.f32 %v8842, %v8882
  %v8884 = vpop.f32.mrf.mxu0
  %v8885 = vadd.f32 %v8844, %v8884
  %v8886 = vpop.f32.mrf.mxu0
  %v8887 = vpop.f32.mrf.mxu0
  %8888 = vdwg.mxu0
  %8889 = vmatprep.subr.bf16.mxu0 %v8096
  %8890 = vmatpush1.bf16.msra.mxu0 %v8095
  %8891 = vmatprep.subr.bf16.mxu0 %v8088
  %8892 = vmatpush1.bf16.msra.mxu0 %v8087
  %8893 = vmatprep.subr.bf16.mxu0 %v8080
  %8894 = vmatpush1.bf16.msra.mxu0 %v8079
  %8895 = vmatprep.subr.bf16.mxu0 %v8072
  %8896 = vmatpush1.bf16.msra.mxu0 %v8071
  %8897 = vmatprep.subr.bf16.mxu0 %v8064
  %8898 = vmatpush1.bf16.msra.mxu0 %v8063
  %8899 = vmatprep.subr.bf16.mxu0 %v8056
  %8900 = vmatpush1.bf16.msra.mxu0 %v8055
  %8901 = vmatprep.subr.bf16.mxu0 %v8048
  %8902 = vmatpush1.bf16.msra.mxu0 %v8047
  %8903 = vmatprep.subr.bf16.mxu0 %v8040
  %8904 = vmatpush1.bf16.msra.mxu0 %v8039
  %8905 = vmatprep.subr.bf16.mxu0 %v8160
  %8906 = vmatpush2.bf16.msra.mxu0 %v8159
  %8907 = vmatprep.subr.bf16.mxu0 %v8152
  %8908 = vmatpush2.bf16.msra.mxu0 %v8151
  %8909 = vmatprep.subr.bf16.mxu0 %v8144
  %8910 = vmatpush2.bf16.msra.mxu0 %v8143
  %8911 = vmatprep.subr.bf16.mxu0 %v8136
  %8912 = vmatpush2.bf16.msra.mxu0 %v8135
  %8913 = vmatprep.subr.bf16.mxu0 %v8128
  %8914 = vmatpush2.bf16.msra.mxu0 %v8127
  %8915 = vmatprep.subr.bf16.mxu0 %v8120
  %8916 = vmatpush2.bf16.msra.mxu0 %v8119
  %8917 = vmatprep.subr.bf16.mxu0 %v8112
  %8918 = vmatpush2.bf16.msra.mxu0 %v8111
  %8919 = vmatprep.subr.bf16.mxu0 %v8104
  %8920 = vmatpush2.bf16.msra.mxu0 %v8103
  %8921 = vmatprep.mubr.bf16.mxu0 %v5681
  %8922 = vmatmul.mubr.bf16.gmra.mxu0 %v5680
  %v8923 = vpop.f32.mrf.mxu0
  %v8924 = vadd.f32 %v8883, %v8923
  %v8925 = vpop.f32.mrf.mxu0
  %v8926 = vadd.f32 %v8885, %v8925
  %v8927 = vpop.f32.mrf.mxu0
  %v8928 = vpop.f32.mrf.mxu0
  %8929 = vdwg.mxu0
  %8930 = vmatprep.subr.bf16.mxu0 %v8224
  %8931 = vmatpush1.bf16.msra.mxu0 %v8223
  %8932 = vmatprep.subr.bf16.mxu0 %v8216
  %8933 = vmatpush1.bf16.msra.mxu0 %v8215
  %8934 = vmatprep.subr.bf16.mxu0 %v8208
  %8935 = vmatpush1.bf16.msra.mxu0 %v8207
  %8936 = vmatprep.subr.bf16.mxu0 %v8200
  %8937 = vmatpush1.bf16.msra.mxu0 %v8199
  %8938 = vmatprep.subr.bf16.mxu0 %v8192
  %8939 = vmatpush1.bf16.msra.mxu0 %v8191
  %8940 = vmatprep.subr.bf16.mxu0 %v8184
  %8941 = vmatpush1.bf16.msra.mxu0 %v8183
  %8942 = vmatprep.subr.bf16.mxu0 %v8176
  %8943 = vmatpush1.bf16.msra.mxu0 %v8175
  %8944 = vmatprep.subr.bf16.mxu0 %v8168
  %8945 = vmatpush1.bf16.msra.mxu0 %v8167
  %8946 = vmatprep.subr.bf16.mxu0 %v8288
  %8947 = vmatpush2.bf16.msra.mxu0 %v8287
  %8948 = vmatprep.subr.bf16.mxu0 %v8280
  %8949 = vmatpush2.bf16.msra.mxu0 %v8279
  %8950 = vmatprep.subr.bf16.mxu0 %v8272
  %8951 = vmatpush2.bf16.msra.mxu0 %v8271
  %8952 = vmatprep.subr.bf16.mxu0 %v8264
  %8953 = vmatpush2.bf16.msra.mxu0 %v8263
  %8954 = vmatprep.subr.bf16.mxu0 %v8256
  %8955 = vmatpush2.bf16.msra.mxu0 %v8255
  %8956 = vmatprep.subr.bf16.mxu0 %v8248
  %8957 = vmatpush2.bf16.msra.mxu0 %v8247
  %8958 = vmatprep.subr.bf16.mxu0 %v8240
  %8959 = vmatpush2.bf16.msra.mxu0 %v8239
  %8960 = vmatprep.subr.bf16.mxu0 %v8232
  %8961 = vmatpush2.bf16.msra.mxu0 %v8231
  %8962 = vmatprep.mubr.bf16.mxu0 %v5683
  %8963 = vmatmul.mubr.bf16.gmra.mxu0 %v5682
  %v8964 = vpop.f32.mrf.mxu0
  %v8965 = vadd.f32 %v8924, %v8964
  %v8966 = vpop.f32.mrf.mxu0
  %v8967 = vadd.f32 %v8926, %v8966
  %v8968 = vpop.f32.mrf.mxu0
  %v8969 = vpop.f32.mrf.mxu0
  %8970 = vdwg.mxu0
  %8971 = vmatprep.subr.bf16.mxu0 %v7842
  %8972 = vmatpush1.bf16.msra.mxu0 %v7841
  %8973 = vmatprep.subr.bf16.mxu0 %v7834
  %8974 = vmatpush1.bf16.msra.mxu0 %v7833
  %8975 = vmatprep.subr.bf16.mxu0 %v7826
  %8976 = vmatpush1.bf16.msra.mxu0 %v7825
  %8977 = vmatprep.subr.bf16.mxu0 %v7818
  %8978 = vmatpush1.bf16.msra.mxu0 %v7817
  %8979 = vmatprep.subr.bf16.mxu0 %v7810
  %8980 = vmatpush1.bf16.msra.mxu0 %v7809
  %8981 = vmatprep.subr.bf16.mxu0 %v7802
  %8982 = vmatpush1.bf16.msra.mxu0 %v7801
  %8983 = vmatprep.subr.bf16.mxu0 %v7794
  %8984 = vmatpush1.bf16.msra.mxu0 %v7793
  %8985 = vmatprep.subr.bf16.mxu0 %v7786
  %8986 = vmatpush1.bf16.msra.mxu0 %v7785
  %8987 = vmatprep.subr.bf16.mxu0 %v7906
  %8988 = vmatpush2.bf16.msra.mxu0 %v7905
  %8989 = vmatprep.subr.bf16.mxu0 %v7898
  %8990 = vmatpush2.bf16.msra.mxu0 %v7897
  %8991 = vmatprep.subr.bf16.mxu0 %v7890
  %8992 = vmatpush2.bf16.msra.mxu0 %v7889
  %8993 = vmatprep.subr.bf16.mxu0 %v7882
  %8994 = vmatpush2.bf16.msra.mxu0 %v7881
  %8995 = vmatprep.subr.bf16.mxu0 %v7874
  %8996 = vmatpush2.bf16.msra.mxu0 %v7873
  %8997 = vmatprep.subr.bf16.mxu0 %v7866
  %8998 = vmatpush2.bf16.msra.mxu0 %v7865
  %8999 = vmatprep.subr.bf16.mxu0 %v7858
  %9000 = vmatpush2.bf16.msra.mxu0 %v7857
  %9001 = vmatprep.subr.bf16.mxu0 %v7850
  %9002 = vmatpush2.bf16.msra.mxu0 %v7849
  %9003 = vmatprep.mubr.bf16.mxu0 %v5677
  %9004 = vmatmul.mubr.bf16.gmra.mxu0 %v5676
  %v9005 = vpop.f32.mrf.mxu0
  %v9006 = vadd.f32 %v6218, %v9005
  %v9007 = vpop.f32.mrf.mxu0
  %v9008 = vadd.f32 %v6222, %v9007
  %v9009 = vpop.f32.mrf.mxu0
  %v9010 = vpop.f32.mrf.mxu0
  %9011 = vdwg.mxu0
  %9012 = vmatprep.subr.bf16.mxu0 %v7970
  %9013 = vmatpush1.bf16.msra.mxu0 %v7969
  %9014 = vmatprep.subr.bf16.mxu0 %v7962
  %9015 = vmatpush1.bf16.msra.mxu0 %v7961
  %9016 = vmatprep.subr.bf16.mxu0 %v7954
  %9017 = vmatpush1.bf16.msra.mxu0 %v7953
  %9018 = vmatprep.subr.bf16.mxu0 %v7946
  %9019 = vmatpush1.bf16.msra.mxu0 %v7945
  %9020 = vmatprep.subr.bf16.mxu0 %v7938
  %9021 = vmatpush1.bf16.msra.mxu0 %v7937
  %9022 = vmatprep.subr.bf16.mxu0 %v7930
  %9023 = vmatpush1.bf16.msra.mxu0 %v7929
  %9024 = vmatprep.subr.bf16.mxu0 %v7922
  %9025 = vmatpush1.bf16.msra.mxu0 %v7921
  %9026 = vmatprep.subr.bf16.mxu0 %v7914
  %9027 = vmatpush1.bf16.msra.mxu0 %v7913
  %9028 = vmatprep.subr.bf16.mxu0 %v8034
  %9029 = vmatpush2.bf16.msra.mxu0 %v8033
  %9030 = vmatprep.subr.bf16.mxu0 %v8026
  %9031 = vmatpush2.bf16.msra.mxu0 %v8025
  %9032 = vmatprep.subr.bf16.mxu0 %v8018
  %9033 = vmatpush2.bf16.msra.mxu0 %v8017
  %9034 = vmatprep.subr.bf16.mxu0 %v8010
  %9035 = vmatpush2.bf16.msra.mxu0 %v8009
  %9036 = vmatprep.subr.bf16.mxu0 %v8002
  %9037 = vmatpush2.bf16.msra.mxu0 %v8001
  %9038 = vmatprep.subr.bf16.mxu0 %v7994
  %9039 = vmatpush2.bf16.msra.mxu0 %v7993
  %9040 = vmatprep.subr.bf16.mxu0 %v7986
  %9041 = vmatpush2.bf16.msra.mxu0 %v7985
  %9042 = vmatprep.subr.bf16.mxu0 %v7978
  %9043 = vmatpush2.bf16.msra.mxu0 %v7977
  %9044 = vmatprep.mubr.bf16.mxu0 %v5679
  %9045 = vmatmul.mubr.bf16.gmra.mxu0 %v5678
  %v9046 = vpop.f32.mrf.mxu0
  %v9047 = vadd.f32 %v9006, %v9046
  %v9048 = vpop.f32.mrf.mxu0
  %v9049 = vadd.f32 %v9008, %v9048
  %v9050 = vpop.f32.mrf.mxu0
  %v9051 = vpop.f32.mrf.mxu0
  %9052 = vdwg.mxu0
  %9053 = vmatprep.subr.bf16.mxu0 %v8098
  %9054 = vmatpush1.bf16.msra.mxu0 %v8097
  %9055 = vmatprep.subr.bf16.mxu0 %v8090
  %9056 = vmatpush1.bf16.msra.mxu0 %v8089
  %9057 = vmatprep.subr.bf16.mxu0 %v8082
  %9058 = vmatpush1.bf16.msra.mxu0 %v8081
  %9059 = vmatprep.subr.bf16.mxu0 %v8074
  %9060 = vmatpush1.bf16.msra.mxu0 %v8073
  %9061 = vmatprep.subr.bf16.mxu0 %v8066
  %9062 = vmatpush1.bf16.msra.mxu0 %v8065
  %9063 = vmatprep.subr.bf16.mxu0 %v8058
  %9064 = vmatpush1.bf16.msra.mxu0 %v8057
  %9065 = vmatprep.subr.bf16.mxu0 %v8050
  %9066 = vmatpush1.bf16.msra.mxu0 %v8049
  %9067 = vmatprep.subr.bf16.mxu0 %v8042
  %9068 = vmatpush1.bf16.msra.mxu0 %v8041
  %9069 = vmatprep.subr.bf16.mxu0 %v8162
  %9070 = vmatpush2.bf16.msra.mxu0 %v8161
  %9071 = vmatprep.subr.bf16.mxu0 %v8154
  %9072 = vmatpush2.bf16.msra.mxu0 %v8153
  %9073 = vmatprep.subr.bf16.mxu0 %v8146
  %9074 = vmatpush2.bf16.msra.mxu0 %v8145
  %9075 = vmatprep.subr.bf16.mxu0 %v8138
  %9076 = vmatpush2.bf16.msra.mxu0 %v8137
  %9077 = vmatprep.subr.bf16.mxu0 %v8130
  %9078 = vmatpush2.bf16.msra.mxu0 %v8129
  %9079 = vmatprep.subr.bf16.mxu0 %v8122
  %9080 = vmatpush2.bf16.msra.mxu0 %v8121
  %9081 = vmatprep.subr.bf16.mxu0 %v8114
  %9082 = vmatpush2.bf16.msra.mxu0 %v8113
  %9083 = vmatprep.subr.bf16.mxu0 %v8106
  %9084 = vmatpush2.bf16.msra.mxu0 %v8105
  %9085 = vmatprep.mubr.bf16.mxu0 %v5681
  %9086 = vmatmul.mubr.bf16.gmra.mxu0 %v5680
  %v9087 = vpop.f32.mrf.mxu0
  %v9088 = vadd.f32 %v9047, %v9087
  %v9089 = vpop.f32.mrf.mxu0
  %v9090 = vadd.f32 %v9049, %v9089
  %v9091 = vpop.f32.mrf.mxu0
  %v9092 = vpop.f32.mrf.mxu0
  %9093 = vdwg.mxu0
  %9094 = vmatprep.subr.bf16.mxu0 %v8226
  %9095 = vmatpush1.bf16.msra.mxu0 %v8225
  %9096 = vmatprep.subr.bf16.mxu0 %v8218
  %9097 = vmatpush1.bf16.msra.mxu0 %v8217
  %9098 = vmatprep.subr.bf16.mxu0 %v8210
  %9099 = vmatpush1.bf16.msra.mxu0 %v8209
  %9100 = vmatprep.subr.bf16.mxu0 %v8202
  %9101 = vmatpush1.bf16.msra.mxu0 %v8201
  %9102 = vmatprep.subr.bf16.mxu0 %v8194
  %9103 = vmatpush1.bf16.msra.mxu0 %v8193
  %9104 = vmatprep.subr.bf16.mxu0 %v8186
  %9105 = vmatpush1.bf16.msra.mxu0 %v8185
  %9106 = vmatprep.subr.bf16.mxu0 %v8178
  %9107 = vmatpush1.bf16.msra.mxu0 %v8177
  %9108 = vmatprep.subr.bf16.mxu0 %v8170
  %9109 = vmatpush1.bf16.msra.mxu0 %v8169
  %9110 = vmatprep.subr.bf16.mxu0 %v8290
  %9111 = vmatpush2.bf16.msra.mxu0 %v8289
  %9112 = vmatprep.subr.bf16.mxu0 %v8282
  %9113 = vmatpush2.bf16.msra.mxu0 %v8281
  %9114 = vmatprep.subr.bf16.mxu0 %v8274
  %9115 = vmatpush2.bf16.msra.mxu0 %v8273
  %9116 = vmatprep.subr.bf16.mxu0 %v8266
  %9117 = vmatpush2.bf16.msra.mxu0 %v8265
  %9118 = vmatprep.subr.bf16.mxu0 %v8258
  %9119 = vmatpush2.bf16.msra.mxu0 %v8257
  %9120 = vmatprep.subr.bf16.mxu0 %v8250
  %9121 = vmatpush2.bf16.msra.mxu0 %v8249
  %9122 = vmatprep.subr.bf16.mxu0 %v8242
  %9123 = vmatpush2.bf16.msra.mxu0 %v8241
  %9124 = vmatprep.subr.bf16.mxu0 %v8234
  %9125 = vmatpush2.bf16.msra.mxu0 %v8233
  %9126 = vmatprep.mubr.bf16.mxu0 %v5683
  %9127 = vmatmul.mubr.bf16.gmra.mxu0 %v5682
  %v9128 = vpop.f32.mrf.mxu0
  %v9129 = vadd.f32 %v9088, %v9128
  %v9130 = vpop.f32.mrf.mxu0
  %v9131 = vadd.f32 %v9090, %v9130
  %v9132 = vpop.f32.mrf.mxu0
  %v9133 = vpop.f32.mrf.mxu0
  %9134 = vdwg.mxu0
  %9135 = vmatprep.subr.bf16.mxu0 %v7844
  %9136 = vmatpush1.bf16.msra.mxu0 %v7843
  %9137 = vmatprep.subr.bf16.mxu0 %v7836
  %9138 = vmatpush1.bf16.msra.mxu0 %v7835
  %9139 = vmatprep.subr.bf16.mxu0 %v7828
  %9140 = vmatpush1.bf16.msra.mxu0 %v7827
  %9141 = vmatprep.subr.bf16.mxu0 %v7820
  %9142 = vmatpush1.bf16.msra.mxu0 %v7819
  %9143 = vmatprep.subr.bf16.mxu0 %v7812
  %9144 = vmatpush1.bf16.msra.mxu0 %v7811
  %9145 = vmatprep.subr.bf16.mxu0 %v7804
  %9146 = vmatpush1.bf16.msra.mxu0 %v7803
  %9147 = vmatprep.subr.bf16.mxu0 %v7796
  %9148 = vmatpush1.bf16.msra.mxu0 %v7795
  %9149 = vmatprep.subr.bf16.mxu0 %v7788
  %9150 = vmatpush1.bf16.msra.mxu0 %v7787
  %9151 = vmatprep.subr.bf16.mxu0 %v7908
  %9152 = vmatpush2.bf16.msra.mxu0 %v7907
  %9153 = vmatprep.subr.bf16.mxu0 %v7900
  %9154 = vmatpush2.bf16.msra.mxu0 %v7899
  %9155 = vmatprep.subr.bf16.mxu0 %v7892
  %9156 = vmatpush2.bf16.msra.mxu0 %v7891
  %9157 = vmatprep.subr.bf16.mxu0 %v7884
  %9158 = vmatpush2.bf16.msra.mxu0 %v7883
  %9159 = vmatprep.subr.bf16.mxu0 %v7876
  %9160 = vmatpush2.bf16.msra.mxu0 %v7875
  %9161 = vmatprep.subr.bf16.mxu0 %v7868
  %9162 = vmatpush2.bf16.msra.mxu0 %v7867
  %9163 = vmatprep.subr.bf16.mxu0 %v7860
  %9164 = vmatpush2.bf16.msra.mxu0 %v7859
  %9165 = vmatprep.subr.bf16.mxu0 %v7852
  %9166 = vmatpush2.bf16.msra.mxu0 %v7851
  %9167 = vmatprep.mubr.bf16.mxu0 %v5677
  %9168 = vmatmul.mubr.bf16.gmra.mxu0 %v5676
  %v9169 = vpop.f32.mrf.mxu0
  %v9170 = vadd.f32 %v6226, %v9169
  %v9171 = vpop.f32.mrf.mxu0
  %v9172 = vadd.f32 %v6230, %v9171
  %v9173 = vpop.f32.mrf.mxu0
  %v9174 = vpop.f32.mrf.mxu0
  %9175 = vdwg.mxu0
  %9176 = vmatprep.subr.bf16.mxu0 %v7972
  %9177 = vmatpush1.bf16.msra.mxu0 %v7971
  %9178 = vmatprep.subr.bf16.mxu0 %v7964
  %9179 = vmatpush1.bf16.msra.mxu0 %v7963
  %9180 = vmatprep.subr.bf16.mxu0 %v7956
  %9181 = vmatpush1.bf16.msra.mxu0 %v7955
  %9182 = vmatprep.subr.bf16.mxu0 %v7948
  %9183 = vmatpush1.bf16.msra.mxu0 %v7947
  %9184 = vmatprep.subr.bf16.mxu0 %v7940
  %9185 = vmatpush1.bf16.msra.mxu0 %v7939
  %9186 = vmatprep.subr.bf16.mxu0 %v7932
  %9187 = vmatpush1.bf16.msra.mxu0 %v7931
  %9188 = vmatprep.subr.bf16.mxu0 %v7924
  %9189 = vmatpush1.bf16.msra.mxu0 %v7923
  %9190 = vmatprep.subr.bf16.mxu0 %v7916
  %9191 = vmatpush1.bf16.msra.mxu0 %v7915
  %9192 = vmatprep.subr.bf16.mxu0 %v8036
  %9193 = vmatpush2.bf16.msra.mxu0 %v8035
  %9194 = vmatprep.subr.bf16.mxu0 %v8028
  %9195 = vmatpush2.bf16.msra.mxu0 %v8027
  %9196 = vmatprep.subr.bf16.mxu0 %v8020
  %9197 = vmatpush2.bf16.msra.mxu0 %v8019
  %9198 = vmatprep.subr.bf16.mxu0 %v8012
  %9199 = vmatpush2.bf16.msra.mxu0 %v8011
  %9200 = vmatprep.subr.bf16.mxu0 %v8004
  %9201 = vmatpush2.bf16.msra.mxu0 %v8003
  %9202 = vmatprep.subr.bf16.mxu0 %v7996
  %9203 = vmatpush2.bf16.msra.mxu0 %v7995
  %9204 = vmatprep.subr.bf16.mxu0 %v7988
  %9205 = vmatpush2.bf16.msra.mxu0 %v7987
  %9206 = vmatprep.subr.bf16.mxu0 %v7980
  %9207 = vmatpush2.bf16.msra.mxu0 %v7979
  %9208 = vmatprep.mubr.bf16.mxu0 %v5679
  %9209 = vmatmul.mubr.bf16.gmra.mxu0 %v5678
  %v9210 = vpop.f32.mrf.mxu0
  %v9211 = vadd.f32 %v9170, %v9210
  %v9212 = vpop.f32.mrf.mxu0
  %v9213 = vadd.f32 %v9172, %v9212
  %v9214 = vpop.f32.mrf.mxu0
  %v9215 = vpop.f32.mrf.mxu0
  %9216 = vdwg.mxu0
  %9217 = vmatprep.subr.bf16.mxu0 %v8100
  %9218 = vmatpush1.bf16.msra.mxu0 %v8099
  %9219 = vmatprep.subr.bf16.mxu0 %v8092
  %9220 = vmatpush1.bf16.msra.mxu0 %v8091
  %9221 = vmatprep.subr.bf16.mxu0 %v8084
  %9222 = vmatpush1.bf16.msra.mxu0 %v8083
  %9223 = vmatprep.subr.bf16.mxu0 %v8076
  %9224 = vmatpush1.bf16.msra.mxu0 %v8075
  %9225 = vmatprep.subr.bf16.mxu0 %v8068
  %9226 = vmatpush1.bf16.msra.mxu0 %v8067
  %9227 = vmatprep.subr.bf16.mxu0 %v8060
  %9228 = vmatpush1.bf16.msra.mxu0 %v8059
  %9229 = vmatprep.subr.bf16.mxu0 %v8052
  %9230 = vmatpush1.bf16.msra.mxu0 %v8051
  %9231 = vmatprep.subr.bf16.mxu0 %v8044
  %9232 = vmatpush1.bf16.msra.mxu0 %v8043
  %9233 = vmatprep.subr.bf16.mxu0 %v8164
  %9234 = vmatpush2.bf16.msra.mxu0 %v8163
  %9235 = vmatprep.subr.bf16.mxu0 %v8156
  %9236 = vmatpush2.bf16.msra.mxu0 %v8155
  %9237 = vmatprep.subr.bf16.mxu0 %v8148
  %9238 = vmatpush2.bf16.msra.mxu0 %v8147
  %9239 = vmatprep.subr.bf16.mxu0 %v8140
  %9240 = vmatpush2.bf16.msra.mxu0 %v8139
  %9241 = vmatprep.subr.bf16.mxu0 %v8132
  %9242 = vmatpush2.bf16.msra.mxu0 %v8131
  %9243 = vmatprep.subr.bf16.mxu0 %v8124
  %9244 = vmatpush2.bf16.msra.mxu0 %v8123
  %9245 = vmatprep.subr.bf16.mxu0 %v8116
  %9246 = vmatpush2.bf16.msra.mxu0 %v8115
  %9247 = vmatprep.subr.bf16.mxu0 %v8108
  %9248 = vmatpush2.bf16.msra.mxu0 %v8107
  %9249 = vmatprep.mubr.bf16.mxu0 %v5681
  %9250 = vmatmul.mubr.bf16.gmra.mxu0 %v5680
  %v9251 = vpop.f32.mrf.mxu0
  %v9252 = vadd.f32 %v9211, %v9251
  %v9253 = vpop.f32.mrf.mxu0
  %v9254 = vadd.f32 %v9213, %v9253
  %v9255 = vpop.f32.mrf.mxu0
  %v9256 = vpop.f32.mrf.mxu0
  %9257 = vdwg.mxu0
  %9258 = vmatprep.subr.bf16.mxu0 %v8228
  %9259 = vmatpush1.bf16.msra.mxu0 %v8227
  %9260 = vmatprep.subr.bf16.mxu0 %v8220
  %9261 = vmatpush1.bf16.msra.mxu0 %v8219
  %9262 = vmatprep.subr.bf16.mxu0 %v8212
  %9263 = vmatpush1.bf16.msra.mxu0 %v8211
  %9264 = vmatprep.subr.bf16.mxu0 %v8204
  %9265 = vmatpush1.bf16.msra.mxu0 %v8203
  %9266 = vmatprep.subr.bf16.mxu0 %v8196
  %9267 = vmatpush1.bf16.msra.mxu0 %v8195
  %9268 = vmatprep.subr.bf16.mxu0 %v8188
  %9269 = vmatpush1.bf16.msra.mxu0 %v8187
  %9270 = vmatprep.subr.bf16.mxu0 %v8180
  %9271 = vmatpush1.bf16.msra.mxu0 %v8179
  %9272 = vmatprep.subr.bf16.mxu0 %v8172
  %9273 = vmatpush1.bf16.msra.mxu0 %v8171
  %9274 = vmatprep.subr.bf16.mxu0 %v8292
  %9275 = vmatpush2.bf16.msra.mxu0 %v8291
  %9276 = vmatprep.subr.bf16.mxu0 %v8284
  %9277 = vmatpush2.bf16.msra.mxu0 %v8283
  %9278 = vmatprep.subr.bf16.mxu0 %v8276
  %9279 = vmatpush2.bf16.msra.mxu0 %v8275
  %9280 = vmatprep.subr.bf16.mxu0 %v8268
  %9281 = vmatpush2.bf16.msra.mxu0 %v8267
  %9282 = vmatprep.subr.bf16.mxu0 %v8260
  %9283 = vmatpush2.bf16.msra.mxu0 %v8259
  %9284 = vmatprep.subr.bf16.mxu0 %v8252
  %9285 = vmatpush2.bf16.msra.mxu0 %v8251
  %9286 = vmatprep.subr.bf16.mxu0 %v8244
  %9287 = vmatpush2.bf16.msra.mxu0 %v8243
  %9288 = vmatprep.subr.bf16.mxu0 %v8236
  %9289 = vmatpush2.bf16.msra.mxu0 %v8235
  %9290 = vmatprep.mubr.bf16.mxu0 %v5683
  %9291 = vmatmul.mubr.bf16.gmra.mxu0 %v5682
  %v9292 = vpop.f32.mrf.mxu0
  %v9293 = vadd.f32 %v9252, %v9292
  %v9294 = vpop.f32.mrf.mxu0
  %v9295 = vadd.f32 %v9254, %v9294
  %v9296 = vpop.f32.mrf.mxu0
  %v9297 = vpop.f32.mrf.mxu0
  %9298 = vdwg.mxu0
  %9299 = vmatprep.subr.bf16.mxu0 %v7846
  %9300 = vmatpush1.bf16.msra.mxu0 %v7845
  %9301 = vmatprep.subr.bf16.mxu0 %v7838
  %9302 = vmatpush1.bf16.msra.mxu0 %v7837
  %9303 = vmatprep.subr.bf16.mxu0 %v7830
  %9304 = vmatpush1.bf16.msra.mxu0 %v7829
  %9305 = vmatprep.subr.bf16.mxu0 %v7822
  %9306 = vmatpush1.bf16.msra.mxu0 %v7821
  %9307 = vmatprep.subr.bf16.mxu0 %v7814
  %9308 = vmatpush1.bf16.msra.mxu0 %v7813
  %9309 = vmatprep.subr.bf16.mxu0 %v7806
  %9310 = vmatpush1.bf16.msra.mxu0 %v7805
  %9311 = vmatprep.subr.bf16.mxu0 %v7798
  %9312 = vmatpush1.bf16.msra.mxu0 %v7797
  %9313 = vmatprep.subr.bf16.mxu0 %v7790
  %9314 = vmatpush1.bf16.msra.mxu0 %v7789
  %9315 = vmatprep.subr.bf16.mxu0 %v7910
  %9316 = vmatpush2.bf16.msra.mxu0 %v7909
  %9317 = vmatprep.subr.bf16.mxu0 %v7902
  %9318 = vmatpush2.bf16.msra.mxu0 %v7901
  %9319 = vmatprep.subr.bf16.mxu0 %v7894
  %9320 = vmatpush2.bf16.msra.mxu0 %v7893
  %9321 = vmatprep.subr.bf16.mxu0 %v7886
  %9322 = vmatpush2.bf16.msra.mxu0 %v7885
  %9323 = vmatprep.subr.bf16.mxu0 %v7878
  %9324 = vmatpush2.bf16.msra.mxu0 %v7877
  %9325 = vmatprep.subr.bf16.mxu0 %v7870
  %9326 = vmatpush2.bf16.msra.mxu0 %v7869
  %9327 = vmatprep.subr.bf16.mxu0 %v7862
  %9328 = vmatpush2.bf16.msra.mxu0 %v7861
  %9329 = vmatprep.subr.bf16.mxu0 %v7854
  %9330 = vmatpush2.bf16.msra.mxu0 %v7853
  %9331 = vmatprep.mubr.bf16.mxu0 %v5677
  %9332 = vmatmul.mubr.bf16.gmra.mxu0 %v5676
  %v9333 = vpop.f32.mrf.mxu0
  %v9334 = vadd.f32 %v6234, %v9333
  %v9335 = vpop.f32.mrf.mxu0
  %v9336 = vadd.f32 %v6238, %v9335
  %v9337 = vpop.f32.mrf.mxu0
  %v9338 = vpop.f32.mrf.mxu0
  %9339 = vdwg.mxu0
  %9340 = vmatprep.subr.bf16.mxu0 %v7974
  %9341 = vmatpush1.bf16.msra.mxu0 %v7973
  %9342 = vmatprep.subr.bf16.mxu0 %v7966
  %9343 = vmatpush1.bf16.msra.mxu0 %v7965
  %9344 = vmatprep.subr.bf16.mxu0 %v7958
  %9345 = vmatpush1.bf16.msra.mxu0 %v7957
  %9346 = vmatprep.subr.bf16.mxu0 %v7950
  %9347 = vmatpush1.bf16.msra.mxu0 %v7949
  %9348 = vmatprep.subr.bf16.mxu0 %v7942
  %9349 = vmatpush1.bf16.msra.mxu0 %v7941
  %9350 = vmatprep.subr.bf16.mxu0 %v7934
  %9351 = vmatpush1.bf16.msra.mxu0 %v7933
  %9352 = vmatprep.subr.bf16.mxu0 %v7926
  %9353 = vmatpush1.bf16.msra.mxu0 %v7925
  %9354 = vmatprep.subr.bf16.mxu0 %v7918
  %9355 = vmatpush1.bf16.msra.mxu0 %v7917
  %9356 = vmatprep.subr.bf16.mxu0 %v8038
  %9357 = vmatpush2.bf16.msra.mxu0 %v8037
  %9358 = vmatprep.subr.bf16.mxu0 %v8030
  %9359 = vmatpush2.bf16.msra.mxu0 %v8029
  %9360 = vmatprep.subr.bf16.mxu0 %v8022
  %9361 = vmatpush2.bf16.msra.mxu0 %v8021
  %9362 = vmatprep.subr.bf16.mxu0 %v8014
  %9363 = vmatpush2.bf16.msra.mxu0 %v8013
  %9364 = vmatprep.subr.bf16.mxu0 %v8006
  %9365 = vmatpush2.bf16.msra.mxu0 %v8005
  %9366 = vmatprep.subr.bf16.mxu0 %v7998
  %9367 = vmatpush2.bf16.msra.mxu0 %v7997
  %9368 = vmatprep.subr.bf16.mxu0 %v7990
  %9369 = vmatpush2.bf16.msra.mxu0 %v7989
  %9370 = vmatprep.subr.bf16.mxu0 %v7982
  %9371 = vmatpush2.bf16.msra.mxu0 %v7981
  %9372 = vmatprep.mubr.bf16.mxu0 %v5679
  %9373 = vmatmul.mubr.bf16.gmra.mxu0 %v5678
  %v9374 = vpop.f32.mrf.mxu0
  %v9375 = vadd.f32 %v9334, %v9374
  %v9376 = vpop.f32.mrf.mxu0
  %v9377 = vadd.f32 %v9336, %v9376
  %v9378 = vpop.f32.mrf.mxu0
  %v9379 = vpop.f32.mrf.mxu0
  %9380 = vdwg.mxu0
  %9381 = vmatprep.subr.bf16.mxu0 %v8102
  %9382 = vmatpush1.bf16.msra.mxu0 %v8101
  %9383 = vmatprep.subr.bf16.mxu0 %v8094
  %9384 = vmatpush1.bf16.msra.mxu0 %v8093
  %9385 = vmatprep.subr.bf16.mxu0 %v8086
  %9386 = vmatpush1.bf16.msra.mxu0 %v8085
  %9387 = vmatprep.subr.bf16.mxu0 %v8078
  %9388 = vmatpush1.bf16.msra.mxu0 %v8077
  %9389 = vmatprep.subr.bf16.mxu0 %v8070
  %9390 = vmatpush1.bf16.msra.mxu0 %v8069
  %9391 = vmatprep.subr.bf16.mxu0 %v8062
  %9392 = vmatpush1.bf16.msra.mxu0 %v8061
  %9393 = vmatprep.subr.bf16.mxu0 %v8054
  %9394 = vmatpush1.bf16.msra.mxu0 %v8053
  %9395 = vmatprep.subr.bf16.mxu0 %v8046
  %9396 = vmatpush1.bf16.msra.mxu0 %v8045
  %9397 = vmatprep.subr.bf16.mxu0 %v8166
  %9398 = vmatpush2.bf16.msra.mxu0 %v8165
  %9399 = vmatprep.subr.bf16.mxu0 %v8158
  %9400 = vmatpush2.bf16.msra.mxu0 %v8157
  %9401 = vmatprep.subr.bf16.mxu0 %v8150
  %9402 = vmatpush2.bf16.msra.mxu0 %v8149
  %9403 = vmatprep.subr.bf16.mxu0 %v8142
  %9404 = vmatpush2.bf16.msra.mxu0 %v8141
  %9405 = vmatprep.subr.bf16.mxu0 %v8134
  %9406 = vmatpush2.bf16.msra.mxu0 %v8133
  %9407 = vmatprep.subr.bf16.mxu0 %v8126
  %9408 = vmatpush2.bf16.msra.mxu0 %v8125
  %9409 = vmatprep.subr.bf16.mxu0 %v8118
  %9410 = vmatpush2.bf16.msra.mxu0 %v8117
  %9411 = vmatprep.subr.bf16.mxu0 %v8110
  %9412 = vmatpush2.bf16.msra.mxu0 %v8109
  %9413 = vmatprep.mubr.bf16.mxu0 %v5681
  %9414 = vmatmul.mubr.bf16.gmra.mxu0 %v5680
  %v9415 = vpop.f32.mrf.mxu0
  %v9416 = vadd.f32 %v9375, %v9415
  %v9417 = vpop.f32.mrf.mxu0
  %v9418 = vadd.f32 %v9377, %v9417
  %v9419 = vpop.f32.mrf.mxu0
  %v9420 = vpop.f32.mrf.mxu0
  %9421 = vdwg.mxu0
  %9422 = vmatprep.subr.bf16.mxu0 %v8230
  %9423 = vmatpush1.bf16.msra.mxu0 %v8229
  %9424 = vmatprep.subr.bf16.mxu0 %v8222
  %9425 = vmatpush1.bf16.msra.mxu0 %v8221
  %9426 = vmatprep.subr.bf16.mxu0 %v8214
  %9427 = vmatpush1.bf16.msra.mxu0 %v8213
  %9428 = vmatprep.subr.bf16.mxu0 %v8206
  %9429 = vmatpush1.bf16.msra.mxu0 %v8205
  %9430 = vmatprep.subr.bf16.mxu0 %v8198
  %9431 = vmatpush1.bf16.msra.mxu0 %v8197
  %9432 = vmatprep.subr.bf16.mxu0 %v8190
  %9433 = vmatpush1.bf16.msra.mxu0 %v8189
  %9434 = vmatprep.subr.bf16.mxu0 %v8182
  %9435 = vmatpush1.bf16.msra.mxu0 %v8181
  %9436 = vmatprep.subr.bf16.mxu0 %v8174
  %9437 = vmatpush1.bf16.msra.mxu0 %v8173
  %9438 = vmatprep.subr.bf16.mxu0 %v8294
  %9439 = vmatpush2.bf16.msra.mxu0 %v8293
  %9440 = vmatprep.subr.bf16.mxu0 %v8286
  %9441 = vmatpush2.bf16.msra.mxu0 %v8285
  %9442 = vmatprep.subr.bf16.mxu0 %v8278
  %9443 = vmatpush2.bf16.msra.mxu0 %v8277
  %9444 = vmatprep.subr.bf16.mxu0 %v8270
  %9445 = vmatpush2.bf16.msra.mxu0 %v8269
  %9446 = vmatprep.subr.bf16.mxu0 %v8262
  %9447 = vmatpush2.bf16.msra.mxu0 %v8261
  %9448 = vmatprep.subr.bf16.mxu0 %v8254
  %9449 = vmatpush2.bf16.msra.mxu0 %v8253
  %9450 = vmatprep.subr.bf16.mxu0 %v8246
  %9451 = vmatpush2.bf16.msra.mxu0 %v8245
  %9452 = vmatprep.subr.bf16.mxu0 %v8238
  %9453 = vmatpush2.bf16.msra.mxu0 %v8237
  %9454 = vmatprep.mubr.bf16.mxu0 %v5683
  %9455 = vmatmul.mubr.bf16.gmra.mxu0 %v5682
  %v9456 = vpop.f32.mrf.mxu0
  %v9457 = vadd.f32 %v9416, %v9456
  %v9458 = vpop.f32.mrf.mxu0
  %v9459 = vadd.f32 %v9418, %v9458
  %v9460 = vpop.f32.mrf.mxu0
  %v9461 = vpop.f32.mrf.mxu0
  %9462 = vdwg.mxu0
  %v9471 = vcombine.low %v8965, %v8967
  %v9472 = vcombine.low %v9129, %v9131
  %v9474 = vunpack.c.l.s4 1983009808
  %v9475 = vunpack.c.0.s8 %v9474
  %v9476 = vlaneseq
  %v9477 = vshrl.u32 %v9476, 7
  %v9478 = vsub.s32 %v9475, %v9477
  %v9479 = vrot.slane %v9471, %v9478
  %v9481 = vunpack.c.l.s4 1983009808
  %v9482 = vunpack.c.0.s8 %v9481
  %v9483 = vlaneseq
  %v9484 = vshrl.u32 %v9483, 7
  %v9485 = vsub.s32 %v9482, %v9484
  %v9486 = vrot.slane %v9472, %v9485
  %v9487 = vcombine.low %v9479, %v9486
  %v9488 = vcombine.low %v9293, %v9295
  %v9489 = vcombine.low %v9457, %v9459
  %v9491 = vunpack.c.l.s4 1983009808
  %v9492 = vunpack.c.0.s8 %v9491
  %v9493 = vlaneseq
  %v9494 = vshrl.u32 %v9493, 7
  %v9495 = vsub.s32 %v9492, %v9494
  %v9496 = vrot.slane %v9488, %v9495
  %v9498 = vunpack.c.l.s4 1983009808
  %v9499 = vunpack.c.0.s8 %v9498
  %v9500 = vlaneseq
  %v9501 = vshrl.u32 %v9500, 7
  %v9502 = vsub.s32 %v9499, %v9501
  %v9503 = vrot.slane %v9489, %v9502
  %v9504 = vcombine.low %v9496, %v9503
  %9507 = vst [vmem:[%s16] sm:$0xff] %v9487
  %9508 = vst [vmem:[%s16 + $0x8] sm:$0xff] %v9504
  %v9509 = vld [vmem:[%s9] sm:$0xff]
  %v9510 = vld [vmem:[%s9 + $0x8] sm:$0xff]
  %v9511 = vld [vmem:[%s9 + $0x10] sm:$0xff]
  %v9512 = vld [vmem:[%s9 + $0x18] sm:$0xff]
  %v9513 = vld [vmem:[%s9 + $0x20] sm:$0xff]
  %v9514 = vld [vmem:[%s9 + $0x28] sm:$0xff]
  %v9515 = vld [vmem:[%s9 + $0x30] sm:$0xff]
  %v9516 = vld [vmem:[%s9 + $0x38] sm:$0xff]
  %v9517 = vld [vmem:[%s9 + $0x40] sm:$0xff]
  %v9518 = vld [vmem:[%s9 + $0x48] sm:$0xff]
  %v9519 = vld [vmem:[%s9 + $0x50] sm:$0xff]
  %v9520 = vld [vmem:[%s9 + $0x58] sm:$0xff]
  %v9521 = vld [vmem:[%s9 + $0x60] sm:$0xff]
  %v9522 = vld [vmem:[%s9 + $0x68] sm:$0xff]
  %v9523 = vld [vmem:[%s9 + $0x70] sm:$0xff]
  %v9524 = vld [vmem:[%s9 + $0x78] sm:$0xff]
  %v9525 = vld [vmem:[%s9 + $0x80] sm:$0xff]
  %v9526 = vld [vmem:[%s9 + $0x88] sm:$0xff]
  %v9527 = vld [vmem:[%s9 + $0x90] sm:$0xff]
  %v9528 = vld [vmem:[%s9 + $0x98] sm:$0xff]
  %v9529 = vld [vmem:[%s9 + $0xa0] sm:$0xff]
  %v9530 = vld [vmem:[%s9 + $0xa8] sm:$0xff]
  %v9531 = vld [vmem:[%s9 + $0xb0] sm:$0xff]
  %v9532 = vld [vmem:[%s9 + $0xb8] sm:$0xff]
  %v9533 = vld [vmem:[%s9 + $0xc0] sm:$0xff]
  %v9534 = vld [vmem:[%s9 + $0xc8] sm:$0xff]
  %v9535 = vld [vmem:[%s9 + $0xd0] sm:$0xff]
  %v9536 = vld [vmem:[%s9 + $0xd8] sm:$0xff]
  %v9537 = vld [vmem:[%s9 + $0xe0] sm:$0xff]
  %v9538 = vld [vmem:[%s9 + $0xe8] sm:$0xff]
  %v9539 = vld [vmem:[%s9 + $0xf0] sm:$0xff]
  %v9540 = vld [vmem:[%s9 + $0xf8] sm:$0xff]
  %v9541 = vld [vmem:[%s10] sm:$0x3]
  %v9543 = vlaneseq
  %v9544 = vshrl.u32 %v9543, 7
  %v9545 = vsub.s32 0, %v9544
  %v9546 = vrot.slane %v9541, %v9545
  %v9547 = vlaneseq
  %v9548 = vshrl.u32 %v9547, 7
  %v9549 = vsub.s32 1, %v9548
  %v9550 = vrot.slane %v9541, %v9549
  %v9585 = vunpack.c.l.b16 %v9509
  %v9586 = vunpack.c.h.b16 %v9509
  %v9587 = vunpack.c.l.b16 %v9510
  %v9588 = vunpack.c.h.b16 %v9510
  %v9589 = vunpack.c.l.b16 %v9511
  %v9590 = vunpack.c.h.b16 %v9511
  %v9591 = vunpack.c.l.b16 %v9512
  %v9592 = vunpack.c.h.b16 %v9512
  %v9593 = vunpack.c.l.b16 %v9513
  %v9594 = vunpack.c.h.b16 %v9513
  %v9595 = vunpack.c.l.b16 %v9514
  %v9596 = vunpack.c.h.b16 %v9514
  %v9597 = vunpack.c.l.b16 %v9515
  %v9598 = vunpack.c.h.b16 %v9515
  %v9599 = vunpack.c.l.b16 %v9516
  %v9600 = vunpack.c.h.b16 %v9516
  %v9601 = vunpack.c.l.b16 %v9517
  %v9602 = vunpack.c.h.b16 %v9517
  %v9603 = vunpack.c.l.b16 %v9518
  %v9604 = vunpack.c.h.b16 %v9518
  %v9605 = vunpack.c.l.b16 %v9519
  %v9606 = vunpack.c.h.b16 %v9519
  %v9607 = vunpack.c.l.b16 %v9520
  %v9608 = vunpack.c.h.b16 %v9520
  %v9609 = vunpack.c.l.b16 %v9521
  %v9610 = vunpack.c.h.b16 %v9521
  %v9611 = vunpack.c.l.b16 %v9522
  %v9612 = vunpack.c.h.b16 %v9522
  %v9613 = vunpack.c.l.b16 %v9523
  %v9614 = vunpack.c.h.b16 %v9523
  %v9615 = vunpack.c.l.b16 %v9524
  %v9616 = vunpack.c.h.b16 %v9524
  %v9617 = vunpack.c.l.b16 %v9525
  %v9618 = vunpack.c.h.b16 %v9525
  %v9619 = vunpack.c.l.b16 %v9526
  %v9620 = vunpack.c.h.b16 %v9526
  %v9621 = vunpack.c.l.b16 %v9527
  %v9622 = vunpack.c.h.b16 %v9527
  %v9623 = vunpack.c.l.b16 %v9528
  %v9624 = vunpack.c.h.b16 %v9528
  %v9625 = vunpack.c.l.b16 %v9529
  %v9626 = vunpack.c.h.b16 %v9529
  %v9627 = vunpack.c.l.b16 %v9530
  %v9628 = vunpack.c.h.b16 %v9530
  %v9629 = vunpack.c.l.b16 %v9531
  %v9630 = vunpack.c.h.b16 %v9531
  %v9631 = vunpack.c.l.b16 %v9532
  %v9632 = vunpack.c.h.b16 %v9532
  %v9633 = vunpack.c.l.b16 %v9533
  %v9634 = vunpack.c.h.b16 %v9533
  %v9635 = vunpack.c.l.b16 %v9534
  %v9636 = vunpack.c.h.b16 %v9534
  %v9637 = vunpack.c.l.b16 %v9535
  %v9638 = vunpack.c.h.b16 %v9535
  %v9639 = vunpack.c.l.b16 %v9536
  %v9640 = vunpack.c.h.b16 %v9536
  %v9641 = vunpack.c.l.b16 %v9537
  %v9642 = vunpack.c.h.b16 %v9537
  %v9643 = vunpack.c.l.b16 %v9538
  %v9644 = vunpack.c.h.b16 %v9538
  %v9645 = vunpack.c.l.b16 %v9539
  %v9646 = vunpack.c.h.b16 %v9539
  %v9647 = vunpack.c.l.b16 %v9540
  %v9648 = vunpack.c.h.b16 %v9540
  %v9649 = vpack.c.b16 %v9587, %v9585
  %v9650 = vpack.c.b16 %v9588, %v9586
  %v9651 = vpack.c.b16 %v9591, %v9589
  %v9652 = vpack.c.b16 %v9592, %v9590
  %v9653 = vpack.c.b16 %v9595, %v9593
  %v9654 = vpack.c.b16 %v9596, %v9594
  %v9655 = vpack.c.b16 %v9599, %v9597
  %v9656 = vpack.c.b16 %v9600, %v9598
  %v9657 = vpack.c.b16 %v9603, %v9601
  %v9658 = vpack.c.b16 %v9604, %v9602
  %v9659 = vpack.c.b16 %v9607, %v9605
  %v9660 = vpack.c.b16 %v9608, %v9606
  %v9661 = vpack.c.b16 %v9611, %v9609
  %v9662 = vpack.c.b16 %v9612, %v9610
  %v9663 = vpack.c.b16 %v9615, %v9613
  %v9664 = vpack.c.b16 %v9616, %v9614
  %v9665 = vpack.c.b16 %v9619, %v9617
  %v9666 = vpack.c.b16 %v9620, %v9618
  %v9667 = vpack.c.b16 %v9623, %v9621
  %v9668 = vpack.c.b16 %v9624, %v9622
  %v9669 = vpack.c.b16 %v9627, %v9625
  %v9670 = vpack.c.b16 %v9628, %v9626
  %v9671 = vpack.c.b16 %v9631, %v9629
  %v9672 = vpack.c.b16 %v9632, %v9630
  %v9673 = vpack.c.b16 %v9635, %v9633
  %v9674 = vpack.c.b16 %v9636, %v9634
  %v9675 = vpack.c.b16 %v9639, %v9637
  %v9676 = vpack.c.b16 %v9640, %v9638
  %v9677 = vpack.c.b16 %v9643, %v9641
  %v9678 = vpack.c.b16 %v9644, %v9642
  %v9679 = vpack.c.b16 %v9647, %v9645
  %v9680 = vpack.c.b16 %v9648, %v9646
  %9713 = vmatprep.subr.bf16.mxu0 %v9664
  %9714 = vmatpush1.bf16.msra.mxu0 %v9663
  %9715 = vmatprep.subr.bf16.mxu0 %v9662
  %9716 = vmatpush1.bf16.msra.mxu0 %v9661
  %9717 = vmatprep.subr.bf16.mxu0 %v9660
  %9718 = vmatpush1.bf16.msra.mxu0 %v9659
  %9719 = vmatprep.subr.bf16.mxu0 %v9658
  %9720 = vmatpush1.bf16.msra.mxu0 %v9657
  %9721 = vmatprep.subr.bf16.mxu0 %v9656
  %9722 = vmatpush1.bf16.msra.mxu0 %v9655
  %9723 = vmatprep.subr.bf16.mxu0 %v9654
  %9724 = vmatpush1.bf16.msra.mxu0 %v9653
  %9725 = vmatprep.subr.bf16.mxu0 %v9652
  %9726 = vmatpush1.bf16.msra.mxu0 %v9651
  %9727 = vmatprep.subr.bf16.mxu0 %v9650
  %9728 = vmatpush1.bf16.msra.mxu0 %v9649
  %9729 = vmatprep.subr.bf16.mxu0 %v9680
  %9730 = vmatpush2.bf16.msra.mxu0 %v9679
  %9731 = vmatprep.subr.bf16.mxu0 %v9678
  %9732 = vmatpush2.bf16.msra.mxu0 %v9677
  %9733 = vmatprep.subr.bf16.mxu0 %v9676
  %9734 = vmatpush2.bf16.msra.mxu0 %v9675
  %9735 = vmatprep.subr.bf16.mxu0 %v9674
  %9736 = vmatpush2.bf16.msra.mxu0 %v9673
  %9737 = vmatprep.subr.bf16.mxu0 %v9672
  %9738 = vmatpush2.bf16.msra.mxu0 %v9671
  %9739 = vmatprep.subr.bf16.mxu0 %v9670
  %9740 = vmatpush2.bf16.msra.mxu0 %v9669
  %9741 = vmatprep.subr.bf16.mxu0 %v9668
  %9742 = vmatpush2.bf16.msra.mxu0 %v9667
  %9743 = vmatprep.subr.bf16.mxu0 %v9666
  %9744 = vmatpush2.bf16.msra.mxu0 %v9665
  %9745 = vmatprep.mubr.bf16.mxu0 %v5685
  %9746 = vmatmul.mubr.bf16.gmra.mxu0 %v5684
  %v9747 = vpop.f32.mrf.mxu0
  %v9748 = vadd.f32 %v9546, %v9747
  %v9749 = vpop.f32.mrf.mxu0
  %v9750 = vadd.f32 %v9550, %v9749
  %v9751 = vpop.f32.mrf.mxu0
  %v9752 = vpop.f32.mrf.mxu0
  %9753 = vdwg.mxu0
  %v9756 = vcombine.low %v9748, %v9750
  %v9758 = vunpack.c.l.s4 1983009808
  %v9759 = vunpack.c.0.s8 %v9758
  %v9760 = vlaneseq
  %v9761 = vshrl.u32 %v9760, 7
  %v9762 = vsub.s32 %v9759, %v9761
  %v9763 = vrot.slane %v9756, %v9762
  %9765 = vst [vmem:[%s17] sm:$0xf] %v9763
  %v9766 = vld [vmem:[%s11] sm:$0xff]
  %v9767 = vld [vmem:[%s11 + $0x8] sm:$0xff]
  %v9768 = vld [vmem:[%s11 + $0x10] sm:$0xff]
  %v9769 = vld [vmem:[%s11 + $0x18] sm:$0xf]
  %v9770 = vld [vmem:[%s11 + $0x1c] sm:$0xff]
  %v9771 = vld [vmem:[%s11 + $0x24] sm:$0xff]
  %v9772 = vld [vmem:[%s11 + $0x2c] sm:$0xff]
  %v9773 = vld [vmem:[%s11 + $0x34] sm:$0xf]
  %v9774 = vld [vmem:[%s11 + $0x38] sm:$0xff]
  %v9775 = vld [vmem:[%s11 + $0x40] sm:$0xff]
  %v9776 = vld [vmem:[%s11 + $0x48] sm:$0xff]
  %v9777 = vld [vmem:[%s11 + $0x50] sm:$0xf]
  %v9778 = vld [vmem:[%s11 + $0x54] sm:$0xff]
  %v9779 = vld [vmem:[%s11 + $0x5c] sm:$0xff]
  %v9780 = vld [vmem:[%s11 + $0x64] sm:$0xff]
  %v9781 = vld [vmem:[%s11 + $0x6c] sm:$0xf]
  %v9782 = vld [vmem:[%s11 + $0x70] sm:$0xff]
  %v9783 = vld [vmem:[%s11 + $0x78] sm:$0xff]
  %v9784 = vld [vmem:[%s11 + $0x80] sm:$0xff]
  %v9785 = vld [vmem:[%s11 + $0x88] sm:$0xf]
  %v9786 = vld [vmem:[%s11 + $0x8c] sm:$0xff]
  %v9787 = vld [vmem:[%s11 + $0x94] sm:$0xff]
  %v9788 = vld [vmem:[%s11 + $0x9c] sm:$0xff]
  %v9789 = vld [vmem:[%s11 + $0xa4] sm:$0xf]
  %v9790 = vld [vmem:[%s11 + $0xa8] sm:$0xff]
  %v9791 = vld [vmem:[%s11 + $0xb0] sm:$0xff]
  %v9792 = vld [vmem:[%s11 + $0xb8] sm:$0xff]
  %v9793 = vld [vmem:[%s11 + $0xc0] sm:$0xf]
  %v9794 = vld [vmem:[%s11 + $0xc4] sm:$0xff]
  %v9795 = vld [vmem:[%s11 + $0xcc] sm:$0xff]
  %v9796 = vld [vmem:[%s11 + $0xd4] sm:$0xff]
  %v9797 = vld [vmem:[%s11 + $0xdc] sm:$0xf]
  %v9798 = vld [vmem:[%s11 + $0xe0] sm:$0xff]
  %v9799 = vld [vmem:[%s11 + $0xe8] sm:$0xff]
  %v9800 = vld [vmem:[%s11 + $0xf0] sm:$0xff]
  %v9801 = vld [vmem:[%s11 + $0xf8] sm:$0xf]
  %v9802 = vld [vmem:[%s11 + $0xfc] sm:$0xff]
  %v9803 = vld [vmem:[%s11 + $0x104] sm:$0xff]
  %v9804 = vld [vmem:[%s11 + $0x10c] sm:$0xff]
  %v9805 = vld [vmem:[%s11 + $0x114] sm:$0xf]
  %v9806 = vld [vmem:[%s11 + $0x118] sm:$0xff]
  %v9807 = vld [vmem:[%s11 + $0x120] sm:$0xff]
  %v9808 = vld [vmem:[%s11 + $0x128] sm:$0xff]
  %v9809 = vld [vmem:[%s11 + $0x130] sm:$0xf]
  %v9810 = vld [vmem:[%s11 + $0x134] sm:$0xff]
  %v9811 = vld [vmem:[%s11 + $0x13c] sm:$0xff]
  %v9812 = vld [vmem:[%s11 + $0x144] sm:$0xff]
  %v9813 = vld [vmem:[%s11 + $0x14c] sm:$0xf]
  %v9814 = vld [vmem:[%s11 + $0x150] sm:$0xff]
  %v9815 = vld [vmem:[%s11 + $0x158] sm:$0xff]
  %v9816 = vld [vmem:[%s11 + $0x160] sm:$0xff]
  %v9817 = vld [vmem:[%s11 + $0x168] sm:$0xf]
  %v9818 = vld [vmem:[%s11 + $0x16c] sm:$0xff]
  %v9819 = vld [vmem:[%s11 + $0x174] sm:$0xff]
  %v9820 = vld [vmem:[%s11 + $0x17c] sm:$0xff]
  %v9821 = vld [vmem:[%s11 + $0x184] sm:$0xf]
  %v9822 = vld [vmem:[%s11 + $0x188] sm:$0xff]
  %v9823 = vld [vmem:[%s11 + $0x190] sm:$0xff]
  %v9824 = vld [vmem:[%s11 + $0x198] sm:$0xff]
  %v9825 = vld [vmem:[%s11 + $0x1a0] sm:$0xf]
  %v9826 = vld [vmem:[%s11 + $0x1a4] sm:$0xff]
  %v9827 = vld [vmem:[%s11 + $0x1ac] sm:$0xff]
  %v9828 = vld [vmem:[%s11 + $0x1b4] sm:$0xff]
  %v9829 = vld [vmem:[%s11 + $0x1bc] sm:$0xf]
  %v9830 = vld [vmem:[%s11 + $0x1c0] sm:$0xff]
  %v9831 = vld [vmem:[%s11 + $0x1c8] sm:$0xff]
  %v9832 = vld [vmem:[%s11 + $0x1d0] sm:$0xff]
  %v9833 = vld [vmem:[%s11 + $0x1d8] sm:$0xf]
  %v9834 = vld [vmem:[%s11 + $0x1dc] sm:$0xff]
  %v9835 = vld [vmem:[%s11 + $0x1e4] sm:$0xff]
  %v9836 = vld [vmem:[%s11 + $0x1ec] sm:$0xff]
  %v9837 = vld [vmem:[%s11 + $0x1f4] sm:$0xf]
  %v9838 = vld [vmem:[%s11 + $0x1f8] sm:$0xff]
  %v9839 = vld [vmem:[%s11 + $0x200] sm:$0xff]
  %v9840 = vld [vmem:[%s11 + $0x208] sm:$0xff]
  %v9841 = vld [vmem:[%s11 + $0x210] sm:$0xf]
  %v9842 = vld [vmem:[%s11 + $0x214] sm:$0xff]
  %v9843 = vld [vmem:[%s11 + $0x21c] sm:$0xff]
  %v9844 = vld [vmem:[%s11 + $0x224] sm:$0xff]
  %v9845 = vld [vmem:[%s11 + $0x22c] sm:$0xf]
  %v9846 = vld [vmem:[%s11 + $0x230] sm:$0xff]
  %v9847 = vld [vmem:[%s11 + $0x238] sm:$0xff]
  %v9848 = vld [vmem:[%s11 + $0x240] sm:$0xff]
  %v9849 = vld [vmem:[%s11 + $0x248] sm:$0xf]
  %v9850 = vld [vmem:[%s11 + $0x24c] sm:$0xff]
  %v9851 = vld [vmem:[%s11 + $0x254] sm:$0xff]
  %v9852 = vld [vmem:[%s11 + $0x25c] sm:$0xff]
  %v9853 = vld [vmem:[%s11 + $0x264] sm:$0xf]
  %v9854 = vld [vmem:[%s11 + $0x268] sm:$0xff]
  %v9855 = vld [vmem:[%s11 + $0x270] sm:$0xff]
  %v9856 = vld [vmem:[%s11 + $0x278] sm:$0xff]
  %v9857 = vld [vmem:[%s11 + $0x280] sm:$0xf]
  %v9858 = vld [vmem:[%s11 + $0x284] sm:$0xff]
  %v9859 = vld [vmem:[%s11 + $0x28c] sm:$0xff]
  %v9860 = vld [vmem:[%s11 + $0x294] sm:$0xff]
  %v9861 = vld [vmem:[%s11 + $0x29c] sm:$0xf]
  %v9862 = vld [vmem:[%s11 + $0x2a0] sm:$0xff]
  %v9863 = vld [vmem:[%s11 + $0x2a8] sm:$0xff]
  %v9864 = vld [vmem:[%s11 + $0x2b0] sm:$0xff]
  %v9865 = vld [vmem:[%s11 + $0x2b8] sm:$0xf]
  %v9866 = vld [vmem:[%s11 + $0x2bc] sm:$0xff]
  %v9867 = vld [vmem:[%s11 + $0x2c4] sm:$0xff]
  %v9868 = vld [vmem:[%s11 + $0x2cc] sm:$0xff]
  %v9869 = vld [vmem:[%s11 + $0x2d4] sm:$0xf]
  %v9870 = vld [vmem:[%s11 + $0x2d8] sm:$0xff]
  %v9871 = vld [vmem:[%s11 + $0x2e0] sm:$0xff]
  %v9872 = vld [vmem:[%s11 + $0x2e8] sm:$0xff]
  %v9873 = vld [vmem:[%s11 + $0x2f0] sm:$0xf]
  %v9874 = vld [vmem:[%s11 + $0x2f4] sm:$0xff]
  %v9875 = vld [vmem:[%s11 + $0x2fc] sm:$0xff]
  %v9876 = vld [vmem:[%s11 + $0x304] sm:$0xff]
  %v9877 = vld [vmem:[%s11 + $0x30c] sm:$0xf]
  %v9878 = vld [vmem:[%s11 + $0x310] sm:$0xff]
  %v9879 = vld [vmem:[%s11 + $0x318] sm:$0xff]
  %v9880 = vld [vmem:[%s11 + $0x320] sm:$0xff]
  %v9881 = vld [vmem:[%s11 + $0x328] sm:$0xf]
  %v9882 = vld [vmem:[%s11 + $0x32c] sm:$0xff]
  %v9883 = vld [vmem:[%s11 + $0x334] sm:$0xff]
  %v9884 = vld [vmem:[%s11 + $0x33c] sm:$0xff]
  %v9885 = vld [vmem:[%s11 + $0x344] sm:$0xf]
  %v9886 = vld [vmem:[%s11 + $0x348] sm:$0xff]
  %v9887 = vld [vmem:[%s11 + $0x350] sm:$0xff]
  %v9888 = vld [vmem:[%s11 + $0x358] sm:$0xff]
  %v9889 = vld [vmem:[%s11 + $0x360] sm:$0xf]
  %v9890 = vld [vmem:[%s11 + $0x364] sm:$0xff]
  %v9891 = vld [vmem:[%s11 + $0x36c] sm:$0xff]
  %v9892 = vld [vmem:[%s11 + $0x374] sm:$0xff]
  %v9893 = vld [vmem:[%s11 + $0x37c] sm:$0xf]
  %v9894 = vld [vmem:[%s11 + $0x380] sm:$0xff]
  %v9895 = vld [vmem:[%s11 + $0x388] sm:$0xff]
  %v9896 = vld [vmem:[%s11 + $0x390] sm:$0xff]
  %v9897 = vld [vmem:[%s11 + $0x398] sm:$0xf]
  %v9898 = vld [vmem:[%s11 + $0x39c] sm:$0xff]
  %v9899 = vld [vmem:[%s11 + $0x3a4] sm:$0xff]
  %v9900 = vld [vmem:[%s11 + $0x3ac] sm:$0xff]
  %v9901 = vld [vmem:[%s11 + $0x3b4] sm:$0xf]
  %v9902 = vld [vmem:[%s11 + $0x3b8] sm:$0xff]
  %v9903 = vld [vmem:[%s11 + $0x3c0] sm:$0xff]
  %v9904 = vld [vmem:[%s11 + $0x3c8] sm:$0xff]
  %v9905 = vld [vmem:[%s11 + $0x3d0] sm:$0xf]
  %v9906 = vld [vmem:[%s11 + $0x3d4] sm:$0xff]
  %v9907 = vld [vmem:[%s11 + $0x3dc] sm:$0xff]
  %v9908 = vld [vmem:[%s11 + $0x3e4] sm:$0xff]
  %v9909 = vld [vmem:[%s11 + $0x3ec] sm:$0xf]
  %v9910 = vld [vmem:[%s11 + $0x3f0] sm:$0xff]
  %v9911 = vld [vmem:[%s11 + $0x3f8] sm:$0xff]
  %v9912 = vld [vmem:[%s11 + $0x400] sm:$0xff]
  %v9913 = vld [vmem:[%s11 + $0x408] sm:$0xf]
  %v9914 = vld [vmem:[%s11 + $0x40c] sm:$0xff]
  %v9915 = vld [vmem:[%s11 + $0x414] sm:$0xff]
  %v9916 = vld [vmem:[%s11 + $0x41c] sm:$0xff]
  %v9917 = vld [vmem:[%s11 + $0x424] sm:$0xf]
  %v9918 = vld [vmem:[%s11 + $0x428] sm:$0xff]
  %v9919 = vld [vmem:[%s11 + $0x430] sm:$0xff]
  %v9920 = vld [vmem:[%s11 + $0x438] sm:$0xff]
  %v9921 = vld [vmem:[%s11 + $0x440] sm:$0xf]
  %v9922 = vld [vmem:[%s11 + $0x444] sm:$0xff]
  %v9923 = vld [vmem:[%s11 + $0x44c] sm:$0xff]
  %v9924 = vld [vmem:[%s11 + $0x454] sm:$0xff]
  %v9925 = vld [vmem:[%s11 + $0x45c] sm:$0xf]
  %v9926 = vld [vmem:[%s11 + $0x460] sm:$0xff]
  %v9927 = vld [vmem:[%s11 + $0x468] sm:$0xff]
  %v9928 = vld [vmem:[%s11 + $0x470] sm:$0xff]
  %v9929 = vld [vmem:[%s11 + $0x478] sm:$0xf]
  %v9930 = vld [vmem:[%s11 + $0x47c] sm:$0xff]
  %v9931 = vld [vmem:[%s11 + $0x484] sm:$0xff]
  %v9932 = vld [vmem:[%s11 + $0x48c] sm:$0xff]
  %v9933 = vld [vmem:[%s11 + $0x494] sm:$0xf]
  %v9934 = vld [vmem:[%s11 + $0x498] sm:$0xff]
  %v9935 = vld [vmem:[%s11 + $0x4a0] sm:$0xff]
  %v9936 = vld [vmem:[%s11 + $0x4a8] sm:$0xff]
  %v9937 = vld [vmem:[%s11 + $0x4b0] sm:$0xf]
  %v9938 = vld [vmem:[%s11 + $0x4b4] sm:$0xff]
  %v9939 = vld [vmem:[%s11 + $0x4bc] sm:$0xff]
  %v9940 = vld [vmem:[%s11 + $0x4c4] sm:$0xff]
  %v9941 = vld [vmem:[%s11 + $0x4cc] sm:$0xf]
  %v9942 = vld [vmem:[%s11 + $0x4d0] sm:$0xff]
  %v9943 = vld [vmem:[%s11 + $0x4d8] sm:$0xff]
  %v9944 = vld [vmem:[%s11 + $0x4e0] sm:$0xff]
  %v9945 = vld [vmem:[%s11 + $0x4e8] sm:$0xf]
  %v9946 = vld [vmem:[%s11 + $0x4ec] sm:$0xff]
  %v9947 = vld [vmem:[%s11 + $0x4f4] sm:$0xff]
  %v9948 = vld [vmem:[%s11 + $0x4fc] sm:$0xff]
  %v9949 = vld [vmem:[%s11 + $0x504] sm:$0xf]
  %v9950 = vld [vmem:[%s11 + $0x508] sm:$0xff]
  %v9951 = vld [vmem:[%s11 + $0x510] sm:$0xff]
  %v9952 = vld [vmem:[%s11 + $0x518] sm:$0xff]
  %v9953 = vld [vmem:[%s11 + $0x520] sm:$0xf]
  %v9954 = vld [vmem:[%s11 + $0x524] sm:$0xff]
  %v9955 = vld [vmem:[%s11 + $0x52c] sm:$0xff]
  %v9956 = vld [vmem:[%s11 + $0x534] sm:$0xff]
  %v9957 = vld [vmem:[%s11 + $0x53c] sm:$0xf]
  %v9958 = vld [vmem:[%s11 + $0x540] sm:$0xff]
  %v9959 = vld [vmem:[%s11 + $0x548] sm:$0xff]
  %v9960 = vld [vmem:[%s11 + $0x550] sm:$0xff]
  %v9961 = vld [vmem:[%s11 + $0x558] sm:$0xf]
  %v9962 = vld [vmem:[%s11 + $0x55c] sm:$0xff]
  %v9963 = vld [vmem:[%s11 + $0x564] sm:$0xff]
  %v9964 = vld [vmem:[%s11 + $0x56c] sm:$0xff]
  %v9965 = vld [vmem:[%s11 + $0x574] sm:$0xf]
  %v9966 = vld [vmem:[%s11 + $0x578] sm:$0xff]
  %v9967 = vld [vmem:[%s11 + $0x580] sm:$0xff]
  %v9968 = vld [vmem:[%s11 + $0x588] sm:$0xff]
  %v9969 = vld [vmem:[%s11 + $0x590] sm:$0xf]
  %v9970 = vld [vmem:[%s11 + $0x594] sm:$0xff]
  %v9971 = vld [vmem:[%s11 + $0x59c] sm:$0xff]
  %v9972 = vld [vmem:[%s11 + $0x5a4] sm:$0xff]
  %v9973 = vld [vmem:[%s11 + $0x5ac] sm:$0xf]
  %v9974 = vld [vmem:[%s11 + $0x5b0] sm:$0xff]
  %v9975 = vld [vmem:[%s11 + $0x5b8] sm:$0xff]
  %v9976 = vld [vmem:[%s11 + $0x5c0] sm:$0xff]
  %v9977 = vld [vmem:[%s11 + $0x5c8] sm:$0xf]
  %v9978 = vld [vmem:[%s11 + $0x5cc] sm:$0xff]
  %v9979 = vld [vmem:[%s11 + $0x5d4] sm:$0xff]
  %v9980 = vld [vmem:[%s11 + $0x5dc] sm:$0xff]
  %v9981 = vld [vmem:[%s11 + $0x5e4] sm:$0xf]
  %v9982 = vld [vmem:[%s11 + $0x5e8] sm:$0xff]
  %v9983 = vld [vmem:[%s11 + $0x5f0] sm:$0xff]
  %v9984 = vld [vmem:[%s11 + $0x5f8] sm:$0xff]
  %v9985 = vld [vmem:[%s11 + $0x600] sm:$0xf]
  %v9986 = vld [vmem:[%s11 + $0x604] sm:$0xff]
  %v9987 = vld [vmem:[%s11 + $0x60c] sm:$0xff]
  %v9988 = vld [vmem:[%s11 + $0x614] sm:$0xff]
  %v9989 = vld [vmem:[%s11 + $0x61c] sm:$0xf]
  %v9990 = vld [vmem:[%s11 + $0x620] sm:$0xff]
  %v9991 = vld [vmem:[%s11 + $0x628] sm:$0xff]
  %v9992 = vld [vmem:[%s11 + $0x630] sm:$0xff]
  %v9993 = vld [vmem:[%s11 + $0x638] sm:$0xf]
  %v9994 = vld [vmem:[%s11 + $0x63c] sm:$0xff]
  %v9995 = vld [vmem:[%s11 + $0x644] sm:$0xff]
  %v9996 = vld [vmem:[%s11 + $0x64c] sm:$0xff]
  %v9997 = vld [vmem:[%s11 + $0x654] sm:$0xf]
  %v9998 = vld [vmem:[%s11 + $0x658] sm:$0xff]
  %v9999 = vld [vmem:[%s11 + $0x660] sm:$0xff]
  %v10000 = vld [vmem:[%s11 + $0x668] sm:$0xff]
  %v10001 = vld [vmem:[%s11 + $0x670] sm:$0xf]
  %v10002 = vld [vmem:[%s11 + $0x674] sm:$0xff]
  %v10003 = vld [vmem:[%s11 + $0x67c] sm:$0xff]
  %v10004 = vld [vmem:[%s11 + $0x684] sm:$0xff]
  %v10005 = vld [vmem:[%s11 + $0x68c] sm:$0xf]
  %v10006 = vld [vmem:[%s11 + $0x690] sm:$0xff]
  %v10007 = vld [vmem:[%s11 + $0x698] sm:$0xff]
  %v10008 = vld [vmem:[%s11 + $0x6a0] sm:$0xff]
  %v10009 = vld [vmem:[%s11 + $0x6a8] sm:$0xf]
  %v10010 = vld [vmem:[%s11 + $0x6ac] sm:$0xff]
  %v10011 = vld [vmem:[%s11 + $0x6b4] sm:$0xff]
  %v10012 = vld [vmem:[%s11 + $0x6bc] sm:$0xff]
  %v10013 = vld [vmem:[%s11 + $0x6c4] sm:$0xf]
  %v10014 = vld [vmem:[%s11 + $0x6c8] sm:$0xff]
  %v10015 = vld [vmem:[%s11 + $0x6d0] sm:$0xff]
  %v10016 = vld [vmem:[%s11 + $0x6d8] sm:$0xff]
  %v10017 = vld [vmem:[%s11 + $0x6e0] sm:$0xf]
  %v10018 = vld [vmem:[%s11 + $0x6e4] sm:$0xff]
  %v10019 = vld [vmem:[%s11 + $0x6ec] sm:$0xff]
  %v10020 = vld [vmem:[%s11 + $0x6f4] sm:$0xff]
  %v10021 = vld [vmem:[%s11 + $0x6fc] sm:$0xf]
  %v10022 = vld [vmem:[%s11 + $0x700] sm:$0xff]
  %v10023 = vld [vmem:[%s11 + $0x708] sm:$0xff]
  %v10024 = vld [vmem:[%s11 + $0x710] sm:$0xff]
  %v10025 = vld [vmem:[%s11 + $0x718] sm:$0xf]
  %v10026 = vld [vmem:[%s11 + $0x71c] sm:$0xff]
  %v10027 = vld [vmem:[%s11 + $0x724] sm:$0xff]
  %v10028 = vld [vmem:[%s11 + $0x72c] sm:$0xff]
  %v10029 = vld [vmem:[%s11 + $0x734] sm:$0xf]
  %v10030 = vld [vmem:[%s11 + $0x738] sm:$0xff]
  %v10031 = vld [vmem:[%s11 + $0x740] sm:$0xff]
  %v10032 = vld [vmem:[%s11 + $0x748] sm:$0xff]
  %v10033 = vld [vmem:[%s11 + $0x750] sm:$0xf]
  %v10034 = vld [vmem:[%s11 + $0x754] sm:$0xff]
  %v10035 = vld [vmem:[%s11 + $0x75c] sm:$0xff]
  %v10036 = vld [vmem:[%s11 + $0x764] sm:$0xff]
  %v10037 = vld [vmem:[%s11 + $0x76c] sm:$0xf]
  %v10038 = vld [vmem:[%s11 + $0x770] sm:$0xff]
  %v10039 = vld [vmem:[%s11 + $0x778] sm:$0xff]
  %v10040 = vld [vmem:[%s11 + $0x780] sm:$0xff]
  %v10041 = vld [vmem:[%s11 + $0x788] sm:$0xf]
  %v10042 = vld [vmem:[%s11 + $0x78c] sm:$0xff]
  %v10043 = vld [vmem:[%s11 + $0x794] sm:$0xff]
  %v10044 = vld [vmem:[%s11 + $0x79c] sm:$0xff]
  %v10045 = vld [vmem:[%s11 + $0x7a4] sm:$0xf]
  %v10046 = vld [vmem:[%s11 + $0x7a8] sm:$0xff]
  %v10047 = vld [vmem:[%s11 + $0x7b0] sm:$0xff]
  %v10048 = vld [vmem:[%s11 + $0x7b8] sm:$0xff]
  %v10049 = vld [vmem:[%s11 + $0x7c0] sm:$0xf]
  %v10050 = vld [vmem:[%s11 + $0x7c4] sm:$0xff]
  %v10051 = vld [vmem:[%s11 + $0x7cc] sm:$0xff]
  %v10052 = vld [vmem:[%s11 + $0x7d4] sm:$0xff]
  %v10053 = vld [vmem:[%s11 + $0x7dc] sm:$0xf]
  %v10054 = vld [vmem:[%s11 + $0x7e0] sm:$0xff]
  %v10055 = vld [vmem:[%s11 + $0x7e8] sm:$0xff]
  %v10056 = vld [vmem:[%s11 + $0x7f0] sm:$0xff]
  %v10057 = vld [vmem:[%s11 + $0x7f8] sm:$0xf]
  %v10058 = vld [vmem:[%s11 + $0x7fc] sm:$0xff]
  %v10059 = vld [vmem:[%s11 + $0x804] sm:$0xff]
  %v10060 = vld [vmem:[%s11 + $0x80c] sm:$0xff]
  %v10061 = vld [vmem:[%s11 + $0x814] sm:$0xf]
  %v10062 = vld [vmem:[%s11 + $0x818] sm:$0xff]
  %v10063 = vld [vmem:[%s11 + $0x820] sm:$0xff]
  %v10064 = vld [vmem:[%s11 + $0x828] sm:$0xff]
  %v10065 = vld [vmem:[%s11 + $0x830] sm:$0xf]
  %v10066 = vld [vmem:[%s11 + $0x834] sm:$0xff]
  %v10067 = vld [vmem:[%s11 + $0x83c] sm:$0xff]
  %v10068 = vld [vmem:[%s11 + $0x844] sm:$0xff]
  %v10069 = vld [vmem:[%s11 + $0x84c] sm:$0xf]
  %v10070 = vld [vmem:[%s11 + $0x850] sm:$0xff]
  %v10071 = vld [vmem:[%s11 + $0x858] sm:$0xff]
  %v10072 = vld [vmem:[%s11 + $0x860] sm:$0xff]
  %v10073 = vld [vmem:[%s11 + $0x868] sm:$0xf]
  %v10074 = vld [vmem:[%s11 + $0x86c] sm:$0xff]
  %v10075 = vld [vmem:[%s11 + $0x874] sm:$0xff]
  %v10076 = vld [vmem:[%s11 + $0x87c] sm:$0xff]
  %v10077 = vld [vmem:[%s11 + $0x884] sm:$0xf]
  %v10078 = vld [vmem:[%s11 + $0x888] sm:$0xff]
  %v10079 = vld [vmem:[%s11 + $0x890] sm:$0xff]
  %v10080 = vld [vmem:[%s11 + $0x898] sm:$0xff]
  %v10081 = vld [vmem:[%s11 + $0x8a0] sm:$0xf]
  %v10082 = vld [vmem:[%s11 + $0x8a4] sm:$0xff]
  %v10083 = vld [vmem:[%s11 + $0x8ac] sm:$0xff]
  %v10084 = vld [vmem:[%s11 + $0x8b4] sm:$0xff]
  %v10085 = vld [vmem:[%s11 + $0x8bc] sm:$0xf]
  %v10086 = vld [vmem:[%s11 + $0x8c0] sm:$0xff]
  %v10087 = vld [vmem:[%s11 + $0x8c8] sm:$0xff]
  %v10088 = vld [vmem:[%s11 + $0x8d0] sm:$0xff]
  %v10089 = vld [vmem:[%s11 + $0x8d8] sm:$0xf]
  %v10090 = vld [vmem:[%s11 + $0x8dc] sm:$0xff]
  %v10091 = vld [vmem:[%s11 + $0x8e4] sm:$0xff]
  %v10092 = vld [vmem:[%s11 + $0x8ec] sm:$0xff]
  %v10093 = vld [vmem:[%s11 + $0x8f4] sm:$0xf]
  %v10094 = vld [vmem:[%s11 + $0x8f8] sm:$0xff]
  %v10095 = vld [vmem:[%s11 + $0x900] sm:$0xff]
  %v10096 = vld [vmem:[%s11 + $0x908] sm:$0xff]
  %v10097 = vld [vmem:[%s11 + $0x910] sm:$0xf]
  %v10098 = vld [vmem:[%s11 + $0x914] sm:$0xff]
  %v10099 = vld [vmem:[%s11 + $0x91c] sm:$0xff]
  %v10100 = vld [vmem:[%s11 + $0x924] sm:$0xff]
  %v10101 = vld [vmem:[%s11 + $0x92c] sm:$0xf]
  %v10102 = vld [vmem:[%s11 + $0x930] sm:$0xff]
  %v10103 = vld [vmem:[%s11 + $0x938] sm:$0xff]
  %v10104 = vld [vmem:[%s11 + $0x940] sm:$0xff]
  %v10105 = vld [vmem:[%s11 + $0x948] sm:$0xf]
  %v10106 = vld [vmem:[%s11 + $0x94c] sm:$0xff]
  %v10107 = vld [vmem:[%s11 + $0x954] sm:$0xff]
  %v10108 = vld [vmem:[%s11 + $0x95c] sm:$0xff]
  %v10109 = vld [vmem:[%s11 + $0x964] sm:$0xf]
  %v10110 = vld [vmem:[%s11 + $0x968] sm:$0xff]
  %v10111 = vld [vmem:[%s11 + $0x970] sm:$0xff]
  %v10112 = vld [vmem:[%s11 + $0x978] sm:$0xff]
  %v10113 = vld [vmem:[%s11 + $0x980] sm:$0xf]
  %v10114 = vld [vmem:[%s11 + $0x984] sm:$0xff]
  %v10115 = vld [vmem:[%s11 + $0x98c] sm:$0xff]
  %v10116 = vld [vmem:[%s11 + $0x994] sm:$0xff]
  %v10117 = vld [vmem:[%s11 + $0x99c] sm:$0xf]
  %v10118 = vld [vmem:[%s11 + $0x9a0] sm:$0xff]
  %v10119 = vld [vmem:[%s11 + $0x9a8] sm:$0xff]
  %v10120 = vld [vmem:[%s11 + $0x9b0] sm:$0xff]
  %v10121 = vld [vmem:[%s11 + $0x9b8] sm:$0xf]
  %v10122 = vld [vmem:[%s11 + $0x9bc] sm:$0xff]
  %v10123 = vld [vmem:[%s11 + $0x9c4] sm:$0xff]
  %v10124 = vld [vmem:[%s11 + $0x9cc] sm:$0xff]
  %v10125 = vld [vmem:[%s11 + $0x9d4] sm:$0xf]
  %v10126 = vld [vmem:[%s11 + $0x9d8] sm:$0xff]
  %v10127 = vld [vmem:[%s11 + $0x9e0] sm:$0xff]
  %v10128 = vld [vmem:[%s11 + $0x9e8] sm:$0xff]
  %v10129 = vld [vmem:[%s11 + $0x9f0] sm:$0xf]
  %v10130 = vld [vmem:[%s11 + $0x9f4] sm:$0xff]
  %v10131 = vld [vmem:[%s11 + $0x9fc] sm:$0xff]
  %v10132 = vld [vmem:[%s11 + $0xa04] sm:$0xff]
  %v10133 = vld [vmem:[%s11 + $0xa0c] sm:$0xf]
  %v10134 = vld [vmem:[%s11 + $0xa10] sm:$0xff]
  %v10135 = vld [vmem:[%s11 + $0xa18] sm:$0xff]
  %v10136 = vld [vmem:[%s11 + $0xa20] sm:$0xff]
  %v10137 = vld [vmem:[%s11 + $0xa28] sm:$0xf]
  %v10138 = vld [vmem:[%s11 + $0xa2c] sm:$0xff]
  %v10139 = vld [vmem:[%s11 + $0xa34] sm:$0xff]
  %v10140 = vld [vmem:[%s11 + $0xa3c] sm:$0xff]
  %v10141 = vld [vmem:[%s11 + $0xa44] sm:$0xf]
  %v10142 = vld [vmem:[%s11 + $0xa48] sm:$0xff]
  %v10143 = vld [vmem:[%s11 + $0xa50] sm:$0xff]
  %v10144 = vld [vmem:[%s11 + $0xa58] sm:$0xff]
  %v10145 = vld [vmem:[%s11 + $0xa60] sm:$0xf]
  %v10146 = vld [vmem:[%s11 + $0xa64] sm:$0xff]
  %v10147 = vld [vmem:[%s11 + $0xa6c] sm:$0xff]
  %v10148 = vld [vmem:[%s11 + $0xa74] sm:$0xff]
  %v10149 = vld [vmem:[%s11 + $0xa7c] sm:$0xf]
  %v10150 = vld [vmem:[%s11 + $0xa80] sm:$0xff]
  %v10151 = vld [vmem:[%s11 + $0xa88] sm:$0xff]
  %v10152 = vld [vmem:[%s11 + $0xa90] sm:$0xff]
  %v10153 = vld [vmem:[%s11 + $0xa98] sm:$0xf]
  %v10154 = vld [vmem:[%s11 + $0xa9c] sm:$0xff]
  %v10155 = vld [vmem:[%s11 + $0xaa4] sm:$0xff]
  %v10156 = vld [vmem:[%s11 + $0xaac] sm:$0xff]
  %v10157 = vld [vmem:[%s11 + $0xab4] sm:$0xf]
  %v10158 = vld [vmem:[%s12] sm:$0x7f]
  %v10160 = vlaneseq
  %v10161 = vshrl.u32 %v10160, 7
  %v10162 = vsub.s32 0, %v10161
  %v10163 = vrot.slane %v10158, %v10162
  %v10164 = vlaneseq
  %v10165 = vshrl.u32 %v10164, 7
  %v10166 = vsub.s32 1, %v10165
  %v10167 = vrot.slane %v10158, %v10166
  %v10168 = vlaneseq
  %v10169 = vshrl.u32 %v10168, 7
  %v10170 = vsub.s32 2, %v10169
  %v10171 = vrot.slane %v10158, %v10170
  %v10172 = vlaneseq
  %v10173 = vshrl.u32 %v10172, 7
  %v10174 = vsub.s32 3, %v10173
  %v10175 = vrot.slane %v10158, %v10174
  %v10176 = vlaneseq
  %v10177 = vshrl.u32 %v10176, 7
  %v10178 = vsub.s32 4, %v10177
  %v10179 = vrot.slane %v10158, %v10178
  %v10180 = vlaneseq
  %v10181 = vshrl.u32 %v10180, 7
  %v10182 = vsub.s32 5, %v10181
  %v10183 = vrot.slane %v10158, %v10182
  %v10184 = vlaneseq
  %v10185 = vshrl.u32 %v10184, 7
  %v10186 = vsub.s32 6, %v10185
  %v10187 = vrot.slane %v10158, %v10186
  %v10587 = vunpack.c.l.b16 %v9766
  %v10588 = vunpack.c.h.b16 %v9766
  %v10589 = vunpack.c.l.b16 %v9767
  %v10590 = vunpack.c.h.b16 %v9767
  %v10591 = vunpack.c.l.b16 %v9768
  %v10592 = vunpack.c.h.b16 %v9768
  %v10593 = vunpack.c.l.b16 %v9769
  %v10594 = vunpack.c.l.b16 %v9770
  %v10595 = vunpack.c.h.b16 %v9770
  %v10596 = vunpack.c.l.b16 %v9771
  %v10597 = vunpack.c.h.b16 %v9771
  %v10598 = vunpack.c.l.b16 %v9772
  %v10599 = vunpack.c.h.b16 %v9772
  %v10600 = vunpack.c.l.b16 %v9773
  %v10601 = vunpack.c.l.b16 %v9774
  %v10602 = vunpack.c.h.b16 %v9774
  %v10603 = vunpack.c.l.b16 %v9775
  %v10604 = vunpack.c.h.b16 %v9775
  %v10605 = vunpack.c.l.b16 %v9776
  %v10606 = vunpack.c.h.b16 %v9776
  %v10607 = vunpack.c.l.b16 %v9777
  %v10608 = vunpack.c.l.b16 %v9778
  %v10609 = vunpack.c.h.b16 %v9778
  %v10610 = vunpack.c.l.b16 %v9779
  %v10611 = vunpack.c.h.b16 %v9779
  %v10612 = vunpack.c.l.b16 %v9780
  %v10613 = vunpack.c.h.b16 %v9780
  %v10614 = vunpack.c.l.b16 %v9781
  %v10615 = vunpack.c.l.b16 %v9782
  %v10616 = vunpack.c.h.b16 %v9782
  %v10617 = vunpack.c.l.b16 %v9783
  %v10618 = vunpack.c.h.b16 %v9783
  %v10619 = vunpack.c.l.b16 %v9784
  %v10620 = vunpack.c.h.b16 %v9784
  %v10621 = vunpack.c.l.b16 %v9785
  %v10622 = vunpack.c.l.b16 %v9786
  %v10623 = vunpack.c.h.b16 %v9786
  %v10624 = vunpack.c.l.b16 %v9787
  %v10625 = vunpack.c.h.b16 %v9787
  %v10626 = vunpack.c.l.b16 %v9788
  %v10627 = vunpack.c.h.b16 %v9788
  %v10628 = vunpack.c.l.b16 %v9789
  %v10629 = vunpack.c.l.b16 %v9790
  %v10630 = vunpack.c.h.b16 %v9790
  %v10631 = vunpack.c.l.b16 %v9791
  %v10632 = vunpack.c.h.b16 %v9791
  %v10633 = vunpack.c.l.b16 %v9792
  %v10634 = vunpack.c.h.b16 %v9792
  %v10635 = vunpack.c.l.b16 %v9793
  %v10636 = vunpack.c.l.b16 %v9794
  %v10637 = vunpack.c.h.b16 %v9794
  %v10638 = vunpack.c.l.b16 %v9795
  %v10639 = vunpack.c.h.b16 %v9795
  %v10640 = vunpack.c.l.b16 %v9796
  %v10641 = vunpack.c.h.b16 %v9796
  %v10642 = vunpack.c.l.b16 %v9797
  %v10643 = vunpack.c.l.b16 %v9798
  %v10644 = vunpack.c.h.b16 %v9798
  %v10645 = vunpack.c.l.b16 %v9799
  %v10646 = vunpack.c.h.b16 %v9799
  %v10647 = vunpack.c.l.b16 %v9800
  %v10648 = vunpack.c.h.b16 %v9800
  %v10649 = vunpack.c.l.b16 %v9801
  %v10650 = vunpack.c.l.b16 %v9802
  %v10651 = vunpack.c.h.b16 %v9802
  %v10652 = vunpack.c.l.b16 %v9803
  %v10653 = vunpack.c.h.b16 %v9803
  %v10654 = vunpack.c.l.b16 %v9804
  %v10655 = vunpack.c.h.b16 %v9804
  %v10656 = vunpack.c.l.b16 %v9805
  %v10657 = vunpack.c.l.b16 %v9806
  %v10658 = vunpack.c.h.b16 %v9806
  %v10659 = vunpack.c.l.b16 %v9807
  %v10660 = vunpack.c.h.b16 %v9807
  %v10661 = vunpack.c.l.b16 %v9808
  %v10662 = vunpack.c.h.b16 %v9808
  %v10663 = vunpack.c.l.b16 %v9809
  %v10664 = vunpack.c.l.b16 %v9810
  %v10665 = vunpack.c.h.b16 %v9810
  %v10666 = vunpack.c.l.b16 %v9811
  %v10667 = vunpack.c.h.b16 %v9811
  %v10668 = vunpack.c.l.b16 %v9812
  %v10669 = vunpack.c.h.b16 %v9812
  %v10670 = vunpack.c.l.b16 %v9813
  %v10671 = vunpack.c.l.b16 %v9814
  %v10672 = vunpack.c.h.b16 %v9814
  %v10673 = vunpack.c.l.b16 %v9815
  %v10674 = vunpack.c.h.b16 %v9815
  %v10675 = vunpack.c.l.b16 %v9816
  %v10676 = vunpack.c.h.b16 %v9816
  %v10677 = vunpack.c.l.b16 %v9817
  %v10678 = vunpack.c.l.b16 %v9818
  %v10679 = vunpack.c.h.b16 %v9818
  %v10680 = vunpack.c.l.b16 %v9819
  %v10681 = vunpack.c.h.b16 %v9819
  %v10682 = vunpack.c.l.b16 %v9820
  %v10683 = vunpack.c.h.b16 %v9820
  %v10684 = vunpack.c.l.b16 %v9821
  %v10685 = vunpack.c.l.b16 %v9822
  %v10686 = vunpack.c.h.b16 %v9822
  %v10687 = vunpack.c.l.b16 %v9823
  %v10688 = vunpack.c.h.b16 %v9823
  %v10689 = vunpack.c.l.b16 %v9824
  %v10690 = vunpack.c.h.b16 %v9824
  %v10691 = vunpack.c.l.b16 %v9825
  %v10692 = vunpack.c.l.b16 %v9826
  %v10693 = vunpack.c.h.b16 %v9826
  %v10694 = vunpack.c.l.b16 %v9827
  %v10695 = vunpack.c.h.b16 %v9827
  %v10696 = vunpack.c.l.b16 %v9828
  %v10697 = vunpack.c.h.b16 %v9828
  %v10698 = vunpack.c.l.b16 %v9829
  %v10699 = vunpack.c.l.b16 %v9830
  %v10700 = vunpack.c.h.b16 %v9830
  %v10701 = vunpack.c.l.b16 %v9831
  %v10702 = vunpack.c.h.b16 %v9831
  %v10703 = vunpack.c.l.b16 %v9832
  %v10704 = vunpack.c.h.b16 %v9832
  %v10705 = vunpack.c.l.b16 %v9833
  %v10706 = vunpack.c.l.b16 %v9834
  %v10707 = vunpack.c.h.b16 %v9834
  %v10708 = vunpack.c.l.b16 %v9835
  %v10709 = vunpack.c.h.b16 %v9835
  %v10710 = vunpack.c.l.b16 %v9836
  %v10711 = vunpack.c.h.b16 %v9836
  %v10712 = vunpack.c.l.b16 %v9837
  %v10713 = vunpack.c.l.b16 %v9838
  %v10714 = vunpack.c.h.b16 %v9838
  %v10715 = vunpack.c.l.b16 %v9839
  %v10716 = vunpack.c.h.b16 %v9839
  %v10717 = vunpack.c.l.b16 %v9840
  %v10718 = vunpack.c.h.b16 %v9840
  %v10719 = vunpack.c.l.b16 %v9841
  %v10720 = vunpack.c.l.b16 %v9842
  %v10721 = vunpack.c.h.b16 %v9842
  %v10722 = vunpack.c.l.b16 %v9843
  %v10723 = vunpack.c.h.b16 %v9843
  %v10724 = vunpack.c.l.b16 %v9844
  %v10725 = vunpack.c.h.b16 %v9844
  %v10726 = vunpack.c.l.b16 %v9845
  %v10727 = vunpack.c.l.b16 %v9846
  %v10728 = vunpack.c.h.b16 %v9846
  %v10729 = vunpack.c.l.b16 %v9847
  %v10730 = vunpack.c.h.b16 %v9847
  %v10731 = vunpack.c.l.b16 %v9848
  %v10732 = vunpack.c.h.b16 %v9848
  %v10733 = vunpack.c.l.b16 %v9849
  %v10734 = vunpack.c.l.b16 %v9850
  %v10735 = vunpack.c.h.b16 %v9850
  %v10736 = vunpack.c.l.b16 %v9851
  %v10737 = vunpack.c.h.b16 %v9851
  %v10738 = vunpack.c.l.b16 %v9852
  %v10739 = vunpack.c.h.b16 %v9852
  %v10740 = vunpack.c.l.b16 %v9853
  %v10741 = vunpack.c.l.b16 %v9854
  %v10742 = vunpack.c.h.b16 %v9854
  %v10743 = vunpack.c.l.b16 %v9855
  %v10744 = vunpack.c.h.b16 %v9855
  %v10745 = vunpack.c.l.b16 %v9856
  %v10746 = vunpack.c.h.b16 %v9856
  %v10747 = vunpack.c.l.b16 %v9857
  %v10748 = vunpack.c.l.b16 %v9858
  %v10749 = vunpack.c.h.b16 %v9858
  %v10750 = vunpack.c.l.b16 %v9859
  %v10751 = vunpack.c.h.b16 %v9859
  %v10752 = vunpack.c.l.b16 %v9860
  %v10753 = vunpack.c.h.b16 %v9860
  %v10754 = vunpack.c.l.b16 %v9861
  %v10755 = vunpack.c.l.b16 %v9862
  %v10756 = vunpack.c.h.b16 %v9862
  %v10757 = vunpack.c.l.b16 %v9863
  %v10758 = vunpack.c.h.b16 %v9863
  %v10759 = vunpack.c.l.b16 %v9864
  %v10760 = vunpack.c.h.b16 %v9864
  %v10761 = vunpack.c.l.b16 %v9865
  %v10762 = vunpack.c.l.b16 %v9866
  %v10763 = vunpack.c.h.b16 %v9866
  %v10764 = vunpack.c.l.b16 %v9867
  %v10765 = vunpack.c.h.b16 %v9867
  %v10766 = vunpack.c.l.b16 %v9868
  %v10767 = vunpack.c.h.b16 %v9868
  %v10768 = vunpack.c.l.b16 %v9869
  %v10769 = vunpack.c.l.b16 %v9870
  %v10770 = vunpack.c.h.b16 %v9870
  %v10771 = vunpack.c.l.b16 %v9871
  %v10772 = vunpack.c.h.b16 %v9871
  %v10773 = vunpack.c.l.b16 %v9872
  %v10774 = vunpack.c.h.b16 %v9872
  %v10775 = vunpack.c.l.b16 %v9873
  %v10776 = vunpack.c.l.b16 %v9874
  %v10777 = vunpack.c.h.b16 %v9874
  %v10778 = vunpack.c.l.b16 %v9875
  %v10779 = vunpack.c.h.b16 %v9875
  %v10780 = vunpack.c.l.b16 %v9876
  %v10781 = vunpack.c.h.b16 %v9876
  %v10782 = vunpack.c.l.b16 %v9877
  %v10783 = vunpack.c.l.b16 %v9878
  %v10784 = vunpack.c.h.b16 %v9878
  %v10785 = vunpack.c.l.b16 %v9879
  %v10786 = vunpack.c.h.b16 %v9879
  %v10787 = vunpack.c.l.b16 %v9880
  %v10788 = vunpack.c.h.b16 %v9880
  %v10789 = vunpack.c.l.b16 %v9881
  %v10790 = vunpack.c.l.b16 %v9882
  %v10791 = vunpack.c.h.b16 %v9882
  %v10792 = vunpack.c.l.b16 %v9883
  %v10793 = vunpack.c.h.b16 %v9883
  %v10794 = vunpack.c.l.b16 %v9884
  %v10795 = vunpack.c.h.b16 %v9884
  %v10796 = vunpack.c.l.b16 %v9885
  %v10797 = vunpack.c.l.b16 %v9886
  %v10798 = vunpack.c.h.b16 %v9886
  %v10799 = vunpack.c.l.b16 %v9887
  %v10800 = vunpack.c.h.b16 %v9887
  %v10801 = vunpack.c.l.b16 %v9888
  %v10802 = vunpack.c.h.b16 %v9888
  %v10803 = vunpack.c.l.b16 %v9889
  %v10804 = vunpack.c.l.b16 %v9890
  %v10805 = vunpack.c.h.b16 %v9890
  %v10806 = vunpack.c.l.b16 %v9891
  %v10807 = vunpack.c.h.b16 %v9891
  %v10808 = vunpack.c.l.b16 %v9892
  %v10809 = vunpack.c.h.b16 %v9892
  %v10810 = vunpack.c.l.b16 %v9893
  %v10811 = vunpack.c.l.b16 %v9894
  %v10812 = vunpack.c.h.b16 %v9894
  %v10813 = vunpack.c.l.b16 %v9895
  %v10814 = vunpack.c.h.b16 %v9895
  %v10815 = vunpack.c.l.b16 %v9896
  %v10816 = vunpack.c.h.b16 %v9896
  %v10817 = vunpack.c.l.b16 %v9897
  %v10818 = vunpack.c.l.b16 %v9898
  %v10819 = vunpack.c.h.b16 %v9898
  %v10820 = vunpack.c.l.b16 %v9899
  %v10821 = vunpack.c.h.b16 %v9899
  %v10822 = vunpack.c.l.b16 %v9900
  %v10823 = vunpack.c.h.b16 %v9900
  %v10824 = vunpack.c.l.b16 %v9901
  %v10825 = vunpack.c.l.b16 %v9902
  %v10826 = vunpack.c.h.b16 %v9902
  %v10827 = vunpack.c.l.b16 %v9903
  %v10828 = vunpack.c.h.b16 %v9903
  %v10829 = vunpack.c.l.b16 %v9904
  %v10830 = vunpack.c.h.b16 %v9904
  %v10831 = vunpack.c.l.b16 %v9905
  %v10832 = vunpack.c.l.b16 %v9906
  %v10833 = vunpack.c.h.b16 %v9906
  %v10834 = vunpack.c.l.b16 %v9907
  %v10835 = vunpack.c.h.b16 %v9907
  %v10836 = vunpack.c.l.b16 %v9908
  %v10837 = vunpack.c.h.b16 %v9908
  %v10838 = vunpack.c.l.b16 %v9909
  %v10839 = vunpack.c.l.b16 %v9910
  %v10840 = vunpack.c.h.b16 %v9910
  %v10841 = vunpack.c.l.b16 %v9911
  %v10842 = vunpack.c.h.b16 %v9911
  %v10843 = vunpack.c.l.b16 %v9912
  %v10844 = vunpack.c.h.b16 %v9912
  %v10845 = vunpack.c.l.b16 %v9913
  %v10846 = vunpack.c.l.b16 %v9914
  %v10847 = vunpack.c.h.b16 %v9914
  %v10848 = vunpack.c.l.b16 %v9915
  %v10849 = vunpack.c.h.b16 %v9915
  %v10850 = vunpack.c.l.b16 %v9916
  %v10851 = vunpack.c.h.b16 %v9916
  %v10852 = vunpack.c.l.b16 %v9917
  %v10853 = vunpack.c.l.b16 %v9918
  %v10854 = vunpack.c.h.b16 %v9918
  %v10855 = vunpack.c.l.b16 %v9919
  %v10856 = vunpack.c.h.b16 %v9919
  %v10857 = vunpack.c.l.b16 %v9920
  %v10858 = vunpack.c.h.b16 %v9920
  %v10859 = vunpack.c.l.b16 %v9921
  %v10860 = vunpack.c.l.b16 %v9922
  %v10861 = vunpack.c.h.b16 %v9922
  %v10862 = vunpack.c.l.b16 %v9923
  %v10863 = vunpack.c.h.b16 %v9923
  %v10864 = vunpack.c.l.b16 %v9924
  %v10865 = vunpack.c.h.b16 %v9924
  %v10866 = vunpack.c.l.b16 %v9925
  %v10867 = vunpack.c.l.b16 %v9926
  %v10868 = vunpack.c.h.b16 %v9926
  %v10869 = vunpack.c.l.b16 %v9927
  %v10870 = vunpack.c.h.b16 %v9927
  %v10871 = vunpack.c.l.b16 %v9928
  %v10872 = vunpack.c.h.b16 %v9928
  %v10873 = vunpack.c.l.b16 %v9929
  %v10874 = vunpack.c.l.b16 %v9930
  %v10875 = vunpack.c.h.b16 %v9930
  %v10876 = vunpack.c.l.b16 %v9931
  %v10877 = vunpack.c.h.b16 %v9931
  %v10878 = vunpack.c.l.b16 %v9932
  %v10879 = vunpack.c.h.b16 %v9932
  %v10880 = vunpack.c.l.b16 %v9933
  %v10881 = vunpack.c.l.b16 %v9934
  %v10882 = vunpack.c.h.b16 %v9934
  %v10883 = vunpack.c.l.b16 %v9935
  %v10884 = vunpack.c.h.b16 %v9935
  %v10885 = vunpack.c.l.b16 %v9936
  %v10886 = vunpack.c.h.b16 %v9936
  %v10887 = vunpack.c.l.b16 %v9937
  %v10888 = vunpack.c.l.b16 %v9938
  %v10889 = vunpack.c.h.b16 %v9938
  %v10890 = vunpack.c.l.b16 %v9939
  %v10891 = vunpack.c.h.b16 %v9939
  %v10892 = vunpack.c.l.b16 %v9940
  %v10893 = vunpack.c.h.b16 %v9940
  %v10894 = vunpack.c.l.b16 %v9941
  %v10895 = vunpack.c.l.b16 %v9942
  %v10896 = vunpack.c.h.b16 %v9942
  %v10897 = vunpack.c.l.b16 %v9943
  %v10898 = vunpack.c.h.b16 %v9943
  %v10899 = vunpack.c.l.b16 %v9944
  %v10900 = vunpack.c.h.b16 %v9944
  %v10901 = vunpack.c.l.b16 %v9945
  %v10902 = vunpack.c.l.b16 %v9946
  %v10903 = vunpack.c.h.b16 %v9946
  %v10904 = vunpack.c.l.b16 %v9947
  %v10905 = vunpack.c.h.b16 %v9947
  %v10906 = vunpack.c.l.b16 %v9948
  %v10907 = vunpack.c.h.b16 %v9948
  %v10908 = vunpack.c.l.b16 %v9949
  %v10909 = vunpack.c.l.b16 %v9950
  %v10910 = vunpack.c.h.b16 %v9950
  %v10911 = vunpack.c.l.b16 %v9951
  %v10912 = vunpack.c.h.b16 %v9951
  %v10913 = vunpack.c.l.b16 %v9952
  %v10914 = vunpack.c.h.b16 %v9952
  %v10915 = vunpack.c.l.b16 %v9953
  %v10916 = vunpack.c.l.b16 %v9954
  %v10917 = vunpack.c.h.b16 %v9954
  %v10918 = vunpack.c.l.b16 %v9955
  %v10919 = vunpack.c.h.b16 %v9955
  %v10920 = vunpack.c.l.b16 %v9956
  %v10921 = vunpack.c.h.b16 %v9956
  %v10922 = vunpack.c.l.b16 %v9957
  %v10923 = vunpack.c.l.b16 %v9958
  %v10924 = vunpack.c.h.b16 %v9958
  %v10925 = vunpack.c.l.b16 %v9959
  %v10926 = vunpack.c.h.b16 %v9959
  %v10927 = vunpack.c.l.b16 %v9960
  %v10928 = vunpack.c.h.b16 %v9960
  %v10929 = vunpack.c.l.b16 %v9961
  %v10930 = vunpack.c.l.b16 %v9962
  %v10931 = vunpack.c.h.b16 %v9962
  %v10932 = vunpack.c.l.b16 %v9963
  %v10933 = vunpack.c.h.b16 %v9963
  %v10934 = vunpack.c.l.b16 %v9964
  %v10935 = vunpack.c.h.b16 %v9964
  %v10936 = vunpack.c.l.b16 %v9965
  %v10937 = vunpack.c.l.b16 %v9966
  %v10938 = vunpack.c.h.b16 %v9966
  %v10939 = vunpack.c.l.b16 %v9967
  %v10940 = vunpack.c.h.b16 %v9967
  %v10941 = vunpack.c.l.b16 %v9968
  %v10942 = vunpack.c.h.b16 %v9968
  %v10943 = vunpack.c.l.b16 %v9969
  %v10944 = vunpack.c.l.b16 %v9970
  %v10945 = vunpack.c.h.b16 %v9970
  %v10946 = vunpack.c.l.b16 %v9971
  %v10947 = vunpack.c.h.b16 %v9971
  %v10948 = vunpack.c.l.b16 %v9972
  %v10949 = vunpack.c.h.b16 %v9972
  %v10950 = vunpack.c.l.b16 %v9973
  %v10951 = vunpack.c.l.b16 %v9974
  %v10952 = vunpack.c.h.b16 %v9974
  %v10953 = vunpack.c.l.b16 %v9975
  %v10954 = vunpack.c.h.b16 %v9975
  %v10955 = vunpack.c.l.b16 %v9976
  %v10956 = vunpack.c.h.b16 %v9976
  %v10957 = vunpack.c.l.b16 %v9977
  %v10958 = vunpack.c.l.b16 %v9978
  %v10959 = vunpack.c.h.b16 %v9978
  %v10960 = vunpack.c.l.b16 %v9979
  %v10961 = vunpack.c.h.b16 %v9979
  %v10962 = vunpack.c.l.b16 %v9980
  %v10963 = vunpack.c.h.b16 %v9980
  %v10964 = vunpack.c.l.b16 %v9981
  %v10965 = vunpack.c.l.b16 %v9982
  %v10966 = vunpack.c.h.b16 %v9982
  %v10967 = vunpack.c.l.b16 %v9983
  %v10968 = vunpack.c.h.b16 %v9983
  %v10969 = vunpack.c.l.b16 %v9984
  %v10970 = vunpack.c.h.b16 %v9984
  %v10971 = vunpack.c.l.b16 %v9985
  %v10972 = vunpack.c.l.b16 %v9986
  %v10973 = vunpack.c.h.b16 %v9986
  %v10974 = vunpack.c.l.b16 %v9987
  %v10975 = vunpack.c.h.b16 %v9987
  %v10976 = vunpack.c.l.b16 %v9988
  %v10977 = vunpack.c.h.b16 %v9988
  %v10978 = vunpack.c.l.b16 %v9989
  %v10979 = vunpack.c.l.b16 %v9990
  %v10980 = vunpack.c.h.b16 %v9990
  %v10981 = vunpack.c.l.b16 %v9991
  %v10982 = vunpack.c.h.b16 %v9991
  %v10983 = vunpack.c.l.b16 %v9992
  %v10984 = vunpack.c.h.b16 %v9992
  %v10985 = vunpack.c.l.b16 %v9993
  %v10986 = vunpack.c.l.b16 %v9994
  %v10987 = vunpack.c.h.b16 %v9994
  %v10988 = vunpack.c.l.b16 %v9995
  %v10989 = vunpack.c.h.b16 %v9995
  %v10990 = vunpack.c.l.b16 %v9996
  %v10991 = vunpack.c.h.b16 %v9996
  %v10992 = vunpack.c.l.b16 %v9997
  %v10993 = vunpack.c.l.b16 %v9998
  %v10994 = vunpack.c.h.b16 %v9998
  %v10995 = vunpack.c.l.b16 %v9999
  %v10996 = vunpack.c.h.b16 %v9999
  %v10997 = vunpack.c.l.b16 %v10000
  %v10998 = vunpack.c.h.b16 %v10000
  %v10999 = vunpack.c.l.b16 %v10001
  %v11000 = vunpack.c.l.b16 %v10002
  %v11001 = vunpack.c.h.b16 %v10002
  %v11002 = vunpack.c.l.b16 %v10003
  %v11003 = vunpack.c.h.b16 %v10003
  %v11004 = vunpack.c.l.b16 %v10004
  %v11005 = vunpack.c.h.b16 %v10004
  %v11006 = vunpack.c.l.b16 %v10005
  %v11007 = vunpack.c.l.b16 %v10006
  %v11008 = vunpack.c.h.b16 %v10006
  %v11009 = vunpack.c.l.b16 %v10007
  %v11010 = vunpack.c.h.b16 %v10007
  %v11011 = vunpack.c.l.b16 %v10008
  %v11012 = vunpack.c.h.b16 %v10008
  %v11013 = vunpack.c.l.b16 %v10009
  %v11014 = vunpack.c.l.b16 %v10010
  %v11015 = vunpack.c.h.b16 %v10010
  %v11016 = vunpack.c.l.b16 %v10011
  %v11017 = vunpack.c.h.b16 %v10011
  %v11018 = vunpack.c.l.b16 %v10012
  %v11019 = vunpack.c.h.b16 %v10012
  %v11020 = vunpack.c.l.b16 %v10013
  %v11021 = vunpack.c.l.b16 %v10014
  %v11022 = vunpack.c.h.b16 %v10014
  %v11023 = vunpack.c.l.b16 %v10015
  %v11024 = vunpack.c.h.b16 %v10015
  %v11025 = vunpack.c.l.b16 %v10016
  %v11026 = vunpack.c.h.b16 %v10016
  %v11027 = vunpack.c.l.b16 %v10017
  %v11028 = vunpack.c.l.b16 %v10018
  %v11029 = vunpack.c.h.b16 %v10018
  %v11030 = vunpack.c.l.b16 %v10019
  %v11031 = vunpack.c.h.b16 %v10019
  %v11032 = vunpack.c.l.b16 %v10020
  %v11033 = vunpack.c.h.b16 %v10020
  %v11034 = vunpack.c.l.b16 %v10021
  %v11035 = vunpack.c.l.b16 %v10022
  %v11036 = vunpack.c.h.b16 %v10022
  %v11037 = vunpack.c.l.b16 %v10023
  %v11038 = vunpack.c.h.b16 %v10023
  %v11039 = vunpack.c.l.b16 %v10024
  %v11040 = vunpack.c.h.b16 %v10024
  %v11041 = vunpack.c.l.b16 %v10025
  %v11042 = vunpack.c.l.b16 %v10026
  %v11043 = vunpack.c.h.b16 %v10026
  %v11044 = vunpack.c.l.b16 %v10027
  %v11045 = vunpack.c.h.b16 %v10027
  %v11046 = vunpack.c.l.b16 %v10028
  %v11047 = vunpack.c.h.b16 %v10028
  %v11048 = vunpack.c.l.b16 %v10029
  %v11049 = vunpack.c.l.b16 %v10030
  %v11050 = vunpack.c.h.b16 %v10030
  %v11051 = vunpack.c.l.b16 %v10031
  %v11052 = vunpack.c.h.b16 %v10031
  %v11053 = vunpack.c.l.b16 %v10032
  %v11054 = vunpack.c.h.b16 %v10032
  %v11055 = vunpack.c.l.b16 %v10033
  %v11056 = vunpack.c.l.b16 %v10034
  %v11057 = vunpack.c.h.b16 %v10034
  %v11058 = vunpack.c.l.b16 %v10035
  %v11059 = vunpack.c.h.b16 %v10035
  %v11060 = vunpack.c.l.b16 %v10036
  %v11061 = vunpack.c.h.b16 %v10036
  %v11062 = vunpack.c.l.b16 %v10037
  %v11063 = vunpack.c.l.b16 %v10038
  %v11064 = vunpack.c.h.b16 %v10038
  %v11065 = vunpack.c.l.b16 %v10039
  %v11066 = vunpack.c.h.b16 %v10039
  %v11067 = vunpack.c.l.b16 %v10040
  %v11068 = vunpack.c.h.b16 %v10040
  %v11069 = vunpack.c.l.b16 %v10041
  %v11070 = vunpack.c.l.b16 %v10042
  %v11071 = vunpack.c.h.b16 %v10042
  %v11072 = vunpack.c.l.b16 %v10043
  %v11073 = vunpack.c.h.b16 %v10043
  %v11074 = vunpack.c.l.b16 %v10044
  %v11075 = vunpack.c.h.b16 %v10044
  %v11076 = vunpack.c.l.b16 %v10045
  %v11077 = vunpack.c.l.b16 %v10046
  %v11078 = vunpack.c.h.b16 %v10046
  %v11079 = vunpack.c.l.b16 %v10047
  %v11080 = vunpack.c.h.b16 %v10047
  %v11081 = vunpack.c.l.b16 %v10048
  %v11082 = vunpack.c.h.b16 %v10048
  %v11083 = vunpack.c.l.b16 %v10049
  %v11084 = vunpack.c.l.b16 %v10050
  %v11085 = vunpack.c.h.b16 %v10050
  %v11086 = vunpack.c.l.b16 %v10051
  %v11087 = vunpack.c.h.b16 %v10051
  %v11088 = vunpack.c.l.b16 %v10052
  %v11089 = vunpack.c.h.b16 %v10052
  %v11090 = vunpack.c.l.b16 %v10053
  %v11091 = vunpack.c.l.b16 %v10054
  %v11092 = vunpack.c.h.b16 %v10054
  %v11093 = vunpack.c.l.b16 %v10055
  %v11094 = vunpack.c.h.b16 %v10055
  %v11095 = vunpack.c.l.b16 %v10056
  %v11096 = vunpack.c.h.b16 %v10056
  %v11097 = vunpack.c.l.b16 %v10057
  %v11098 = vunpack.c.l.b16 %v10058
  %v11099 = vunpack.c.h.b16 %v10058
  %v11100 = vunpack.c.l.b16 %v10059
  %v11101 = vunpack.c.h.b16 %v10059
  %v11102 = vunpack.c.l.b16 %v10060
  %v11103 = vunpack.c.h.b16 %v10060
  %v11104 = vunpack.c.l.b16 %v10061
  %v11105 = vunpack.c.l.b16 %v10062
  %v11106 = vunpack.c.h.b16 %v10062
  %v11107 = vunpack.c.l.b16 %v10063
  %v11108 = vunpack.c.h.b16 %v10063
  %v11109 = vunpack.c.l.b16 %v10064
  %v11110 = vunpack.c.h.b16 %v10064
  %v11111 = vunpack.c.l.b16 %v10065
  %v11112 = vunpack.c.l.b16 %v10066
  %v11113 = vunpack.c.h.b16 %v10066
  %v11114 = vunpack.c.l.b16 %v10067
  %v11115 = vunpack.c.h.b16 %v10067
  %v11116 = vunpack.c.l.b16 %v10068
  %v11117 = vunpack.c.h.b16 %v10068
  %v11118 = vunpack.c.l.b16 %v10069
  %v11119 = vunpack.c.l.b16 %v10070
  %v11120 = vunpack.c.h.b16 %v10070
  %v11121 = vunpack.c.l.b16 %v10071
  %v11122 = vunpack.c.h.b16 %v10071
  %v11123 = vunpack.c.l.b16 %v10072
  %v11124 = vunpack.c.h.b16 %v10072
  %v11125 = vunpack.c.l.b16 %v10073
  %v11126 = vunpack.c.l.b16 %v10074
  %v11127 = vunpack.c.h.b16 %v10074
  %v11128 = vunpack.c.l.b16 %v10075
  %v11129 = vunpack.c.h.b16 %v10075
  %v11130 = vunpack.c.l.b16 %v10076
  %v11131 = vunpack.c.h.b16 %v10076
  %v11132 = vunpack.c.l.b16 %v10077
  %v11133 = vunpack.c.l.b16 %v10078
  %v11134 = vunpack.c.h.b16 %v10078
  %v11135 = vunpack.c.l.b16 %v10079
  %v11136 = vunpack.c.h.b16 %v10079
  %v11137 = vunpack.c.l.b16 %v10080
  %v11138 = vunpack.c.h.b16 %v10080
  %v11139 = vunpack.c.l.b16 %v10081
  %v11140 = vunpack.c.l.b16 %v10082
  %v11141 = vunpack.c.h.b16 %v10082
  %v11142 = vunpack.c.l.b16 %v10083
  %v11143 = vunpack.c.h.b16 %v10083
  %v11144 = vunpack.c.l.b16 %v10084
  %v11145 = vunpack.c.h.b16 %v10084
  %v11146 = vunpack.c.l.b16 %v10085
  %v11147 = vunpack.c.l.b16 %v10086
  %v11148 = vunpack.c.h.b16 %v10086
  %v11149 = vunpack.c.l.b16 %v10087
  %v11150 = vunpack.c.h.b16 %v10087
  %v11151 = vunpack.c.l.b16 %v10088
  %v11152 = vunpack.c.h.b16 %v10088
  %v11153 = vunpack.c.l.b16 %v10089
  %v11154 = vunpack.c.l.b16 %v10090
  %v11155 = vunpack.c.h.b16 %v10090
  %v11156 = vunpack.c.l.b16 %v10091
  %v11157 = vunpack.c.h.b16 %v10091
  %v11158 = vunpack.c.l.b16 %v10092
  %v11159 = vunpack.c.h.b16 %v10092
  %v11160 = vunpack.c.l.b16 %v10093
  %v11161 = vunpack.c.l.b16 %v10094
  %v11162 = vunpack.c.h.b16 %v10094
  %v11163 = vunpack.c.l.b16 %v10095
  %v11164 = vunpack.c.h.b16 %v10095
  %v11165 = vunpack.c.l.b16 %v10096
  %v11166 = vunpack.c.h.b16 %v10096
  %v11167 = vunpack.c.l.b16 %v10097
  %v11168 = vunpack.c.l.b16 %v10098
  %v11169 = vunpack.c.h.b16 %v10098
  %v11170 = vunpack.c.l.b16 %v10099
  %v11171 = vunpack.c.h.b16 %v10099
  %v11172 = vunpack.c.l.b16 %v10100
  %v11173 = vunpack.c.h.b16 %v10100
  %v11174 = vunpack.c.l.b16 %v10101
  %v11175 = vunpack.c.l.b16 %v10102
  %v11176 = vunpack.c.h.b16 %v10102
  %v11177 = vunpack.c.l.b16 %v10103
  %v11178 = vunpack.c.h.b16 %v10103
  %v11179 = vunpack.c.l.b16 %v10104
  %v11180 = vunpack.c.h.b16 %v10104
  %v11181 = vunpack.c.l.b16 %v10105
  %v11182 = vunpack.c.l.b16 %v10106
  %v11183 = vunpack.c.h.b16 %v10106
  %v11184 = vunpack.c.l.b16 %v10107
  %v11185 = vunpack.c.h.b16 %v10107
  %v11186 = vunpack.c.l.b16 %v10108
  %v11187 = vunpack.c.h.b16 %v10108
  %v11188 = vunpack.c.l.b16 %v10109
  %v11189 = vunpack.c.l.b16 %v10110
  %v11190 = vunpack.c.h.b16 %v10110
  %v11191 = vunpack.c.l.b16 %v10111
  %v11192 = vunpack.c.h.b16 %v10111
  %v11193 = vunpack.c.l.b16 %v10112
  %v11194 = vunpack.c.h.b16 %v10112
  %v11195 = vunpack.c.l.b16 %v10113
  %v11196 = vunpack.c.l.b16 %v10114
  %v11197 = vunpack.c.h.b16 %v10114
  %v11198 = vunpack.c.l.b16 %v10115
  %v11199 = vunpack.c.h.b16 %v10115
  %v11200 = vunpack.c.l.b16 %v10116
  %v11201 = vunpack.c.h.b16 %v10116
  %v11202 = vunpack.c.l.b16 %v10117
  %v11203 = vunpack.c.l.b16 %v10118
  %v11204 = vunpack.c.h.b16 %v10118
  %v11205 = vunpack.c.l.b16 %v10119
  %v11206 = vunpack.c.h.b16 %v10119
  %v11207 = vunpack.c.l.b16 %v10120
  %v11208 = vunpack.c.h.b16 %v10120
  %v11209 = vunpack.c.l.b16 %v10121
  %v11210 = vunpack.c.l.b16 %v10122
  %v11211 = vunpack.c.h.b16 %v10122
  %v11212 = vunpack.c.l.b16 %v10123
  %v11213 = vunpack.c.h.b16 %v10123
  %v11214 = vunpack.c.l.b16 %v10124
  %v11215 = vunpack.c.h.b16 %v10124
  %v11216 = vunpack.c.l.b16 %v10125
  %v11217 = vunpack.c.l.b16 %v10126
  %v11218 = vunpack.c.h.b16 %v10126
  %v11219 = vunpack.c.l.b16 %v10127
  %v11220 = vunpack.c.h.b16 %v10127
  %v11221 = vunpack.c.l.b16 %v10128
  %v11222 = vunpack.c.h.b16 %v10128
  %v11223 = vunpack.c.l.b16 %v10129
  %v11224 = vunpack.c.l.b16 %v10130
  %v11225 = vunpack.c.h.b16 %v10130
  %v11226 = vunpack.c.l.b16 %v10131
  %v11227 = vunpack.c.h.b16 %v10131
  %v11228 = vunpack.c.l.b16 %v10132
  %v11229 = vunpack.c.h.b16 %v10132
  %v11230 = vunpack.c.l.b16 %v10133
  %v11231 = vunpack.c.l.b16 %v10134
  %v11232 = vunpack.c.h.b16 %v10134
  %v11233 = vunpack.c.l.b16 %v10135
  %v11234 = vunpack.c.h.b16 %v10135
  %v11235 = vunpack.c.l.b16 %v10136
  %v11236 = vunpack.c.h.b16 %v10136
  %v11237 = vunpack.c.l.b16 %v10137
  %v11238 = vunpack.c.l.b16 %v10138
  %v11239 = vunpack.c.h.b16 %v10138
  %v11240 = vunpack.c.l.b16 %v10139
  %v11241 = vunpack.c.h.b16 %v10139
  %v11242 = vunpack.c.l.b16 %v10140
  %v11243 = vunpack.c.h.b16 %v10140
  %v11244 = vunpack.c.l.b16 %v10141
  %v11245 = vunpack.c.l.b16 %v10142
  %v11246 = vunpack.c.h.b16 %v10142
  %v11247 = vunpack.c.l.b16 %v10143
  %v11248 = vunpack.c.h.b16 %v10143
  %v11249 = vunpack.c.l.b16 %v10144
  %v11250 = vunpack.c.h.b16 %v10144
  %v11251 = vunpack.c.l.b16 %v10145
  %v11252 = vunpack.c.l.b16 %v10146
  %v11253 = vunpack.c.h.b16 %v10146
  %v11254 = vunpack.c.l.b16 %v10147
  %v11255 = vunpack.c.h.b16 %v10147
  %v11256 = vunpack.c.l.b16 %v10148
  %v11257 = vunpack.c.h.b16 %v10148
  %v11258 = vunpack.c.l.b16 %v10149
  %v11259 = vunpack.c.l.b16 %v10150
  %v11260 = vunpack.c.h.b16 %v10150
  %v11261 = vunpack.c.l.b16 %v10151
  %v11262 = vunpack.c.h.b16 %v10151
  %v11263 = vunpack.c.l.b16 %v10152
  %v11264 = vunpack.c.h.b16 %v10152
  %v11265 = vunpack.c.l.b16 %v10153
  %v11266 = vunpack.c.l.b16 %v10154
  %v11267 = vunpack.c.h.b16 %v10154
  %v11268 = vunpack.c.l.b16 %v10155
  %v11269 = vunpack.c.h.b16 %v10155
  %v11270 = vunpack.c.l.b16 %v10156
  %v11271 = vunpack.c.h.b16 %v10156
  %v11272 = vunpack.c.l.b16 %v10157
  %v11273 = vpack.c.b16 %v10594, %v10587
  %v11274 = vpack.c.b16 %v10595, %v10588
  %v11275 = vpack.c.b16 %v10596, %v10589
  %v11276 = vpack.c.b16 %v10597, %v10590
  %v11277 = vpack.c.b16 %v10598, %v10591
  %v11278 = vpack.c.b16 %v10599, %v10592
  %v11279 = vpack.c.b16 %v10600, %v10593
  %v11280 = vpack.c.b16 %v10608, %v10601
  %v11281 = vpack.c.b16 %v10609, %v10602
  %v11282 = vpack.c.b16 %v10610, %v10603
  %v11283 = vpack.c.b16 %v10611, %v10604
  %v11284 = vpack.c.b16 %v10612, %v10605
  %v11285 = vpack.c.b16 %v10613, %v10606
  %v11286 = vpack.c.b16 %v10614, %v10607
  %v11287 = vpack.c.b16 %v10622, %v10615
  %v11288 = vpack.c.b16 %v10623, %v10616
  %v11289 = vpack.c.b16 %v10624, %v10617
  %v11290 = vpack.c.b16 %v10625, %v10618
  %v11291 = vpack.c.b16 %v10626, %v10619
  %v11292 = vpack.c.b16 %v10627, %v10620
  %v11293 = vpack.c.b16 %v10628, %v10621
  %v11294 = vpack.c.b16 %v10636, %v10629
  %v11295 = vpack.c.b16 %v10637, %v10630
  %v11296 = vpack.c.b16 %v10638, %v10631
  %v11297 = vpack.c.b16 %v10639, %v10632
  %v11298 = vpack.c.b16 %v10640, %v10633
  %v11299 = vpack.c.b16 %v10641, %v10634
  %v11300 = vpack.c.b16 %v10642, %v10635
  %v11301 = vpack.c.b16 %v10650, %v10643
  %v11302 = vpack.c.b16 %v10651, %v10644
  %v11303 = vpack.c.b16 %v10652, %v10645
  %v11304 = vpack.c.b16 %v10653, %v10646
  %v11305 = vpack.c.b16 %v10654, %v10647
  %v11306 = vpack.c.b16 %v10655, %v10648
  %v11307 = vpack.c.b16 %v10656, %v10649
  %v11308 = vpack.c.b16 %v10664, %v10657
  %v11309 = vpack.c.b16 %v10665, %v10658
  %v11310 = vpack.c.b16 %v10666, %v10659
  %v11311 = vpack.c.b16 %v10667, %v10660
  %v11312 = vpack.c.b16 %v10668, %v10661
  %v11313 = vpack.c.b16 %v10669, %v10662
  %v11314 = vpack.c.b16 %v10670, %v10663
  %v11315 = vpack.c.b16 %v10678, %v10671
  %v11316 = vpack.c.b16 %v10679, %v10672
  %v11317 = vpack.c.b16 %v10680, %v10673
  %v11318 = vpack.c.b16 %v10681, %v10674
  %v11319 = vpack.c.b16 %v10682, %v10675
  %v11320 = vpack.c.b16 %v10683, %v10676
  %v11321 = vpack.c.b16 %v10684, %v10677
  %v11322 = vpack.c.b16 %v10692, %v10685
  %v11323 = vpack.c.b16 %v10693, %v10686
  %v11324 = vpack.c.b16 %v10694, %v10687
  %v11325 = vpack.c.b16 %v10695, %v10688
  %v11326 = vpack.c.b16 %v10696, %v10689
  %v11327 = vpack.c.b16 %v10697, %v10690
  %v11328 = vpack.c.b16 %v10698, %v10691
  %v11329 = vpack.c.b16 %v10706, %v10699
  %v11330 = vpack.c.b16 %v10707, %v10700
  %v11331 = vpack.c.b16 %v10708, %v10701
  %v11332 = vpack.c.b16 %v10709, %v10702
  %v11333 = vpack.c.b16 %v10710, %v10703
  %v11334 = vpack.c.b16 %v10711, %v10704
  %v11335 = vpack.c.b16 %v10712, %v10705
  %v11336 = vpack.c.b16 %v10720, %v10713
  %v11337 = vpack.c.b16 %v10721, %v10714
  %v11338 = vpack.c.b16 %v10722, %v10715
  %v11339 = vpack.c.b16 %v10723, %v10716
  %v11340 = vpack.c.b16 %v10724, %v10717
  %v11341 = vpack.c.b16 %v10725, %v10718
  %v11342 = vpack.c.b16 %v10726, %v10719
  %v11343 = vpack.c.b16 %v10734, %v10727
  %v11344 = vpack.c.b16 %v10735, %v10728
  %v11345 = vpack.c.b16 %v10736, %v10729
  %v11346 = vpack.c.b16 %v10737, %v10730
  %v11347 = vpack.c.b16 %v10738, %v10731
  %v11348 = vpack.c.b16 %v10739, %v10732
  %v11349 = vpack.c.b16 %v10740, %v10733
  %v11350 = vpack.c.b16 %v10748, %v10741
  %v11351 = vpack.c.b16 %v10749, %v10742
  %v11352 = vpack.c.b16 %v10750, %v10743
  %v11353 = vpack.c.b16 %v10751, %v10744
  %v11354 = vpack.c.b16 %v10752, %v10745
  %v11355 = vpack.c.b16 %v10753, %v10746
  %v11356 = vpack.c.b16 %v10754, %v10747
  %v11357 = vpack.c.b16 %v10762, %v10755
  %v11358 = vpack.c.b16 %v10763, %v10756
  %v11359 = vpack.c.b16 %v10764, %v10757
  %v11360 = vpack.c.b16 %v10765, %v10758
  %v11361 = vpack.c.b16 %v10766, %v10759
  %v11362 = vpack.c.b16 %v10767, %v10760
  %v11363 = vpack.c.b16 %v10768, %v10761
  %v11364 = vpack.c.b16 %v10776, %v10769
  %v11365 = vpack.c.b16 %v10777, %v10770
  %v11366 = vpack.c.b16 %v10778, %v10771
  %v11367 = vpack.c.b16 %v10779, %v10772
  %v11368 = vpack.c.b16 %v10780, %v10773
  %v11369 = vpack.c.b16 %v10781, %v10774
  %v11370 = vpack.c.b16 %v10782, %v10775
  %v11371 = vpack.c.b16 %v10790, %v10783
  %v11372 = vpack.c.b16 %v10791, %v10784
  %v11373 = vpack.c.b16 %v10792, %v10785
  %v11374 = vpack.c.b16 %v10793, %v10786
  %v11375 = vpack.c.b16 %v10794, %v10787
  %v11376 = vpack.c.b16 %v10795, %v10788
  %v11377 = vpack.c.b16 %v10796, %v10789
  %v11378 = vpack.c.b16 %v10804, %v10797
  %v11379 = vpack.c.b16 %v10805, %v10798
  %v11380 = vpack.c.b16 %v10806, %v10799
  %v11381 = vpack.c.b16 %v10807, %v10800
  %v11382 = vpack.c.b16 %v10808, %v10801
  %v11383 = vpack.c.b16 %v10809, %v10802
  %v11384 = vpack.c.b16 %v10810, %v10803
  %v11385 = vpack.c.b16 %v10818, %v10811
  %v11386 = vpack.c.b16 %v10819, %v10812
  %v11387 = vpack.c.b16 %v10820, %v10813
  %v11388 = vpack.c.b16 %v10821, %v10814
  %v11389 = vpack.c.b16 %v10822, %v10815
  %v11390 = vpack.c.b16 %v10823, %v10816
  %v11391 = vpack.c.b16 %v10824, %v10817
  %v11392 = vpack.c.b16 %v10832, %v10825
  %v11393 = vpack.c.b16 %v10833, %v10826
  %v11394 = vpack.c.b16 %v10834, %v10827
  %v11395 = vpack.c.b16 %v10835, %v10828
  %v11396 = vpack.c.b16 %v10836, %v10829
  %v11397 = vpack.c.b16 %v10837, %v10830
  %v11398 = vpack.c.b16 %v10838, %v10831
  %v11399 = vpack.c.b16 %v10846, %v10839
  %v11400 = vpack.c.b16 %v10847, %v10840
  %v11401 = vpack.c.b16 %v10848, %v10841
  %v11402 = vpack.c.b16 %v10849, %v10842
  %v11403 = vpack.c.b16 %v10850, %v10843
  %v11404 = vpack.c.b16 %v10851, %v10844
  %v11405 = vpack.c.b16 %v10852, %v10845
  %v11406 = vpack.c.b16 %v10860, %v10853
  %v11407 = vpack.c.b16 %v10861, %v10854
  %v11408 = vpack.c.b16 %v10862, %v10855
  %v11409 = vpack.c.b16 %v10863, %v10856
  %v11410 = vpack.c.b16 %v10864, %v10857
  %v11411 = vpack.c.b16 %v10865, %v10858
  %v11412 = vpack.c.b16 %v10866, %v10859
  %v11413 = vpack.c.b16 %v10874, %v10867
  %v11414 = vpack.c.b16 %v10875, %v10868
  %v11415 = vpack.c.b16 %v10876, %v10869
  %v11416 = vpack.c.b16 %v10877, %v10870
  %v11417 = vpack.c.b16 %v10878, %v10871
  %v11418 = vpack.c.b16 %v10879, %v10872
  %v11419 = vpack.c.b16 %v10880, %v10873
  %v11420 = vpack.c.b16 %v10888, %v10881
  %v11421 = vpack.c.b16 %v10889, %v10882
  %v11422 = vpack.c.b16 %v10890, %v10883
  %v11423 = vpack.c.b16 %v10891, %v10884
  %v11424 = vpack.c.b16 %v10892, %v10885
  %v11425 = vpack.c.b16 %v10893, %v10886
  %v11426 = vpack.c.b16 %v10894, %v10887
  %v11427 = vpack.c.b16 %v10902, %v10895
  %v11428 = vpack.c.b16 %v10903, %v10896
  %v11429 = vpack.c.b16 %v10904, %v10897
  %v11430 = vpack.c.b16 %v10905, %v10898
  %v11431 = vpack.c.b16 %v10906, %v10899
  %v11432 = vpack.c.b16 %v10907, %v10900
  %v11433 = vpack.c.b16 %v10908, %v10901
  %v11434 = vpack.c.b16 %v10916, %v10909
  %v11435 = vpack.c.b16 %v10917, %v10910
  %v11436 = vpack.c.b16 %v10918, %v10911
  %v11437 = vpack.c.b16 %v10919, %v10912
  %v11438 = vpack.c.b16 %v10920, %v10913
  %v11439 = vpack.c.b16 %v10921, %v10914
  %v11440 = vpack.c.b16 %v10922, %v10915
  %v11441 = vpack.c.b16 %v10930, %v10923
  %v11442 = vpack.c.b16 %v10931, %v10924
  %v11443 = vpack.c.b16 %v10932, %v10925
  %v11444 = vpack.c.b16 %v10933, %v10926
  %v11445 = vpack.c.b16 %v10934, %v10927
  %v11446 = vpack.c.b16 %v10935, %v10928
  %v11447 = vpack.c.b16 %v10936, %v10929
  %v11448 = vpack.c.b16 %v10944, %v10937
  %v11449 = vpack.c.b16 %v10945, %v10938
  %v11450 = vpack.c.b16 %v10946, %v10939
  %v11451 = vpack.c.b16 %v10947, %v10940
  %v11452 = vpack.c.b16 %v10948, %v10941
  %v11453 = vpack.c.b16 %v10949, %v10942
  %v11454 = vpack.c.b16 %v10950, %v10943
  %v11455 = vpack.c.b16 %v10958, %v10951
  %v11456 = vpack.c.b16 %v10959, %v10952
  %v11457 = vpack.c.b16 %v10960, %v10953
  %v11458 = vpack.c.b16 %v10961, %v10954
  %v11459 = vpack.c.b16 %v10962, %v10955
  %v11460 = vpack.c.b16 %v10963, %v10956
  %v11461 = vpack.c.b16 %v10964, %v10957
  %v11462 = vpack.c.b16 %v10972, %v10965
  %v11463 = vpack.c.b16 %v10973, %v10966
  %v11464 = vpack.c.b16 %v10974, %v10967
  %v11465 = vpack.c.b16 %v10975, %v10968
  %v11466 = vpack.c.b16 %v10976, %v10969
  %v11467 = vpack.c.b16 %v10977, %v10970
  %v11468 = vpack.c.b16 %v10978, %v10971
  %v11469 = vpack.c.b16 %v10986, %v10979
  %v11470 = vpack.c.b16 %v10987, %v10980
  %v11471 = vpack.c.b16 %v10988, %v10981
  %v11472 = vpack.c.b16 %v10989, %v10982
  %v11473 = vpack.c.b16 %v10990, %v10983
  %v11474 = vpack.c.b16 %v10991, %v10984
  %v11475 = vpack.c.b16 %v10992, %v10985
  %v11476 = vpack.c.b16 %v11000, %v10993
  %v11477 = vpack.c.b16 %v11001, %v10994
  %v11478 = vpack.c.b16 %v11002, %v10995
  %v11479 = vpack.c.b16 %v11003, %v10996
  %v11480 = vpack.c.b16 %v11004, %v10997
  %v11481 = vpack.c.b16 %v11005, %v10998
  %v11482 = vpack.c.b16 %v11006, %v10999
  %v11483 = vpack.c.b16 %v11014, %v11007
  %v11484 = vpack.c.b16 %v11015, %v11008
  %v11485 = vpack.c.b16 %v11016, %v11009
  %v11486 = vpack.c.b16 %v11017, %v11010
  %v11487 = vpack.c.b16 %v11018, %v11011
  %v11488 = vpack.c.b16 %v11019, %v11012
  %v11489 = vpack.c.b16 %v11020, %v11013
  %v11490 = vpack.c.b16 %v11028, %v11021
  %v11491 = vpack.c.b16 %v11029, %v11022
  %v11492 = vpack.c.b16 %v11030, %v11023
  %v11493 = vpack.c.b16 %v11031, %v11024
  %v11494 = vpack.c.b16 %v11032, %v11025
  %v11495 = vpack.c.b16 %v11033, %v11026
  %v11496 = vpack.c.b16 %v11034, %v11027
  %v11497 = vpack.c.b16 %v11042, %v11035
  %v11498 = vpack.c.b16 %v11043, %v11036
  %v11499 = vpack.c.b16 %v11044, %v11037
  %v11500 = vpack.c.b16 %v11045, %v11038
  %v11501 = vpack.c.b16 %v11046, %v11039
  %v11502 = vpack.c.b16 %v11047, %v11040
  %v11503 = vpack.c.b16 %v11048, %v11041
  %v11504 = vpack.c.b16 %v11056, %v11049
  %v11505 = vpack.c.b16 %v11057, %v11050
  %v11506 = vpack.c.b16 %v11058, %v11051
  %v11507 = vpack.c.b16 %v11059, %v11052
  %v11508 = vpack.c.b16 %v11060, %v11053
  %v11509 = vpack.c.b16 %v11061, %v11054
  %v11510 = vpack.c.b16 %v11062, %v11055
  %v11511 = vpack.c.b16 %v11070, %v11063
  %v11512 = vpack.c.b16 %v11071, %v11064
  %v11513 = vpack.c.b16 %v11072, %v11065
  %v11514 = vpack.c.b16 %v11073, %v11066
  %v11515 = vpack.c.b16 %v11074, %v11067
  %v11516 = vpack.c.b16 %v11075, %v11068
  %v11517 = vpack.c.b16 %v11076, %v11069
  %v11518 = vpack.c.b16 %v11084, %v11077
  %v11519 = vpack.c.b16 %v11085, %v11078
  %v11520 = vpack.c.b16 %v11086, %v11079
  %v11521 = vpack.c.b16 %v11087, %v11080
  %v11522 = vpack.c.b16 %v11088, %v11081
  %v11523 = vpack.c.b16 %v11089, %v11082
  %v11524 = vpack.c.b16 %v11090, %v11083
  %v11525 = vpack.c.b16 %v11098, %v11091
  %v11526 = vpack.c.b16 %v11099, %v11092
  %v11527 = vpack.c.b16 %v11100, %v11093
  %v11528 = vpack.c.b16 %v11101, %v11094
  %v11529 = vpack.c.b16 %v11102, %v11095
  %v11530 = vpack.c.b16 %v11103, %v11096
  %v11531 = vpack.c.b16 %v11104, %v11097
  %v11532 = vpack.c.b16 %v11112, %v11105
  %v11533 = vpack.c.b16 %v11113, %v11106
  %v11534 = vpack.c.b16 %v11114, %v11107
  %v11535 = vpack.c.b16 %v11115, %v11108
  %v11536 = vpack.c.b16 %v11116, %v11109
  %v11537 = vpack.c.b16 %v11117, %v11110
  %v11538 = vpack.c.b16 %v11118, %v11111
  %v11539 = vpack.c.b16 %v11126, %v11119
  %v11540 = vpack.c.b16 %v11127, %v11120
  %v11541 = vpack.c.b16 %v11128, %v11121
  %v11542 = vpack.c.b16 %v11129, %v11122
  %v11543 = vpack.c.b16 %v11130, %v11123
  %v11544 = vpack.c.b16 %v11131, %v11124
  %v11545 = vpack.c.b16 %v11132, %v11125
  %v11546 = vpack.c.b16 %v11140, %v11133
  %v11547 = vpack.c.b16 %v11141, %v11134
  %v11548 = vpack.c.b16 %v11142, %v11135
  %v11549 = vpack.c.b16 %v11143, %v11136
  %v11550 = vpack.c.b16 %v11144, %v11137
  %v11551 = vpack.c.b16 %v11145, %v11138
  %v11552 = vpack.c.b16 %v11146, %v11139
  %v11553 = vpack.c.b16 %v11154, %v11147
  %v11554 = vpack.c.b16 %v11155, %v11148
  %v11555 = vpack.c.b16 %v11156, %v11149
  %v11556 = vpack.c.b16 %v11157, %v11150
  %v11557 = vpack.c.b16 %v11158, %v11151
  %v11558 = vpack.c.b16 %v11159, %v11152
  %v11559 = vpack.c.b16 %v11160, %v11153
  %v11560 = vpack.c.b16 %v11168, %v11161
  %v11561 = vpack.c.b16 %v11169, %v11162
  %v11562 = vpack.c.b16 %v11170, %v11163
  %v11563 = vpack.c.b16 %v11171, %v11164
  %v11564 = vpack.c.b16 %v11172, %v11165
  %v11565 = vpack.c.b16 %v11173, %v11166
  %v11566 = vpack.c.b16 %v11174, %v11167
  %v11567 = vpack.c.b16 %v11182, %v11175
  %v11568 = vpack.c.b16 %v11183, %v11176
  %v11569 = vpack.c.b16 %v11184, %v11177
  %v11570 = vpack.c.b16 %v11185, %v11178
  %v11571 = vpack.c.b16 %v11186, %v11179
  %v11572 = vpack.c.b16 %v11187, %v11180
  %v11573 = vpack.c.b16 %v11188, %v11181
  %v11574 = vpack.c.b16 %v11196, %v11189
  %v11575 = vpack.c.b16 %v11197, %v11190
  %v11576 = vpack.c.b16 %v11198, %v11191
  %v11577 = vpack.c.b16 %v11199, %v11192
  %v11578 = vpack.c.b16 %v11200, %v11193
  %v11579 = vpack.c.b16 %v11201, %v11194
  %v11580 = vpack.c.b16 %v11202, %v11195
  %v11581 = vpack.c.b16 %v11210, %v11203
  %v11582 = vpack.c.b16 %v11211, %v11204
  %v11583 = vpack.c.b16 %v11212, %v11205
  %v11584 = vpack.c.b16 %v11213, %v11206
  %v11585 = vpack.c.b16 %v11214, %v11207
  %v11586 = vpack.c.b16 %v11215, %v11208
  %v11587 = vpack.c.b16 %v11216, %v11209
  %v11588 = vpack.c.b16 %v11224, %v11217
  %v11589 = vpack.c.b16 %v11225, %v11218
  %v11590 = vpack.c.b16 %v11226, %v11219
  %v11591 = vpack.c.b16 %v11227, %v11220
  %v11592 = vpack.c.b16 %v11228, %v11221
  %v11593 = vpack.c.b16 %v11229, %v11222
  %v11594 = vpack.c.b16 %v11230, %v11223
  %v11595 = vpack.c.b16 %v11238, %v11231
  %v11596 = vpack.c.b16 %v11239, %v11232
  %v11597 = vpack.c.b16 %v11240, %v11233
  %v11598 = vpack.c.b16 %v11241, %v11234
  %v11599 = vpack.c.b16 %v11242, %v11235
  %v11600 = vpack.c.b16 %v11243, %v11236
  %v11601 = vpack.c.b16 %v11244, %v11237
  %v11602 = vpack.c.b16 %v11252, %v11245
  %v11603 = vpack.c.b16 %v11253, %v11246
  %v11604 = vpack.c.b16 %v11254, %v11247
  %v11605 = vpack.c.b16 %v11255, %v11248
  %v11606 = vpack.c.b16 %v11256, %v11249
  %v11607 = vpack.c.b16 %v11257, %v11250
  %v11608 = vpack.c.b16 %v11258, %v11251
  %v11609 = vpack.c.b16 %v11266, %v11259
  %v11610 = vpack.c.b16 %v11267, %v11260
  %v11611 = vpack.c.b16 %v11268, %v11261
  %v11612 = vpack.c.b16 %v11269, %v11262
  %v11613 = vpack.c.b16 %v11270, %v11263
  %v11614 = vpack.c.b16 %v11271, %v11264
  %v11615 = vpack.c.b16 %v11272, %v11265
  %vm11959 = vcmask 130048
  %v11961 = vsel %vm11959, %v5692, 0
  %11963 = vmatprep.subr.bf16.mxu0 %v11323
  %11964 = vmatpush1.bf16.msra.mxu0 %v11322
  %11965 = vmatprep.subr.bf16.mxu0 %v11316
  %11966 = vmatpush1.bf16.msra.mxu0 %v11315
  %11967 = vmatprep.subr.bf16.mxu0 %v11309
  %11968 = vmatpush1.bf16.msra.mxu0 %v11308
  %11969 = vmatprep.subr.bf16.mxu0 %v11302
  %11970 = vmatpush1.bf16.msra.mxu0 %v11301
  %11971 = vmatprep.subr.bf16.mxu0 %v11295
  %11972 = vmatpush1.bf16.msra.mxu0 %v11294
  %11973 = vmatprep.subr.bf16.mxu0 %v11288
  %11974 = vmatpush1.bf16.msra.mxu0 %v11287
  %11975 = vmatprep.subr.bf16.mxu0 %v11281
  %11976 = vmatpush1.bf16.msra.mxu0 %v11280
  %11977 = vmatprep.subr.bf16.mxu0 %v11274
  %11978 = vmatpush1.bf16.msra.mxu0 %v11273
  %11979 = vmatprep.subr.bf16.mxu0 %v11379
  %11980 = vmatpush2.bf16.msra.mxu0 %v11378
  %11981 = vmatprep.subr.bf16.mxu0 %v11372
  %11982 = vmatpush2.bf16.msra.mxu0 %v11371
  %11983 = vmatprep.subr.bf16.mxu0 %v11365
  %11984 = vmatpush2.bf16.msra.mxu0 %v11364
  %11985 = vmatprep.subr.bf16.mxu0 %v11358
  %11986 = vmatpush2.bf16.msra.mxu0 %v11357
  %11987 = vmatprep.subr.bf16.mxu0 %v11351
  %11988 = vmatpush2.bf16.msra.mxu0 %v11350
  %11989 = vmatprep.subr.bf16.mxu0 %v11344
  %11990 = vmatpush2.bf16.msra.mxu0 %v11343
  %11991 = vmatprep.subr.bf16.mxu0 %v11337
  %11992 = vmatpush2.bf16.msra.mxu0 %v11336
  %11993 = vmatprep.subr.bf16.mxu0 %v11330
  %11994 = vmatpush2.bf16.msra.mxu0 %v11329
  %11995 = vmatprep.mubr.bf16.mxu0 %v5687
  %11996 = vmatmul.mubr.bf16.gmra.mxu0 %v5686
  %v11997 = vpop.f32.mrf.mxu0
  %v11998 = vadd.f32 %v10163, %v11997
  %v11999 = vpop.f32.mrf.mxu0
  %v12000 = vadd.f32 %v10167, %v11999
  %v12001 = vpop.f32.mrf.mxu0
  %v12002 = vpop.f32.mrf.mxu0
  %12003 = vdwg.mxu0
  %12004 = vmatprep.subr.bf16.mxu0 %v11435
  %12005 = vmatpush1.bf16.msra.mxu0 %v11434
  %12006 = vmatprep.subr.bf16.mxu0 %v11428
  %12007 = vmatpush1.bf16.msra.mxu0 %v11427
  %12008 = vmatprep.subr.bf16.mxu0 %v11421
  %12009 = vmatpush1.bf16.msra.mxu0 %v11420
  %12010 = vmatprep.subr.bf16.mxu0 %v11414
  %12011 = vmatpush1.bf16.msra.mxu0 %v11413
  %12012 = vmatprep.subr.bf16.mxu0 %v11407
  %12013 = vmatpush1.bf16.msra.mxu0 %v11406
  %12014 = vmatprep.subr.bf16.mxu0 %v11400
  %12015 = vmatpush1.bf16.msra.mxu0 %v11399
  %12016 = vmatprep.subr.bf16.mxu0 %v11393
  %12017 = vmatpush1.bf16.msra.mxu0 %v11392
  %12018 = vmatprep.subr.bf16.mxu0 %v11386
  %12019 = vmatpush1.bf16.msra.mxu0 %v11385
  %12020 = vmatprep.subr.bf16.mxu0 %v11491
  %12021 = vmatpush2.bf16.msra.mxu0 %v11490
  %12022 = vmatprep.subr.bf16.mxu0 %v11484
  %12023 = vmatpush2.bf16.msra.mxu0 %v11483
  %12024 = vmatprep.subr.bf16.mxu0 %v11477
  %12025 = vmatpush2.bf16.msra.mxu0 %v11476
  %12026 = vmatprep.subr.bf16.mxu0 %v11470
  %12027 = vmatpush2.bf16.msra.mxu0 %v11469
  %12028 = vmatprep.subr.bf16.mxu0 %v11463
  %12029 = vmatpush2.bf16.msra.mxu0 %v11462
  %12030 = vmatprep.subr.bf16.mxu0 %v11456
  %12031 = vmatpush2.bf16.msra.mxu0 %v11455
  %12032 = vmatprep.subr.bf16.mxu0 %v11449
  %12033 = vmatpush2.bf16.msra.mxu0 %v11448
  %12034 = vmatprep.subr.bf16.mxu0 %v11442
  %12035 = vmatpush2.bf16.msra.mxu0 %v11441
  %12036 = vmatprep.mubr.bf16.mxu0 %v5689
  %12037 = vmatmul.mubr.bf16.gmra.mxu0 %v5688
  %v12038 = vpop.f32.mrf.mxu0
  %v12039 = vadd.f32 %v11998, %v12038
  %v12040 = vpop.f32.mrf.mxu0
  %v12041 = vadd.f32 %v12000, %v12040
  %v12042 = vpop.f32.mrf.mxu0
  %v12043 = vpop.f32.mrf.mxu0
  %12044 = vdwg.mxu0
  %12045 = vmatprep.subr.bf16.mxu0 %v11547
  %12046 = vmatpush1.bf16.msra.mxu0 %v11546
  %12047 = vmatprep.subr.bf16.mxu0 %v11540
  %12048 = vmatpush1.bf16.msra.mxu0 %v11539
  %12049 = vmatprep.subr.bf16.mxu0 %v11533
  %12050 = vmatpush1.bf16.msra.mxu0 %v11532
  %12051 = vmatprep.subr.bf16.mxu0 %v11526
  %12052 = vmatpush1.bf16.msra.mxu0 %v11525
  %12053 = vmatprep.subr.bf16.mxu0 %v11519
  %12054 = vmatpush1.bf16.msra.mxu0 %v11518
  %12055 = vmatprep.subr.bf16.mxu0 %v11512
  %12056 = vmatpush1.bf16.msra.mxu0 %v11511
  %12057 = vmatprep.subr.bf16.mxu0 %v11505
  %12058 = vmatpush1.bf16.msra.mxu0 %v11504
  %12059 = vmatprep.subr.bf16.mxu0 %v11498
  %12060 = vmatpush1.bf16.msra.mxu0 %v11497
  %12061 = vmatprep.subr.bf16.mxu0 %v11603
  %12062 = vmatpush2.bf16.msra.mxu0 %v11602
  %12063 = vmatprep.subr.bf16.mxu0 %v11596
  %12064 = vmatpush2.bf16.msra.mxu0 %v11595
  %12065 = vmatprep.subr.bf16.mxu0 %v11589
  %12066 = vmatpush2.bf16.msra.mxu0 %v11588
  %12067 = vmatprep.subr.bf16.mxu0 %v11582
  %12068 = vmatpush2.bf16.msra.mxu0 %v11581
  %12069 = vmatprep.subr.bf16.mxu0 %v11575
  %12070 = vmatpush2.bf16.msra.mxu0 %v11574
  %12071 = vmatprep.subr.bf16.mxu0 %v11568
  %12072 = vmatpush2.bf16.msra.mxu0 %v11567
  %12073 = vmatprep.subr.bf16.mxu0 %v11561
  %12074 = vmatpush2.bf16.msra.mxu0 %v11560
  %12075 = vmatprep.subr.bf16.mxu0 %v11554
  %12076 = vmatpush2.bf16.msra.mxu0 %v11553
  %12077 = vmatprep.mubr.bf16.mxu0 %v5691
  %12078 = vmatmul.mubr.bf16.gmra.mxu0 %v5690
  %v12079 = vpop.f32.mrf.mxu0
  %v12080 = vadd.f32 %v12039, %v12079
  %v12081 = vpop.f32.mrf.mxu0
  %v12082 = vadd.f32 %v12041, %v12081
  %v12083 = vpop.f32.mrf.mxu0
  %v12084 = vpop.f32.mrf.mxu0
  %12085 = vdwg.mxu0
  %12086 = vmatprep.subr.bf16.mxu0 0
  %12087 = vmatpush1.bf16.msra.mxu0 0
  %12088 = vmatprep.subr.bf16.mxu0 0
  %12089 = vmatpush1.bf16.msra.mxu0 0
  %12090 = vmatprep.subr.bf16.mxu0 0
  %12091 = vmatpush1.bf16.msra.mxu0 0
  %12092 = vmatprep.subr.bf16.mxu0 0
  %12093 = vmatpush1.bf16.msra.mxu0 0
  %12094 = vmatprep.subr.bf16.mxu0 0
  %12095 = vmatpush1.bf16.msra.mxu0 0
  %12096 = vmatprep.subr.bf16.mxu0 0
  %12097 = vmatpush1.bf16.msra.mxu0 0
  %12098 = vmatprep.subr.bf16.mxu0 0
  %12099 = vmatpush1.bf16.msra.mxu0 0
  %12100 = vmatprep.subr.bf16.mxu0 %v11610
  %12101 = vmatpush1.bf16.msra.mxu0 %v11609
  %12102 = vmatprep.subr.bf16.mxu0 0
  %12103 = vmatpush2.bf16.msra.mxu0 0
  %12104 = vmatprep.subr.bf16.mxu0 0
  %12105 = vmatpush2.bf16.msra.mxu0 0
  %12106 = vmatprep.subr.bf16.mxu0 0
  %12107 = vmatpush2.bf16.msra.mxu0 0
  %12108 = vmatprep.subr.bf16.mxu0 0
  %12109 = vmatpush2.bf16.msra.mxu0 0
  %12110 = vmatprep.subr.bf16.mxu0 0
  %12111 = vmatpush2.bf16.msra.mxu0 0
  %12112 = vmatprep.subr.bf16.mxu0 0
  %12113 = vmatpush2.bf16.msra.mxu0 0
  %12114 = vmatprep.subr.bf16.mxu0 0
  %12115 = vmatpush2.bf16.msra.mxu0 0
  %12116 = vmatprep.subr.bf16.mxu0 0
  %12117 = vmatpush2.bf16.msra.mxu0 0
  %12118 = vmatprep.mubr.bf16.mxu0 0
  %12119 = vmatmul.mubr.bf16.gmra.mxu0 %v11961
  %v12120 = vpop.f32.mrf.mxu0
  %v12121 = vadd.f32 %v12080, %v12120
  %v12122 = vpop.f32.mrf.mxu0
  %v12123 = vadd.f32 %v12082, %v12122
  %v12124 = vpop.f32.mrf.mxu0
  %v12125 = vpop.f32.mrf.mxu0
  %12126 = vdwg.mxu0
  %12127 = vmatprep.subr.bf16.mxu0 %v11325
  %12128 = vmatpush1.bf16.msra.mxu0 %v11324
  %12129 = vmatprep.subr.bf16.mxu0 %v11318
  %12130 = vmatpush1.bf16.msra.mxu0 %v11317
  %12131 = vmatprep.subr.bf16.mxu0 %v11311
  %12132 = vmatpush1.bf16.msra.mxu0 %v11310
  %12133 = vmatprep.subr.bf16.mxu0 %v11304
  %12134 = vmatpush1.bf16.msra.mxu0 %v11303
  %12135 = vmatprep.subr.bf16.mxu0 %v11297
  %12136 = vmatpush1.bf16.msra.mxu0 %v11296
  %12137 = vmatprep.subr.bf16.mxu0 %v11290
  %12138 = vmatpush1.bf16.msra.mxu0 %v11289
  %12139 = vmatprep.subr.bf16.mxu0 %v11283
  %12140 = vmatpush1.bf16.msra.mxu0 %v11282
  %12141 = vmatprep.subr.bf16.mxu0 %v11276
  %12142 = vmatpush1.bf16.msra.mxu0 %v11275
  %12143 = vmatprep.subr.bf16.mxu0 %v11381
  %12144 = vmatpush2.bf16.msra.mxu0 %v11380
  %12145 = vmatprep.subr.bf16.mxu0 %v11374
  %12146 = vmatpush2.bf16.msra.mxu0 %v11373
  %12147 = vmatprep.subr.bf16.mxu0 %v11367
  %12148 = vmatpush2.bf16.msra.mxu0 %v11366
  %12149 = vmatprep.subr.bf16.mxu0 %v11360
  %12150 = vmatpush2.bf16.msra.mxu0 %v11359
  %12151 = vmatprep.subr.bf16.mxu0 %v11353
  %12152 = vmatpush2.bf16.msra.mxu0 %v11352
  %12153 = vmatprep.subr.bf16.mxu0 %v11346
  %12154 = vmatpush2.bf16.msra.mxu0 %v11345
  %12155 = vmatprep.subr.bf16.mxu0 %v11339
  %12156 = vmatpush2.bf16.msra.mxu0 %v11338
  %12157 = vmatprep.subr.bf16.mxu0 %v11332
  %12158 = vmatpush2.bf16.msra.mxu0 %v11331
  %12159 = vmatprep.mubr.bf16.mxu0 %v5687
  %12160 = vmatmul.mubr.bf16.gmra.mxu0 %v5686
  %v12161 = vpop.f32.mrf.mxu0
  %v12162 = vadd.f32 %v10171, %v12161
  %v12163 = vpop.f32.mrf.mxu0
  %v12164 = vadd.f32 %v10175, %v12163
  %v12165 = vpop.f32.mrf.mxu0
  %v12166 = vpop.f32.mrf.mxu0
  %12167 = vdwg.mxu0
  %12168 = vmatprep.subr.bf16.mxu0 %v11437
  %12169 = vmatpush1.bf16.msra.mxu0 %v11436
  %12170 = vmatprep.subr.bf16.mxu0 %v11430
  %12171 = vmatpush1.bf16.msra.mxu0 %v11429
  %12172 = vmatprep.subr.bf16.mxu0 %v11423
  %12173 = vmatpush1.bf16.msra.mxu0 %v11422
  %12174 = vmatprep.subr.bf16.mxu0 %v11416
  %12175 = vmatpush1.bf16.msra.mxu0 %v11415
  %12176 = vmatprep.subr.bf16.mxu0 %v11409
  %12177 = vmatpush1.bf16.msra.mxu0 %v11408
  %12178 = vmatprep.subr.bf16.mxu0 %v11402
  %12179 = vmatpush1.bf16.msra.mxu0 %v11401
  %12180 = vmatprep.subr.bf16.mxu0 %v11395
  %12181 = vmatpush1.bf16.msra.mxu0 %v11394
  %12182 = vmatprep.subr.bf16.mxu0 %v11388
  %12183 = vmatpush1.bf16.msra.mxu0 %v11387
  %12184 = vmatprep.subr.bf16.mxu0 %v11493
  %12185 = vmatpush2.bf16.msra.mxu0 %v11492
  %12186 = vmatprep.subr.bf16.mxu0 %v11486
  %12187 = vmatpush2.bf16.msra.mxu0 %v11485
  %12188 = vmatprep.subr.bf16.mxu0 %v11479
  %12189 = vmatpush2.bf16.msra.mxu0 %v11478
  %12190 = vmatprep.subr.bf16.mxu0 %v11472
  %12191 = vmatpush2.bf16.msra.mxu0 %v11471
  %12192 = vmatprep.subr.bf16.mxu0 %v11465
  %12193 = vmatpush2.bf16.msra.mxu0 %v11464
  %12194 = vmatprep.subr.bf16.mxu0 %v11458
  %12195 = vmatpush2.bf16.msra.mxu0 %v11457
  %12196 = vmatprep.subr.bf16.mxu0 %v11451
  %12197 = vmatpush2.bf16.msra.mxu0 %v11450
  %12198 = vmatprep.subr.bf16.mxu0 %v11444
  %12199 = vmatpush2.bf16.msra.mxu0 %v11443
  %12200 = vmatprep.mubr.bf16.mxu0 %v5689
  %12201 = vmatmul.mubr.bf16.gmra.mxu0 %v5688
  %v12202 = vpop.f32.mrf.mxu0
  %v12203 = vadd.f32 %v12162, %v12202
  %v12204 = vpop.f32.mrf.mxu0
  %v12205 = vadd.f32 %v12164, %v12204
  %v12206 = vpop.f32.mrf.mxu0
  %v12207 = vpop.f32.mrf.mxu0
  %12208 = vdwg.mxu0
  %12209 = vmatprep.subr.bf16.mxu0 %v11549
  %12210 = vmatpush1.bf16.msra.mxu0 %v11548
  %12211 = vmatprep.subr.bf16.mxu0 %v11542
  %12212 = vmatpush1.bf16.msra.mxu0 %v11541
  %12213 = vmatprep.subr.bf16.mxu0 %v11535
  %12214 = vmatpush1.bf16.msra.mxu0 %v11534
  %12215 = vmatprep.subr.bf16.mxu0 %v11528
  %12216 = vmatpush1.bf16.msra.mxu0 %v11527
  %12217 = vmatprep.subr.bf16.mxu0 %v11521
  %12218 = vmatpush1.bf16.msra.mxu0 %v11520
  %12219 = vmatprep.subr.bf16.mxu0 %v11514
  %12220 = vmatpush1.bf16.msra.mxu0 %v11513
  %12221 = vmatprep.subr.bf16.mxu0 %v11507
  %12222 = vmatpush1.bf16.msra.mxu0 %v11506
  %12223 = vmatprep.subr.bf16.mxu0 %v11500
  %12224 = vmatpush1.bf16.msra.mxu0 %v11499
  %12225 = vmatprep.subr.bf16.mxu0 %v11605
  %12226 = vmatpush2.bf16.msra.mxu0 %v11604
  %12227 = vmatprep.subr.bf16.mxu0 %v11598
  %12228 = vmatpush2.bf16.msra.mxu0 %v11597
  %12229 = vmatprep.subr.bf16.mxu0 %v11591
  %12230 = vmatpush2.bf16.msra.mxu0 %v11590
  %12231 = vmatprep.subr.bf16.mxu0 %v11584
  %12232 = vmatpush2.bf16.msra.mxu0 %v11583
  %12233 = vmatprep.subr.bf16.mxu0 %v11577
  %12234 = vmatpush2.bf16.msra.mxu0 %v11576
  %12235 = vmatprep.subr.bf16.mxu0 %v11570
  %12236 = vmatpush2.bf16.msra.mxu0 %v11569
  %12237 = vmatprep.subr.bf16.mxu0 %v11563
  %12238 = vmatpush2.bf16.msra.mxu0 %v11562
  %12239 = vmatprep.subr.bf16.mxu0 %v11556
  %12240 = vmatpush2.bf16.msra.mxu0 %v11555
  %12241 = vmatprep.mubr.bf16.mxu0 %v5691
  %12242 = vmatmul.mubr.bf16.gmra.mxu0 %v5690
  %v12243 = vpop.f32.mrf.mxu0
  %v12244 = vadd.f32 %v12203, %v12243
  %v12245 = vpop.f32.mrf.mxu0
  %v12246 = vadd.f32 %v12205, %v12245
  %v12247 = vpop.f32.mrf.mxu0
  %v12248 = vpop.f32.mrf.mxu0
  %12249 = vdwg.mxu0
  %12250 = vmatprep.subr.bf16.mxu0 0
  %12251 = vmatpush1.bf16.msra.mxu0 0
  %12252 = vmatprep.subr.bf16.mxu0 0
  %12253 = vmatpush1.bf16.msra.mxu0 0
  %12254 = vmatprep.subr.bf16.mxu0 0
  %12255 = vmatpush1.bf16.msra.mxu0 0
  %12256 = vmatprep.subr.bf16.mxu0 0
  %12257 = vmatpush1.bf16.msra.mxu0 0
  %12258 = vmatprep.subr.bf16.mxu0 0
  %12259 = vmatpush1.bf16.msra.mxu0 0
  %12260 = vmatprep.subr.bf16.mxu0 0
  %12261 = vmatpush1.bf16.msra.mxu0 0
  %12262 = vmatprep.subr.bf16.mxu0 0
  %12263 = vmatpush1.bf16.msra.mxu0 0
  %12264 = vmatprep.subr.bf16.mxu0 %v11612
  %12265 = vmatpush1.bf16.msra.mxu0 %v11611
  %12266 = vmatprep.subr.bf16.mxu0 0
  %12267 = vmatpush2.bf16.msra.mxu0 0
  %12268 = vmatprep.subr.bf16.mxu0 0
  %12269 = vmatpush2.bf16.msra.mxu0 0
  %12270 = vmatprep.subr.bf16.mxu0 0
  %12271 = vmatpush2.bf16.msra.mxu0 0
  %12272 = vmatprep.subr.bf16.mxu0 0
  %12273 = vmatpush2.bf16.msra.mxu0 0
  %12274 = vmatprep.subr.bf16.mxu0 0
  %12275 = vmatpush2.bf16.msra.mxu0 0
  %12276 = vmatprep.subr.bf16.mxu0 0
  %12277 = vmatpush2.bf16.msra.mxu0 0
  %12278 = vmatprep.subr.bf16.mxu0 0
  %12279 = vmatpush2.bf16.msra.mxu0 0
  %12280 = vmatprep.subr.bf16.mxu0 0
  %12281 = vmatpush2.bf16.msra.mxu0 0
  %12282 = vmatprep.mubr.bf16.mxu0 0
  %12283 = vmatmul.mubr.bf16.gmra.mxu0 %v11961
  %v12284 = vpop.f32.mrf.mxu0
  %v12285 = vadd.f32 %v12244, %v12284
  %v12286 = vpop.f32.mrf.mxu0
  %v12287 = vadd.f32 %v12246, %v12286
  %v12288 = vpop.f32.mrf.mxu0
  %v12289 = vpop.f32.mrf.mxu0
  %12290 = vdwg.mxu0
  %12291 = vmatprep.subr.bf16.mxu0 %v11327
  %12292 = vmatpush1.bf16.msra.mxu0 %v11326
  %12293 = vmatprep.subr.bf16.mxu0 %v11320
  %12294 = vmatpush1.bf16.msra.mxu0 %v11319
  %12295 = vmatprep.subr.bf16.mxu0 %v11313
  %12296 = vmatpush1.bf16.msra.mxu0 %v11312
  %12297 = vmatprep.subr.bf16.mxu0 %v11306
  %12298 = vmatpush1.bf16.msra.mxu0 %v11305
  %12299 = vmatprep.subr.bf16.mxu0 %v11299
  %12300 = vmatpush1.bf16.msra.mxu0 %v11298
  %12301 = vmatprep.subr.bf16.mxu0 %v11292
  %12302 = vmatpush1.bf16.msra.mxu0 %v11291
  %12303 = vmatprep.subr.bf16.mxu0 %v11285
  %12304 = vmatpush1.bf16.msra.mxu0 %v11284
  %12305 = vmatprep.subr.bf16.mxu0 %v11278
  %12306 = vmatpush1.bf16.msra.mxu0 %v11277
  %12307 = vmatprep.subr.bf16.mxu0 %v11383
  %12308 = vmatpush2.bf16.msra.mxu0 %v11382
  %12309 = vmatprep.subr.bf16.mxu0 %v11376
  %12310 = vmatpush2.bf16.msra.mxu0 %v11375
  %12311 = vmatprep.subr.bf16.mxu0 %v11369
  %12312 = vmatpush2.bf16.msra.mxu0 %v11368
  %12313 = vmatprep.subr.bf16.mxu0 %v11362
  %12314 = vmatpush2.bf16.msra.mxu0 %v11361
  %12315 = vmatprep.subr.bf16.mxu0 %v11355
  %12316 = vmatpush2.bf16.msra.mxu0 %v11354
  %12317 = vmatprep.subr.bf16.mxu0 %v11348
  %12318 = vmatpush2.bf16.msra.mxu0 %v11347
  %12319 = vmatprep.subr.bf16.mxu0 %v11341
  %12320 = vmatpush2.bf16.msra.mxu0 %v11340
  %12321 = vmatprep.subr.bf16.mxu0 %v11334
  %12322 = vmatpush2.bf16.msra.mxu0 %v11333
  %12323 = vmatprep.mubr.bf16.mxu0 %v5687
  %12324 = vmatmul.mubr.bf16.gmra.mxu0 %v5686
  %v12325 = vpop.f32.mrf.mxu0
  %v12326 = vadd.f32 %v10179, %v12325
  %v12327 = vpop.f32.mrf.mxu0
  %v12328 = vadd.f32 %v10183, %v12327
  %v12329 = vpop.f32.mrf.mxu0
  %v12330 = vpop.f32.mrf.mxu0
  %12331 = vdwg.mxu0
  %12332 = vmatprep.subr.bf16.mxu0 %v11439
  %12333 = vmatpush1.bf16.msra.mxu0 %v11438
  %12334 = vmatprep.subr.bf16.mxu0 %v11432
  %12335 = vmatpush1.bf16.msra.mxu0 %v11431
  %12336 = vmatprep.subr.bf16.mxu0 %v11425
  %12337 = vmatpush1.bf16.msra.mxu0 %v11424
  %12338 = vmatprep.subr.bf16.mxu0 %v11418
  %12339 = vmatpush1.bf16.msra.mxu0 %v11417
  %12340 = vmatprep.subr.bf16.mxu0 %v11411
  %12341 = vmatpush1.bf16.msra.mxu0 %v11410
  %12342 = vmatprep.subr.bf16.mxu0 %v11404
  %12343 = vmatpush1.bf16.msra.mxu0 %v11403
  %12344 = vmatprep.subr.bf16.mxu0 %v11397
  %12345 = vmatpush1.bf16.msra.mxu0 %v11396
  %12346 = vmatprep.subr.bf16.mxu0 %v11390
  %12347 = vmatpush1.bf16.msra.mxu0 %v11389
  %12348 = vmatprep.subr.bf16.mxu0 %v11495
  %12349 = vmatpush2.bf16.msra.mxu0 %v11494
  %12350 = vmatprep.subr.bf16.mxu0 %v11488
  %12351 = vmatpush2.bf16.msra.mxu0 %v11487
  %12352 = vmatprep.subr.bf16.mxu0 %v11481
  %12353 = vmatpush2.bf16.msra.mxu0 %v11480
  %12354 = vmatprep.subr.bf16.mxu0 %v11474
  %12355 = vmatpush2.bf16.msra.mxu0 %v11473
  %12356 = vmatprep.subr.bf16.mxu0 %v11467
  %12357 = vmatpush2.bf16.msra.mxu0 %v11466
  %12358 = vmatprep.subr.bf16.mxu0 %v11460
  %12359 = vmatpush2.bf16.msra.mxu0 %v11459
  %12360 = vmatprep.subr.bf16.mxu0 %v11453
  %12361 = vmatpush2.bf16.msra.mxu0 %v11452
  %12362 = vmatprep.subr.bf16.mxu0 %v11446
  %12363 = vmatpush2.bf16.msra.mxu0 %v11445
  %12364 = vmatprep.mubr.bf16.mxu0 %v5689
  %12365 = vmatmul.mubr.bf16.gmra.mxu0 %v5688
  %v12366 = vpop.f32.mrf.mxu0
  %v12367 = vadd.f32 %v12326, %v12366
  %v12368 = vpop.f32.mrf.mxu0
  %v12369 = vadd.f32 %v12328, %v12368
  %v12370 = vpop.f32.mrf.mxu0
  %v12371 = vpop.f32.mrf.mxu0
  %12372 = vdwg.mxu0
  %12373 = vmatprep.subr.bf16.mxu0 %v11551
  %12374 = vmatpush1.bf16.msra.mxu0 %v11550
  %12375 = vmatprep.subr.bf16.mxu0 %v11544
  %12376 = vmatpush1.bf16.msra.mxu0 %v11543
  %12377 = vmatprep.subr.bf16.mxu0 %v11537
  %12378 = vmatpush1.bf16.msra.mxu0 %v11536
  %12379 = vmatprep.subr.bf16.mxu0 %v11530
  %12380 = vmatpush1.bf16.msra.mxu0 %v11529
  %12381 = vmatprep.subr.bf16.mxu0 %v11523
  %12382 = vmatpush1.bf16.msra.mxu0 %v11522
  %12383 = vmatprep.subr.bf16.mxu0 %v11516
  %12384 = vmatpush1.bf16.msra.mxu0 %v11515
  %12385 = vmatprep.subr.bf16.mxu0 %v11509
  %12386 = vmatpush1.bf16.msra.mxu0 %v11508
  %12387 = vmatprep.subr.bf16.mxu0 %v11502
  %12388 = vmatpush1.bf16.msra.mxu0 %v11501
  %12389 = vmatprep.subr.bf16.mxu0 %v11607
  %12390 = vmatpush2.bf16.msra.mxu0 %v11606
  %12391 = vmatprep.subr.bf16.mxu0 %v11600
  %12392 = vmatpush2.bf16.msra.mxu0 %v11599
  %12393 = vmatprep.subr.bf16.mxu0 %v11593
  %12394 = vmatpush2.bf16.msra.mxu0 %v11592
  %12395 = vmatprep.subr.bf16.mxu0 %v11586
  %12396 = vmatpush2.bf16.msra.mxu0 %v11585
  %12397 = vmatprep.subr.bf16.mxu0 %v11579
  %12398 = vmatpush2.bf16.msra.mxu0 %v11578
  %12399 = vmatprep.subr.bf16.mxu0 %v11572
  %12400 = vmatpush2.bf16.msra.mxu0 %v11571
  %12401 = vmatprep.subr.bf16.mxu0 %v11565
  %12402 = vmatpush2.bf16.msra.mxu0 %v11564
  %12403 = vmatprep.subr.bf16.mxu0 %v11558
  %12404 = vmatpush2.bf16.msra.mxu0 %v11557
  %12405 = vmatprep.mubr.bf16.mxu0 %v5691
  %12406 = vmatmul.mubr.bf16.gmra.mxu0 %v5690
  %v12407 = vpop.f32.mrf.mxu0
  %v12408 = vadd.f32 %v12367, %v12407
  %v12409 = vpop.f32.mrf.mxu0
  %v12410 = vadd.f32 %v12369, %v12409
  %v12411 = vpop.f32.mrf.mxu0
  %v12412 = vpop.f32.mrf.mxu0
  %12413 = vdwg.mxu0
  %12414 = vmatprep.subr.bf16.mxu0 0
  %12415 = vmatpush1.bf16.msra.mxu0 0
  %12416 = vmatprep.subr.bf16.mxu0 0
  %12417 = vmatpush1.bf16.msra.mxu0 0
  %12418 = vmatprep.subr.bf16.mxu0 0
  %12419 = vmatpush1.bf16.msra.mxu0 0
  %12420 = vmatprep.subr.bf16.mxu0 0
  %12421 = vmatpush1.bf16.msra.mxu0 0
  %12422 = vmatprep.subr.bf16.mxu0 0
  %12423 = vmatpush1.bf16.msra.mxu0 0
  %12424 = vmatprep.subr.bf16.mxu0 0
  %12425 = vmatpush1.bf16.msra.mxu0 0
  %12426 = vmatprep.subr.bf16.mxu0 0
  %12427 = vmatpush1.bf16.msra.mxu0 0
  %12428 = vmatprep.subr.bf16.mxu0 %v11614
  %12429 = vmatpush1.bf16.msra.mxu0 %v11613
  %12430 = vmatprep.subr.bf16.mxu0 0
  %12431 = vmatpush2.bf16.msra.mxu0 0
  %12432 = vmatprep.subr.bf16.mxu0 0
  %12433 = vmatpush2.bf16.msra.mxu0 0
  %12434 = vmatprep.subr.bf16.mxu0 0
  %12435 = vmatpush2.bf16.msra.mxu0 0
  %12436 = vmatprep.subr.bf16.mxu0 0
  %12437 = vmatpush2.bf16.msra.mxu0 0
  %12438 = vmatprep.subr.bf16.mxu0 0
  %12439 = vmatpush2.bf16.msra.mxu0 0
  %12440 = vmatprep.subr.bf16.mxu0 0
  %12441 = vmatpush2.bf16.msra.mxu0 0
  %12442 = vmatprep.subr.bf16.mxu0 0
  %12443 = vmatpush2.bf16.msra.mxu0 0
  %12444 = vmatprep.subr.bf16.mxu0 0
  %12445 = vmatpush2.bf16.msra.mxu0 0
  %12446 = vmatprep.mubr.bf16.mxu0 0
  %12447 = vmatmul.mubr.bf16.gmra.mxu0 %v11961
  %v12448 = vpop.f32.mrf.mxu0
  %v12449 = vadd.f32 %v12408, %v12448
  %v12450 = vpop.f32.mrf.mxu0
  %v12451 = vadd.f32 %v12410, %v12450
  %v12452 = vpop.f32.mrf.mxu0
  %v12453 = vpop.f32.mrf.mxu0
  %12454 = vdwg.mxu0
  %12455 = vmatprep.subr.bf16.mxu0 0
  %12456 = vmatpush1.bf16.msra.mxu0 %v11328
  %12457 = vmatprep.subr.bf16.mxu0 0
  %12458 = vmatpush1.bf16.msra.mxu0 %v11321
  %12459 = vmatprep.subr.bf16.mxu0 0
  %12460 = vmatpush1.bf16.msra.mxu0 %v11314
  %12461 = vmatprep.subr.bf16.mxu0 0
  %12462 = vmatpush1.bf16.msra.mxu0 %v11307
  %12463 = vmatprep.subr.bf16.mxu0 0
  %12464 = vmatpush1.bf16.msra.mxu0 %v11300
  %12465 = vmatprep.subr.bf16.mxu0 0
  %12466 = vmatpush1.bf16.msra.mxu0 %v11293
  %12467 = vmatprep.subr.bf16.mxu0 0
  %12468 = vmatpush1.bf16.msra.mxu0 %v11286
  %12469 = vmatprep.subr.bf16.mxu0 0
  %12470 = vmatpush1.bf16.msra.mxu0 %v11279
  %12471 = vmatprep.subr.bf16.mxu0 0
  %12472 = vmatpush2.bf16.msra.mxu0 %v11384
  %12473 = vmatprep.subr.bf16.mxu0 0
  %12474 = vmatpush2.bf16.msra.mxu0 %v11377
  %12475 = vmatprep.subr.bf16.mxu0 0
  %12476 = vmatpush2.bf16.msra.mxu0 %v11370
  %12477 = vmatprep.subr.bf16.mxu0 0
  %12478 = vmatpush2.bf16.msra.mxu0 %v11363
  %12479 = vmatprep.subr.bf16.mxu0 0
  %12480 = vmatpush2.bf16.msra.mxu0 %v11356
  %12481 = vmatprep.subr.bf16.mxu0 0
  %12482 = vmatpush2.bf16.msra.mxu0 %v11349
  %12483 = vmatprep.subr.bf16.mxu0 0
  %12484 = vmatpush2.bf16.msra.mxu0 %v11342
  %12485 = vmatprep.subr.bf16.mxu0 0
  %12486 = vmatpush2.bf16.msra.mxu0 %v11335
  %12487 = vmatprep.mubr.bf16.mxu0 %v5687
  %12488 = vmatmul.mubr.bf16.gmra.mxu0 %v5686
  %v12489 = vpop.f32.mrf.mxu0
  %v12490 = vadd.f32 %v10187, %v12489
  %v12491 = vpop.f32.mrf.mxu0
  %v12492 = vpop.f32.mrf.mxu0
  %v12493 = vpop.f32.mrf.mxu0
  %12494 = vdwg.mxu0
  %12495 = vmatprep.subr.bf16.mxu0 0
  %12496 = vmatpush1.bf16.msra.mxu0 %v11440
  %12497 = vmatprep.subr.bf16.mxu0 0
  %12498 = vmatpush1.bf16.msra.mxu0 %v11433
  %12499 = vmatprep.subr.bf16.mxu0 0
  %12500 = vmatpush1.bf16.msra.mxu0 %v11426
  %12501 = vmatprep.subr.bf16.mxu0 0
  %12502 = vmatpush1.bf16.msra.mxu0 %v11419
  %12503 = vmatprep.subr.bf16.mxu0 0
  %12504 = vmatpush1.bf16.msra.mxu0 %v11412
  %12505 = vmatprep.subr.bf16.mxu0 0
  %12506 = vmatpush1.bf16.msra.mxu0 %v11405
  %12507 = vmatprep.subr.bf16.mxu0 0
  %12508 = vmatpush1.bf16.msra.mxu0 %v11398
  %12509 = vmatprep.subr.bf16.mxu0 0
  %12510 = vmatpush1.bf16.msra.mxu0 %v11391
  %12511 = vmatprep.subr.bf16.mxu0 0
  %12512 = vmatpush2.bf16.msra.mxu0 %v11496
  %12513 = vmatprep.subr.bf16.mxu0 0
  %12514 = vmatpush2.bf16.msra.mxu0 %v11489
  %12515 = vmatprep.subr.bf16.mxu0 0
  %12516 = vmatpush2.bf16.msra.mxu0 %v11482
  %12517 = vmatprep.subr.bf16.mxu0 0
  %12518 = vmatpush2.bf16.msra.mxu0 %v11475
  %12519 = vmatprep.subr.bf16.mxu0 0
  %12520 = vmatpush2.bf16.msra.mxu0 %v11468
  %12521 = vmatprep.subr.bf16.mxu0 0
  %12522 = vmatpush2.bf16.msra.mxu0 %v11461
  %12523 = vmatprep.subr.bf16.mxu0 0
  %12524 = vmatpush2.bf16.msra.mxu0 %v11454
  %12525 = vmatprep.subr.bf16.mxu0 0
  %12526 = vmatpush2.bf16.msra.mxu0 %v11447
  %12527 = vmatprep.mubr.bf16.mxu0 %v5689
  %12528 = vmatmul.mubr.bf16.gmra.mxu0 %v5688
  %v12529 = vpop.f32.mrf.mxu0
  %v12530 = vadd.f32 %v12490, %v12529
  %v12531 = vpop.f32.mrf.mxu0
  %v12532 = vpop.f32.mrf.mxu0
  %v12533 = vpop.f32.mrf.mxu0
  %12534 = vdwg.mxu0
  %12535 = vmatprep.subr.bf16.mxu0 0
  %12536 = vmatpush1.bf16.msra.mxu0 %v11552
  %12537 = vmatprep.subr.bf16.mxu0 0
  %12538 = vmatpush1.bf16.msra.mxu0 %v11545
  %12539 = vmatprep.subr.bf16.mxu0 0
  %12540 = vmatpush1.bf16.msra.mxu0 %v11538
  %12541 = vmatprep.subr.bf16.mxu0 0
  %12542 = vmatpush1.bf16.msra.mxu0 %v11531
  %12543 = vmatprep.subr.bf16.mxu0 0
  %12544 = vmatpush1.bf16.msra.mxu0 %v11524
  %12545 = vmatprep.subr.bf16.mxu0 0
  %12546 = vmatpush1.bf16.msra.mxu0 %v11517
  %12547 = vmatprep.subr.bf16.mxu0 0
  %12548 = vmatpush1.bf16.msra.mxu0 %v11510
  %12549 = vmatprep.subr.bf16.mxu0 0
  %12550 = vmatpush1.bf16.msra.mxu0 %v11503
  %12551 = vmatprep.subr.bf16.mxu0 0
  %12552 = vmatpush2.bf16.msra.mxu0 %v11608
  %12553 = vmatprep.subr.bf16.mxu0 0
  %12554 = vmatpush2.bf16.msra.mxu0 %v11601
  %12555 = vmatprep.subr.bf16.mxu0 0
  %12556 = vmatpush2.bf16.msra.mxu0 %v11594
  %12557 = vmatprep.subr.bf16.mxu0 0
  %12558 = vmatpush2.bf16.msra.mxu0 %v11587
  %12559 = vmatprep.subr.bf16.mxu0 0
  %12560 = vmatpush2.bf16.msra.mxu0 %v11580
  %12561 = vmatprep.subr.bf16.mxu0 0
  %12562 = vmatpush2.bf16.msra.mxu0 %v11573
  %12563 = vmatprep.subr.bf16.mxu0 0
  %12564 = vmatpush2.bf16.msra.mxu0 %v11566
  %12565 = vmatprep.subr.bf16.mxu0 0
  %12566 = vmatpush2.bf16.msra.mxu0 %v11559
  %12567 = vmatprep.mubr.bf16.mxu0 %v5691
  %12568 = vmatmul.mubr.bf16.gmra.mxu0 %v5690
  %v12569 = vpop.f32.mrf.mxu0
  %v12570 = vadd.f32 %v12530, %v12569
  %v12571 = vpop.f32.mrf.mxu0
  %v12572 = vpop.f32.mrf.mxu0
  %v12573 = vpop.f32.mrf.mxu0
  %12574 = vdwg.mxu0
  %12575 = vmatprep.subr.bf16.mxu0 0
  %12576 = vmatpush1.bf16.msra.mxu0 0
  %12577 = vmatprep.subr.bf16.mxu0 0
  %12578 = vmatpush1.bf16.msra.mxu0 0
  %12579 = vmatprep.subr.bf16.mxu0 0
  %12580 = vmatpush1.bf16.msra.mxu0 0
  %12581 = vmatprep.subr.bf16.mxu0 0
  %12582 = vmatpush1.bf16.msra.mxu0 0
  %12583 = vmatprep.subr.bf16.mxu0 0
  %12584 = vmatpush1.bf16.msra.mxu0 0
  %12585 = vmatprep.subr.bf16.mxu0 0
  %12586 = vmatpush1.bf16.msra.mxu0 0
  %12587 = vmatprep.subr.bf16.mxu0 0
  %12588 = vmatpush1.bf16.msra.mxu0 0
  %12589 = vmatprep.subr.bf16.mxu0 0
  %12590 = vmatpush1.bf16.msra.mxu0 %v11615
  %12591 = vmatprep.subr.bf16.mxu0 0
  %12592 = vmatpush2.bf16.msra.mxu0 0
  %12593 = vmatprep.subr.bf16.mxu0 0
  %12594 = vmatpush2.bf16.msra.mxu0 0
  %12595 = vmatprep.subr.bf16.mxu0 0
  %12596 = vmatpush2.bf16.msra.mxu0 0
  %12597 = vmatprep.subr.bf16.mxu0 0
  %12598 = vmatpush2.bf16.msra.mxu0 0
  %12599 = vmatprep.subr.bf16.mxu0 0
  %12600 = vmatpush2.bf16.msra.mxu0 0
  %12601 = vmatprep.subr.bf16.mxu0 0
  %12602 = vmatpush2.bf16.msra.mxu0 0
  %12603 = vmatprep.subr.bf16.mxu0 0
  %12604 = vmatpush2.bf16.msra.mxu0 0
  %12605 = vmatprep.subr.bf16.mxu0 0
  %12606 = vmatpush2.bf16.msra.mxu0 0
  %12607 = vmatprep.mubr.bf16.mxu0 0
  %12608 = vmatmul.mubr.bf16.gmra.mxu0 %v11961
  %v12609 = vpop.f32.mrf.mxu0
  %v12610 = vadd.f32 %v12570, %v12609
  %v12611 = vpop.f32.mrf.mxu0
  %v12612 = vpop.f32.mrf.mxu0
  %v12613 = vpop.f32.mrf.mxu0
  %12614 = vdwg.mxu0
  %v12622 = vcombine.low %v12121, %v12123
  %v12623 = vcombine.low %v12285, %v12287
  %v12625 = vunpack.c.l.s4 1983009808
  %v12626 = vunpack.c.0.s8 %v12625
  %v12627 = vlaneseq
  %v12628 = vshrl.u32 %v12627, 7
  %v12629 = vsub.s32 %v12626, %v12628
  %v12630 = vrot.slane %v12622, %v12629
  %v12632 = vunpack.c.l.s4 1983009808
  %v12633 = vunpack.c.0.s8 %v12632
  %v12634 = vlaneseq
  %v12635 = vshrl.u32 %v12634, 7
  %v12636 = vsub.s32 %v12633, %v12635
  %v12637 = vrot.slane %v12623, %v12636
  %v12638 = vcombine.low %v12630, %v12637
  %v12639 = vcombine.low %v12449, %v12451
  %v12641 = vunpack.c.l.s4 1983009808
  %v12642 = vunpack.c.0.s8 %v12641
  %v12643 = vlaneseq
  %v12644 = vshrl.u32 %v12643, 7
  %v12645 = vsub.s32 %v12642, %v12644
  %v12646 = vrot.slane %v12639, %v12645
  %v12648 = vunpack.c.l.s4 1983009808
  %v12649 = vunpack.c.0.s8 %v12648
  %v12650 = vlaneseq
  %v12651 = vshrl.u32 %v12650, 7
  %v12652 = vsub.s32 %v12649, %v12651
  %v12653 = vrot.slane %v12610, %v12652
  %v12654 = vcombine.low %v12646, %v12653
  %12657 = vst [vmem:[%s19] sm:$0xff] %v12638
  %vm12658 = vcmask 1041408
  %vm12659 = vcmask 1043458
  %vm12660 = vmor %vm12659, %vm12658
  %vm12661 = vcmask 128004
  %vm12662 = vmor %vm12661, %vm12660
  %12663 = vst.msk [vmem:[%s19 + $0x8] sm:$0x3f] %vm12662, %v12654
  %v12664 = vld [vmem:[%s13] sm:$0xf]
  %v12665 = vld [vmem:[%s13 + $0x4] sm:$0xf]
  %v12666 = vld [vmem:[%s13 + $0x8] sm:$0xf]
  %v12667 = vld [vmem:[%s13 + $0xc] sm:$0xf]
  %v12668 = vld [vmem:[%s13 + $0x10] sm:$0xf]
  %v12669 = vld [vmem:[%s13 + $0x14] sm:$0xf]
  %v12670 = vld [vmem:[%s13 + $0x18] sm:$0xf]
  %v12671 = vld [vmem:[%s13 + $0x1c] sm:$0xf]
  %v12672 = vld [vmem:[%s13 + $0x20] sm:$0xf]
  %v12673 = vld [vmem:[%s13 + $0x24] sm:$0xf]
  %v12674 = vld [vmem:[%s13 + $0x28] sm:$0x3]
  %v12675 = vld [vmem:[%s14] sm:$0x1]
  %v12677 = vlaneseq
  %v12678 = vshrl.u32 %v12677, 7
  %v12679 = vsub.s32 0, %v12678
  %v12680 = vrot.slane %v12675, %v12679
  %12683 = vrot.lane.b32.xlu0 %v5692, 112
  %v12684 = vpop.permute.xlu0 %12683
  %v12696 = vunpack.c.l.b16 %v12664
  %v12697 = vunpack.c.l.b16 %v12665
  %v12698 = vunpack.c.l.b16 %v12666
  %v12699 = vunpack.c.l.b16 %v12667
  %v12700 = vunpack.c.l.b16 %v12668
  %v12701 = vunpack.c.l.b16 %v12669
  %v12702 = vunpack.c.l.b16 %v12670
  %v12703 = vunpack.c.l.b16 %v12671
  %v12704 = vunpack.c.l.b16 %v12672
  %v12705 = vunpack.c.l.b16 %v12673
  %v12706 = vunpack.c.l.b16 %v12674
  %v12707 = vpack.c.b16 %v12697, %v12696
  %v12708 = vpack.c.b16 %v12699, %v12698
  %v12709 = vpack.c.b16 %v12701, %v12700
  %v12710 = vpack.c.b16 %v12703, %v12702
  %v12711 = vpack.c.b16 %v12705, %v12704
  %v12712 = vpack.c.b16 %v12706, %v12706
  %vm12718 = vcmask 687104
  %v12720 = vsel %vm12718, %v12684, 0
  %v12723 = vsel %vm12658, %v12712, 0
  %12725 = vmatprep.subr.bf16.mxu0 0
  %12726 = vmatpush1.bf16.msra.mxu0 0
  %12727 = vmatprep.subr.bf16.mxu0 0
  %12728 = vmatpush1.bf16.msra.mxu0 0
  %12729 = vmatprep.subr.bf16.mxu0 0
  %12730 = vmatpush1.bf16.msra.mxu0 %v12723
  %12731 = vmatprep.subr.bf16.mxu0 0
  %12732 = vmatpush1.bf16.msra.mxu0 %v12711
  %12733 = vmatprep.subr.bf16.mxu0 0
  %12734 = vmatpush1.bf16.msra.mxu0 %v12710
  %12735 = vmatprep.subr.bf16.mxu0 0
  %12736 = vmatpush1.bf16.msra.mxu0 %v12709
  %12737 = vmatprep.subr.bf16.mxu0 0
  %12738 = vmatpush1.bf16.msra.mxu0 %v12708
  %12739 = vmatprep.subr.bf16.mxu0 0
  %12740 = vmatpush1.bf16.msra.mxu0 %v12707
  %12741 = vmatprep.subr.bf16.mxu0 0
  %12742 = vmatpush2.bf16.msra.mxu0 0
  %12743 = vmatprep.subr.bf16.mxu0 0
  %12744 = vmatpush2.bf16.msra.mxu0 0
  %12745 = vmatprep.subr.bf16.mxu0 0
  %12746 = vmatpush2.bf16.msra.mxu0 0
  %12747 = vmatprep.subr.bf16.mxu0 0
  %12748 = vmatpush2.bf16.msra.mxu0 0
  %12749 = vmatprep.subr.bf16.mxu0 0
  %12750 = vmatpush2.bf16.msra.mxu0 0
  %12751 = vmatprep.subr.bf16.mxu0 0
  %12752 = vmatpush2.bf16.msra.mxu0 0
  %12753 = vmatprep.subr.bf16.mxu0 0
  %12754 = vmatpush2.bf16.msra.mxu0 0
  %12755 = vmatprep.subr.bf16.mxu0 0
  %12756 = vmatpush2.bf16.msra.mxu0 0
  %12757 = vmatprep.mubr.bf16.mxu0 0
  %12758 = vmatmul.mubr.bf16.gmra.mxu0 %v12720
  %v12759 = vpop.f32.mrf.mxu0
  %v12760 = vadd.f32 %v12680, %v12759
  %v12761 = vpop.f32.mrf.mxu0
  %v12762 = vpop.f32.mrf.mxu0
  %v12763 = vpop.f32.mrf.mxu0
  %12764 = vdwg.mxu0
  %12765 = vst [vmem:[%s18] sm:$0x3] %v12760
  // Predicated region
  $region62: #{diffusion_forward.2} parent=0 // pred_check
    _
  $region63: #{diffusion_forward.2} parent=0 // pred_check_branch
    %12767 = sbr.rel (0) target = $region65
  $region64: #{diffusion_forward.2} parent=0 // pred_region
    _
  $region65: #{diffusion_forward.2} parent=0 // pred_fallthru
    _
  // Predicated region
  $region66: #{diffusion_forward.2} parent=0 // pred_check
    _
  $region67: #{diffusion_forward.2} parent=0 // pred_check_branch
    %12769 = sbr.rel (0) target = $region69
  $region68: #{diffusion_forward.2} parent=0 // pred_region
    _
  $region69: #{diffusion_forward.2} parent=0 // pred_fallthru
    _
  // Predicated region
  $region70: #{diffusion_forward.2} parent=0 // pred_check
    _
  $region71: #{diffusion_forward.2} parent=0 // pred_check_branch
    %12771 = sbr.rel (0) target = $region73
  $region72: #{diffusion_forward.2} parent=0 // pred_region
    _
  $region73: #{diffusion_forward.2} parent=0 // pred_fallthru
    _
  // Predicated region
  $region74: #{diffusion_forward.2} parent=0 // pred_check
    _
  $region75: #{diffusion_forward.2} parent=0 // pred_check_branch
    %12773 = sbr.rel (0) target = $region77
  $region76: #{diffusion_forward.2} parent=0 // pred_region
    _
  $region77: #{diffusion_forward.2} parent=0 // pred_fallthru
    _
  // Predicated region
  $region78: #{diffusion_forward.2} parent=0 // pred_check
    _
  $region79: #{diffusion_forward.2} parent=0 // pred_check_branch
    %12775 = sbr.rel (0) target = $region81
  $region80: #{diffusion_forward.2} parent=0 // pred_region
    _
  $region81: #{diffusion_forward.2} parent=0 // pred_fallthru
    _
  // Predicated region
  $region82: #{diffusion_forward.2} parent=0 // pred_check
    _
  $region83: #{diffusion_forward.2} parent=0 // pred_check_branch
    %12777 = sbr.rel (0) target = $region85
  $region84: #{diffusion_forward.2} parent=0 // pred_region
    _
  $region85: #{diffusion_forward.2} parent=0 // pred_fallthru
    _
  // Predicated region
  $region86: #{diffusion_forward.2} parent=0 // pred_check
    _
  $region87: #{diffusion_forward.2} parent=0 // pred_check_branch
    %12779 = sbr.rel (0) target = $region89
  $region88: #{diffusion_forward.2} parent=0 // pred_region
    _
  $region89: #{diffusion_forward.2} parent=0 // pred_fallthru
    _
  // Predicated region
  $region90: #{diffusion_forward.2} parent=0 // pred_check
    _
  $region91: #{diffusion_forward.2} parent=0 // pred_check_branch
    %12781 = sbr.rel (0) target = $region93
  $region92: #{diffusion_forward.2} parent=0 // pred_region
    _
  $region93: #{diffusion_forward.2} parent=0 // pred_fallthru
    _
  // Predicated region
  $region94: #{diffusion_forward.2} parent=0 // pred_check
    _
  $region95: #{diffusion_forward.2} parent=0 // pred_check_branch
    %12783 = sbr.rel (0) target = $region97
  $region96: #{diffusion_forward.2} parent=0 // pred_region
    _
  $region97: #{diffusion_forward.2} parent=0 // pred_fallthru
    _
  // Predicated region
  $region98: #{diffusion_forward.2} parent=0 // pred_check
    _
  $region99: #{diffusion_forward.2} parent=0 // pred_check_branch
    %12785 = sbr.rel (0) target = $region101
  $region100: #{diffusion_forward.2} parent=0 // pred_region
    _
  $region101: #{diffusion_forward.2} parent=0 // pred_fallthru
    _

</llo_original>
